<compile_context>
chip_gen: v7x
topology: tpu7x:2x2x1
jax: 0.10.0
libtpu: 0.0.40
codegen_flags: <defaults>
</compile_context>

<pallas_src>
import jax
import jax.numpy as jnp
from jax import lax
from jax.experimental import pallas as pl
from jax.experimental.pallas import tpu as pltpu

# ----------------------------- problem sizes --------------------------------
N_NODES = 16          # num entities
N_REL   = 8           # num relations (even; edge_type in [0, N_REL//2))
D_IN    = 32          # entity_in_dim == relation_dim
D_OUT   = 16          # entity_out_dim
NHEADS  = 2           # nheads_CAGNN
N_EDGES = 64          # number of edges in adj
ALPHA   = 0.2         # LeakyReLU negative slope

HDO   = NHEADS * D_OUT        # 32  (per-path concat-over-heads width)
E2    = 2 * N_EDGES           # 128 (head-path rows then tail-path rows)
NCOMB = 2 * NHEADS            # 4   (head-path heads, then tail-path heads)

_F32 = jnp.float32
_HI  = lax.Precision.HIGHEST


def _dot(a, b, precision=_HI):
    return jnp.dot(a, b, precision=precision, preferred_element_type=_F32)


# ------------------------------- fused kernel --------------------------------
def fused_kernel(ent_emb_ref, rel_emb_ref, ent_idx_ref, rel_idx_ref,
                 grp_row_ref, grp_col_ref, W_rel_ref, wc_top_ref, wc_bot_ref,
                 a_blk_ref, w_rel_ref, ent_out_ref, rel_out_ref):
    i32 = jnp.int32
    ent_emb = ent_emb_ref[...]                       # (N, D_IN)
    rel_emb = rel_emb_ref[...]                       # (R, D_IN)

    # --- entity branch: ent = entity_embeddings @ W_rel (default precision) --
    ent_out_ref[...] = jnp.dot(ent_emb, W_rel_ref[...],
                               preferred_element_type=_F32)

    # --- one-hot selectors built in-kernel (VPU only; no HBM gathers) --------
    ent_idx = ent_idx_ref[...]                       # (2E, 1) int32: heads, then tails
    rel_idx = rel_idx_ref[...]                       # (2E, 1) int32: et+R/2, then et
    grp_row = grp_row_ref[...]                       # (1, 2E) int32: [et, et]
    grp_col = grp_col_ref[...]                       # (2E, 1) int32: [et, et]

    sel_ent = (ent_idx == lax.broadcasted_iota(i32, (E2, N_NODES), 1)).astype(_F32)
    sel_rel = (rel_idx == lax.broadcasted_iota(i32, (E2, N_REL), 1)).astype(_F32)
    A2  = (lax.broadcasted_iota(i32, (N_REL, E2), 0) == grp_row).astype(_F32)  # (R, 2E)
    A2T = (grp_col == lax.broadcasted_iota(i32, (E2, N_REL), 1)).astype(_F32)  # (2E, R)

    # --- gathers as MXU matmuls: project the small tables, then one-hot pick --
    p_ent = _dot(ent_emb, wc_top_ref[...])           # (N, 2*HDO)
    p_rel = _dot(rel_emb, wc_bot_ref[...])           # (R, 2*HDO)
    # rows 0:E  = head-path [head_ent || rel_head] projection (all heads + both
    #             weight banks), rows E:2E = tail-path.
    h = _dot(sel_ent, p_ent) + _dot(sel_rel, p_rel)  # (2E, 2*HDO)

    # --- attention scores for all (path, head) combos in one matmul ----------
    s = _dot(h, a_blk_ref[...])                      # (2E, NCOMB)
    s = jnp.where(s > 0, s, ALPHA * s)               # leaky relu

    # validity mask: rows 0:E pair with combos 0:NHEADS (head path),
    # rows E:2E pair with combos NHEADS:2*NHEADS (tail path).
    ri = lax.broadcasted_iota(i32, (E2, NCOMB), 0)
    ci = lax.broadcasted_iota(i32, (E2, NCOMB), 1)
    valid = ((ri < N_EDGES) == (ci < NHEADS)).astype(_F32)

    # --- segment softmax over edges grouped by relation ----------------------
    # A single per-combo max (uniform shift) replaces the per-group max of the
    # reference; softmax is invariant to any shift constant within a group.
    m = jnp.max(s, axis=0, keepdims=True)            # (1, NCOMB)
    p = jnp.exp(s - m) * valid                       # (2E, NCOMB)
    denom = _dot(A2, p)                              # (R, NCOMB) per-group sums
    # Every edge belongs to a non-empty group, so edge_den > 0 everywhere;
    # empty groups keep denom == 0 but are never scattered back.
    edge_den = _dot(A2T, denom)                      # (2E, NCOMB)
    attn = p / edge_den                              # zero on invalid combos

    # expand attn columns to D_OUT-wide blocks with a 0/1 matmul, weight h,
    # and aggregate edges -> relations with one MXU matmul.
    rc = lax.broadcasted_iota(i32, (NCOMB, 2 * HDO), 0)
    cc = lax.broadcasted_iota(i32, (NCOMB, 2 * HDO), 1)
    lo = rc * D_OUT
    expand = ((cc >= lo) & (cc < lo + D_OUT)).astype(_F32)   # (NCOMB, 2*HDO)
    wh = h * _dot(attn, expand)                      # (2E, 2*HDO)
    agg = _dot(A2, wh)                               # (R, 2*HDO)

    # ELU with clamped exp argument (cannot overflow for large positives)
    agg = jnp.where(agg > 0, agg, jnp.exp(jnp.minimum(agg, 0.0)) - 1.0)

    # head-path block + tail-path block, then final projection
    # (concat(rel_rep, rel_emb) @ w_rel, decomposed per row-block of w_rel).
    rel_rep = agg[:, :HDO] + agg[:, HDO:]            # (R, HDO)
    rel_out_ref[...] = (_dot(rel_rep, w_rel_ref[:HDO, :]) +
                        _dot(rel_emb, w_rel_ref[HDO:, :]))


# ------------------------------- wrapper -------------------------------------
_VMEM = pl.BlockSpec(memory_space=pltpu.MemorySpace.VMEM)


def latent_learning_forward(params, edge_list, edge_type):
    ent_emb = params["entity_embeddings"]            # (N, D_IN)
    rel_emb = params["relation_embeddings"]          # (R, D_IN)
    w_hr, a_hr = params["w_hr"], params["a_hr"]
    w_tr, a_tr = params["w_tr"], params["a_tr"]

    # integer-only glue (reshapes / tiny int ops; no float gathers in XLA)
    ent_idx = edge_list.astype(jnp.int32).reshape(E2, 1)
    rel_idx = jnp.concatenate([edge_type + N_REL // 2,
                               edge_type]).astype(jnp.int32).reshape(E2, 1)
    grp = jnp.concatenate([edge_type, edge_type]).astype(jnp.int32)
    grp_row = grp.reshape(1, E2)
    grp_col = grp.reshape(E2, 1)

    # weight packing: batch both heads and both (head/tail) weight banks so the
    # in-kernel per-edge projection is a single wide matmul chain.
    w_cat = jnp.concatenate([w_hr[k] for k in range(NHEADS)] +
                            [w_tr[k] for k in range(NHEADS)], axis=1)  # (2*D_IN, 2*HDO)
    wc_top, wc_bot = w_cat[:D_IN], w_cat[D_IN:]
    a_blk = jnp.zeros((2 * HDO, NCOMB), jnp.float32)                   # block-diag a's
    a_list = [a_hr[k] for k in range(NHEADS)] + [a_tr[k] for k in range(NHEADS)]
    for c, a in enumerate(a_list):
        a_blk = a_blk.at[c * D_OUT:(c + 1) * D_OUT, c].set(a[0])

    ent, rel = pl.pallas_call(
        fused_kernel,
        out_shape=(jax.ShapeDtypeStruct((N_NODES, HDO), jnp.float32),
                   jax.ShapeDtypeStruct((N_REL, HDO), jnp.float32)),
        in_specs=[_VMEM] * 11,
        out_specs=(_VMEM, _VMEM),
    )(ent_emb, rel_emb, ent_idx, rel_idx, grp_row, grp_col,
      params["W_rel"], wc_top, wc_bot, a_blk, params["w_rel"])
    return ent, rel


# --------------------------- pure-JAX reference ------------------------------
def reference_forward(params, edge_list, edge_type):
    ent_emb = params["entity_embeddings"]
    rel_emb = params["relation_embeddings"]
    head_ent = ent_emb[edge_list[0]]
    tail_ent = ent_emb[edge_list[1]]
    rel_head = rel_emb[edge_type + N_REL // 2]
    rel_tail = rel_emb[edge_type]
    A = (edge_type[None, :] == jnp.arange(N_REL)[:, None]).astype(jnp.float32)

    def cross_att(src, grp, W, a):
        h = jnp.dot(jnp.concatenate([src, grp], axis=1), W, precision=_HI)
        e = jnp.sum(h * a, axis=1, keepdims=True)
        e = jnp.where(e > 0, e, ALPHA * e)
        scores = jnp.where(A > 0, e.T, -1e30)
        seg_max = jnp.max(scores, axis=1, keepdims=True)
        edge_max = jnp.sum(A * seg_max, axis=0)[:, None]
        p = jnp.exp(e - edge_max)
        denom = jnp.sum(A * p.T, axis=1, keepdims=True)
        edge_denom = jnp.sum(A * denom, axis=0)[:, None]
        attn = p / edge_denom
        agg = jnp.dot(A, attn * h, precision=_HI)
        return jnp.where(agg > 0, agg, jnp.exp(agg) - 1.0)

    heads = [cross_att(head_ent, rel_head, params["w_hr"][k], params["a_hr"][k])
             for k in range(NHEADS)]
    tails = [cross_att(tail_ent, rel_tail, params["w_tr"][k], params["a_tr"][k])
             for k in range(NHEADS)]
    rel_rep = jnp.concatenate(heads, axis=1) + jnp.concatenate(tails, axis=1)
    rel = jnp.dot(jnp.concatenate([rel_rep, rel_emb], axis=1), params["w_rel"],
                  precision=_HI)
    ent = jnp.dot(ent_emb, params["W_rel"], precision=_HI)
    return ent, rel


# ---------------------------------- main -------------------------------------
if __name__ == "__main__":
    key = jax.random.PRNGKey(0)
    keys = jax.random.split(key, 10)

    def xavier(k, shape, gain=1.414):
        fan_in, fan_out = shape[-2], shape[-1]
        lim = gain * (6.0 / (fan_in + fan_out)) ** 0.5
        return jax.random.uniform(k, shape, jnp.float32, -lim, lim)

    params = {
        "entity_embeddings":   jax.random.normal(keys[0], (N_NODES, D_IN), jnp.float32),
        "relation_embeddings": jax.random.normal(keys[1], (N_REL, D_IN), jnp.float32),
        "W_rel": xavier(keys[2], (D_IN, NHEADS * D_OUT)),
        "w_rel": xavier(keys[3], (D_IN + NHEADS * D_OUT, NHEADS * D_OUT)),
        # Cross_Att stand-in parameters (per attention bank, stacked over heads)
        "w_hr": xavier(keys[4], (NHEADS, 2 * D_IN, D_OUT)),
        "a_hr": xavier(keys[5], (NHEADS, 1, D_OUT)),
        "w_tr": xavier(keys[6], (NHEADS, 2 * D_IN, D_OUT)),
        "a_tr": xavier(keys[7], (NHEADS, 1, D_OUT)),
        # w_ent exists in __init__ but is unused in forward() -> omitted
    }

    edge_list = jax.random.randint(keys[8], (2, N_EDGES), 0, N_NODES, jnp.int32)
    edge_type = jax.random.randint(keys[9], (N_EDGES,), 0, N_REL // 2, jnp.int32)

    ent, rel = jax.jit(latent_learning_forward)(params, edge_list, edge_type)
    jax.block_until_ready((ent, rel))

    ent_ref, rel_ref = reference_forward(params, edge_list, edge_type)
    assert ent.shape == (N_NODES, NHEADS * D_OUT)
    assert rel.shape == (N_REL, NHEADS * D_OUT)
    # 2e-2 tolerance covers the default (bf16-pass) precision used for the
    # standalone entity projection; the softmax path matches to ~1e-5.
    assert jnp.allclose(ent, ent_ref, rtol=2e-2, atol=2e-2), "entity mismatch"
    assert jnp.allclose(rel, rel_ref, rtol=2e-2, atol=2e-2), "relation mismatch"

    print("KERNEL_OK")
</pallas_src>

<mosaic_0001>
module attributes {stable_mosaic.version = 11 : i64} {
  func.func @fused_kernel(%arg0: memref<16x32xf32, #tpu.memory_space<vmem>>, %arg1: memref<8x32xf32, #tpu.memory_space<vmem>>, %arg2: memref<128x1xi32, #tpu.memory_space<vmem>>, %arg3: memref<128x1xi32, #tpu.memory_space<vmem>>, %arg4: memref<1x128xi32, #tpu.memory_space<vmem>>, %arg5: memref<128x1xi32, #tpu.memory_space<vmem>>, %arg6: memref<32x32xf32, #tpu.memory_space<vmem>>, %arg7: memref<32x64xf32, #tpu.memory_space<vmem>>, %arg8: memref<32x64xf32, #tpu.memory_space<vmem>>, %arg9: memref<64x4xf32, #tpu.memory_space<vmem>>, %arg10: memref<64x32xf32, #tpu.memory_space<vmem>>, %arg11: memref<16x32xf32, #tpu.memory_space<vmem>>, %arg12: memref<8x32xf32, #tpu.memory_space<vmem>>) attributes {dimension_semantics = [], scalar_prefetch = 0 : i64, scratch_operands = 0 : i64, tpu.core_type = #tpu.core_type<tc>} {
    %c0 = arith.constant 0 : index
    %c0_0 = arith.constant 0 : index
    %0 = vector.load %arg0[%c0, %c0_0] : memref<16x32xf32, #tpu.memory_space<vmem>>, vector<16x32xf32>
    %c0_1 = arith.constant 0 : index
    %c0_2 = arith.constant 0 : index
    %1 = vector.load %arg1[%c0_1, %c0_2] : memref<8x32xf32, #tpu.memory_space<vmem>>, vector<8x32xf32>
    %c0_3 = arith.constant 0 : index
    %c0_4 = arith.constant 0 : index
    %2 = vector.load %arg6[%c0_3, %c0_4] : memref<32x32xf32, #tpu.memory_space<vmem>>, vector<32x32xf32>
    %cst = arith.constant dense<0.000000e+00> : vector<16x32xf32>
    %3 = tpu.matmul %0, %2, %cst {dimension_numbers = #tpu.dot_dimension_numbers<[1], [0], [0], [1], [0, 0, 1, 1], [], []>} : vector<16x32xf32>, vector<32x32xf32>, vector<16x32xf32> -> vector<16x32xf32>
    %c0_5 = arith.constant 0 : index
    %c0_6 = arith.constant 0 : index
    %4 = vector.load %arg11[%c0_5, %c0_6] : memref<16x32xf32, #tpu.memory_space<vmem>>, vector<16x32xf32>
    tpu.vector_store %arg11[%c0_5, %c0_6], %3 {strides = array<i32>} : memref<16x32xf32, #tpu.memory_space<vmem>>, vector<16x32xf32>,
    %c0_7 = arith.constant 0 : index
    %c0_8 = arith.constant 0 : index
    %5 = vector.load %arg2[%c0_7, %c0_8] : memref<128x1xi32, #tpu.memory_space<vmem>>, vector<128x1xi32>
    %c0_9 = arith.constant 0 : index
    %c0_10 = arith.constant 0 : index
    %6 = vector.load %arg3[%c0_9, %c0_10] : memref<128x1xi32, #tpu.memory_space<vmem>>, vector<128x1xi32>
    %c0_11 = arith.constant 0 : index
    %c0_12 = arith.constant 0 : index
    %7 = vector.load %arg4[%c0_11, %c0_12] : memref<1x128xi32, #tpu.memory_space<vmem>>, vector<1x128xi32>
    %c0_13 = arith.constant 0 : index
    %c0_14 = arith.constant 0 : index
    %8 = vector.load %arg5[%c0_13, %c0_14] : memref<128x1xi32, #tpu.memory_space<vmem>>, vector<128x1xi32>
    %9 = tpu.iota {dimensions = array<i32: 1>} : vector<128x16xi32>
    %10 = vector.broadcast %5 : vector<128x1xi32> to vector<128x16xi32>
    %11 = arith.cmpi eq, %10, %9 : vector<128x16xi32>
    %12 = arith.extui %11 : vector<128x16xi1> to vector<128x16xi32>
    %13 = arith.sitofp %12 : vector<128x16xi32> to vector<128x16xf32>
    %14 = tpu.iota {dimensions = array<i32: 1>} : vector<128x8xi32>
    %15 = vector.broadcast %6 : vector<128x1xi32> to vector<128x8xi32>
    %16 = arith.cmpi eq, %15, %14 : vector<128x8xi32>
    %17 = arith.extui %16 : vector<128x8xi1> to vector<128x8xi32>
    %18 = arith.sitofp %17 : vector<128x8xi32> to vector<128x8xf32>
    %19 = tpu.iota {dimensions = array<i32: 0>} : vector<8x128xi32>
    %20 = vector.broadcast %7 : vector<1x128xi32> to vector<8x128xi32>
    %21 = arith.cmpi eq, %19, %20 : vector<8x128xi32>
    %22 = arith.extui %21 : vector<8x128xi1> to vector<8x128xi32>
    %23 = arith.sitofp %22 : vector<8x128xi32> to vector<8x128xf32>
    %24 = tpu.iota {dimensions = array<i32: 1>} : vector<128x8xi32>
    %25 = vector.broadcast %8 : vector<128x1xi32> to vector<128x8xi32>
    %26 = arith.cmpi eq, %25, %24 : vector<128x8xi32>
    %27 = arith.extui %26 : vector<128x8xi1> to vector<128x8xi32>
    %28 = arith.sitofp %27 : vector<128x8xi32> to vector<128x8xf32>
    %c0_15 = arith.constant 0 : index
    %c0_16 = arith.constant 0 : index
    %29 = vector.load %arg7[%c0_15, %c0_16] : memref<32x64xf32, #tpu.memory_space<vmem>>, vector<32x64xf32>
    %cst_17 = arith.constant dense<0.000000e+00> : vector<16x64xf32>
    %30 = tpu.matmul %0, %29, %cst_17 {dimension_numbers = #tpu.dot_dimension_numbers<[1], [0], [0], [1], [0, 0, 1, 1], [], []>, precision = #tpu.contract_precision<fp32>} : vector<16x32xf32>, vector<32x64xf32>, vector<16x64xf32> -> vector<16x64xf32>
    %c0_18 = arith.constant 0 : index
    %c0_19 = arith.constant 0 : index
    %31 = vector.load %arg8[%c0_18, %c0_19] : memref<32x64xf32, #tpu.memory_space<vmem>>, vector<32x64xf32>
    %cst_20 = arith.constant dense<0.000000e+00> : vector<8x64xf32>
    %32 = tpu.matmul %1, %31, %cst_20 {dimension_numbers = #tpu.dot_dimension_numbers<[1], [0], [0], [1], [0, 0, 1, 1], [], []>, precision = #tpu.contract_precision<fp32>} : vector<8x32xf32>, vector<32x64xf32>, vector<8x64xf32> -> vector<8x64xf32>
    %cst_21 = arith.constant dense<0.000000e+00> : vector<128x64xf32>
    %33 = tpu.matmul %13, %30, %cst_21 {dimension_numbers = #tpu.dot_dimension_numbers<[1], [0], [0], [1], [0, 0, 1, 1], [], []>, precision = #tpu.contract_precision<fp32>} : vector<128x16xf32>, vector<16x64xf32>, vector<128x64xf32> -> vector<128x64xf32>
    %cst_22 = arith.constant dense<0.000000e+00> : vector<128x64xf32>
    %34 = tpu.matmul %18, %32, %cst_22 {dimension_numbers = #tpu.dot_dimension_numbers<[1], [0], [0], [1], [0, 0, 1, 1], [], []>, precision = #tpu.contract_precision<fp32>} : vector<128x8xf32>, vector<8x64xf32>, vector<128x64xf32> -> vector<128x64xf32>
    %35 = arith.addf %33, %34 : vector<128x64xf32>
    %c0_23 = arith.constant 0 : index
    %c0_24 = arith.constant 0 : index
    %36 = vector.load %arg9[%c0_23, %c0_24] : memref<64x4xf32, #tpu.memory_space<vmem>>, vector<64x4xf32>
    %cst_25 = arith.constant dense<0.000000e+00> : vector<128x4xf32>
    %37 = tpu.matmul %35, %36, %cst_25 {dimension_numbers = #tpu.dot_dimension_numbers<[1], [0], [0], [1], [0, 0, 1, 1], [], []>, precision = #tpu.contract_precision<fp32>} : vector<128x64xf32>, vector<64x4xf32>, vector<128x4xf32> -> vector<128x4xf32>
    %cst_26 = arith.constant 0.000000e+00 : f32
    %38 = vector.broadcast %cst_26 : f32 to vector<128x4xf32>
    %39 = arith.cmpf ogt, %37, %38 : vector<128x4xf32>
    %cst_27 = arith.constant 2.000000e-01 : f32
    %40 = vector.broadcast %cst_27 : f32 to vector<128x4xf32>
    %41 = arith.mulf %40, %37 : vector<128x4xf32>
    %42 = arith.select %39, %37, %41 : vector<128x4xi1>, vector<128x4xf32>
    %43 = tpu.iota {dimensions = array<i32: 0>} : vector<128x4xi32>
    %44 = tpu.iota {dimensions = array<i32: 1>} : vector<128x4xi32>
    %c64_i32 = arith.constant 64 : i32
    %45 = vector.broadcast %c64_i32 : i32 to vector<128x4xi32>
    %46 = arith.cmpi slt, %43, %45 : vector<128x4xi32>
    %c2_i32 = arith.constant 2 : i32
    %47 = vector.broadcast %c2_i32 : i32 to vector<128x4xi32>
    %48 = arith.cmpi slt, %44, %47 : vector<128x4xi32>
    %49 = arith.xori %46, %48 : vector<128x4xi1>
    %cst_28 = arith.constant dense<true> : vector<128x4xi1>
    %50 = arith.xori %49, %cst_28 : vector<128x4xi1>
    %51 = arith.extui %50 : vector<128x4xi1> to vector<128x4xi32>
    %52 = arith.sitofp %51 : vector<128x4xi32> to vector<128x4xf32>
    %cst_29 = arith.constant dense<0xFF800000> : vector<4xf32>
    %53 = vector.multi_reduction <maximumf>, %42, %cst_29 [0] : vector<128x4xf32> to vector<4xf32>
    %54 = vector.shape_cast %53 : vector<4xf32> to vector<1x4xf32>
    %55 = vector.broadcast %54 : vector<1x4xf32> to vector<128x4xf32>
    %56 = arith.subf %42, %55 : vector<128x4xf32>
    %57 = math.exp %56 : vector<128x4xf32>
    %58 = arith.mulf %57, %52 : vector<128x4xf32>
    %cst_30 = arith.constant dense<0.000000e+00> : vector<8x4xf32>
    %59 = tpu.matmul %23, %58, %cst_30 {dimension_numbers = #tpu.dot_dimension_numbers<[1], [0], [0], [1], [0, 0, 1, 1], [], []>, precision = #tpu.contract_precision<fp32>} : vector<8x128xf32>, vector<128x4xf32>, vector<8x4xf32> -> vector<8x4xf32>
    %cst_31 = arith.constant dense<0.000000e+00> : vector<128x4xf32>
    %60 = tpu.matmul %28, %59, %cst_31 {dimension_numbers = #tpu.dot_dimension_numbers<[1], [0], [0], [1], [0, 0, 1, 1], [], []>, precision = #tpu.contract_precision<fp32>} : vector<128x8xf32>, vector<8x4xf32>, vector<128x4xf32> -> vector<128x4xf32>
    %61 = arith.divf %58, %60 : vector<128x4xf32>
    %62 = tpu.iota {dimensions = array<i32: 0>} : vector<4x64xi32>
    %63 = tpu.iota {dimensions = array<i32: 1>} : vector<4x64xi32>
    %c16_i32 = arith.constant 16 : i32
    %64 = vector.broadcast %c16_i32 : i32 to vector<4x64xi32>
    %65 = arith.muli %62, %64 : vector<4x64xi32>
    %66 = arith.cmpi sge, %63, %65 : vector<4x64xi32>
    %c16_i32_32 = arith.constant 16 : i32
    %67 = vector.broadcast %c16_i32_32 : i32 to vector<4x64xi32>
    %68 = arith.addi %65, %67 : vector<4x64xi32>
    %69 = arith.cmpi slt, %63, %68 : vector<4x64xi32>
    %70 = arith.andi %66, %69 : vector<4x64xi1>
    %71 = arith.extui %70 : vector<4x64xi1> to vector<4x64xi32>
    %72 = arith.sitofp %71 : vector<4x64xi32> to vector<4x64xf32>
    %cst_33 = arith.constant dense<0.000000e+00> : vector<128x64xf32>
    %73 = tpu.matmul %61, %72, %cst_33 {dimension_numbers = #tpu.dot_dimension_numbers<[1], [0], [0], [1], [0, 0, 1, 1], [], []>, precision = #tpu.contract_precision<fp32>} : vector<128x4xf32>, vector<4x64xf32>, vector<128x64xf32> -> vector<128x64xf32>
    %74 = arith.mulf %35, %73 : vector<128x64xf32>
    %cst_34 = arith.constant dense<0.000000e+00> : vector<8x64xf32>
    %75 = tpu.matmul %23, %74, %cst_34 {dimension_numbers = #tpu.dot_dimension_numbers<[1], [0], [0], [1], [0, 0, 1, 1], [], []>, precision = #tpu.contract_precision<fp32>} : vector<8x128xf32>, vector<128x64xf32>, vector<8x64xf32> -> vector<8x64xf32>
    %cst_35 = arith.constant 0.000000e+00 : f32
    %76 = vector.broadcast %cst_35 : f32 to vector<8x64xf32>
    %77 = arith.cmpf ogt, %75, %76 : vector<8x64xf32>
    %cst_36 = arith.constant 0.000000e+00 : f32
    %78 = vector.broadcast %cst_36 : f32 to vector<8x64xf32>
    %79 = arith.minimumf %75, %78 : vector<8x64xf32>
    %80 = math.exp %79 : vector<8x64xf32>
    %cst_37 = arith.constant 1.000000e+00 : f32
    %81 = vector.broadcast %cst_37 : f32 to vector<8x64xf32>
    %82 = arith.subf %80, %81 : vector<8x64xf32>
    %83 = arith.select %77, %75, %82 : vector<8x64xi1>, vector<8x64xf32>
    %84 = vector.extract_strided_slice %83 {offsets = [0, 0], sizes = [8, 32], strides = [1, 1]} : vector<8x64xf32> to vector<8x32xf32>
    %85 = vector.extract_strided_slice %83 {offsets = [0, 32], sizes = [8, 32], strides = [1, 1]} : vector<8x64xf32> to vector<8x32xf32>
    %86 = arith.addf %84, %85 : vector<8x32xf32>
    %c0_38 = arith.constant 0 : index
    %c0_39 = arith.constant 0 : index
    %87 = vector.load %arg10[%c0_38, %c0_39] : memref<64x32xf32, #tpu.memory_space<vmem>>, vector<32x32xf32>
    %cst_40 = arith.constant dense<0.000000e+00> : vector<8x32xf32>
    %88 = tpu.matmul %86, %87, %cst_40 {dimension_numbers = #tpu.dot_dimension_numbers<[1], [0], [0], [1], [0, 0, 1, 1], [], []>, precision = #tpu.contract_precision<fp32>} : vector<8x32xf32>, vector<32x32xf32>, vector<8x32xf32> -> vector<8x32xf32>
    %c32 = arith.constant 32 : index
    %c0_41 = arith.constant 0 : index
    %89 = vector.load %arg10[%c32, %c0_41] : memref<64x32xf32, #tpu.memory_space<vmem>>, vector<32x32xf32>
    %cst_42 = arith.constant dense<0.000000e+00> : vector<8x32xf32>
    %90 = tpu.matmul %1, %89, %cst_42 {dimension_numbers = #tpu.dot_dimension_numbers<[1], [0], [0], [1], [0, 0, 1, 1], [], []>, precision = #tpu.contract_precision<fp32>} : vector<8x32xf32>, vector<32x32xf32>, vector<8x32xf32> -> vector<8x32xf32>
    %91 = arith.addf %88, %90 : vector<8x32xf32>
    %c0_43 = arith.constant 0 : index
    %c0_44 = arith.constant 0 : index
    %92 = vector.load %arg12[%c0_43, %c0_44] : memref<8x32xf32, #tpu.memory_space<vmem>>, vector<8x32xf32>
    tpu.vector_store %arg12[%c0_43, %c0_44], %91 {strides = array<i32>} : memref<8x32xf32, #tpu.memory_space<vmem>>, vector<8x32xf32>,
    return
  }
}

</mosaic_0001>

<llo_original>
// kernel: latent_learning_forward.1
$region0: #{latent_learning_forward.1}
  #allocation0 [shape = 'u32[]', space=smem, size = 0x4, offset = 0x4, fixed_abs, tag = 'smem constant byte address 0x4 - core index']
  #allocation1 [shape = 'u32[144,128]{1,0:T(1,128)}', space=vmem, size = 0x12000, scoped, tag = 'internal scratch']
  %s0 = inlined_call_operand.vmem [shape: f32[16,32], index: 0, kind: input, shape index: {}]
  %s1 = inlined_call_operand.vmem [shape: f32[8,32], index: 1, kind: input, shape index: {}]
  %s2 = inlined_call_operand.vmem [shape: s32[128,1], index: 2, kind: input, shape index: {}]
  %s3 = inlined_call_operand.vmem [shape: s32[128,1], index: 3, kind: input, shape index: {}]
  %s4 = inlined_call_operand.vmem [shape: s32[1,128], index: 4, kind: input, shape index: {}]
  %s5 = inlined_call_operand.vmem [shape: s32[128,1], index: 5, kind: input, shape index: {}]
  %s6 = inlined_call_operand.vmem [shape: f32[32,32], index: 6, kind: input, shape index: {}]
  %s7 = inlined_call_operand.vmem [shape: f32[32,64], index: 7, kind: input, shape index: {}]
  %s8 = inlined_call_operand.vmem [shape: f32[32,64], index: 8, kind: input, shape index: {}]
  %s9 = inlined_call_operand.vmem [shape: f32[64,4], index: 9, kind: input, shape index: {}]
  %s10 = inlined_call_operand.vmem [shape: f32[64,32], index: 10, kind: input, shape index: {}]
  %s11 = inlined_call_operand.hbm [shape: f32[16,32], index: 11, kind: output, shape index: {0}]
  %s12 = inlined_call_operand.hbm [shape: f32[8,32], index: 12, kind: output, shape index: {1}]
  %13 = xla_tuple %s11, %s12
  %s14 = sld [smem:[#allocation0]]
  $region62: #{latent_learning_forward.1} parent=0
    _
  %s16 = ssub.s32 1, %s14
  %s17 = scalar_select 0, %s16, %s14
  $region1: #{latent_learning_forward.1} parent=0
    #allocation2 [shape = 'u8[8192]{0}', space=vmem, size = 0x2000, scoped, tag = 'output window, operand 0, single buffered']
    #allocation3 [shape = 's32[1]{0}', space=sflag, size = 0x4, scoped, tag = 'scoped memory for latent_learning_forward.1']
    #allocation4 [shape = 'u8[4096]{0}', space=vmem, size = 0x1000, scoped, tag = 'output window, operand 1, single buffered']
    #allocation5 [shape = 's32[1]{0}', space=sflag, size = 0x4, scoped, tag = 'scoped memory for latent_learning_forward.1']
    %18 = vsyncpa [#allocation3], 0
    %19 = vsyncpa [#allocation5], 0
    // Predicated region
    $region2: #{latent_learning_forward.1} parent=1 // pred_check
      _
    $region3: #{latent_learning_forward.1} parent=1 // pred_check_branch
      %21 = sbr.rel (0) target = $region5
    $region4: #{latent_learning_forward.1} parent=1 // pred_region
      _
    $region5: #{latent_learning_forward.1} parent=1 // pred_fallthru
      _
    // Predicated region
    $region6: #{latent_learning_forward.1} parent=1 // pred_check
      _
    $region7: #{latent_learning_forward.1} parent=1 // pred_check_branch
      %23 = sbr.rel (0) target = $region9
    $region8: #{latent_learning_forward.1} parent=1 // pred_region
      _
    $region9: #{latent_learning_forward.1} parent=1 // pred_fallthru
      _
    // Predicated region
    $region10: #{latent_learning_forward.1} parent=1 // pred_check
      _
    $region11: #{latent_learning_forward.1} parent=1 // pred_check_branch
      %25 = sbr.rel (0) target = $region13
    $region12: #{latent_learning_forward.1} parent=1 // pred_region
      _
    $region13: #{latent_learning_forward.1} parent=1 // pred_fallthru
      _
    // Predicated region
    $region14: #{latent_learning_forward.1} parent=1 // pred_check
      _
    $region15: #{latent_learning_forward.1} parent=1 // pred_check_branch
      %27 = sbr.rel (0) target = $region17
    $region16: #{latent_learning_forward.1} parent=1 // pred_region
      _
    $region17: #{latent_learning_forward.1} parent=1 // pred_fallthru
      _
    // Predicated region
    $region18: #{latent_learning_forward.1} parent=1 // pred_check
      _
    $region19: #{latent_learning_forward.1} parent=1 // pred_check_branch
      %29 = sbr.rel (0) target = $region21
    $region20: #{latent_learning_forward.1} parent=1 // pred_region
      _
    $region21: #{latent_learning_forward.1} parent=1 // pred_fallthru
      _
    // Predicated region
    $region22: #{latent_learning_forward.1} parent=1 // pred_check
      _
    $region23: #{latent_learning_forward.1} parent=1 // pred_check_branch
      %31 = sbr.rel (0) target = $region25
    $region24: #{latent_learning_forward.1} parent=1 // pred_region
      _
    $region25: #{latent_learning_forward.1} parent=1 // pred_fallthru
      _
    // Predicated region
    $region26: #{latent_learning_forward.1} parent=1 // pred_check
      _
    $region27: #{latent_learning_forward.1} parent=1 // pred_check_branch
      %33 = sbr.rel (0) target = $region29
    $region28: #{latent_learning_forward.1} parent=1 // pred_region
      _
    $region29: #{latent_learning_forward.1} parent=1 // pred_fallthru
      _
    // Predicated region
    $region30: #{latent_learning_forward.1} parent=1 // pred_check
      _
    $region31: #{latent_learning_forward.1} parent=1 // pred_check_branch
      %35 = sbr.rel (0) target = $region33
    $region32: #{latent_learning_forward.1} parent=1 // pred_region
      _
    $region33: #{latent_learning_forward.1} parent=1 // pred_fallthru
      _
    // Predicated region
    $region34: #{latent_learning_forward.1} parent=1 // pred_check
      _
    $region35: #{latent_learning_forward.1} parent=1 // pred_check_branch
      %37 = sbr.rel (0) target = $region37
    $region36: #{latent_learning_forward.1} parent=1 // pred_region
      _
    $region37: #{latent_learning_forward.1} parent=1 // pred_fallthru
      _
    // Predicated region
    $region38: #{latent_learning_forward.1} parent=1 // pred_check
      _
    $region39: #{latent_learning_forward.1} parent=1 // pred_check_branch
      %39 = sbr.rel (0) target = $region41
    $region40: #{latent_learning_forward.1} parent=1 // pred_region
      _
    $region41: #{latent_learning_forward.1} parent=1 // pred_fallthru
      _
    // Predicated region
    $region42: #{latent_learning_forward.1} parent=1 // pred_check
      _
    $region43: #{latent_learning_forward.1} parent=1 // pred_check_branch
      %41 = sbr.rel (0) target = $region45
    $region44: #{latent_learning_forward.1} parent=1 // pred_region
      _
    $region45: #{latent_learning_forward.1} parent=1 // pred_fallthru
      _
    %v42 = vld [vmem:[%s0] sm:$0xff]
    %v43 = vld [vmem:[%s0 + $0x8] sm:$0xff]
    %v44 = vld [vmem:[%s1] sm:$0xff]
    %v45 = vld [vmem:[%s6] sm:$0xff]
    %v46 = vld [vmem:[%s6 + $0x8] sm:$0xff]
    %v47 = vld [vmem:[%s6 + $0x10] sm:$0xff]
    %v48 = vld [vmem:[%s6 + $0x18] sm:$0xff]
    %vm49 = vcmask 261120
    %v51 = vsel %vm49, %v42, 0
    %v54 = vsel %vm49, %v43, 0
    %56 = vmatprep.subr.mxu0 0.0
    %57 = vmatpush1.msra.mxu0 %v45
    %58 = vmatprep.subr.mxu0 0.0
    %59 = vmatpush1.msra.mxu0 %v46
    %60 = vmatprep.subr.mxu0 0.0
    %61 = vmatpush1.msra.mxu0 %v47
    %62 = vmatprep.subr.mxu0 0.0
    %63 = vmatpush1.msra.mxu0 %v48
    %64 = vmatprep.subr.mxu0 0.0
    %65 = vmatpush1.msra.mxu0 0.0
    %66 = vmatprep.subr.mxu0 0.0
    %67 = vmatpush1.msra.mxu0 0.0
    %68 = vmatprep.subr.mxu0 0.0
    %69 = vmatpush1.msra.mxu0 0.0
    %70 = vmatprep.subr.mxu0 0.0
    %71 = vmatpush1.msra.mxu0 0.0
    %72 = vmatprep.subr.mxu0 0.0
    %73 = vmatpush1.msra.mxu0 0.0
    %74 = vmatprep.subr.mxu0 0.0
    %75 = vmatpush1.msra.mxu0 0.0
    %76 = vmatprep.subr.mxu0 0.0
    %77 = vmatpush1.msra.mxu0 0.0
    %78 = vmatprep.subr.mxu0 0.0
    %79 = vmatpush1.msra.mxu0 0.0
    %80 = vmatprep.subr.mxu0 0.0
    %81 = vmatpush1.msra.mxu0 0.0
    %82 = vmatprep.subr.mxu0 0.0
    %83 = vmatpush1.msra.mxu0 0.0
    %84 = vmatprep.subr.mxu0 0.0
    %85 = vmatpush1.msra.mxu0 0.0
    %86 = vmatprep.subr.mxu0 0.0
    %87 = vmatpush1.msra.mxu0 0.0
    %88 = vmatprep.subr.mxu0 0.0
    %89 = vmatpush1.msra.mxu0 0.0
    %90 = vmatprep.subr.mxu0 0.0
    %91 = vmatpush1.msra.mxu0 0.0
    %92 = vmatprep.subr.mxu0 0.0
    %93 = vmatpush1.msra.mxu0 0.0
    %94 = vmatprep.subr.mxu0 0.0
    %95 = vmatpush1.msra.mxu0 0.0
    %96 = vmatprep.subr.mxu0 0.0
    %97 = vmatpush1.msra.mxu0 0.0
    %98 = vmatprep.subr.mxu0 0.0
    %99 = vmatpush1.msra.mxu0 0.0
    %100 = vmatprep.subr.mxu0 0.0
    %101 = vmatpush1.msra.mxu0 0.0
    %102 = vmatprep.subr.mxu0 0.0
    %103 = vmatpush1.msra.mxu0 0.0
    %104 = vmatprep.subr.mxu0 0.0
    %105 = vmatpush1.msra.mxu0 0.0
    %106 = vmatprep.subr.mxu0 0.0
    %107 = vmatpush1.msra.mxu0 0.0
    %108 = vmatprep.subr.mxu0 0.0
    %109 = vmatpush1.msra.mxu0 0.0
    %110 = vmatprep.subr.mxu0 0.0
    %111 = vmatpush1.msra.mxu0 0.0
    %112 = vmatprep.subr.mxu0 0.0
    %113 = vmatpush1.msra.mxu0 0.0
    %114 = vmatprep.subr.mxu0 0.0
    %115 = vmatpush1.msra.mxu0 0.0
    %116 = vmatprep.subr.mxu0 0.0
    %117 = vmatpush1.msra.mxu0 0.0
    %118 = vmatprep.subr.mxu0 0.0
    %119 = vmatpush1.msra.mxu0 0.0
    %120 = vmatprep.mubr.f32.mxu0 0.0
    %121 = vmatmul.mubr.f32.gmra.mrb[0].mxu0 %v51
    %v122 = vpop.f32.mrb[0].mxu0
    %v123 = vadd.f32 0.0, %v122
    %v124 = vpop.f32.mrb[0].mxu0
    %125 = vmatprep.mubr.f32.mxu0 0.0
    %126 = vmatmul.mubr.f32.gmra.mrb[0].mxu0 %v54
    %v127 = vpop.f32.mrb[0].mxu0
    %v128 = vadd.f32 0.0, %v127
    %v129 = vpop.f32.mrb[0].mxu0
    %130 = vdwg.mxu0
    %131 = vst.msk [vmem:[#allocation2] sm:$0xff] %vm49, %v123
    %132 = vst.msk [vmem:[#allocation2 + $0x8] sm:$0xff] %vm49, %v128
    %v133 = vld [vmem:[%s2] sm:$0xff]
    %v134 = vld [vmem:[%s2 + $0x8] sm:$0xff]
    %v135 = vld [vmem:[%s2 + $0x10] sm:$0xff]
    %v136 = vld [vmem:[%s2 + $0x18] sm:$0xff]
    %v137 = vld [vmem:[%s2 + $0x20] sm:$0xff]
    %v138 = vld [vmem:[%s2 + $0x28] sm:$0xff]
    %v139 = vld [vmem:[%s2 + $0x30] sm:$0xff]
    %v140 = vld [vmem:[%s2 + $0x38] sm:$0xff]
    %v141 = vld [vmem:[%s2 + $0x40] sm:$0xff]
    %v142 = vld [vmem:[%s2 + $0x48] sm:$0xff]
    %v143 = vld [vmem:[%s2 + $0x50] sm:$0xff]
    %v144 = vld [vmem:[%s2 + $0x58] sm:$0xff]
    %v145 = vld [vmem:[%s2 + $0x60] sm:$0xff]
    %v146 = vld [vmem:[%s2 + $0x68] sm:$0xff]
    %v147 = vld [vmem:[%s2 + $0x70] sm:$0xff]
    %v148 = vld [vmem:[%s2 + $0x78] sm:$0xff]
    %v149 = vld [vmem:[%s3] sm:$0xff]
    %v150 = vld [vmem:[%s3 + $0x8] sm:$0xff]
    %v151 = vld [vmem:[%s3 + $0x10] sm:$0xff]
    %v152 = vld [vmem:[%s3 + $0x18] sm:$0xff]
    %v153 = vld [vmem:[%s3 + $0x20] sm:$0xff]
    %v154 = vld [vmem:[%s3 + $0x28] sm:$0xff]
    %v155 = vld [vmem:[%s3 + $0x30] sm:$0xff]
    %v156 = vld [vmem:[%s3 + $0x38] sm:$0xff]
    %v157 = vld [vmem:[%s3 + $0x40] sm:$0xff]
    %v158 = vld [vmem:[%s3 + $0x48] sm:$0xff]
    %v159 = vld [vmem:[%s3 + $0x50] sm:$0xff]
    %v160 = vld [vmem:[%s3 + $0x58] sm:$0xff]
    %v161 = vld [vmem:[%s3 + $0x60] sm:$0xff]
    %v162 = vld [vmem:[%s3 + $0x68] sm:$0xff]
    %v163 = vld [vmem:[%s3 + $0x70] sm:$0xff]
    %v164 = vld [vmem:[%s3 + $0x78] sm:$0xff]
    %v165 = vld [vmem:[%s4] sm:$0x1]
    %v166 = vld [vmem:[%s5] sm:$0xff]
    %v167 = vld [vmem:[%s5 + $0x8] sm:$0xff]
    %v168 = vld [vmem:[%s5 + $0x10] sm:$0xff]
    %v169 = vld [vmem:[%s5 + $0x18] sm:$0xff]
    %v170 = vld [vmem:[%s5 + $0x20] sm:$0xff]
    %v171 = vld [vmem:[%s5 + $0x28] sm:$0xff]
    %v172 = vld [vmem:[%s5 + $0x30] sm:$0xff]
    %v173 = vld [vmem:[%s5 + $0x38] sm:$0xff]
    %v174 = vld [vmem:[%s5 + $0x40] sm:$0xff]
    %v175 = vld [vmem:[%s5 + $0x48] sm:$0xff]
    %v176 = vld [vmem:[%s5 + $0x50] sm:$0xff]
    %v177 = vld [vmem:[%s5 + $0x58] sm:$0xff]
    %v178 = vld [vmem:[%s5 + $0x60] sm:$0xff]
    %v179 = vld [vmem:[%s5 + $0x68] sm:$0xff]
    %v180 = vld [vmem:[%s5 + $0x70] sm:$0xff]
    %v181 = vld [vmem:[%s5 + $0x78] sm:$0xff]
    %v182 = vlaneseq
    %v183 = vand.u32 %v182, 127
    %184 = vset.pattern.permute.xlu0 0
    %185 = vperm.xlu0 %184, %v133
    %v186 = vpop.permute.xlu0 %185
    %187 = vset.pattern.permute.xlu0 0
    %188 = vperm.xlu0 %187, %v134
    %v189 = vpop.permute.xlu0 %188
    %190 = vset.pattern.permute.xlu0 0
    %191 = vperm.xlu0 %190, %v135
    %v192 = vpop.permute.xlu0 %191
    %193 = vset.pattern.permute.xlu0 0
    %194 = vperm.xlu0 %193, %v136
    %v195 = vpop.permute.xlu0 %194
    %196 = vset.pattern.permute.xlu0 0
    %197 = vperm.xlu0 %196, %v137
    %v198 = vpop.permute.xlu0 %197
    %199 = vset.pattern.permute.xlu0 0
    %200 = vperm.xlu0 %199, %v138
    %v201 = vpop.permute.xlu0 %200
    %202 = vset.pattern.permute.xlu0 0
    %203 = vperm.xlu0 %202, %v139
    %v204 = vpop.permute.xlu0 %203
    %205 = vset.pattern.permute.xlu0 0
    %206 = vperm.xlu0 %205, %v140
    %v207 = vpop.permute.xlu0 %206
    %208 = vset.pattern.permute.xlu0 0
    %209 = vperm.xlu0 %208, %v141
    %v210 = vpop.permute.xlu0 %209
    %211 = vset.pattern.permute.xlu0 0
    %212 = vperm.xlu0 %211, %v142
    %v213 = vpop.permute.xlu0 %212
    %214 = vset.pattern.permute.xlu0 0
    %215 = vperm.xlu0 %214, %v143
    %v216 = vpop.permute.xlu0 %215
    %217 = vset.pattern.permute.xlu0 0
    %218 = vperm.xlu0 %217, %v144
    %v219 = vpop.permute.xlu0 %218
    %220 = vset.pattern.permute.xlu0 0
    %221 = vperm.xlu0 %220, %v145
    %v222 = vpop.permute.xlu0 %221
    %223 = vset.pattern.permute.xlu0 0
    %224 = vperm.xlu0 %223, %v146
    %v225 = vpop.permute.xlu0 %224
    %226 = vset.pattern.permute.xlu0 0
    %227 = vperm.xlu0 %226, %v147
    %v228 = vpop.permute.xlu0 %227
    %229 = vset.pattern.permute.xlu0 0
    %230 = vperm.xlu0 %229, %v148
    %v231 = vpop.permute.xlu0 %230
    %vm232 = vcmp.eq.s32.totalorder %v186, %v183
    %vm233 = vcmp.eq.s32.totalorder %v189, %v183
    %vm234 = vcmp.eq.s32.totalorder %v192, %v183
    %vm235 = vcmp.eq.s32.totalorder %v195, %v183
    %vm236 = vcmp.eq.s32.totalorder %v198, %v183
    %vm237 = vcmp.eq.s32.totalorder %v201, %v183
    %vm238 = vcmp.eq.s32.totalorder %v204, %v183
    %vm239 = vcmp.eq.s32.totalorder %v207, %v183
    %vm240 = vcmp.eq.s32.totalorder %v210, %v183
    %vm241 = vcmp.eq.s32.totalorder %v213, %v183
    %vm242 = vcmp.eq.s32.totalorder %v216, %v183
    %vm243 = vcmp.eq.s32.totalorder %v219, %v183
    %vm244 = vcmp.eq.s32.totalorder %v222, %v183
    %vm245 = vcmp.eq.s32.totalorder %v225, %v183
    %vm246 = vcmp.eq.s32.totalorder %v228, %v183
    %vm247 = vcmp.eq.s32.totalorder %v231, %v183
    %v248 = vsel %vm232, 1, 0
    %v249 = vsel %vm233, 1, 0
    %v250 = vsel %vm234, 1, 0
    %v251 = vsel %vm235, 1, 0
    %v252 = vsel %vm236, 1, 0
    %v253 = vsel %vm237, 1, 0
    %v254 = vsel %vm238, 1, 0
    %v255 = vsel %vm239, 1, 0
    %v256 = vsel %vm240, 1, 0
    %v257 = vsel %vm241, 1, 0
    %v258 = vsel %vm242, 1, 0
    %v259 = vsel %vm243, 1, 0
    %v260 = vsel %vm244, 1, 0
    %v261 = vsel %vm245, 1, 0
    %v262 = vsel %vm246, 1, 0
    %v263 = vsel %vm247, 1, 0
    %v264 = vcvt.s32.f32 %v248
    %v265 = vcvt.s32.f32 %v249
    %v266 = vcvt.s32.f32 %v250
    %v267 = vcvt.s32.f32 %v251
    %v268 = vcvt.s32.f32 %v252
    %v269 = vcvt.s32.f32 %v253
    %v270 = vcvt.s32.f32 %v254
    %v271 = vcvt.s32.f32 %v255
    %v272 = vcvt.s32.f32 %v256
    %v273 = vcvt.s32.f32 %v257
    %v274 = vcvt.s32.f32 %v258
    %v275 = vcvt.s32.f32 %v259
    %v276 = vcvt.s32.f32 %v260
    %v277 = vcvt.s32.f32 %v261
    %v278 = vcvt.s32.f32 %v262
    %v279 = vcvt.s32.f32 %v263
    %280 = vset.pattern.permute.xlu0 0
    %281 = vperm.xlu0 %280, %v149
    %v282 = vpop.permute.xlu0 %281
    %283 = vset.pattern.permute.xlu0 0
    %284 = vperm.xlu0 %283, %v150
    %v285 = vpop.permute.xlu0 %284
    %286 = vset.pattern.permute.xlu0 0
    %287 = vperm.xlu0 %286, %v151
    %v288 = vpop.permute.xlu0 %287
    %289 = vset.pattern.permute.xlu0 0
    %290 = vperm.xlu0 %289, %v152
    %v291 = vpop.permute.xlu0 %290
    %292 = vset.pattern.permute.xlu0 0
    %293 = vperm.xlu0 %292, %v153
    %v294 = vpop.permute.xlu0 %293
    %295 = vset.pattern.permute.xlu0 0
    %296 = vperm.xlu0 %295, %v154
    %v297 = vpop.permute.xlu0 %296
    %298 = vset.pattern.permute.xlu0 0
    %299 = vperm.xlu0 %298, %v155
    %v300 = vpop.permute.xlu0 %299
    %301 = vset.pattern.permute.xlu0 0
    %302 = vperm.xlu0 %301, %v156
    %v303 = vpop.permute.xlu0 %302
    %304 = vset.pattern.permute.xlu0 0
    %305 = vperm.xlu0 %304, %v157
    %v306 = vpop.permute.xlu0 %305
    %307 = vset.pattern.permute.xlu0 0
    %308 = vperm.xlu0 %307, %v158
    %v309 = vpop.permute.xlu0 %308
    %310 = vset.pattern.permute.xlu0 0
    %311 = vperm.xlu0 %310, %v159
    %v312 = vpop.permute.xlu0 %311
    %313 = vset.pattern.permute.xlu0 0
    %314 = vperm.xlu0 %313, %v160
    %v315 = vpop.permute.xlu0 %314
    %316 = vset.pattern.permute.xlu0 0
    %317 = vperm.xlu0 %316, %v161
    %v318 = vpop.permute.xlu0 %317
    %319 = vset.pattern.permute.xlu0 0
    %320 = vperm.xlu0 %319, %v162
    %v321 = vpop.permute.xlu0 %320
    %322 = vset.pattern.permute.xlu0 0
    %323 = vperm.xlu0 %322, %v163
    %v324 = vpop.permute.xlu0 %323
    %325 = vset.pattern.permute.xlu0 0
    %326 = vperm.xlu0 %325, %v164
    %v327 = vpop.permute.xlu0 %326
    %vm328 = vcmp.eq.s32.totalorder %v282, %v183
    %vm329 = vcmp.eq.s32.totalorder %v285, %v183
    %vm330 = vcmp.eq.s32.totalorder %v288, %v183
    %vm331 = vcmp.eq.s32.totalorder %v291, %v183
    %vm332 = vcmp.eq.s32.totalorder %v294, %v183
    %vm333 = vcmp.eq.s32.totalorder %v297, %v183
    %vm334 = vcmp.eq.s32.totalorder %v300, %v183
    %vm335 = vcmp.eq.s32.totalorder %v303, %v183
    %vm336 = vcmp.eq.s32.totalorder %v306, %v183
    %vm337 = vcmp.eq.s32.totalorder %v309, %v183
    %vm338 = vcmp.eq.s32.totalorder %v312, %v183
    %vm339 = vcmp.eq.s32.totalorder %v315, %v183
    %vm340 = vcmp.eq.s32.totalorder %v318, %v183
    %vm341 = vcmp.eq.s32.totalorder %v321, %v183
    %vm342 = vcmp.eq.s32.totalorder %v324, %v183
    %vm343 = vcmp.eq.s32.totalorder %v327, %v183
    %v344 = vsel %vm328, 1, 0
    %v345 = vsel %vm329, 1, 0
    %v346 = vsel %vm330, 1, 0
    %v347 = vsel %vm331, 1, 0
    %v348 = vsel %vm332, 1, 0
    %v349 = vsel %vm333, 1, 0
    %v350 = vsel %vm334, 1, 0
    %v351 = vsel %vm335, 1, 0
    %v352 = vsel %vm336, 1, 0
    %v353 = vsel %vm337, 1, 0
    %v354 = vsel %vm338, 1, 0
    %v355 = vsel %vm339, 1, 0
    %v356 = vsel %vm340, 1, 0
    %v357 = vsel %vm341, 1, 0
    %v358 = vsel %vm342, 1, 0
    %v359 = vsel %vm343, 1, 0
    %v360 = vcvt.s32.f32 %v344
    %v361 = vcvt.s32.f32 %v345
    %v362 = vcvt.s32.f32 %v346
    %v363 = vcvt.s32.f32 %v347
    %v364 = vcvt.s32.f32 %v348
    %v365 = vcvt.s32.f32 %v349
    %v366 = vcvt.s32.f32 %v350
    %v367 = vcvt.s32.f32 %v351
    %v368 = vcvt.s32.f32 %v352
    %v369 = vcvt.s32.f32 %v353
    %v370 = vcvt.s32.f32 %v354
    %v371 = vcvt.s32.f32 %v355
    %v372 = vcvt.s32.f32 %v356
    %v373 = vcvt.s32.f32 %v357
    %v374 = vcvt.s32.f32 %v358
    %v375 = vcvt.s32.f32 %v359
    %v376 = vlaneseq
    %v377 = vshrl.u32 %v376, 7
    %v378 = vlaneseq
    %v379 = vshrl.u32 %v378, 7
    %v380 = vsub.s32 0, %v379
    %v381 = vrot.slane %v165, %v380
    %vm382 = vcmp.eq.s32.totalorder %v377, %v381
    %v383 = vsel %vm382, 1, 0
    %v384 = vcvt.s32.f32 %v383
    %385 = vset.pattern.permute.xlu0 0
    %386 = vperm.xlu0 %385, %v166
    %v387 = vpop.permute.xlu0 %386
    %388 = vset.pattern.permute.xlu0 0
    %389 = vperm.xlu0 %388, %v167
    %v390 = vpop.permute.xlu0 %389
    %391 = vset.pattern.permute.xlu0 0
    %392 = vperm.xlu0 %391, %v168
    %v393 = vpop.permute.xlu0 %392
    %394 = vset.pattern.permute.xlu0 0
    %395 = vperm.xlu0 %394, %v169
    %v396 = vpop.permute.xlu0 %395
    %397 = vset.pattern.permute.xlu0 0
    %398 = vperm.xlu0 %397, %v170
    %v399 = vpop.permute.xlu0 %398
    %400 = vset.pattern.permute.xlu0 0
    %401 = vperm.xlu0 %400, %v171
    %v402 = vpop.permute.xlu0 %401
    %403 = vset.pattern.permute.xlu0 0
    %404 = vperm.xlu0 %403, %v172
    %v405 = vpop.permute.xlu0 %404
    %406 = vset.pattern.permute.xlu0 0
    %407 = vperm.xlu0 %406, %v173
    %v408 = vpop.permute.xlu0 %407
    %409 = vset.pattern.permute.xlu0 0
    %410 = vperm.xlu0 %409, %v174
    %v411 = vpop.permute.xlu0 %410
    %412 = vset.pattern.permute.xlu0 0
    %413 = vperm.xlu0 %412, %v175
    %v414 = vpop.permute.xlu0 %413
    %415 = vset.pattern.permute.xlu0 0
    %416 = vperm.xlu0 %415, %v176
    %v417 = vpop.permute.xlu0 %416
    %418 = vset.pattern.permute.xlu0 0
    %419 = vperm.xlu0 %418, %v177
    %v420 = vpop.permute.xlu0 %419
    %421 = vset.pattern.permute.xlu0 0
    %422 = vperm.xlu0 %421, %v178
    %v423 = vpop.permute.xlu0 %422
    %424 = vset.pattern.permute.xlu0 0
    %425 = vperm.xlu0 %424, %v179
    %v426 = vpop.permute.xlu0 %425
    %427 = vset.pattern.permute.xlu0 0
    %428 = vperm.xlu0 %427, %v180
    %v429 = vpop.permute.xlu0 %428
    %430 = vset.pattern.permute.xlu0 0
    %431 = vperm.xlu0 %430, %v181
    %v432 = vpop.permute.xlu0 %431
    %vm433 = vcmp.eq.s32.totalorder %v387, %v183
    %vm434 = vcmp.eq.s32.totalorder %v390, %v183
    %vm435 = vcmp.eq.s32.totalorder %v393, %v183
    %vm436 = vcmp.eq.s32.totalorder %v396, %v183
    %vm437 = vcmp.eq.s32.totalorder %v399, %v183
    %vm438 = vcmp.eq.s32.totalorder %v402, %v183
    %vm439 = vcmp.eq.s32.totalorder %v405, %v183
    %vm440 = vcmp.eq.s32.totalorder %v408, %v183
    %vm441 = vcmp.eq.s32.totalorder %v411, %v183
    %vm442 = vcmp.eq.s32.totalorder %v414, %v183
    %vm443 = vcmp.eq.s32.totalorder %v417, %v183
    %vm444 = vcmp.eq.s32.totalorder %v420, %v183
    %vm445 = vcmp.eq.s32.totalorder %v423, %v183
    %vm446 = vcmp.eq.s32.totalorder %v426, %v183
    %vm447 = vcmp.eq.s32.totalorder %v429, %v183
    %vm448 = vcmp.eq.s32.totalorder %v432, %v183
    %v449 = vsel %vm433, 1, 0
    %v450 = vsel %vm434, 1, 0
    %v451 = vsel %vm435, 1, 0
    %v452 = vsel %vm436, 1, 0
    %v453 = vsel %vm437, 1, 0
    %v454 = vsel %vm438, 1, 0
    %v455 = vsel %vm439, 1, 0
    %v456 = vsel %vm440, 1, 0
    %v457 = vsel %vm441, 1, 0
    %v458 = vsel %vm442, 1, 0
    %v459 = vsel %vm443, 1, 0
    %v460 = vsel %vm444, 1, 0
    %v461 = vsel %vm445, 1, 0
    %v462 = vsel %vm446, 1, 0
    %v463 = vsel %vm447, 1, 0
    %v464 = vsel %vm448, 1, 0
    %v465 = vcvt.s32.f32 %v449
    %v466 = vcvt.s32.f32 %v450
    %v467 = vcvt.s32.f32 %v451
    %v468 = vcvt.s32.f32 %v452
    %v469 = vcvt.s32.f32 %v453
    %v470 = vcvt.s32.f32 %v454
    %v471 = vcvt.s32.f32 %v455
    %v472 = vcvt.s32.f32 %v456
    %v473 = vcvt.s32.f32 %v457
    %v474 = vcvt.s32.f32 %v458
    %v475 = vcvt.s32.f32 %v459
    %v476 = vcvt.s32.f32 %v460
    %v477 = vcvt.s32.f32 %v461
    %v478 = vcvt.s32.f32 %v462
    %v479 = vcvt.s32.f32 %v463
    %v480 = vcvt.s32.f32 %v464
    %v481 = vld [vmem:[%s7] sm:$0xff]
    %v482 = vld [vmem:[%s7 + $0x8] sm:$0xff]
    %v483 = vld [vmem:[%s7 + $0x10] sm:$0xff]
    %v484 = vld [vmem:[%s7 + $0x18] sm:$0xff]
    %485 = vmatprep.subr.mxu0 0.0
    %v486 = vand.u32 %v481, 4294901760
    %487 = vmatpush1.msra.mxu0 %v486
    %488 = vmatprep.subr.mxu0 0.0
    %v489 = vand.u32 %v482, 4294901760
    %490 = vmatpush1.msra.mxu0 %v489
    %491 = vmatprep.subr.mxu0 0.0
    %v492 = vand.u32 %v483, 4294901760
    %493 = vmatpush1.msra.mxu0 %v492
    %494 = vmatprep.subr.mxu0 0.0
    %v495 = vand.u32 %v484, 4294901760
    %496 = vmatpush1.msra.mxu0 %v495
    %497 = vmatprep.subr.mxu0 0.0
    %498 = vmatpush1.msra.mxu0 0.0
    %499 = vmatprep.subr.mxu0 0.0
    %500 = vmatpush1.msra.mxu0 0.0
    %501 = vmatprep.subr.mxu0 0.0
    %502 = vmatpush1.msra.mxu0 0.0
    %503 = vmatprep.subr.mxu0 0.0
    %504 = vmatpush1.msra.mxu0 0.0
    %505 = vmatprep.subr.mxu0 0.0
    %506 = vmatpush1.msra.mxu0 0.0
    %507 = vmatprep.subr.mxu0 0.0
    %508 = vmatpush1.msra.mxu0 0.0
    %509 = vmatprep.subr.mxu0 0.0
    %510 = vmatpush1.msra.mxu0 0.0
    %511 = vmatprep.subr.mxu0 0.0
    %512 = vmatpush1.msra.mxu0 0.0
    %513 = vmatprep.subr.mxu0 0.0
    %514 = vmatpush1.msra.mxu0 0.0
    %515 = vmatprep.subr.mxu0 0.0
    %516 = vmatpush1.msra.mxu0 0.0
    %517 = vmatprep.subr.mxu0 0.0
    %518 = vmatpush1.msra.mxu0 0.0
    %519 = vmatprep.subr.mxu0 0.0
    %520 = vmatpush1.msra.mxu0 0.0
    %521 = vmatprep.subr.mxu0 0.0
    %522 = vmatpush1.msra.mxu0 0.0
    %523 = vmatprep.subr.mxu0 0.0
    %524 = vmatpush1.msra.mxu0 0.0
    %525 = vmatprep.subr.mxu0 0.0
    %526 = vmatpush1.msra.mxu0 0.0
    %527 = vmatprep.subr.mxu0 0.0
    %528 = vmatpush1.msra.mxu0 0.0
    %529 = vmatprep.subr.mxu0 0.0
    %530 = vmatpush1.msra.mxu0 0.0
    %531 = vmatprep.subr.mxu0 0.0
    %532 = vmatpush1.msra.mxu0 0.0
    %533 = vmatprep.subr.mxu0 0.0
    %534 = vmatpush1.msra.mxu0 0.0
    %535 = vmatprep.subr.mxu0 0.0
    %536 = vmatpush1.msra.mxu0 0.0
    %537 = vmatprep.subr.mxu0 0.0
    %538 = vmatpush1.msra.mxu0 0.0
    %539 = vmatprep.subr.mxu0 0.0
    %540 = vmatpush1.msra.mxu0 0.0
    %541 = vmatprep.subr.mxu0 0.0
    %542 = vmatpush1.msra.mxu0 0.0
    %543 = vmatprep.subr.mxu0 0.0
    %544 = vmatpush1.msra.mxu0 0.0
    %545 = vmatprep.subr.mxu0 0.0
    %546 = vmatpush1.msra.mxu0 0.0
    %547 = vmatprep.subr.mxu0 0.0
    %548 = vmatpush1.msra.mxu0 0.0
    %549 = vmatprep.subr.mxu0 0.0
    %550 = vmatpush1.msra.mxu0 0.0
    %551 = vmatprep.subr.mxu0 0.0
    %552 = vmatpush1.msra.mxu0 0.0
    %553 = vmatprep.mubr.f32.mxu0 0.0
    %v554 = vand.u32 %v51, 4294901760
    %v555 = vsub.f32 %v51, %v554
    %v556 = vand.u32 %v555, 4294901760
    %v557 = vsub.f32 %v555, %v556
    %v558 = vand.u32 %v557, 4294901760
    %559 = vmatmul.mubr.f32.gmra.mrb[0].mxu0 %v558
    %v560 = vpop.f32.mrb[0].mxu0
    %v561 = vadd.f32 0.0, %v560
    %v562 = vpop.f32.mrb[0].mxu0
    %563 = vmatprep.mubr.f32.mxu0 0.0
    %v564 = vand.u32 %v54, 4294901760
    %v565 = vsub.f32 %v54, %v564
    %v566 = vand.u32 %v565, 4294901760
    %v567 = vsub.f32 %v565, %v566
    %v568 = vand.u32 %v567, 4294901760
    %569 = vmatmul.mubr.f32.gmra.mrb[0].mxu0 %v568
    %v570 = vpop.f32.mrb[0].mxu0
    %v571 = vadd.f32 0.0, %v570
    %v572 = vpop.f32.mrb[0].mxu0
    %573 = vdwg.mxu0
    %574 = vmatprep.subr.mxu0 0.0
    %v575 = vand.u32 %v481, 4294901760
    %v576 = vsub.f32 %v481, %v575
    %v577 = vand.u32 %v576, 4294901760
    %v578 = vsub.f32 %v576, %v577
    %v579 = vand.u32 %v578, 4294901760
    %580 = vmatpush1.msra.mxu0 %v579
    %581 = vmatprep.subr.mxu0 0.0
    %v582 = vand.u32 %v482, 4294901760
    %v583 = vsub.f32 %v482, %v582
    %v584 = vand.u32 %v583, 4294901760
    %v585 = vsub.f32 %v583, %v584
    %v586 = vand.u32 %v585, 4294901760
    %587 = vmatpush1.msra.mxu0 %v586
    %588 = vmatprep.subr.mxu0 0.0
    %v589 = vand.u32 %v483, 4294901760
    %v590 = vsub.f32 %v483, %v589
    %v591 = vand.u32 %v590, 4294901760
    %v592 = vsub.f32 %v590, %v591
    %v593 = vand.u32 %v592, 4294901760
    %594 = vmatpush1.msra.mxu0 %v593
    %595 = vmatprep.subr.mxu0 0.0
    %v596 = vand.u32 %v484, 4294901760
    %v597 = vsub.f32 %v484, %v596
    %v598 = vand.u32 %v597, 4294901760
    %v599 = vsub.f32 %v597, %v598
    %v600 = vand.u32 %v599, 4294901760
    %601 = vmatpush1.msra.mxu0 %v600
    %602 = vmatprep.subr.mxu0 0.0
    %603 = vmatpush1.msra.mxu0 0.0
    %604 = vmatprep.subr.mxu0 0.0
    %605 = vmatpush1.msra.mxu0 0.0
    %606 = vmatprep.subr.mxu0 0.0
    %607 = vmatpush1.msra.mxu0 0.0
    %608 = vmatprep.subr.mxu0 0.0
    %609 = vmatpush1.msra.mxu0 0.0
    %610 = vmatprep.subr.mxu0 0.0
    %611 = vmatpush1.msra.mxu0 0.0
    %612 = vmatprep.subr.mxu0 0.0
    %613 = vmatpush1.msra.mxu0 0.0
    %614 = vmatprep.subr.mxu0 0.0
    %615 = vmatpush1.msra.mxu0 0.0
    %616 = vmatprep.subr.mxu0 0.0
    %617 = vmatpush1.msra.mxu0 0.0
    %618 = vmatprep.subr.mxu0 0.0
    %619 = vmatpush1.msra.mxu0 0.0
    %620 = vmatprep.subr.mxu0 0.0
    %621 = vmatpush1.msra.mxu0 0.0
    %622 = vmatprep.subr.mxu0 0.0
    %623 = vmatpush1.msra.mxu0 0.0
    %624 = vmatprep.subr.mxu0 0.0
    %625 = vmatpush1.msra.mxu0 0.0
    %626 = vmatprep.subr.mxu0 0.0
    %627 = vmatpush1.msra.mxu0 0.0
    %628 = vmatprep.subr.mxu0 0.0
    %629 = vmatpush1.msra.mxu0 0.0
    %630 = vmatprep.subr.mxu0 0.0
    %631 = vmatpush1.msra.mxu0 0.0
    %632 = vmatprep.subr.mxu0 0.0
    %633 = vmatpush1.msra.mxu0 0.0
    %634 = vmatprep.subr.mxu0 0.0
    %635 = vmatpush1.msra.mxu0 0.0
    %636 = vmatprep.subr.mxu0 0.0
    %637 = vmatpush1.msra.mxu0 0.0
    %638 = vmatprep.subr.mxu0 0.0
    %639 = vmatpush1.msra.mxu0 0.0
    %640 = vmatprep.subr.mxu0 0.0
    %641 = vmatpush1.msra.mxu0 0.0
    %642 = vmatprep.subr.mxu0 0.0
    %643 = vmatpush1.msra.mxu0 0.0
    %644 = vmatprep.subr.mxu0 0.0
    %645 = vmatpush1.msra.mxu0 0.0
    %646 = vmatprep.subr.mxu0 0.0
    %647 = vmatpush1.msra.mxu0 0.0
    %648 = vmatprep.subr.mxu0 0.0
    %649 = vmatpush1.msra.mxu0 0.0
    %650 = vmatprep.subr.mxu0 0.0
    %651 = vmatpush1.msra.mxu0 0.0
    %652 = vmatprep.subr.mxu0 0.0
    %653 = vmatpush1.msra.mxu0 0.0
    %654 = vmatprep.subr.mxu0 0.0
    %655 = vmatpush1.msra.mxu0 0.0
    %656 = vmatprep.subr.mxu0 0.0
    %657 = vmatpush1.msra.mxu0 0.0
    %658 = vmatprep.mubr.f32.mxu0 0.0
    %v659 = vand.u32 %v51, 4294901760
    %660 = vmatmul.mubr.f32.gmra.mrb[0].mxu0 %v659
    %v661 = vpop.f32.mrb[0].mxu0
    %v662 = vadd.f32 %v561, %v661
    %v663 = vpop.f32.mrb[0].mxu0
    %664 = vmatprep.mubr.f32.mxu0 0.0
    %v665 = vand.u32 %v54, 4294901760
    %666 = vmatmul.mubr.f32.gmra.mrb[0].mxu0 %v665
    %v667 = vpop.f32.mrb[0].mxu0
    %v668 = vadd.f32 %v571, %v667
    %v669 = vpop.f32.mrb[0].mxu0
    %670 = vdwg.mxu0
    %671 = vmatprep.subr.mxu0 0.0
    %v672 = vand.u32 %v481, 4294901760
    %v673 = vsub.f32 %v481, %v672
    %674 = vmatpush1.msra.mxu0 %v673
    %675 = vmatprep.subr.mxu0 0.0
    %v676 = vand.u32 %v482, 4294901760
    %v677 = vsub.f32 %v482, %v676
    %678 = vmatpush1.msra.mxu0 %v677
    %679 = vmatprep.subr.mxu0 0.0
    %v680 = vand.u32 %v483, 4294901760
    %v681 = vsub.f32 %v483, %v680
    %682 = vmatpush1.msra.mxu0 %v681
    %683 = vmatprep.subr.mxu0 0.0
    %v684 = vand.u32 %v484, 4294901760
    %v685 = vsub.f32 %v484, %v684
    %686 = vmatpush1.msra.mxu0 %v685
    %687 = vmatprep.subr.mxu0 0.0
    %688 = vmatpush1.msra.mxu0 0.0
    %689 = vmatprep.subr.mxu0 0.0
    %690 = vmatpush1.msra.mxu0 0.0
    %691 = vmatprep.subr.mxu0 0.0
    %692 = vmatpush1.msra.mxu0 0.0
    %693 = vmatprep.subr.mxu0 0.0
    %694 = vmatpush1.msra.mxu0 0.0
    %695 = vmatprep.subr.mxu0 0.0
    %696 = vmatpush1.msra.mxu0 0.0
    %697 = vmatprep.subr.mxu0 0.0
    %698 = vmatpush1.msra.mxu0 0.0
    %699 = vmatprep.subr.mxu0 0.0
    %700 = vmatpush1.msra.mxu0 0.0
    %701 = vmatprep.subr.mxu0 0.0
    %702 = vmatpush1.msra.mxu0 0.0
    %703 = vmatprep.subr.mxu0 0.0
    %704 = vmatpush1.msra.mxu0 0.0
    %705 = vmatprep.subr.mxu0 0.0
    %706 = vmatpush1.msra.mxu0 0.0
    %707 = vmatprep.subr.mxu0 0.0
    %708 = vmatpush1.msra.mxu0 0.0
    %709 = vmatprep.subr.mxu0 0.0
    %710 = vmatpush1.msra.mxu0 0.0
    %711 = vmatprep.subr.mxu0 0.0
    %712 = vmatpush1.msra.mxu0 0.0
    %713 = vmatprep.subr.mxu0 0.0
    %714 = vmatpush1.msra.mxu0 0.0
    %715 = vmatprep.subr.mxu0 0.0
    %716 = vmatpush1.msra.mxu0 0.0
    %717 = vmatprep.subr.mxu0 0.0
    %718 = vmatpush1.msra.mxu0 0.0
    %719 = vmatprep.subr.mxu0 0.0
    %720 = vmatpush1.msra.mxu0 0.0
    %721 = vmatprep.subr.mxu0 0.0
    %722 = vmatpush1.msra.mxu0 0.0
    %723 = vmatprep.subr.mxu0 0.0
    %724 = vmatpush1.msra.mxu0 0.0
    %725 = vmatprep.subr.mxu0 0.0
    %726 = vmatpush1.msra.mxu0 0.0
    %727 = vmatprep.subr.mxu0 0.0
    %728 = vmatpush1.msra.mxu0 0.0
    %729 = vmatprep.subr.mxu0 0.0
    %730 = vmatpush1.msra.mxu0 0.0
    %731 = vmatprep.subr.mxu0 0.0
    %732 = vmatpush1.msra.mxu0 0.0
    %733 = vmatprep.subr.mxu0 0.0
    %734 = vmatpush1.msra.mxu0 0.0
    %735 = vmatprep.subr.mxu0 0.0
    %736 = vmatpush1.msra.mxu0 0.0
    %737 = vmatprep.subr.mxu0 0.0
    %738 = vmatpush1.msra.mxu0 0.0
    %739 = vmatprep.subr.mxu0 0.0
    %740 = vmatpush1.msra.mxu0 0.0
    %741 = vmatprep.subr.mxu0 0.0
    %742 = vmatpush1.msra.mxu0 0.0
    %743 = vmatprep.mubr.f32.mxu0 0.0
    %v744 = vand.u32 %v51, 4294901760
    %v745 = vsub.f32 %v51, %v744
    %746 = vmatmul.mubr.f32.gmra.mrb[0].mxu0 %v745
    %v747 = vpop.f32.mrb[0].mxu0
    %v748 = vadd.f32 %v662, %v747
    %v749 = vpop.f32.mrb[0].mxu0
    %750 = vmatprep.mubr.f32.mxu0 0.0
    %v751 = vand.u32 %v54, 4294901760
    %v752 = vsub.f32 %v54, %v751
    %753 = vmatmul.mubr.f32.gmra.mrb[0].mxu0 %v752
    %v754 = vpop.f32.mrb[0].mxu0
    %v755 = vadd.f32 %v668, %v754
    %v756 = vpop.f32.mrb[0].mxu0
    %757 = vdwg.mxu0
    %758 = vmatprep.subr.mxu0 0.0
    %v759 = vand.u32 %v481, 4294901760
    %760 = vmatpush1.msra.mxu0 %v759
    %761 = vmatprep.subr.mxu0 0.0
    %v762 = vand.u32 %v482, 4294901760
    %763 = vmatpush1.msra.mxu0 %v762
    %764 = vmatprep.subr.mxu0 0.0
    %v765 = vand.u32 %v483, 4294901760
    %766 = vmatpush1.msra.mxu0 %v765
    %767 = vmatprep.subr.mxu0 0.0
    %v768 = vand.u32 %v484, 4294901760
    %769 = vmatpush1.msra.mxu0 %v768
    %770 = vmatprep.subr.mxu0 0.0
    %771 = vmatpush1.msra.mxu0 0.0
    %772 = vmatprep.subr.mxu0 0.0
    %773 = vmatpush1.msra.mxu0 0.0
    %774 = vmatprep.subr.mxu0 0.0
    %775 = vmatpush1.msra.mxu0 0.0
    %776 = vmatprep.subr.mxu0 0.0
    %777 = vmatpush1.msra.mxu0 0.0
    %778 = vmatprep.subr.mxu0 0.0
    %779 = vmatpush1.msra.mxu0 0.0
    %780 = vmatprep.subr.mxu0 0.0
    %781 = vmatpush1.msra.mxu0 0.0
    %782 = vmatprep.subr.mxu0 0.0
    %783 = vmatpush1.msra.mxu0 0.0
    %784 = vmatprep.subr.mxu0 0.0
    %785 = vmatpush1.msra.mxu0 0.0
    %786 = vmatprep.subr.mxu0 0.0
    %787 = vmatpush1.msra.mxu0 0.0
    %788 = vmatprep.subr.mxu0 0.0
    %789 = vmatpush1.msra.mxu0 0.0
    %790 = vmatprep.subr.mxu0 0.0
    %791 = vmatpush1.msra.mxu0 0.0
    %792 = vmatprep.subr.mxu0 0.0
    %793 = vmatpush1.msra.mxu0 0.0
    %794 = vmatprep.subr.mxu0 0.0
    %795 = vmatpush1.msra.mxu0 0.0
    %796 = vmatprep.subr.mxu0 0.0
    %797 = vmatpush1.msra.mxu0 0.0
    %798 = vmatprep.subr.mxu0 0.0
    %799 = vmatpush1.msra.mxu0 0.0
    %800 = vmatprep.subr.mxu0 0.0
    %801 = vmatpush1.msra.mxu0 0.0
    %802 = vmatprep.subr.mxu0 0.0
    %803 = vmatpush1.msra.mxu0 0.0
    %804 = vmatprep.subr.mxu0 0.0
    %805 = vmatpush1.msra.mxu0 0.0
    %806 = vmatprep.subr.mxu0 0.0
    %807 = vmatpush1.msra.mxu0 0.0
    %808 = vmatprep.subr.mxu0 0.0
    %809 = vmatpush1.msra.mxu0 0.0
    %810 = vmatprep.subr.mxu0 0.0
    %811 = vmatpush1.msra.mxu0 0.0
    %812 = vmatprep.subr.mxu0 0.0
    %813 = vmatpush1.msra.mxu0 0.0
    %814 = vmatprep.subr.mxu0 0.0
    %815 = vmatpush1.msra.mxu0 0.0
    %816 = vmatprep.subr.mxu0 0.0
    %817 = vmatpush1.msra.mxu0 0.0
    %818 = vmatprep.subr.mxu0 0.0
    %819 = vmatpush1.msra.mxu0 0.0
    %820 = vmatprep.subr.mxu0 0.0
    %821 = vmatpush1.msra.mxu0 0.0
    %822 = vmatprep.subr.mxu0 0.0
    %823 = vmatpush1.msra.mxu0 0.0
    %824 = vmatprep.subr.mxu0 0.0
    %825 = vmatpush1.msra.mxu0 0.0
    %826 = vmatprep.mubr.f32.mxu0 0.0
    %v827 = vand.u32 %v51, 4294901760
    %v828 = vsub.f32 %v51, %v827
    %v829 = vand.u32 %v828, 4294901760
    %830 = vmatmul.mubr.f32.gmra.mrb[0].mxu0 %v829
    %v831 = vpop.f32.mrb[0].mxu0
    %v832 = vadd.f32 %v748, %v831
    %v833 = vpop.f32.mrb[0].mxu0
    %834 = vmatprep.mubr.f32.mxu0 0.0
    %v835 = vand.u32 %v54, 4294901760
    %v836 = vsub.f32 %v54, %v835
    %v837 = vand.u32 %v836, 4294901760
    %838 = vmatmul.mubr.f32.gmra.mrb[0].mxu0 %v837
    %v839 = vpop.f32.mrb[0].mxu0
    %v840 = vadd.f32 %v755, %v839
    %v841 = vpop.f32.mrb[0].mxu0
    %842 = vdwg.mxu0
    %843 = vmatprep.subr.mxu0 0.0
    %v844 = vand.u32 %v481, 4294901760
    %v845 = vsub.f32 %v481, %v844
    %v846 = vand.u32 %v845, 4294901760
    %847 = vmatpush1.msra.mxu0 %v846
    %848 = vmatprep.subr.mxu0 0.0
    %v849 = vand.u32 %v482, 4294901760
    %v850 = vsub.f32 %v482, %v849
    %v851 = vand.u32 %v850, 4294901760
    %852 = vmatpush1.msra.mxu0 %v851
    %853 = vmatprep.subr.mxu0 0.0
    %v854 = vand.u32 %v483, 4294901760
    %v855 = vsub.f32 %v483, %v854
    %v856 = vand.u32 %v855, 4294901760
    %857 = vmatpush1.msra.mxu0 %v856
    %858 = vmatprep.subr.mxu0 0.0
    %v859 = vand.u32 %v484, 4294901760
    %v860 = vsub.f32 %v484, %v859
    %v861 = vand.u32 %v860, 4294901760
    %862 = vmatpush1.msra.mxu0 %v861
    %863 = vmatprep.subr.mxu0 0.0
    %864 = vmatpush1.msra.mxu0 0.0
    %865 = vmatprep.subr.mxu0 0.0
    %866 = vmatpush1.msra.mxu0 0.0
    %867 = vmatprep.subr.mxu0 0.0
    %868 = vmatpush1.msra.mxu0 0.0
    %869 = vmatprep.subr.mxu0 0.0
    %870 = vmatpush1.msra.mxu0 0.0
    %871 = vmatprep.subr.mxu0 0.0
    %872 = vmatpush1.msra.mxu0 0.0
    %873 = vmatprep.subr.mxu0 0.0
    %874 = vmatpush1.msra.mxu0 0.0
    %875 = vmatprep.subr.mxu0 0.0
    %876 = vmatpush1.msra.mxu0 0.0
    %877 = vmatprep.subr.mxu0 0.0
    %878 = vmatpush1.msra.mxu0 0.0
    %879 = vmatprep.subr.mxu0 0.0
    %880 = vmatpush1.msra.mxu0 0.0
    %881 = vmatprep.subr.mxu0 0.0
    %882 = vmatpush1.msra.mxu0 0.0
    %883 = vmatprep.subr.mxu0 0.0
    %884 = vmatpush1.msra.mxu0 0.0
    %885 = vmatprep.subr.mxu0 0.0
    %886 = vmatpush1.msra.mxu0 0.0
    %887 = vmatprep.subr.mxu0 0.0
    %888 = vmatpush1.msra.mxu0 0.0
    %889 = vmatprep.subr.mxu0 0.0
    %890 = vmatpush1.msra.mxu0 0.0
    %891 = vmatprep.subr.mxu0 0.0
    %892 = vmatpush1.msra.mxu0 0.0
    %893 = vmatprep.subr.mxu0 0.0
    %894 = vmatpush1.msra.mxu0 0.0
    %895 = vmatprep.subr.mxu0 0.0
    %896 = vmatpush1.msra.mxu0 0.0
    %897 = vmatprep.subr.mxu0 0.0
    %898 = vmatpush1.msra.mxu0 0.0
    %899 = vmatprep.subr.mxu0 0.0
    %900 = vmatpush1.msra.mxu0 0.0
    %901 = vmatprep.subr.mxu0 0.0
    %902 = vmatpush1.msra.mxu0 0.0
    %903 = vmatprep.subr.mxu0 0.0
    %904 = vmatpush1.msra.mxu0 0.0
    %905 = vmatprep.subr.mxu0 0.0
    %906 = vmatpush1.msra.mxu0 0.0
    %907 = vmatprep.subr.mxu0 0.0
    %908 = vmatpush1.msra.mxu0 0.0
    %909 = vmatprep.subr.mxu0 0.0
    %910 = vmatpush1.msra.mxu0 0.0
    %911 = vmatprep.subr.mxu0 0.0
    %912 = vmatpush1.msra.mxu0 0.0
    %913 = vmatprep.subr.mxu0 0.0
    %914 = vmatpush1.msra.mxu0 0.0
    %915 = vmatprep.subr.mxu0 0.0
    %916 = vmatpush1.msra.mxu0 0.0
    %917 = vmatprep.subr.mxu0 0.0
    %918 = vmatpush1.msra.mxu0 0.0
    %919 = vmatprep.mubr.f32.mxu0 0.0
    %v920 = vand.u32 %v51, 4294901760
    %921 = vmatmul.mubr.f32.gmra.mrb[0].mxu0 %v920
    %v922 = vpop.f32.mrb[0].mxu0
    %v923 = vadd.f32 %v832, %v922
    %v924 = vpop.f32.mrb[0].mxu0
    %925 = vmatprep.mubr.f32.mxu0 0.0
    %v926 = vand.u32 %v54, 4294901760
    %927 = vmatmul.mubr.f32.gmra.mrb[0].mxu0 %v926
    %v928 = vpop.f32.mrb[0].mxu0
    %v929 = vadd.f32 %v840, %v928
    %v930 = vpop.f32.mrb[0].mxu0
    %931 = vdwg.mxu0
    %932 = vmatprep.subr.mxu0 0.0
    %v933 = vand.u32 %v481, 4294901760
    %934 = vmatpush1.msra.mxu0 %v933
    %935 = vmatprep.subr.mxu0 0.0
    %v936 = vand.u32 %v482, 4294901760
    %937 = vmatpush1.msra.mxu0 %v936
    %938 = vmatprep.subr.mxu0 0.0
    %v939 = vand.u32 %v483, 4294901760
    %940 = vmatpush1.msra.mxu0 %v939
    %941 = vmatprep.subr.mxu0 0.0
    %v942 = vand.u32 %v484, 4294901760
    %943 = vmatpush1.msra.mxu0 %v942
    %944 = vmatprep.subr.mxu0 0.0
    %945 = vmatpush1.msra.mxu0 0.0
    %946 = vmatprep.subr.mxu0 0.0
    %947 = vmatpush1.msra.mxu0 0.0
    %948 = vmatprep.subr.mxu0 0.0
    %949 = vmatpush1.msra.mxu0 0.0
    %950 = vmatprep.subr.mxu0 0.0
    %951 = vmatpush1.msra.mxu0 0.0
    %952 = vmatprep.subr.mxu0 0.0
    %953 = vmatpush1.msra.mxu0 0.0
    %954 = vmatprep.subr.mxu0 0.0
    %955 = vmatpush1.msra.mxu0 0.0
    %956 = vmatprep.subr.mxu0 0.0
    %957 = vmatpush1.msra.mxu0 0.0
    %958 = vmatprep.subr.mxu0 0.0
    %959 = vmatpush1.msra.mxu0 0.0
    %960 = vmatprep.subr.mxu0 0.0
    %961 = vmatpush1.msra.mxu0 0.0
    %962 = vmatprep.subr.mxu0 0.0
    %963 = vmatpush1.msra.mxu0 0.0
    %964 = vmatprep.subr.mxu0 0.0
    %965 = vmatpush1.msra.mxu0 0.0
    %966 = vmatprep.subr.mxu0 0.0
    %967 = vmatpush1.msra.mxu0 0.0
    %968 = vmatprep.subr.mxu0 0.0
    %969 = vmatpush1.msra.mxu0 0.0
    %970 = vmatprep.subr.mxu0 0.0
    %971 = vmatpush1.msra.mxu0 0.0
    %972 = vmatprep.subr.mxu0 0.0
    %973 = vmatpush1.msra.mxu0 0.0
    %974 = vmatprep.subr.mxu0 0.0
    %975 = vmatpush1.msra.mxu0 0.0
    %976 = vmatprep.subr.mxu0 0.0
    %977 = vmatpush1.msra.mxu0 0.0
    %978 = vmatprep.subr.mxu0 0.0
    %979 = vmatpush1.msra.mxu0 0.0
    %980 = vmatprep.subr.mxu0 0.0
    %981 = vmatpush1.msra.mxu0 0.0
    %982 = vmatprep.subr.mxu0 0.0
    %983 = vmatpush1.msra.mxu0 0.0
    %984 = vmatprep.subr.mxu0 0.0
    %985 = vmatpush1.msra.mxu0 0.0
    %986 = vmatprep.subr.mxu0 0.0
    %987 = vmatpush1.msra.mxu0 0.0
    %988 = vmatprep.subr.mxu0 0.0
    %989 = vmatpush1.msra.mxu0 0.0
    %990 = vmatprep.subr.mxu0 0.0
    %991 = vmatpush1.msra.mxu0 0.0
    %992 = vmatprep.subr.mxu0 0.0
    %993 = vmatpush1.msra.mxu0 0.0
    %994 = vmatprep.subr.mxu0 0.0
    %995 = vmatpush1.msra.mxu0 0.0
    %996 = vmatprep.subr.mxu0 0.0
    %997 = vmatpush1.msra.mxu0 0.0
    %998 = vmatprep.subr.mxu0 0.0
    %999 = vmatpush1.msra.mxu0 0.0
    %1000 = vmatprep.mubr.f32.mxu0 0.0
    %v1001 = vand.u32 %v51, 4294901760
    %1002 = vmatmul.mubr.f32.gmra.mrb[0].mxu0 %v1001
    %v1003 = vpop.f32.mrb[0].mxu0
    %v1004 = vadd.f32 %v923, %v1003
    %v1005 = vpop.f32.mrb[0].mxu0
    %1006 = vmatprep.mubr.f32.mxu0 0.0
    %v1007 = vand.u32 %v54, 4294901760
    %1008 = vmatmul.mubr.f32.gmra.mrb[0].mxu0 %v1007
    %v1009 = vpop.f32.mrb[0].mxu0
    %v1010 = vadd.f32 %v929, %v1009
    %v1011 = vpop.f32.mrb[0].mxu0
    %1012 = vdwg.mxu0
    %v1013 = vld [vmem:[%s8] sm:$0xff]
    %v1014 = vld [vmem:[%s8 + $0x8] sm:$0xff]
    %v1015 = vld [vmem:[%s8 + $0x10] sm:$0xff]
    %v1016 = vld [vmem:[%s8 + $0x18] sm:$0xff]
    %v1018 = vsel %vm49, %v44, 0
    %1020 = vmatprep.subr.mxu0 0.0
    %v1021 = vand.u32 %v1013, 4294901760
    %1022 = vmatpush1.msra.mxu0 %v1021
    %1023 = vmatprep.subr.mxu0 0.0
    %v1024 = vand.u32 %v1014, 4294901760
    %1025 = vmatpush1.msra.mxu0 %v1024
    %1026 = vmatprep.subr.mxu0 0.0
    %v1027 = vand.u32 %v1015, 4294901760
    %1028 = vmatpush1.msra.mxu0 %v1027
    %1029 = vmatprep.subr.mxu0 0.0
    %v1030 = vand.u32 %v1016, 4294901760
    %1031 = vmatpush1.msra.mxu0 %v1030
    %1032 = vmatprep.subr.mxu0 0.0
    %1033 = vmatpush1.msra.mxu0 0.0
    %1034 = vmatprep.subr.mxu0 0.0
    %1035 = vmatpush1.msra.mxu0 0.0
    %1036 = vmatprep.subr.mxu0 0.0
    %1037 = vmatpush1.msra.mxu0 0.0
    %1038 = vmatprep.subr.mxu0 0.0
    %1039 = vmatpush1.msra.mxu0 0.0
    %1040 = vmatprep.subr.mxu0 0.0
    %1041 = vmatpush1.msra.mxu0 0.0
    %1042 = vmatprep.subr.mxu0 0.0
    %1043 = vmatpush1.msra.mxu0 0.0
    %1044 = vmatprep.subr.mxu0 0.0
    %1045 = vmatpush1.msra.mxu0 0.0
    %1046 = vmatprep.subr.mxu0 0.0
    %1047 = vmatpush1.msra.mxu0 0.0
    %1048 = vmatprep.subr.mxu0 0.0
    %1049 = vmatpush1.msra.mxu0 0.0
    %1050 = vmatprep.subr.mxu0 0.0
    %1051 = vmatpush1.msra.mxu0 0.0
    %1052 = vmatprep.subr.mxu0 0.0
    %1053 = vmatpush1.msra.mxu0 0.0
    %1054 = vmatprep.subr.mxu0 0.0
    %1055 = vmatpush1.msra.mxu0 0.0
    %1056 = vmatprep.subr.mxu0 0.0
    %1057 = vmatpush1.msra.mxu0 0.0
    %1058 = vmatprep.subr.mxu0 0.0
    %1059 = vmatpush1.msra.mxu0 0.0
    %1060 = vmatprep.subr.mxu0 0.0
    %1061 = vmatpush1.msra.mxu0 0.0
    %1062 = vmatprep.subr.mxu0 0.0
    %1063 = vmatpush1.msra.mxu0 0.0
    %1064 = vmatprep.subr.mxu0 0.0
    %1065 = vmatpush1.msra.mxu0 0.0
    %1066 = vmatprep.subr.mxu0 0.0
    %1067 = vmatpush1.msra.mxu0 0.0
    %1068 = vmatprep.subr.mxu0 0.0
    %1069 = vmatpush1.msra.mxu0 0.0
    %1070 = vmatprep.subr.mxu0 0.0
    %1071 = vmatpush1.msra.mxu0 0.0
    %1072 = vmatprep.subr.mxu0 0.0
    %1073 = vmatpush1.msra.mxu0 0.0
    %1074 = vmatprep.subr.mxu0 0.0
    %1075 = vmatpush1.msra.mxu0 0.0
    %1076 = vmatprep.subr.mxu0 0.0
    %1077 = vmatpush1.msra.mxu0 0.0
    %1078 = vmatprep.subr.mxu0 0.0
    %1079 = vmatpush1.msra.mxu0 0.0
    %1080 = vmatprep.subr.mxu0 0.0
    %1081 = vmatpush1.msra.mxu0 0.0
    %1082 = vmatprep.subr.mxu0 0.0
    %1083 = vmatpush1.msra.mxu0 0.0
    %1084 = vmatprep.subr.mxu0 0.0
    %1085 = vmatpush1.msra.mxu0 0.0
    %1086 = vmatprep.subr.mxu0 0.0
    %1087 = vmatpush1.msra.mxu0 0.0
    %1088 = vmatprep.mubr.f32.mxu0 0.0
    %v1089 = vand.u32 %v1018, 4294901760
    %v1090 = vsub.f32 %v1018, %v1089
    %v1091 = vand.u32 %v1090, 4294901760
    %v1092 = vsub.f32 %v1090, %v1091
    %v1093 = vand.u32 %v1092, 4294901760
    %1094 = vmatmul.mubr.f32.gmra.mrb[0].mxu0 %v1093
    %v1095 = vpop.f32.mrb[0].mxu0
    %v1096 = vadd.f32 0.0, %v1095
    %v1097 = vpop.f32.mrb[0].mxu0
    %1098 = vdwg.mxu0
    %1099 = vmatprep.subr.mxu0 0.0
    %v1100 = vand.u32 %v1013, 4294901760
    %v1101 = vsub.f32 %v1013, %v1100
    %v1102 = vand.u32 %v1101, 4294901760
    %v1103 = vsub.f32 %v1101, %v1102
    %v1104 = vand.u32 %v1103, 4294901760
    %1105 = vmatpush1.msra.mxu0 %v1104
    %1106 = vmatprep.subr.mxu0 0.0
    %v1107 = vand.u32 %v1014, 4294901760
    %v1108 = vsub.f32 %v1014, %v1107
    %v1109 = vand.u32 %v1108, 4294901760
    %v1110 = vsub.f32 %v1108, %v1109
    %v1111 = vand.u32 %v1110, 4294901760
    %1112 = vmatpush1.msra.mxu0 %v1111
    %1113 = vmatprep.subr.mxu0 0.0
    %v1114 = vand.u32 %v1015, 4294901760
    %v1115 = vsub.f32 %v1015, %v1114
    %v1116 = vand.u32 %v1115, 4294901760
    %v1117 = vsub.f32 %v1115, %v1116
    %v1118 = vand.u32 %v1117, 4294901760
    %1119 = vmatpush1.msra.mxu0 %v1118
    %1120 = vmatprep.subr.mxu0 0.0
    %v1121 = vand.u32 %v1016, 4294901760
    %v1122 = vsub.f32 %v1016, %v1121
    %v1123 = vand.u32 %v1122, 4294901760
    %v1124 = vsub.f32 %v1122, %v1123
    %v1125 = vand.u32 %v1124, 4294901760
    %1126 = vmatpush1.msra.mxu0 %v1125
    %1127 = vmatprep.subr.mxu0 0.0
    %1128 = vmatpush1.msra.mxu0 0.0
    %1129 = vmatprep.subr.mxu0 0.0
    %1130 = vmatpush1.msra.mxu0 0.0
    %1131 = vmatprep.subr.mxu0 0.0
    %1132 = vmatpush1.msra.mxu0 0.0
    %1133 = vmatprep.subr.mxu0 0.0
    %1134 = vmatpush1.msra.mxu0 0.0
    %1135 = vmatprep.subr.mxu0 0.0
    %1136 = vmatpush1.msra.mxu0 0.0
    %1137 = vmatprep.subr.mxu0 0.0
    %1138 = vmatpush1.msra.mxu0 0.0
    %1139 = vmatprep.subr.mxu0 0.0
    %1140 = vmatpush1.msra.mxu0 0.0
    %1141 = vmatprep.subr.mxu0 0.0
    %1142 = vmatpush1.msra.mxu0 0.0
    %1143 = vmatprep.subr.mxu0 0.0
    %1144 = vmatpush1.msra.mxu0 0.0
    %1145 = vmatprep.subr.mxu0 0.0
    %1146 = vmatpush1.msra.mxu0 0.0
    %1147 = vmatprep.subr.mxu0 0.0
    %1148 = vmatpush1.msra.mxu0 0.0
    %1149 = vmatprep.subr.mxu0 0.0
    %1150 = vmatpush1.msra.mxu0 0.0
    %1151 = vmatprep.subr.mxu0 0.0
    %1152 = vmatpush1.msra.mxu0 0.0
    %1153 = vmatprep.subr.mxu0 0.0
    %1154 = vmatpush1.msra.mxu0 0.0
    %1155 = vmatprep.subr.mxu0 0.0
    %1156 = vmatpush1.msra.mxu0 0.0
    %1157 = vmatprep.subr.mxu0 0.0
    %1158 = vmatpush1.msra.mxu0 0.0
    %1159 = vmatprep.subr.mxu0 0.0
    %1160 = vmatpush1.msra.mxu0 0.0
    %1161 = vmatprep.subr.mxu0 0.0
    %1162 = vmatpush1.msra.mxu0 0.0
    %1163 = vmatprep.subr.mxu0 0.0
    %1164 = vmatpush1.msra.mxu0 0.0
    %1165 = vmatprep.subr.mxu0 0.0
    %1166 = vmatpush1.msra.mxu0 0.0
    %1167 = vmatprep.subr.mxu0 0.0
    %1168 = vmatpush1.msra.mxu0 0.0
    %1169 = vmatprep.subr.mxu0 0.0
    %1170 = vmatpush1.msra.mxu0 0.0
    %1171 = vmatprep.subr.mxu0 0.0
    %1172 = vmatpush1.msra.mxu0 0.0
    %1173 = vmatprep.subr.mxu0 0.0
    %1174 = vmatpush1.msra.mxu0 0.0
    %1175 = vmatprep.subr.mxu0 0.0
    %1176 = vmatpush1.msra.mxu0 0.0
    %1177 = vmatprep.subr.mxu0 0.0
    %1178 = vmatpush1.msra.mxu0 0.0
    %1179 = vmatprep.subr.mxu0 0.0
    %1180 = vmatpush1.msra.mxu0 0.0
    %1181 = vmatprep.subr.mxu0 0.0
    %1182 = vmatpush1.msra.mxu0 0.0
    %1183 = vmatprep.mubr.f32.mxu0 0.0
    %v1184 = vand.u32 %v1018, 4294901760
    %1185 = vmatmul.mubr.f32.gmra.mrb[0].mxu0 %v1184
    %v1186 = vpop.f32.mrb[0].mxu0
    %v1187 = vadd.f32 %v1096, %v1186
    %v1188 = vpop.f32.mrb[0].mxu0
    %1189 = vdwg.mxu0
    %1190 = vmatprep.subr.mxu0 0.0
    %v1191 = vand.u32 %v1013, 4294901760
    %v1192 = vsub.f32 %v1013, %v1191
    %1193 = vmatpush1.msra.mxu0 %v1192
    %1194 = vmatprep.subr.mxu0 0.0
    %v1195 = vand.u32 %v1014, 4294901760
    %v1196 = vsub.f32 %v1014, %v1195
    %1197 = vmatpush1.msra.mxu0 %v1196
    %1198 = vmatprep.subr.mxu0 0.0
    %v1199 = vand.u32 %v1015, 4294901760
    %v1200 = vsub.f32 %v1015, %v1199
    %1201 = vmatpush1.msra.mxu0 %v1200
    %1202 = vmatprep.subr.mxu0 0.0
    %v1203 = vand.u32 %v1016, 4294901760
    %v1204 = vsub.f32 %v1016, %v1203
    %1205 = vmatpush1.msra.mxu0 %v1204
    %1206 = vmatprep.subr.mxu0 0.0
    %1207 = vmatpush1.msra.mxu0 0.0
    %1208 = vmatprep.subr.mxu0 0.0
    %1209 = vmatpush1.msra.mxu0 0.0
    %1210 = vmatprep.subr.mxu0 0.0
    %1211 = vmatpush1.msra.mxu0 0.0
    %1212 = vmatprep.subr.mxu0 0.0
    %1213 = vmatpush1.msra.mxu0 0.0
    %1214 = vmatprep.subr.mxu0 0.0
    %1215 = vmatpush1.msra.mxu0 0.0
    %1216 = vmatprep.subr.mxu0 0.0
    %1217 = vmatpush1.msra.mxu0 0.0
    %1218 = vmatprep.subr.mxu0 0.0
    %1219 = vmatpush1.msra.mxu0 0.0
    %1220 = vmatprep.subr.mxu0 0.0
    %1221 = vmatpush1.msra.mxu0 0.0
    %1222 = vmatprep.subr.mxu0 0.0
    %1223 = vmatpush1.msra.mxu0 0.0
    %1224 = vmatprep.subr.mxu0 0.0
    %1225 = vmatpush1.msra.mxu0 0.0
    %1226 = vmatprep.subr.mxu0 0.0
    %1227 = vmatpush1.msra.mxu0 0.0
    %1228 = vmatprep.subr.mxu0 0.0
    %1229 = vmatpush1.msra.mxu0 0.0
    %1230 = vmatprep.subr.mxu0 0.0
    %1231 = vmatpush1.msra.mxu0 0.0
    %1232 = vmatprep.subr.mxu0 0.0
    %1233 = vmatpush1.msra.mxu0 0.0
    %1234 = vmatprep.subr.mxu0 0.0
    %1235 = vmatpush1.msra.mxu0 0.0
    %1236 = vmatprep.subr.mxu0 0.0
    %1237 = vmatpush1.msra.mxu0 0.0
    %1238 = vmatprep.subr.mxu0 0.0
    %1239 = vmatpush1.msra.mxu0 0.0
    %1240 = vmatprep.subr.mxu0 0.0
    %1241 = vmatpush1.msra.mxu0 0.0
    %1242 = vmatprep.subr.mxu0 0.0
    %1243 = vmatpush1.msra.mxu0 0.0
    %1244 = vmatprep.subr.mxu0 0.0
    %1245 = vmatpush1.msra.mxu0 0.0
    %1246 = vmatprep.subr.mxu0 0.0
    %1247 = vmatpush1.msra.mxu0 0.0
    %1248 = vmatprep.subr.mxu0 0.0
    %1249 = vmatpush1.msra.mxu0 0.0
    %1250 = vmatprep.subr.mxu0 0.0
    %1251 = vmatpush1.msra.mxu0 0.0
    %1252 = vmatprep.subr.mxu0 0.0
    %1253 = vmatpush1.msra.mxu0 0.0
    %1254 = vmatprep.subr.mxu0 0.0
    %1255 = vmatpush1.msra.mxu0 0.0
    %1256 = vmatprep.subr.mxu0 0.0
    %1257 = vmatpush1.msra.mxu0 0.0
    %1258 = vmatprep.subr.mxu0 0.0
    %1259 = vmatpush1.msra.mxu0 0.0
    %1260 = vmatprep.subr.mxu0 0.0
    %1261 = vmatpush1.msra.mxu0 0.0
    %1262 = vmatprep.mubr.f32.mxu0 0.0
    %v1263 = vand.u32 %v1018, 4294901760
    %v1264 = vsub.f32 %v1018, %v1263
    %1265 = vmatmul.mubr.f32.gmra.mrb[0].mxu0 %v1264
    %v1266 = vpop.f32.mrb[0].mxu0
    %v1267 = vadd.f32 %v1187, %v1266
    %v1268 = vpop.f32.mrb[0].mxu0
    %1269 = vdwg.mxu0
    %1270 = vmatprep.subr.mxu0 0.0
    %v1271 = vand.u32 %v1013, 4294901760
    %1272 = vmatpush1.msra.mxu0 %v1271
    %1273 = vmatprep.subr.mxu0 0.0
    %v1274 = vand.u32 %v1014, 4294901760
    %1275 = vmatpush1.msra.mxu0 %v1274
    %1276 = vmatprep.subr.mxu0 0.0
    %v1277 = vand.u32 %v1015, 4294901760
    %1278 = vmatpush1.msra.mxu0 %v1277
    %1279 = vmatprep.subr.mxu0 0.0
    %v1280 = vand.u32 %v1016, 4294901760
    %1281 = vmatpush1.msra.mxu0 %v1280
    %1282 = vmatprep.subr.mxu0 0.0
    %1283 = vmatpush1.msra.mxu0 0.0
    %1284 = vmatprep.subr.mxu0 0.0
    %1285 = vmatpush1.msra.mxu0 0.0
    %1286 = vmatprep.subr.mxu0 0.0
    %1287 = vmatpush1.msra.mxu0 0.0
    %1288 = vmatprep.subr.mxu0 0.0
    %1289 = vmatpush1.msra.mxu0 0.0
    %1290 = vmatprep.subr.mxu0 0.0
    %1291 = vmatpush1.msra.mxu0 0.0
    %1292 = vmatprep.subr.mxu0 0.0
    %1293 = vmatpush1.msra.mxu0 0.0
    %1294 = vmatprep.subr.mxu0 0.0
    %1295 = vmatpush1.msra.mxu0 0.0
    %1296 = vmatprep.subr.mxu0 0.0
    %1297 = vmatpush1.msra.mxu0 0.0
    %1298 = vmatprep.subr.mxu0 0.0
    %1299 = vmatpush1.msra.mxu0 0.0
    %1300 = vmatprep.subr.mxu0 0.0
    %1301 = vmatpush1.msra.mxu0 0.0
    %1302 = vmatprep.subr.mxu0 0.0
    %1303 = vmatpush1.msra.mxu0 0.0
    %1304 = vmatprep.subr.mxu0 0.0
    %1305 = vmatpush1.msra.mxu0 0.0
    %1306 = vmatprep.subr.mxu0 0.0
    %1307 = vmatpush1.msra.mxu0 0.0
    %1308 = vmatprep.subr.mxu0 0.0
    %1309 = vmatpush1.msra.mxu0 0.0
    %1310 = vmatprep.subr.mxu0 0.0
    %1311 = vmatpush1.msra.mxu0 0.0
    %1312 = vmatprep.subr.mxu0 0.0
    %1313 = vmatpush1.msra.mxu0 0.0
    %1314 = vmatprep.subr.mxu0 0.0
    %1315 = vmatpush1.msra.mxu0 0.0
    %1316 = vmatprep.subr.mxu0 0.0
    %1317 = vmatpush1.msra.mxu0 0.0
    %1318 = vmatprep.subr.mxu0 0.0
    %1319 = vmatpush1.msra.mxu0 0.0
    %1320 = vmatprep.subr.mxu0 0.0
    %1321 = vmatpush1.msra.mxu0 0.0
    %1322 = vmatprep.subr.mxu0 0.0
    %1323 = vmatpush1.msra.mxu0 0.0
    %1324 = vmatprep.subr.mxu0 0.0
    %1325 = vmatpush1.msra.mxu0 0.0
    %1326 = vmatprep.subr.mxu0 0.0
    %1327 = vmatpush1.msra.mxu0 0.0
    %1328 = vmatprep.subr.mxu0 0.0
    %1329 = vmatpush1.msra.mxu0 0.0
    %1330 = vmatprep.subr.mxu0 0.0
    %1331 = vmatpush1.msra.mxu0 0.0
    %1332 = vmatprep.subr.mxu0 0.0
    %1333 = vmatpush1.msra.mxu0 0.0
    %1334 = vmatprep.subr.mxu0 0.0
    %1335 = vmatpush1.msra.mxu0 0.0
    %1336 = vmatprep.subr.mxu0 0.0
    %1337 = vmatpush1.msra.mxu0 0.0
    %1338 = vmatprep.mubr.f32.mxu0 0.0
    %v1339 = vand.u32 %v1018, 4294901760
    %v1340 = vsub.f32 %v1018, %v1339
    %v1341 = vand.u32 %v1340, 4294901760
    %1342 = vmatmul.mubr.f32.gmra.mrb[0].mxu0 %v1341
    %v1343 = vpop.f32.mrb[0].mxu0
    %v1344 = vadd.f32 %v1267, %v1343
    %v1345 = vpop.f32.mrb[0].mxu0
    %1346 = vdwg.mxu0
    %1347 = vmatprep.subr.mxu0 0.0
    %v1348 = vand.u32 %v1013, 4294901760
    %v1349 = vsub.f32 %v1013, %v1348
    %v1350 = vand.u32 %v1349, 4294901760
    %1351 = vmatpush1.msra.mxu0 %v1350
    %1352 = vmatprep.subr.mxu0 0.0
    %v1353 = vand.u32 %v1014, 4294901760
    %v1354 = vsub.f32 %v1014, %v1353
    %v1355 = vand.u32 %v1354, 4294901760
    %1356 = vmatpush1.msra.mxu0 %v1355
    %1357 = vmatprep.subr.mxu0 0.0
    %v1358 = vand.u32 %v1015, 4294901760
    %v1359 = vsub.f32 %v1015, %v1358
    %v1360 = vand.u32 %v1359, 4294901760
    %1361 = vmatpush1.msra.mxu0 %v1360
    %1362 = vmatprep.subr.mxu0 0.0
    %v1363 = vand.u32 %v1016, 4294901760
    %v1364 = vsub.f32 %v1016, %v1363
    %v1365 = vand.u32 %v1364, 4294901760
    %1366 = vmatpush1.msra.mxu0 %v1365
    %1367 = vmatprep.subr.mxu0 0.0
    %1368 = vmatpush1.msra.mxu0 0.0
    %1369 = vmatprep.subr.mxu0 0.0
    %1370 = vmatpush1.msra.mxu0 0.0
    %1371 = vmatprep.subr.mxu0 0.0
    %1372 = vmatpush1.msra.mxu0 0.0
    %1373 = vmatprep.subr.mxu0 0.0
    %1374 = vmatpush1.msra.mxu0 0.0
    %1375 = vmatprep.subr.mxu0 0.0
    %1376 = vmatpush1.msra.mxu0 0.0
    %1377 = vmatprep.subr.mxu0 0.0
    %1378 = vmatpush1.msra.mxu0 0.0
    %1379 = vmatprep.subr.mxu0 0.0
    %1380 = vmatpush1.msra.mxu0 0.0
    %1381 = vmatprep.subr.mxu0 0.0
    %1382 = vmatpush1.msra.mxu0 0.0
    %1383 = vmatprep.subr.mxu0 0.0
    %1384 = vmatpush1.msra.mxu0 0.0
    %1385 = vmatprep.subr.mxu0 0.0
    %1386 = vmatpush1.msra.mxu0 0.0
    %1387 = vmatprep.subr.mxu0 0.0
    %1388 = vmatpush1.msra.mxu0 0.0
    %1389 = vmatprep.subr.mxu0 0.0
    %1390 = vmatpush1.msra.mxu0 0.0
    %1391 = vmatprep.subr.mxu0 0.0
    %1392 = vmatpush1.msra.mxu0 0.0
    %1393 = vmatprep.subr.mxu0 0.0
    %1394 = vmatpush1.msra.mxu0 0.0
    %1395 = vmatprep.subr.mxu0 0.0
    %1396 = vmatpush1.msra.mxu0 0.0
    %1397 = vmatprep.subr.mxu0 0.0
    %1398 = vmatpush1.msra.mxu0 0.0
    %1399 = vmatprep.subr.mxu0 0.0
    %1400 = vmatpush1.msra.mxu0 0.0
    %1401 = vmatprep.subr.mxu0 0.0
    %1402 = vmatpush1.msra.mxu0 0.0
    %1403 = vmatprep.subr.mxu0 0.0
    %1404 = vmatpush1.msra.mxu0 0.0
    %1405 = vmatprep.subr.mxu0 0.0
    %1406 = vmatpush1.msra.mxu0 0.0
    %1407 = vmatprep.subr.mxu0 0.0
    %1408 = vmatpush1.msra.mxu0 0.0
    %1409 = vmatprep.subr.mxu0 0.0
    %1410 = vmatpush1.msra.mxu0 0.0
    %1411 = vmatprep.subr.mxu0 0.0
    %1412 = vmatpush1.msra.mxu0 0.0
    %1413 = vmatprep.subr.mxu0 0.0
    %1414 = vmatpush1.msra.mxu0 0.0
    %1415 = vmatprep.subr.mxu0 0.0
    %1416 = vmatpush1.msra.mxu0 0.0
    %1417 = vmatprep.subr.mxu0 0.0
    %1418 = vmatpush1.msra.mxu0 0.0
    %1419 = vmatprep.subr.mxu0 0.0
    %1420 = vmatpush1.msra.mxu0 0.0
    %1421 = vmatprep.subr.mxu0 0.0
    %1422 = vmatpush1.msra.mxu0 0.0
    %1423 = vmatprep.mubr.f32.mxu0 0.0
    %v1424 = vand.u32 %v1018, 4294901760
    %1425 = vmatmul.mubr.f32.gmra.mrb[0].mxu0 %v1424
    %v1426 = vpop.f32.mrb[0].mxu0
    %v1427 = vadd.f32 %v1344, %v1426
    %v1428 = vpop.f32.mrb[0].mxu0
    %1429 = vdwg.mxu0
    %1430 = vmatprep.subr.mxu0 0.0
    %v1431 = vand.u32 %v1013, 4294901760
    %1432 = vmatpush1.msra.mxu0 %v1431
    %1433 = vmatprep.subr.mxu0 0.0
    %v1434 = vand.u32 %v1014, 4294901760
    %1435 = vmatpush1.msra.mxu0 %v1434
    %1436 = vmatprep.subr.mxu0 0.0
    %v1437 = vand.u32 %v1015, 4294901760
    %1438 = vmatpush1.msra.mxu0 %v1437
    %1439 = vmatprep.subr.mxu0 0.0
    %v1440 = vand.u32 %v1016, 4294901760
    %1441 = vmatpush1.msra.mxu0 %v1440
    %1442 = vmatprep.subr.mxu0 0.0
    %1443 = vmatpush1.msra.mxu0 0.0
    %1444 = vmatprep.subr.mxu0 0.0
    %1445 = vmatpush1.msra.mxu0 0.0
    %1446 = vmatprep.subr.mxu0 0.0
    %1447 = vmatpush1.msra.mxu0 0.0
    %1448 = vmatprep.subr.mxu0 0.0
    %1449 = vmatpush1.msra.mxu0 0.0
    %1450 = vmatprep.subr.mxu0 0.0
    %1451 = vmatpush1.msra.mxu0 0.0
    %1452 = vmatprep.subr.mxu0 0.0
    %1453 = vmatpush1.msra.mxu0 0.0
    %1454 = vmatprep.subr.mxu0 0.0
    %1455 = vmatpush1.msra.mxu0 0.0
    %1456 = vmatprep.subr.mxu0 0.0
    %1457 = vmatpush1.msra.mxu0 0.0
    %1458 = vmatprep.subr.mxu0 0.0
    %1459 = vmatpush1.msra.mxu0 0.0
    %1460 = vmatprep.subr.mxu0 0.0
    %1461 = vmatpush1.msra.mxu0 0.0
    %1462 = vmatprep.subr.mxu0 0.0
    %1463 = vmatpush1.msra.mxu0 0.0
    %1464 = vmatprep.subr.mxu0 0.0
    %1465 = vmatpush1.msra.mxu0 0.0
    %1466 = vmatprep.subr.mxu0 0.0
    %1467 = vmatpush1.msra.mxu0 0.0
    %1468 = vmatprep.subr.mxu0 0.0
    %1469 = vmatpush1.msra.mxu0 0.0
    %1470 = vmatprep.subr.mxu0 0.0
    %1471 = vmatpush1.msra.mxu0 0.0
    %1472 = vmatprep.subr.mxu0 0.0
    %1473 = vmatpush1.msra.mxu0 0.0
    %1474 = vmatprep.subr.mxu0 0.0
    %1475 = vmatpush1.msra.mxu0 0.0
    %1476 = vmatprep.subr.mxu0 0.0
    %1477 = vmatpush1.msra.mxu0 0.0
    %1478 = vmatprep.subr.mxu0 0.0
    %1479 = vmatpush1.msra.mxu0 0.0
    %1480 = vmatprep.subr.mxu0 0.0
    %1481 = vmatpush1.msra.mxu0 0.0
    %1482 = vmatprep.subr.mxu0 0.0
    %1483 = vmatpush1.msra.mxu0 0.0
    %1484 = vmatprep.subr.mxu0 0.0
    %1485 = vmatpush1.msra.mxu0 0.0
    %1486 = vmatprep.subr.mxu0 0.0
    %1487 = vmatpush1.msra.mxu0 0.0
    %1488 = vmatprep.subr.mxu0 0.0
    %1489 = vmatpush1.msra.mxu0 0.0
    %1490 = vmatprep.subr.mxu0 0.0
    %1491 = vmatpush1.msra.mxu0 0.0
    %1492 = vmatprep.subr.mxu0 0.0
    %1493 = vmatpush1.msra.mxu0 0.0
    %1494 = vmatprep.subr.mxu0 0.0
    %1495 = vmatpush1.msra.mxu0 0.0
    %1496 = vmatprep.subr.mxu0 0.0
    %1497 = vmatpush1.msra.mxu0 0.0
    %1498 = vmatprep.mubr.f32.mxu0 0.0
    %v1499 = vand.u32 %v1018, 4294901760
    %1500 = vmatmul.mubr.f32.gmra.mrb[0].mxu0 %v1499
    %v1501 = vpop.f32.mrb[0].mxu0
    %v1502 = vadd.f32 %v1427, %v1501
    %v1503 = vpop.f32.mrb[0].mxu0
    %1504 = vdwg.mxu0
    %vm1505 = vcmask 64512
    %v1507 = vsel %vm1505, %v360, 0
    %v1510 = vsel %vm1505, %v361, 0
    %v1513 = vsel %vm1505, %v362, 0
    %v1516 = vsel %vm1505, %v363, 0
    %v1519 = vsel %vm1505, %v364, 0
    %v1522 = vsel %vm1505, %v365, 0
    %v1525 = vsel %vm1505, %v366, 0
    %v1528 = vsel %vm1505, %v367, 0
    %v1531 = vsel %vm1505, %v368, 0
    %v1534 = vsel %vm1505, %v369, 0
    %v1537 = vsel %vm1505, %v370, 0
    %v1540 = vsel %vm1505, %v371, 0
    %v1543 = vsel %vm1505, %v372, 0
    %v1546 = vsel %vm1505, %v373, 0
    %v1549 = vsel %vm1505, %v374, 0
    %v1552 = vsel %vm1505, %v375, 0
    %1554 = vmatprep.subr.mxu0 0.0
    %v1555 = vand.u32 %v1502, 4294901760
    %1556 = vmatpush1.msra.mxu0 %v1555
    %1557 = vmatprep.subr.mxu0 0.0
    %1558 = vmatpush1.msra.mxu0 0.0
    %1559 = vmatprep.subr.mxu0 0.0
    %1560 = vmatpush1.msra.mxu0 0.0
    %1561 = vmatprep.subr.mxu0 0.0
    %1562 = vmatpush1.msra.mxu0 0.0
    %1563 = vmatprep.subr.mxu0 0.0
    %1564 = vmatpush1.msra.mxu0 0.0
    %1565 = vmatprep.subr.mxu0 0.0
    %1566 = vmatpush1.msra.mxu0 0.0
    %1567 = vmatprep.subr.mxu0 0.0
    %1568 = vmatpush1.msra.mxu0 0.0
    %1569 = vmatprep.subr.mxu0 0.0
    %1570 = vmatpush1.msra.mxu0 0.0
    %1571 = vmatprep.subr.mxu0 0.0
    %1572 = vmatpush1.msra.mxu0 0.0
    %1573 = vmatprep.subr.mxu0 0.0
    %1574 = vmatpush1.msra.mxu0 0.0
    %1575 = vmatprep.subr.mxu0 0.0
    %1576 = vmatpush1.msra.mxu0 0.0
    %1577 = vmatprep.subr.mxu0 0.0
    %1578 = vmatpush1.msra.mxu0 0.0
    %1579 = vmatprep.subr.mxu0 0.0
    %1580 = vmatpush1.msra.mxu0 0.0
    %1581 = vmatprep.subr.mxu0 0.0
    %1582 = vmatpush1.msra.mxu0 0.0
    %1583 = vmatprep.subr.mxu0 0.0
    %1584 = vmatpush1.msra.mxu0 0.0
    %1585 = vmatprep.subr.mxu0 0.0
    %1586 = vmatpush1.msra.mxu0 0.0
    %1587 = vmatprep.subr.mxu0 0.0
    %1588 = vmatpush1.msra.mxu0 0.0
    %1589 = vmatprep.subr.mxu0 0.0
    %1590 = vmatpush1.msra.mxu0 0.0
    %1591 = vmatprep.subr.mxu0 0.0
    %1592 = vmatpush1.msra.mxu0 0.0
    %1593 = vmatprep.subr.mxu0 0.0
    %1594 = vmatpush1.msra.mxu0 0.0
    %1595 = vmatprep.subr.mxu0 0.0
    %1596 = vmatpush1.msra.mxu0 0.0
    %1597 = vmatprep.subr.mxu0 0.0
    %1598 = vmatpush1.msra.mxu0 0.0
    %1599 = vmatprep.subr.mxu0 0.0
    %1600 = vmatpush1.msra.mxu0 0.0
    %1601 = vmatprep.subr.mxu0 0.0
    %1602 = vmatpush1.msra.mxu0 0.0
    %1603 = vmatprep.subr.mxu0 0.0
    %1604 = vmatpush1.msra.mxu0 0.0
    %1605 = vmatprep.subr.mxu0 0.0
    %1606 = vmatpush1.msra.mxu0 0.0
    %1607 = vmatprep.subr.mxu0 0.0
    %1608 = vmatpush1.msra.mxu0 0.0
    %1609 = vmatprep.subr.mxu0 0.0
    %1610 = vmatpush1.msra.mxu0 0.0
    %1611 = vmatprep.subr.mxu0 0.0
    %1612 = vmatpush1.msra.mxu0 0.0
    %1613 = vmatprep.subr.mxu0 0.0
    %1614 = vmatpush1.msra.mxu0 0.0
    %1615 = vmatprep.subr.mxu0 0.0
    %1616 = vmatpush1.msra.mxu0 0.0
    %1617 = vmatprep.subr.mxu0 0.0
    %1618 = vmatpush1.msra.mxu0 0.0
    %1619 = vmatprep.mubr.f32.mxu0 0.0
    %v1620 = vand.u32 %v1507, 4294901760
    %v1621 = vsub.f32 %v1507, %v1620
    %v1622 = vand.u32 %v1621, 4294901760
    %v1623 = vsub.f32 %v1621, %v1622
    %v1624 = vand.u32 %v1623, 4294901760
    %1625 = vmatmul.mubr.f32.gmra.mrb[0].mxu0 %v1624
    %v1626 = vpop.f32.mrb[0].mxu0
    %v1627 = vadd.f32 0.0, %v1626
    %v1628 = vpop.f32.mrb[0].mxu0
    %1629 = vmatprep.mubr.f32.mxu0 0.0
    %v1630 = vand.u32 %v1510, 4294901760
    %v1631 = vsub.f32 %v1510, %v1630
    %v1632 = vand.u32 %v1631, 4294901760
    %v1633 = vsub.f32 %v1631, %v1632
    %v1634 = vand.u32 %v1633, 4294901760
    %1635 = vmatmul.mubr.f32.gmra.mrb[0].mxu0 %v1634
    %v1636 = vpop.f32.mrb[0].mxu0
    %v1637 = vadd.f32 0.0, %v1636
    %v1638 = vpop.f32.mrb[0].mxu0
    %1639 = vmatprep.mubr.f32.mxu0 0.0
    %v1640 = vand.u32 %v1513, 4294901760
    %v1641 = vsub.f32 %v1513, %v1640
    %v1642 = vand.u32 %v1641, 4294901760
    %v1643 = vsub.f32 %v1641, %v1642
    %v1644 = vand.u32 %v1643, 4294901760
    %1645 = vmatmul.mubr.f32.gmra.mrb[0].mxu0 %v1644
    %v1646 = vpop.f32.mrb[0].mxu0
    %v1647 = vadd.f32 0.0, %v1646
    %v1648 = vpop.f32.mrb[0].mxu0
    %1649 = vmatprep.mubr.f32.mxu0 0.0
    %v1650 = vand.u32 %v1516, 4294901760
    %v1651 = vsub.f32 %v1516, %v1650
    %v1652 = vand.u32 %v1651, 4294901760
    %v1653 = vsub.f32 %v1651, %v1652
    %v1654 = vand.u32 %v1653, 4294901760
    %1655 = vmatmul.mubr.f32.gmra.mrb[0].mxu0 %v1654
    %v1656 = vpop.f32.mrb[0].mxu0
    %v1657 = vadd.f32 0.0, %v1656
    %v1658 = vpop.f32.mrb[0].mxu0
    %1659 = vmatprep.mubr.f32.mxu0 0.0
    %v1660 = vand.u32 %v1519, 4294901760
    %v1661 = vsub.f32 %v1519, %v1660
    %v1662 = vand.u32 %v1661, 4294901760
    %v1663 = vsub.f32 %v1661, %v1662
    %v1664 = vand.u32 %v1663, 4294901760
    %1665 = vmatmul.mubr.f32.gmra.mrb[0].mxu0 %v1664
    %v1666 = vpop.f32.mrb[0].mxu0
    %v1667 = vadd.f32 0.0, %v1666
    %v1668 = vpop.f32.mrb[0].mxu0
    %1669 = vmatprep.mubr.f32.mxu0 0.0
    %v1670 = vand.u32 %v1522, 4294901760
    %v1671 = vsub.f32 %v1522, %v1670
    %v1672 = vand.u32 %v1671, 4294901760
    %v1673 = vsub.f32 %v1671, %v1672
    %v1674 = vand.u32 %v1673, 4294901760
    %1675 = vmatmul.mubr.f32.gmra.mrb[0].mxu0 %v1674
    %v1676 = vpop.f32.mrb[0].mxu0
    %v1677 = vadd.f32 0.0, %v1676
    %v1678 = vpop.f32.mrb[0].mxu0
    %1679 = vmatprep.mubr.f32.mxu0 0.0
    %v1680 = vand.u32 %v1525, 4294901760
    %v1681 = vsub.f32 %v1525, %v1680
    %v1682 = vand.u32 %v1681, 4294901760
    %v1683 = vsub.f32 %v1681, %v1682
    %v1684 = vand.u32 %v1683, 4294901760
    %1685 = vmatmul.mubr.f32.gmra.mrb[0].mxu0 %v1684
    %v1686 = vpop.f32.mrb[0].mxu0
    %v1687 = vadd.f32 0.0, %v1686
    %v1688 = vpop.f32.mrb[0].mxu0
    %1689 = vmatprep.mubr.f32.mxu0 0.0
    %v1690 = vand.u32 %v1528, 4294901760
    %v1691 = vsub.f32 %v1528, %v1690
    %v1692 = vand.u32 %v1691, 4294901760
    %v1693 = vsub.f32 %v1691, %v1692
    %v1694 = vand.u32 %v1693, 4294901760
    %1695 = vmatmul.mubr.f32.gmra.mrb[0].mxu0 %v1694
    %v1696 = vpop.f32.mrb[0].mxu0
    %v1697 = vadd.f32 0.0, %v1696
    %v1698 = vpop.f32.mrb[0].mxu0
    %1699 = vmatprep.mubr.f32.mxu0 0.0
    %v1700 = vand.u32 %v1531, 4294901760
    %v1701 = vsub.f32 %v1531, %v1700
    %v1702 = vand.u32 %v1701, 4294901760
    %v1703 = vsub.f32 %v1701, %v1702
    %v1704 = vand.u32 %v1703, 4294901760
    %1705 = vmatmul.mubr.f32.gmra.mrb[0].mxu0 %v1704
    %v1706 = vpop.f32.mrb[0].mxu0
    %v1707 = vadd.f32 0.0, %v1706
    %v1708 = vpop.f32.mrb[0].mxu0
    %1709 = vmatprep.mubr.f32.mxu0 0.0
    %v1710 = vand.u32 %v1534, 4294901760
    %v1711 = vsub.f32 %v1534, %v1710
    %v1712 = vand.u32 %v1711, 4294901760
    %v1713 = vsub.f32 %v1711, %v1712
    %v1714 = vand.u32 %v1713, 4294901760
    %1715 = vmatmul.mubr.f32.gmra.mrb[0].mxu0 %v1714
    %v1716 = vpop.f32.mrb[0].mxu0
    %v1717 = vadd.f32 0.0, %v1716
    %v1718 = vpop.f32.mrb[0].mxu0
    %1719 = vmatprep.mubr.f32.mxu0 0.0
    %v1720 = vand.u32 %v1537, 4294901760
    %v1721 = vsub.f32 %v1537, %v1720
    %v1722 = vand.u32 %v1721, 4294901760
    %v1723 = vsub.f32 %v1721, %v1722
    %v1724 = vand.u32 %v1723, 4294901760
    %1725 = vmatmul.mubr.f32.gmra.mrb[0].mxu0 %v1724
    %v1726 = vpop.f32.mrb[0].mxu0
    %v1727 = vadd.f32 0.0, %v1726
    %v1728 = vpop.f32.mrb[0].mxu0
    %1729 = vmatprep.mubr.f32.mxu0 0.0
    %v1730 = vand.u32 %v1540, 4294901760
    %v1731 = vsub.f32 %v1540, %v1730
    %v1732 = vand.u32 %v1731, 4294901760
    %v1733 = vsub.f32 %v1731, %v1732
    %v1734 = vand.u32 %v1733, 4294901760
    %1735 = vmatmul.mubr.f32.gmra.mrb[0].mxu0 %v1734
    %v1736 = vpop.f32.mrb[0].mxu0
    %v1737 = vadd.f32 0.0, %v1736
    %v1738 = vpop.f32.mrb[0].mxu0
    %1739 = vmatprep.mubr.f32.mxu0 0.0
    %v1740 = vand.u32 %v1543, 4294901760
    %v1741 = vsub.f32 %v1543, %v1740
    %v1742 = vand.u32 %v1741, 4294901760
    %v1743 = vsub.f32 %v1741, %v1742
    %v1744 = vand.u32 %v1743, 4294901760
    %1745 = vmatmul.mubr.f32.gmra.mrb[0].mxu0 %v1744
    %v1746 = vpop.f32.mrb[0].mxu0
    %v1747 = vadd.f32 0.0, %v1746
    %v1748 = vpop.f32.mrb[0].mxu0
    %1749 = vmatprep.mubr.f32.mxu0 0.0
    %v1750 = vand.u32 %v1546, 4294901760
    %v1751 = vsub.f32 %v1546, %v1750
    %v1752 = vand.u32 %v1751, 4294901760
    %v1753 = vsub.f32 %v1751, %v1752
    %v1754 = vand.u32 %v1753, 4294901760
    %1755 = vmatmul.mubr.f32.gmra.mrb[0].mxu0 %v1754
    %v1756 = vpop.f32.mrb[0].mxu0
    %v1757 = vadd.f32 0.0, %v1756
    %v1758 = vpop.f32.mrb[0].mxu0
    %1759 = vmatprep.mubr.f32.mxu0 0.0
    %v1760 = vand.u32 %v1549, 4294901760
    %v1761 = vsub.f32 %v1549, %v1760
    %v1762 = vand.u32 %v1761, 4294901760
    %v1763 = vsub.f32 %v1761, %v1762
    %v1764 = vand.u32 %v1763, 4294901760
    %1765 = vmatmul.mubr.f32.gmra.mrb[0].mxu0 %v1764
    %v1766 = vpop.f32.mrb[0].mxu0
    %v1767 = vadd.f32 0.0, %v1766
    %v1768 = vpop.f32.mrb[0].mxu0
    %1769 = vmatprep.mubr.f32.mxu0 0.0
    %v1770 = vand.u32 %v1552, 4294901760
    %v1771 = vsub.f32 %v1552, %v1770
    %v1772 = vand.u32 %v1771, 4294901760
    %v1773 = vsub.f32 %v1771, %v1772
    %v1774 = vand.u32 %v1773, 4294901760
    %1775 = vmatmul.mubr.f32.gmra.mrb[0].mxu0 %v1774
    %v1776 = vpop.f32.mrb[0].mxu0
    %v1777 = vadd.f32 0.0, %v1776
    %v1778 = vpop.f32.mrb[0].mxu0
    %1779 = vdwg.mxu0
    %1780 = vmatprep.subr.mxu0 0.0
    %v1781 = vand.u32 %v1502, 4294901760
    %v1782 = vsub.f32 %v1502, %v1781
    %v1783 = vand.u32 %v1782, 4294901760
    %v1784 = vsub.f32 %v1782, %v1783
    %v1785 = vand.u32 %v1784, 4294901760
    %1786 = vmatpush1.msra.mxu0 %v1785
    %1787 = vmatprep.subr.mxu0 0.0
    %1788 = vmatpush1.msra.mxu0 0.0
    %1789 = vmatprep.subr.mxu0 0.0
    %1790 = vmatpush1.msra.mxu0 0.0
    %1791 = vmatprep.subr.mxu0 0.0
    %1792 = vmatpush1.msra.mxu0 0.0
    %1793 = vmatprep.subr.mxu0 0.0
    %1794 = vmatpush1.msra.mxu0 0.0
    %1795 = vmatprep.subr.mxu0 0.0
    %1796 = vmatpush1.msra.mxu0 0.0
    %1797 = vmatprep.subr.mxu0 0.0
    %1798 = vmatpush1.msra.mxu0 0.0
    %1799 = vmatprep.subr.mxu0 0.0
    %1800 = vmatpush1.msra.mxu0 0.0
    %1801 = vmatprep.subr.mxu0 0.0
    %1802 = vmatpush1.msra.mxu0 0.0
    %1803 = vmatprep.subr.mxu0 0.0
    %1804 = vmatpush1.msra.mxu0 0.0
    %1805 = vmatprep.subr.mxu0 0.0
    %1806 = vmatpush1.msra.mxu0 0.0
    %1807 = vmatprep.subr.mxu0 0.0
    %1808 = vmatpush1.msra.mxu0 0.0
    %1809 = vmatprep.subr.mxu0 0.0
    %1810 = vmatpush1.msra.mxu0 0.0
    %1811 = vmatprep.subr.mxu0 0.0
    %1812 = vmatpush1.msra.mxu0 0.0
    %1813 = vmatprep.subr.mxu0 0.0
    %1814 = vmatpush1.msra.mxu0 0.0
    %1815 = vmatprep.subr.mxu0 0.0
    %1816 = vmatpush1.msra.mxu0 0.0
    %1817 = vmatprep.subr.mxu0 0.0
    %1818 = vmatpush1.msra.mxu0 0.0
    %1819 = vmatprep.subr.mxu0 0.0
    %1820 = vmatpush1.msra.mxu0 0.0
    %1821 = vmatprep.subr.mxu0 0.0
    %1822 = vmatpush1.msra.mxu0 0.0
    %1823 = vmatprep.subr.mxu0 0.0
    %1824 = vmatpush1.msra.mxu0 0.0
    %1825 = vmatprep.subr.mxu0 0.0
    %1826 = vmatpush1.msra.mxu0 0.0
    %1827 = vmatprep.subr.mxu0 0.0
    %1828 = vmatpush1.msra.mxu0 0.0
    %1829 = vmatprep.subr.mxu0 0.0
    %1830 = vmatpush1.msra.mxu0 0.0
    %1831 = vmatprep.subr.mxu0 0.0
    %1832 = vmatpush1.msra.mxu0 0.0
    %1833 = vmatprep.subr.mxu0 0.0
    %1834 = vmatpush1.msra.mxu0 0.0
    %1835 = vmatprep.subr.mxu0 0.0
    %1836 = vmatpush1.msra.mxu0 0.0
    %1837 = vmatprep.subr.mxu0 0.0
    %1838 = vmatpush1.msra.mxu0 0.0
    %1839 = vmatprep.subr.mxu0 0.0
    %1840 = vmatpush1.msra.mxu0 0.0
    %1841 = vmatprep.subr.mxu0 0.0
    %1842 = vmatpush1.msra.mxu0 0.0
    %1843 = vmatprep.subr.mxu0 0.0
    %1844 = vmatpush1.msra.mxu0 0.0
    %1845 = vmatprep.subr.mxu0 0.0
    %1846 = vmatpush1.msra.mxu0 0.0
    %1847 = vmatprep.subr.mxu0 0.0
    %1848 = vmatpush1.msra.mxu0 0.0
    %1849 = vmatprep.mubr.f32.mxu0 0.0
    %v1850 = vand.u32 %v1507, 4294901760
    %1851 = vmatmul.mubr.f32.gmra.mrb[0].mxu0 %v1850
    %v1852 = vpop.f32.mrb[0].mxu0
    %v1853 = vadd.f32 %v1627, %v1852
    %v1854 = vpop.f32.mrb[0].mxu0
    %1855 = vmatprep.mubr.f32.mxu0 0.0
    %v1856 = vand.u32 %v1510, 4294901760
    %1857 = vmatmul.mubr.f32.gmra.mrb[0].mxu0 %v1856
    %v1858 = vpop.f32.mrb[0].mxu0
    %v1859 = vadd.f32 %v1637, %v1858
    %v1860 = vpop.f32.mrb[0].mxu0
    %1861 = vmatprep.mubr.f32.mxu0 0.0
    %v1862 = vand.u32 %v1513, 4294901760
    %1863 = vmatmul.mubr.f32.gmra.mrb[0].mxu0 %v1862
    %v1864 = vpop.f32.mrb[0].mxu0
    %v1865 = vadd.f32 %v1647, %v1864
    %v1866 = vpop.f32.mrb[0].mxu0
    %1867 = vmatprep.mubr.f32.mxu0 0.0
    %v1868 = vand.u32 %v1516, 4294901760
    %1869 = vmatmul.mubr.f32.gmra.mrb[0].mxu0 %v1868
    %v1870 = vpop.f32.mrb[0].mxu0
    %v1871 = vadd.f32 %v1657, %v1870
    %v1872 = vpop.f32.mrb[0].mxu0
    %1873 = vmatprep.mubr.f32.mxu0 0.0
    %v1874 = vand.u32 %v1519, 4294901760
    %1875 = vmatmul.mubr.f32.gmra.mrb[0].mxu0 %v1874
    %v1876 = vpop.f32.mrb[0].mxu0
    %v1877 = vadd.f32 %v1667, %v1876
    %v1878 = vpop.f32.mrb[0].mxu0
    %1879 = vmatprep.mubr.f32.mxu0 0.0
    %v1880 = vand.u32 %v1522, 4294901760
    %1881 = vmatmul.mubr.f32.gmra.mrb[0].mxu0 %v1880
    %v1882 = vpop.f32.mrb[0].mxu0
    %v1883 = vadd.f32 %v1677, %v1882
    %v1884 = vpop.f32.mrb[0].mxu0
    %1885 = vmatprep.mubr.f32.mxu0 0.0
    %v1886 = vand.u32 %v1525, 4294901760
    %1887 = vmatmul.mubr.f32.gmra.mrb[0].mxu0 %v1886
    %v1888 = vpop.f32.mrb[0].mxu0
    %v1889 = vadd.f32 %v1687, %v1888
    %v1890 = vpop.f32.mrb[0].mxu0
    %1891 = vmatprep.mubr.f32.mxu0 0.0
    %v1892 = vand.u32 %v1528, 4294901760
    %1893 = vmatmul.mubr.f32.gmra.mrb[0].mxu0 %v1892
    %v1894 = vpop.f32.mrb[0].mxu0
    %v1895 = vadd.f32 %v1697, %v1894
    %v1896 = vpop.f32.mrb[0].mxu0
    %1897 = vmatprep.mubr.f32.mxu0 0.0
    %v1898 = vand.u32 %v1531, 4294901760
    %1899 = vmatmul.mubr.f32.gmra.mrb[0].mxu0 %v1898
    %v1900 = vpop.f32.mrb[0].mxu0
    %v1901 = vadd.f32 %v1707, %v1900
    %v1902 = vpop.f32.mrb[0].mxu0
    %1903 = vmatprep.mubr.f32.mxu0 0.0
    %v1904 = vand.u32 %v1534, 4294901760
    %1905 = vmatmul.mubr.f32.gmra.mrb[0].mxu0 %v1904
    %v1906 = vpop.f32.mrb[0].mxu0
    %v1907 = vadd.f32 %v1717, %v1906
    %v1908 = vpop.f32.mrb[0].mxu0
    %1909 = vmatprep.mubr.f32.mxu0 0.0
    %v1910 = vand.u32 %v1537, 4294901760
    %1911 = vmatmul.mubr.f32.gmra.mrb[0].mxu0 %v1910
    %v1912 = vpop.f32.mrb[0].mxu0
    %v1913 = vadd.f32 %v1727, %v1912
    %v1914 = vpop.f32.mrb[0].mxu0
    %1915 = vmatprep.mubr.f32.mxu0 0.0
    %v1916 = vand.u32 %v1540, 4294901760
    %1917 = vmatmul.mubr.f32.gmra.mrb[0].mxu0 %v1916
    %v1918 = vpop.f32.mrb[0].mxu0
    %v1919 = vadd.f32 %v1737, %v1918
    %v1920 = vpop.f32.mrb[0].mxu0
    %1921 = vmatprep.mubr.f32.mxu0 0.0
    %v1922 = vand.u32 %v1543, 4294901760
    %1923 = vmatmul.mubr.f32.gmra.mrb[0].mxu0 %v1922
    %v1924 = vpop.f32.mrb[0].mxu0
    %v1925 = vadd.f32 %v1747, %v1924
    %v1926 = vpop.f32.mrb[0].mxu0
    %1927 = vmatprep.mubr.f32.mxu0 0.0
    %v1928 = vand.u32 %v1546, 4294901760
    %1929 = vmatmul.mubr.f32.gmra.mrb[0].mxu0 %v1928
    %v1930 = vpop.f32.mrb[0].mxu0
    %v1931 = vadd.f32 %v1757, %v1930
    %v1932 = vpop.f32.mrb[0].mxu0
    %1933 = vmatprep.mubr.f32.mxu0 0.0
    %v1934 = vand.u32 %v1549, 4294901760
    %1935 = vmatmul.mubr.f32.gmra.mrb[0].mxu0 %v1934
    %v1936 = vpop.f32.mrb[0].mxu0
    %v1937 = vadd.f32 %v1767, %v1936
    %v1938 = vpop.f32.mrb[0].mxu0
    %1939 = vmatprep.mubr.f32.mxu0 0.0
    %v1940 = vand.u32 %v1552, 4294901760
    %1941 = vmatmul.mubr.f32.gmra.mrb[0].mxu0 %v1940
    %v1942 = vpop.f32.mrb[0].mxu0
    %v1943 = vadd.f32 %v1777, %v1942
    %v1944 = vpop.f32.mrb[0].mxu0
    %1945 = vdwg.mxu0
    %1946 = vmatprep.subr.mxu0 0.0
    %v1947 = vand.u32 %v1502, 4294901760
    %v1948 = vsub.f32 %v1502, %v1947
    %1949 = vmatpush1.msra.mxu0 %v1948
    %1950 = vmatprep.subr.mxu0 0.0
    %1951 = vmatpush1.msra.mxu0 0.0
    %1952 = vmatprep.subr.mxu0 0.0
    %1953 = vmatpush1.msra.mxu0 0.0
    %1954 = vmatprep.subr.mxu0 0.0
    %1955 = vmatpush1.msra.mxu0 0.0
    %1956 = vmatprep.subr.mxu0 0.0
    %1957 = vmatpush1.msra.mxu0 0.0
    %1958 = vmatprep.subr.mxu0 0.0
    %1959 = vmatpush1.msra.mxu0 0.0
    %1960 = vmatprep.subr.mxu0 0.0
    %1961 = vmatpush1.msra.mxu0 0.0
    %1962 = vmatprep.subr.mxu0 0.0
    %1963 = vmatpush1.msra.mxu0 0.0
    %1964 = vmatprep.subr.mxu0 0.0
    %1965 = vmatpush1.msra.mxu0 0.0
    %1966 = vmatprep.subr.mxu0 0.0
    %1967 = vmatpush1.msra.mxu0 0.0
    %1968 = vmatprep.subr.mxu0 0.0
    %1969 = vmatpush1.msra.mxu0 0.0
    %1970 = vmatprep.subr.mxu0 0.0
    %1971 = vmatpush1.msra.mxu0 0.0
    %1972 = vmatprep.subr.mxu0 0.0
    %1973 = vmatpush1.msra.mxu0 0.0
    %1974 = vmatprep.subr.mxu0 0.0
    %1975 = vmatpush1.msra.mxu0 0.0
    %1976 = vmatprep.subr.mxu0 0.0
    %1977 = vmatpush1.msra.mxu0 0.0
    %1978 = vmatprep.subr.mxu0 0.0
    %1979 = vmatpush1.msra.mxu0 0.0
    %1980 = vmatprep.subr.mxu0 0.0
    %1981 = vmatpush1.msra.mxu0 0.0
    %1982 = vmatprep.subr.mxu0 0.0
    %1983 = vmatpush1.msra.mxu0 0.0
    %1984 = vmatprep.subr.mxu0 0.0
    %1985 = vmatpush1.msra.mxu0 0.0
    %1986 = vmatprep.subr.mxu0 0.0
    %1987 = vmatpush1.msra.mxu0 0.0
    %1988 = vmatprep.subr.mxu0 0.0
    %1989 = vmatpush1.msra.mxu0 0.0
    %1990 = vmatprep.subr.mxu0 0.0
    %1991 = vmatpush1.msra.mxu0 0.0
    %1992 = vmatprep.subr.mxu0 0.0
    %1993 = vmatpush1.msra.mxu0 0.0
    %1994 = vmatprep.subr.mxu0 0.0
    %1995 = vmatpush1.msra.mxu0 0.0
    %1996 = vmatprep.subr.mxu0 0.0
    %1997 = vmatpush1.msra.mxu0 0.0
    %1998 = vmatprep.subr.mxu0 0.0
    %1999 = vmatpush1.msra.mxu0 0.0
    %2000 = vmatprep.subr.mxu0 0.0
    %2001 = vmatpush1.msra.mxu0 0.0
    %2002 = vmatprep.subr.mxu0 0.0
    %2003 = vmatpush1.msra.mxu0 0.0
    %2004 = vmatprep.subr.mxu0 0.0
    %2005 = vmatpush1.msra.mxu0 0.0
    %2006 = vmatprep.subr.mxu0 0.0
    %2007 = vmatpush1.msra.mxu0 0.0
    %2008 = vmatprep.subr.mxu0 0.0
    %2009 = vmatpush1.msra.mxu0 0.0
    %2010 = vmatprep.subr.mxu0 0.0
    %2011 = vmatpush1.msra.mxu0 0.0
    %2012 = vmatprep.mubr.f32.mxu0 0.0
    %v2013 = vand.u32 %v1507, 4294901760
    %v2014 = vsub.f32 %v1507, %v2013
    %2015 = vmatmul.mubr.f32.gmra.mrb[0].mxu0 %v2014
    %v2016 = vpop.f32.mrb[0].mxu0
    %v2017 = vadd.f32 %v1853, %v2016
    %v2018 = vpop.f32.mrb[0].mxu0
    %2019 = vmatprep.mubr.f32.mxu0 0.0
    %v2020 = vand.u32 %v1510, 4294901760
    %v2021 = vsub.f32 %v1510, %v2020
    %2022 = vmatmul.mubr.f32.gmra.mrb[0].mxu0 %v2021
    %v2023 = vpop.f32.mrb[0].mxu0
    %v2024 = vadd.f32 %v1859, %v2023
    %v2025 = vpop.f32.mrb[0].mxu0
    %2026 = vmatprep.mubr.f32.mxu0 0.0
    %v2027 = vand.u32 %v1513, 4294901760
    %v2028 = vsub.f32 %v1513, %v2027
    %2029 = vmatmul.mubr.f32.gmra.mrb[0].mxu0 %v2028
    %v2030 = vpop.f32.mrb[0].mxu0
    %v2031 = vadd.f32 %v1865, %v2030
    %v2032 = vpop.f32.mrb[0].mxu0
    %2033 = vmatprep.mubr.f32.mxu0 0.0
    %v2034 = vand.u32 %v1516, 4294901760
    %v2035 = vsub.f32 %v1516, %v2034
    %2036 = vmatmul.mubr.f32.gmra.mrb[0].mxu0 %v2035
    %v2037 = vpop.f32.mrb[0].mxu0
    %v2038 = vadd.f32 %v1871, %v2037
    %v2039 = vpop.f32.mrb[0].mxu0
    %2040 = vmatprep.mubr.f32.mxu0 0.0
    %v2041 = vand.u32 %v1519, 4294901760
    %v2042 = vsub.f32 %v1519, %v2041
    %2043 = vmatmul.mubr.f32.gmra.mrb[0].mxu0 %v2042
    %v2044 = vpop.f32.mrb[0].mxu0
    %v2045 = vadd.f32 %v1877, %v2044
    %v2046 = vpop.f32.mrb[0].mxu0
    %2047 = vmatprep.mubr.f32.mxu0 0.0
    %v2048 = vand.u32 %v1522, 4294901760
    %v2049 = vsub.f32 %v1522, %v2048
    %2050 = vmatmul.mubr.f32.gmra.mrb[0].mxu0 %v2049
    %v2051 = vpop.f32.mrb[0].mxu0
    %v2052 = vadd.f32 %v1883, %v2051
    %v2053 = vpop.f32.mrb[0].mxu0
    %2054 = vmatprep.mubr.f32.mxu0 0.0
    %v2055 = vand.u32 %v1525, 4294901760
    %v2056 = vsub.f32 %v1525, %v2055
    %2057 = vmatmul.mubr.f32.gmra.mrb[0].mxu0 %v2056
    %v2058 = vpop.f32.mrb[0].mxu0
    %v2059 = vadd.f32 %v1889, %v2058
    %v2060 = vpop.f32.mrb[0].mxu0
    %2061 = vmatprep.mubr.f32.mxu0 0.0
    %v2062 = vand.u32 %v1528, 4294901760
    %v2063 = vsub.f32 %v1528, %v2062
    %2064 = vmatmul.mubr.f32.gmra.mrb[0].mxu0 %v2063
    %v2065 = vpop.f32.mrb[0].mxu0
    %v2066 = vadd.f32 %v1895, %v2065
    %v2067 = vpop.f32.mrb[0].mxu0
    %2068 = vmatprep.mubr.f32.mxu0 0.0
    %v2069 = vand.u32 %v1531, 4294901760
    %v2070 = vsub.f32 %v1531, %v2069
    %2071 = vmatmul.mubr.f32.gmra.mrb[0].mxu0 %v2070
    %v2072 = vpop.f32.mrb[0].mxu0
    %v2073 = vadd.f32 %v1901, %v2072
    %v2074 = vpop.f32.mrb[0].mxu0
    %2075 = vmatprep.mubr.f32.mxu0 0.0
    %v2076 = vand.u32 %v1534, 4294901760
    %v2077 = vsub.f32 %v1534, %v2076
    %2078 = vmatmul.mubr.f32.gmra.mrb[0].mxu0 %v2077
    %v2079 = vpop.f32.mrb[0].mxu0
    %v2080 = vadd.f32 %v1907, %v2079
    %v2081 = vpop.f32.mrb[0].mxu0
    %2082 = vmatprep.mubr.f32.mxu0 0.0
    %v2083 = vand.u32 %v1537, 4294901760
    %v2084 = vsub.f32 %v1537, %v2083
    %2085 = vmatmul.mubr.f32.gmra.mrb[0].mxu0 %v2084
    %v2086 = vpop.f32.mrb[0].mxu0
    %v2087 = vadd.f32 %v1913, %v2086
    %v2088 = vpop.f32.mrb[0].mxu0
    %2089 = vmatprep.mubr.f32.mxu0 0.0
    %v2090 = vand.u32 %v1540, 4294901760
    %v2091 = vsub.f32 %v1540, %v2090
    %2092 = vmatmul.mubr.f32.gmra.mrb[0].mxu0 %v2091
    %v2093 = vpop.f32.mrb[0].mxu0
    %v2094 = vadd.f32 %v1919, %v2093
    %v2095 = vpop.f32.mrb[0].mxu0
    %2096 = vmatprep.mubr.f32.mxu0 0.0
    %v2097 = vand.u32 %v1543, 4294901760
    %v2098 = vsub.f32 %v1543, %v2097
    %2099 = vmatmul.mubr.f32.gmra.mrb[0].mxu0 %v2098
    %v2100 = vpop.f32.mrb[0].mxu0
    %v2101 = vadd.f32 %v1925, %v2100
    %v2102 = vpop.f32.mrb[0].mxu0
    %2103 = vmatprep.mubr.f32.mxu0 0.0
    %v2104 = vand.u32 %v1546, 4294901760
    %v2105 = vsub.f32 %v1546, %v2104
    %2106 = vmatmul.mubr.f32.gmra.mrb[0].mxu0 %v2105
    %v2107 = vpop.f32.mrb[0].mxu0
    %v2108 = vadd.f32 %v1931, %v2107
    %v2109 = vpop.f32.mrb[0].mxu0
    %2110 = vmatprep.mubr.f32.mxu0 0.0
    %v2111 = vand.u32 %v1549, 4294901760
    %v2112 = vsub.f32 %v1549, %v2111
    %2113 = vmatmul.mubr.f32.gmra.mrb[0].mxu0 %v2112
    %v2114 = vpop.f32.mrb[0].mxu0
    %v2115 = vadd.f32 %v1937, %v2114
    %v2116 = vpop.f32.mrb[0].mxu0
    %2117 = vmatprep.mubr.f32.mxu0 0.0
    %v2118 = vand.u32 %v1552, 4294901760
    %v2119 = vsub.f32 %v1552, %v2118
    %2120 = vmatmul.mubr.f32.gmra.mrb[0].mxu0 %v2119
    %v2121 = vpop.f32.mrb[0].mxu0
    %v2122 = vadd.f32 %v1943, %v2121
    %v2123 = vpop.f32.mrb[0].mxu0
    %2124 = vdwg.mxu0
    %2125 = vmatprep.subr.mxu0 0.0
    %v2126 = vand.u32 %v1502, 4294901760
    %2127 = vmatpush1.msra.mxu0 %v2126
    %2128 = vmatprep.subr.mxu0 0.0
    %2129 = vmatpush1.msra.mxu0 0.0
    %2130 = vmatprep.subr.mxu0 0.0
    %2131 = vmatpush1.msra.mxu0 0.0
    %2132 = vmatprep.subr.mxu0 0.0
    %2133 = vmatpush1.msra.mxu0 0.0
    %2134 = vmatprep.subr.mxu0 0.0
    %2135 = vmatpush1.msra.mxu0 0.0
    %2136 = vmatprep.subr.mxu0 0.0
    %2137 = vmatpush1.msra.mxu0 0.0
    %2138 = vmatprep.subr.mxu0 0.0
    %2139 = vmatpush1.msra.mxu0 0.0
    %2140 = vmatprep.subr.mxu0 0.0
    %2141 = vmatpush1.msra.mxu0 0.0
    %2142 = vmatprep.subr.mxu0 0.0
    %2143 = vmatpush1.msra.mxu0 0.0
    %2144 = vmatprep.subr.mxu0 0.0
    %2145 = vmatpush1.msra.mxu0 0.0
    %2146 = vmatprep.subr.mxu0 0.0
    %2147 = vmatpush1.msra.mxu0 0.0
    %2148 = vmatprep.subr.mxu0 0.0
    %2149 = vmatpush1.msra.mxu0 0.0
    %2150 = vmatprep.subr.mxu0 0.0
    %2151 = vmatpush1.msra.mxu0 0.0
    %2152 = vmatprep.subr.mxu0 0.0
    %2153 = vmatpush1.msra.mxu0 0.0
    %2154 = vmatprep.subr.mxu0 0.0
    %2155 = vmatpush1.msra.mxu0 0.0
    %2156 = vmatprep.subr.mxu0 0.0
    %2157 = vmatpush1.msra.mxu0 0.0
    %2158 = vmatprep.subr.mxu0 0.0
    %2159 = vmatpush1.msra.mxu0 0.0
    %2160 = vmatprep.subr.mxu0 0.0
    %2161 = vmatpush1.msra.mxu0 0.0
    %2162 = vmatprep.subr.mxu0 0.0
    %2163 = vmatpush1.msra.mxu0 0.0
    %2164 = vmatprep.subr.mxu0 0.0
    %2165 = vmatpush1.msra.mxu0 0.0
    %2166 = vmatprep.subr.mxu0 0.0
    %2167 = vmatpush1.msra.mxu0 0.0
    %2168 = vmatprep.subr.mxu0 0.0
    %2169 = vmatpush1.msra.mxu0 0.0
    %2170 = vmatprep.subr.mxu0 0.0
    %2171 = vmatpush1.msra.mxu0 0.0
    %2172 = vmatprep.subr.mxu0 0.0
    %2173 = vmatpush1.msra.mxu0 0.0
    %2174 = vmatprep.subr.mxu0 0.0
    %2175 = vmatpush1.msra.mxu0 0.0
    %2176 = vmatprep.subr.mxu0 0.0
    %2177 = vmatpush1.msra.mxu0 0.0
    %2178 = vmatprep.subr.mxu0 0.0
    %2179 = vmatpush1.msra.mxu0 0.0
    %2180 = vmatprep.subr.mxu0 0.0
    %2181 = vmatpush1.msra.mxu0 0.0
    %2182 = vmatprep.subr.mxu0 0.0
    %2183 = vmatpush1.msra.mxu0 0.0
    %2184 = vmatprep.subr.mxu0 0.0
    %2185 = vmatpush1.msra.mxu0 0.0
    %2186 = vmatprep.subr.mxu0 0.0
    %2187 = vmatpush1.msra.mxu0 0.0
    %2188 = vmatprep.subr.mxu0 0.0
    %2189 = vmatpush1.msra.mxu0 0.0
    %2190 = vmatprep.mubr.f32.mxu0 0.0
    %v2191 = vand.u32 %v1507, 4294901760
    %v2192 = vsub.f32 %v1507, %v2191
    %v2193 = vand.u32 %v2192, 4294901760
    %2194 = vmatmul.mubr.f32.gmra.mrb[0].mxu0 %v2193
    %v2195 = vpop.f32.mrb[0].mxu0
    %v2196 = vadd.f32 %v2017, %v2195
    %v2197 = vpop.f32.mrb[0].mxu0
    %2198 = vmatprep.mubr.f32.mxu0 0.0
    %v2199 = vand.u32 %v1510, 4294901760
    %v2200 = vsub.f32 %v1510, %v2199
    %v2201 = vand.u32 %v2200, 4294901760
    %2202 = vmatmul.mubr.f32.gmra.mrb[0].mxu0 %v2201
    %v2203 = vpop.f32.mrb[0].mxu0
    %v2204 = vadd.f32 %v2024, %v2203
    %v2205 = vpop.f32.mrb[0].mxu0
    %2206 = vmatprep.mubr.f32.mxu0 0.0
    %v2207 = vand.u32 %v1513, 4294901760
    %v2208 = vsub.f32 %v1513, %v2207
    %v2209 = vand.u32 %v2208, 4294901760
    %2210 = vmatmul.mubr.f32.gmra.mrb[0].mxu0 %v2209
    %v2211 = vpop.f32.mrb[0].mxu0
    %v2212 = vadd.f32 %v2031, %v2211
    %v2213 = vpop.f32.mrb[0].mxu0
    %2214 = vmatprep.mubr.f32.mxu0 0.0
    %v2215 = vand.u32 %v1516, 4294901760
    %v2216 = vsub.f32 %v1516, %v2215
    %v2217 = vand.u32 %v2216, 4294901760
    %2218 = vmatmul.mubr.f32.gmra.mrb[0].mxu0 %v2217
    %v2219 = vpop.f32.mrb[0].mxu0
    %v2220 = vadd.f32 %v2038, %v2219
    %v2221 = vpop.f32.mrb[0].mxu0
    %2222 = vmatprep.mubr.f32.mxu0 0.0
    %v2223 = vand.u32 %v1519, 4294901760
    %v2224 = vsub.f32 %v1519, %v2223
    %v2225 = vand.u32 %v2224, 4294901760
    %2226 = vmatmul.mubr.f32.gmra.mrb[0].mxu0 %v2225
    %v2227 = vpop.f32.mrb[0].mxu0
    %v2228 = vadd.f32 %v2045, %v2227
    %v2229 = vpop.f32.mrb[0].mxu0
    %2230 = vmatprep.mubr.f32.mxu0 0.0
    %v2231 = vand.u32 %v1522, 4294901760
    %v2232 = vsub.f32 %v1522, %v2231
    %v2233 = vand.u32 %v2232, 4294901760
    %2234 = vmatmul.mubr.f32.gmra.mrb[0].mxu0 %v2233
    %v2235 = vpop.f32.mrb[0].mxu0
    %v2236 = vadd.f32 %v2052, %v2235
    %v2237 = vpop.f32.mrb[0].mxu0
    %2238 = vmatprep.mubr.f32.mxu0 0.0
    %v2239 = vand.u32 %v1525, 4294901760
    %v2240 = vsub.f32 %v1525, %v2239
    %v2241 = vand.u32 %v2240, 4294901760
    %2242 = vmatmul.mubr.f32.gmra.mrb[0].mxu0 %v2241
    %v2243 = vpop.f32.mrb[0].mxu0
    %v2244 = vadd.f32 %v2059, %v2243
    %v2245 = vpop.f32.mrb[0].mxu0
    %2246 = vmatprep.mubr.f32.mxu0 0.0
    %v2247 = vand.u32 %v1528, 4294901760
    %v2248 = vsub.f32 %v1528, %v2247
    %v2249 = vand.u32 %v2248, 4294901760
    %2250 = vmatmul.mubr.f32.gmra.mrb[0].mxu0 %v2249
    %v2251 = vpop.f32.mrb[0].mxu0
    %v2252 = vadd.f32 %v2066, %v2251
    %v2253 = vpop.f32.mrb[0].mxu0
    %2254 = vmatprep.mubr.f32.mxu0 0.0
    %v2255 = vand.u32 %v1531, 4294901760
    %v2256 = vsub.f32 %v1531, %v2255
    %v2257 = vand.u32 %v2256, 4294901760
    %2258 = vmatmul.mubr.f32.gmra.mrb[0].mxu0 %v2257
    %v2259 = vpop.f32.mrb[0].mxu0
    %v2260 = vadd.f32 %v2073, %v2259
    %v2261 = vpop.f32.mrb[0].mxu0
    %2262 = vmatprep.mubr.f32.mxu0 0.0
    %v2263 = vand.u32 %v1534, 4294901760
    %v2264 = vsub.f32 %v1534, %v2263
    %v2265 = vand.u32 %v2264, 4294901760
    %2266 = vmatmul.mubr.f32.gmra.mrb[0].mxu0 %v2265
    %v2267 = vpop.f32.mrb[0].mxu0
    %v2268 = vadd.f32 %v2080, %v2267
    %v2269 = vpop.f32.mrb[0].mxu0
    %2270 = vmatprep.mubr.f32.mxu0 0.0
    %v2271 = vand.u32 %v1537, 4294901760
    %v2272 = vsub.f32 %v1537, %v2271
    %v2273 = vand.u32 %v2272, 4294901760
    %2274 = vmatmul.mubr.f32.gmra.mrb[0].mxu0 %v2273
    %v2275 = vpop.f32.mrb[0].mxu0
    %v2276 = vadd.f32 %v2087, %v2275
    %v2277 = vpop.f32.mrb[0].mxu0
    %2278 = vmatprep.mubr.f32.mxu0 0.0
    %v2279 = vand.u32 %v1540, 4294901760
    %v2280 = vsub.f32 %v1540, %v2279
    %v2281 = vand.u32 %v2280, 4294901760
    %2282 = vmatmul.mubr.f32.gmra.mrb[0].mxu0 %v2281
    %v2283 = vpop.f32.mrb[0].mxu0
    %v2284 = vadd.f32 %v2094, %v2283
    %v2285 = vpop.f32.mrb[0].mxu0
    %2286 = vmatprep.mubr.f32.mxu0 0.0
    %v2287 = vand.u32 %v1543, 4294901760
    %v2288 = vsub.f32 %v1543, %v2287
    %v2289 = vand.u32 %v2288, 4294901760
    %2290 = vmatmul.mubr.f32.gmra.mrb[0].mxu0 %v2289
    %v2291 = vpop.f32.mrb[0].mxu0
    %v2292 = vadd.f32 %v2101, %v2291
    %v2293 = vpop.f32.mrb[0].mxu0
    %2294 = vmatprep.mubr.f32.mxu0 0.0
    %v2295 = vand.u32 %v1546, 4294901760
    %v2296 = vsub.f32 %v1546, %v2295
    %v2297 = vand.u32 %v2296, 4294901760
    %2298 = vmatmul.mubr.f32.gmra.mrb[0].mxu0 %v2297
    %v2299 = vpop.f32.mrb[0].mxu0
    %v2300 = vadd.f32 %v2108, %v2299
    %v2301 = vpop.f32.mrb[0].mxu0
    %2302 = vmatprep.mubr.f32.mxu0 0.0
    %v2303 = vand.u32 %v1549, 4294901760
    %v2304 = vsub.f32 %v1549, %v2303
    %v2305 = vand.u32 %v2304, 4294901760
    %2306 = vmatmul.mubr.f32.gmra.mrb[0].mxu0 %v2305
    %v2307 = vpop.f32.mrb[0].mxu0
    %v2308 = vadd.f32 %v2115, %v2307
    %v2309 = vpop.f32.mrb[0].mxu0
    %2310 = vmatprep.mubr.f32.mxu0 0.0
    %v2311 = vand.u32 %v1552, 4294901760
    %v2312 = vsub.f32 %v1552, %v2311
    %v2313 = vand.u32 %v2312, 4294901760
    %2314 = vmatmul.mubr.f32.gmra.mrb[0].mxu0 %v2313
    %v2315 = vpop.f32.mrb[0].mxu0
    %v2316 = vadd.f32 %v2122, %v2315
    %v2317 = vpop.f32.mrb[0].mxu0
    %2318 = vdwg.mxu0
    %2319 = vmatprep.subr.mxu0 0.0
    %v2320 = vand.u32 %v1502, 4294901760
    %v2321 = vsub.f32 %v1502, %v2320
    %v2322 = vand.u32 %v2321, 4294901760
    %2323 = vmatpush1.msra.mxu0 %v2322
    %2324 = vmatprep.subr.mxu0 0.0
    %2325 = vmatpush1.msra.mxu0 0.0
    %2326 = vmatprep.subr.mxu0 0.0
    %2327 = vmatpush1.msra.mxu0 0.0
    %2328 = vmatprep.subr.mxu0 0.0
    %2329 = vmatpush1.msra.mxu0 0.0
    %2330 = vmatprep.subr.mxu0 0.0
    %2331 = vmatpush1.msra.mxu0 0.0
    %2332 = vmatprep.subr.mxu0 0.0
    %2333 = vmatpush1.msra.mxu0 0.0
    %2334 = vmatprep.subr.mxu0 0.0
    %2335 = vmatpush1.msra.mxu0 0.0
    %2336 = vmatprep.subr.mxu0 0.0
    %2337 = vmatpush1.msra.mxu0 0.0
    %2338 = vmatprep.subr.mxu0 0.0
    %2339 = vmatpush1.msra.mxu0 0.0
    %2340 = vmatprep.subr.mxu0 0.0
    %2341 = vmatpush1.msra.mxu0 0.0
    %2342 = vmatprep.subr.mxu0 0.0
    %2343 = vmatpush1.msra.mxu0 0.0
    %2344 = vmatprep.subr.mxu0 0.0
    %2345 = vmatpush1.msra.mxu0 0.0
    %2346 = vmatprep.subr.mxu0 0.0
    %2347 = vmatpush1.msra.mxu0 0.0
    %2348 = vmatprep.subr.mxu0 0.0
    %2349 = vmatpush1.msra.mxu0 0.0
    %2350 = vmatprep.subr.mxu0 0.0
    %2351 = vmatpush1.msra.mxu0 0.0
    %2352 = vmatprep.subr.mxu0 0.0
    %2353 = vmatpush1.msra.mxu0 0.0
    %2354 = vmatprep.subr.mxu0 0.0
    %2355 = vmatpush1.msra.mxu0 0.0
    %2356 = vmatprep.subr.mxu0 0.0
    %2357 = vmatpush1.msra.mxu0 0.0
    %2358 = vmatprep.subr.mxu0 0.0
    %2359 = vmatpush1.msra.mxu0 0.0
    %2360 = vmatprep.subr.mxu0 0.0
    %2361 = vmatpush1.msra.mxu0 0.0
    %2362 = vmatprep.subr.mxu0 0.0
    %2363 = vmatpush1.msra.mxu0 0.0
    %2364 = vmatprep.subr.mxu0 0.0
    %2365 = vmatpush1.msra.mxu0 0.0
    %2366 = vmatprep.subr.mxu0 0.0
    %2367 = vmatpush1.msra.mxu0 0.0
    %2368 = vmatprep.subr.mxu0 0.0
    %2369 = vmatpush1.msra.mxu0 0.0
    %2370 = vmatprep.subr.mxu0 0.0
    %2371 = vmatpush1.msra.mxu0 0.0
    %2372 = vmatprep.subr.mxu0 0.0
    %2373 = vmatpush1.msra.mxu0 0.0
    %2374 = vmatprep.subr.mxu0 0.0
    %2375 = vmatpush1.msra.mxu0 0.0
    %2376 = vmatprep.subr.mxu0 0.0
    %2377 = vmatpush1.msra.mxu0 0.0
    %2378 = vmatprep.subr.mxu0 0.0
    %2379 = vmatpush1.msra.mxu0 0.0
    %2380 = vmatprep.subr.mxu0 0.0
    %2381 = vmatpush1.msra.mxu0 0.0
    %2382 = vmatprep.subr.mxu0 0.0
    %2383 = vmatpush1.msra.mxu0 0.0
    %2384 = vmatprep.subr.mxu0 0.0
    %2385 = vmatpush1.msra.mxu0 0.0
    %2386 = vmatprep.mubr.f32.mxu0 0.0
    %v2387 = vand.u32 %v1507, 4294901760
    %2388 = vmatmul.mubr.f32.gmra.mrb[0].mxu0 %v2387
    %v2389 = vpop.f32.mrb[0].mxu0
    %v2390 = vadd.f32 %v2196, %v2389
    %v2391 = vpop.f32.mrb[0].mxu0
    %2392 = vmatprep.mubr.f32.mxu0 0.0
    %v2393 = vand.u32 %v1510, 4294901760
    %2394 = vmatmul.mubr.f32.gmra.mrb[0].mxu0 %v2393
    %v2395 = vpop.f32.mrb[0].mxu0
    %v2396 = vadd.f32 %v2204, %v2395
    %v2397 = vpop.f32.mrb[0].mxu0
    %2398 = vmatprep.mubr.f32.mxu0 0.0
    %v2399 = vand.u32 %v1513, 4294901760
    %2400 = vmatmul.mubr.f32.gmra.mrb[0].mxu0 %v2399
    %v2401 = vpop.f32.mrb[0].mxu0
    %v2402 = vadd.f32 %v2212, %v2401
    %v2403 = vpop.f32.mrb[0].mxu0
    %2404 = vmatprep.mubr.f32.mxu0 0.0
    %v2405 = vand.u32 %v1516, 4294901760
    %2406 = vmatmul.mubr.f32.gmra.mrb[0].mxu0 %v2405
    %v2407 = vpop.f32.mrb[0].mxu0
    %v2408 = vadd.f32 %v2220, %v2407
    %v2409 = vpop.f32.mrb[0].mxu0
    %2410 = vmatprep.mubr.f32.mxu0 0.0
    %v2411 = vand.u32 %v1519, 4294901760
    %2412 = vmatmul.mubr.f32.gmra.mrb[0].mxu0 %v2411
    %v2413 = vpop.f32.mrb[0].mxu0
    %v2414 = vadd.f32 %v2228, %v2413
    %v2415 = vpop.f32.mrb[0].mxu0
    %2416 = vmatprep.mubr.f32.mxu0 0.0
    %v2417 = vand.u32 %v1522, 4294901760
    %2418 = vmatmul.mubr.f32.gmra.mrb[0].mxu0 %v2417
    %v2419 = vpop.f32.mrb[0].mxu0
    %v2420 = vadd.f32 %v2236, %v2419
    %v2421 = vpop.f32.mrb[0].mxu0
    %2422 = vmatprep.mubr.f32.mxu0 0.0
    %v2423 = vand.u32 %v1525, 4294901760
    %2424 = vmatmul.mubr.f32.gmra.mrb[0].mxu0 %v2423
    %v2425 = vpop.f32.mrb[0].mxu0
    %v2426 = vadd.f32 %v2244, %v2425
    %v2427 = vpop.f32.mrb[0].mxu0
    %2428 = vmatprep.mubr.f32.mxu0 0.0
    %v2429 = vand.u32 %v1528, 4294901760
    %2430 = vmatmul.mubr.f32.gmra.mrb[0].mxu0 %v2429
    %v2431 = vpop.f32.mrb[0].mxu0
    %v2432 = vadd.f32 %v2252, %v2431
    %v2433 = vpop.f32.mrb[0].mxu0
    %2434 = vmatprep.mubr.f32.mxu0 0.0
    %v2435 = vand.u32 %v1531, 4294901760
    %2436 = vmatmul.mubr.f32.gmra.mrb[0].mxu0 %v2435
    %v2437 = vpop.f32.mrb[0].mxu0
    %v2438 = vadd.f32 %v2260, %v2437
    %v2439 = vpop.f32.mrb[0].mxu0
    %2440 = vmatprep.mubr.f32.mxu0 0.0
    %v2441 = vand.u32 %v1534, 4294901760
    %2442 = vmatmul.mubr.f32.gmra.mrb[0].mxu0 %v2441
    %v2443 = vpop.f32.mrb[0].mxu0
    %v2444 = vadd.f32 %v2268, %v2443
    %v2445 = vpop.f32.mrb[0].mxu0
    %2446 = vmatprep.mubr.f32.mxu0 0.0
    %v2447 = vand.u32 %v1537, 4294901760
    %2448 = vmatmul.mubr.f32.gmra.mrb[0].mxu0 %v2447
    %v2449 = vpop.f32.mrb[0].mxu0
    %v2450 = vadd.f32 %v2276, %v2449
    %v2451 = vpop.f32.mrb[0].mxu0
    %2452 = vmatprep.mubr.f32.mxu0 0.0
    %v2453 = vand.u32 %v1540, 4294901760
    %2454 = vmatmul.mubr.f32.gmra.mrb[0].mxu0 %v2453
    %v2455 = vpop.f32.mrb[0].mxu0
    %v2456 = vadd.f32 %v2284, %v2455
    %v2457 = vpop.f32.mrb[0].mxu0
    %2458 = vmatprep.mubr.f32.mxu0 0.0
    %v2459 = vand.u32 %v1543, 4294901760
    %2460 = vmatmul.mubr.f32.gmra.mrb[0].mxu0 %v2459
    %v2461 = vpop.f32.mrb[0].mxu0
    %v2462 = vadd.f32 %v2292, %v2461
    %v2463 = vpop.f32.mrb[0].mxu0
    %2464 = vmatprep.mubr.f32.mxu0 0.0
    %v2465 = vand.u32 %v1546, 4294901760
    %2466 = vmatmul.mubr.f32.gmra.mrb[0].mxu0 %v2465
    %v2467 = vpop.f32.mrb[0].mxu0
    %v2468 = vadd.f32 %v2300, %v2467
    %v2469 = vpop.f32.mrb[0].mxu0
    %2470 = vmatprep.mubr.f32.mxu0 0.0
    %v2471 = vand.u32 %v1549, 4294901760
    %2472 = vmatmul.mubr.f32.gmra.mrb[0].mxu0 %v2471
    %v2473 = vpop.f32.mrb[0].mxu0
    %v2474 = vadd.f32 %v2308, %v2473
    %v2475 = vpop.f32.mrb[0].mxu0
    %2476 = vmatprep.mubr.f32.mxu0 0.0
    %v2477 = vand.u32 %v1552, 4294901760
    %2478 = vmatmul.mubr.f32.gmra.mrb[0].mxu0 %v2477
    %v2479 = vpop.f32.mrb[0].mxu0
    %v2480 = vadd.f32 %v2316, %v2479
    %v2481 = vpop.f32.mrb[0].mxu0
    %2482 = vdwg.mxu0
    %2483 = vmatprep.subr.mxu0 0.0
    %v2484 = vand.u32 %v1502, 4294901760
    %2485 = vmatpush1.msra.mxu0 %v2484
    %2486 = vmatprep.subr.mxu0 0.0
    %2487 = vmatpush1.msra.mxu0 0.0
    %2488 = vmatprep.subr.mxu0 0.0
    %2489 = vmatpush1.msra.mxu0 0.0
    %2490 = vmatprep.subr.mxu0 0.0
    %2491 = vmatpush1.msra.mxu0 0.0
    %2492 = vmatprep.subr.mxu0 0.0
    %2493 = vmatpush1.msra.mxu0 0.0
    %2494 = vmatprep.subr.mxu0 0.0
    %2495 = vmatpush1.msra.mxu0 0.0
    %2496 = vmatprep.subr.mxu0 0.0
    %2497 = vmatpush1.msra.mxu0 0.0
    %2498 = vmatprep.subr.mxu0 0.0
    %2499 = vmatpush1.msra.mxu0 0.0
    %2500 = vmatprep.subr.mxu0 0.0
    %2501 = vmatpush1.msra.mxu0 0.0
    %2502 = vmatprep.subr.mxu0 0.0
    %2503 = vmatpush1.msra.mxu0 0.0
    %2504 = vmatprep.subr.mxu0 0.0
    %2505 = vmatpush1.msra.mxu0 0.0
    %2506 = vmatprep.subr.mxu0 0.0
    %2507 = vmatpush1.msra.mxu0 0.0
    %2508 = vmatprep.subr.mxu0 0.0
    %2509 = vmatpush1.msra.mxu0 0.0
    %2510 = vmatprep.subr.mxu0 0.0
    %2511 = vmatpush1.msra.mxu0 0.0
    %2512 = vmatprep.subr.mxu0 0.0
    %2513 = vmatpush1.msra.mxu0 0.0
    %2514 = vmatprep.subr.mxu0 0.0
    %2515 = vmatpush1.msra.mxu0 0.0
    %2516 = vmatprep.subr.mxu0 0.0
    %2517 = vmatpush1.msra.mxu0 0.0
    %2518 = vmatprep.subr.mxu0 0.0
    %2519 = vmatpush1.msra.mxu0 0.0
    %2520 = vmatprep.subr.mxu0 0.0
    %2521 = vmatpush1.msra.mxu0 0.0
    %2522 = vmatprep.subr.mxu0 0.0
    %2523 = vmatpush1.msra.mxu0 0.0
    %2524 = vmatprep.subr.mxu0 0.0
    %2525 = vmatpush1.msra.mxu0 0.0
    %2526 = vmatprep.subr.mxu0 0.0
    %2527 = vmatpush1.msra.mxu0 0.0
    %2528 = vmatprep.subr.mxu0 0.0
    %2529 = vmatpush1.msra.mxu0 0.0
    %2530 = vmatprep.subr.mxu0 0.0
    %2531 = vmatpush1.msra.mxu0 0.0
    %2532 = vmatprep.subr.mxu0 0.0
    %2533 = vmatpush1.msra.mxu0 0.0
    %2534 = vmatprep.subr.mxu0 0.0
    %2535 = vmatpush1.msra.mxu0 0.0
    %2536 = vmatprep.subr.mxu0 0.0
    %2537 = vmatpush1.msra.mxu0 0.0
    %2538 = vmatprep.subr.mxu0 0.0
    %2539 = vmatpush1.msra.mxu0 0.0
    %2540 = vmatprep.subr.mxu0 0.0
    %2541 = vmatpush1.msra.mxu0 0.0
    %2542 = vmatprep.subr.mxu0 0.0
    %2543 = vmatpush1.msra.mxu0 0.0
    %2544 = vmatprep.subr.mxu0 0.0
    %2545 = vmatpush1.msra.mxu0 0.0
    %2546 = vmatprep.subr.mxu0 0.0
    %2547 = vmatpush1.msra.mxu0 0.0
    %2548 = vmatprep.mubr.f32.mxu0 0.0
    %v2549 = vand.u32 %v1507, 4294901760
    %2550 = vmatmul.mubr.f32.gmra.mrb[0].mxu0 %v2549
    %v2551 = vpop.f32.mrb[0].mxu0
    %v2552 = vadd.f32 %v2390, %v2551
    %v2553 = vpop.f32.mrb[0].mxu0
    %2554 = vmatprep.mubr.f32.mxu0 0.0
    %v2555 = vand.u32 %v1510, 4294901760
    %2556 = vmatmul.mubr.f32.gmra.mrb[0].mxu0 %v2555
    %v2557 = vpop.f32.mrb[0].mxu0
    %v2558 = vadd.f32 %v2396, %v2557
    %v2559 = vpop.f32.mrb[0].mxu0
    %2560 = vmatprep.mubr.f32.mxu0 0.0
    %v2561 = vand.u32 %v1513, 4294901760
    %2562 = vmatmul.mubr.f32.gmra.mrb[0].mxu0 %v2561
    %v2563 = vpop.f32.mrb[0].mxu0
    %v2564 = vadd.f32 %v2402, %v2563
    %v2565 = vpop.f32.mrb[0].mxu0
    %2566 = vmatprep.mubr.f32.mxu0 0.0
    %v2567 = vand.u32 %v1516, 4294901760
    %2568 = vmatmul.mubr.f32.gmra.mrb[0].mxu0 %v2567
    %v2569 = vpop.f32.mrb[0].mxu0
    %v2570 = vadd.f32 %v2408, %v2569
    %v2571 = vpop.f32.mrb[0].mxu0
    %2572 = vmatprep.mubr.f32.mxu0 0.0
    %v2573 = vand.u32 %v1519, 4294901760
    %2574 = vmatmul.mubr.f32.gmra.mrb[0].mxu0 %v2573
    %v2575 = vpop.f32.mrb[0].mxu0
    %v2576 = vadd.f32 %v2414, %v2575
    %v2577 = vpop.f32.mrb[0].mxu0
    %2578 = vmatprep.mubr.f32.mxu0 0.0
    %v2579 = vand.u32 %v1522, 4294901760
    %2580 = vmatmul.mubr.f32.gmra.mrb[0].mxu0 %v2579
    %v2581 = vpop.f32.mrb[0].mxu0
    %v2582 = vadd.f32 %v2420, %v2581
    %v2583 = vpop.f32.mrb[0].mxu0
    %2584 = vmatprep.mubr.f32.mxu0 0.0
    %v2585 = vand.u32 %v1525, 4294901760
    %2586 = vmatmul.mubr.f32.gmra.mrb[0].mxu0 %v2585
    %v2587 = vpop.f32.mrb[0].mxu0
    %v2588 = vadd.f32 %v2426, %v2587
    %v2589 = vpop.f32.mrb[0].mxu0
    %2590 = vmatprep.mubr.f32.mxu0 0.0
    %v2591 = vand.u32 %v1528, 4294901760
    %2592 = vmatmul.mubr.f32.gmra.mrb[0].mxu0 %v2591
    %v2593 = vpop.f32.mrb[0].mxu0
    %v2594 = vadd.f32 %v2432, %v2593
    %v2595 = vpop.f32.mrb[0].mxu0
    %2596 = vmatprep.mubr.f32.mxu0 0.0
    %v2597 = vand.u32 %v1531, 4294901760
    %2598 = vmatmul.mubr.f32.gmra.mrb[0].mxu0 %v2597
    %v2599 = vpop.f32.mrb[0].mxu0
    %v2600 = vadd.f32 %v2438, %v2599
    %v2601 = vpop.f32.mrb[0].mxu0
    %2602 = vmatprep.mubr.f32.mxu0 0.0
    %v2603 = vand.u32 %v1534, 4294901760
    %2604 = vmatmul.mubr.f32.gmra.mrb[0].mxu0 %v2603
    %v2605 = vpop.f32.mrb[0].mxu0
    %v2606 = vadd.f32 %v2444, %v2605
    %v2607 = vpop.f32.mrb[0].mxu0
    %2608 = vmatprep.mubr.f32.mxu0 0.0
    %v2609 = vand.u32 %v1537, 4294901760
    %2610 = vmatmul.mubr.f32.gmra.mrb[0].mxu0 %v2609
    %v2611 = vpop.f32.mrb[0].mxu0
    %v2612 = vadd.f32 %v2450, %v2611
    %v2613 = vpop.f32.mrb[0].mxu0
    %2614 = vmatprep.mubr.f32.mxu0 0.0
    %v2615 = vand.u32 %v1540, 4294901760
    %2616 = vmatmul.mubr.f32.gmra.mrb[0].mxu0 %v2615
    %v2617 = vpop.f32.mrb[0].mxu0
    %v2618 = vadd.f32 %v2456, %v2617
    %v2619 = vpop.f32.mrb[0].mxu0
    %2620 = vmatprep.mubr.f32.mxu0 0.0
    %v2621 = vand.u32 %v1543, 4294901760
    %2622 = vmatmul.mubr.f32.gmra.mrb[0].mxu0 %v2621
    %v2623 = vpop.f32.mrb[0].mxu0
    %v2624 = vadd.f32 %v2462, %v2623
    %v2625 = vpop.f32.mrb[0].mxu0
    %2626 = vmatprep.mubr.f32.mxu0 0.0
    %v2627 = vand.u32 %v1546, 4294901760
    %2628 = vmatmul.mubr.f32.gmra.mrb[0].mxu0 %v2627
    %v2629 = vpop.f32.mrb[0].mxu0
    %v2630 = vadd.f32 %v2468, %v2629
    %v2631 = vpop.f32.mrb[0].mxu0
    %2632 = vmatprep.mubr.f32.mxu0 0.0
    %v2633 = vand.u32 %v1549, 4294901760
    %2634 = vmatmul.mubr.f32.gmra.mrb[0].mxu0 %v2633
    %v2635 = vpop.f32.mrb[0].mxu0
    %v2636 = vadd.f32 %v2474, %v2635
    %v2637 = vpop.f32.mrb[0].mxu0
    %2638 = vmatprep.mubr.f32.mxu0 0.0
    %v2639 = vand.u32 %v1552, 4294901760
    %2640 = vmatmul.mubr.f32.gmra.mrb[0].mxu0 %v2639
    %v2641 = vpop.f32.mrb[0].mxu0
    %v2642 = vadd.f32 %v2480, %v2641
    %v2643 = vpop.f32.mrb[0].mxu0
    %2644 = vdwg.mxu0
    %vm2645 = vcmask 130048
    %v2647 = vsel %vm2645, %v264, 0
    %v2650 = vsel %vm2645, %v265, 0
    %v2653 = vsel %vm2645, %v266, 0
    %v2656 = vsel %vm2645, %v267, 0
    %v2659 = vsel %vm2645, %v268, 0
    %v2662 = vsel %vm2645, %v269, 0
    %v2665 = vsel %vm2645, %v270, 0
    %v2668 = vsel %vm2645, %v271, 0
    %v2671 = vsel %vm2645, %v272, 0
    %v2674 = vsel %vm2645, %v273, 0
    %v2677 = vsel %vm2645, %v274, 0
    %v2680 = vsel %vm2645, %v275, 0
    %v2683 = vsel %vm2645, %v276, 0
    %v2686 = vsel %vm2645, %v277, 0
    %v2689 = vsel %vm2645, %v278, 0
    %v2692 = vsel %vm2645, %v279, 0
    %2694 = vmatprep.subr.mxu0 0.0
    %v2695 = vand.u32 %v1004, 4294901760
    %2696 = vmatpush1.msra.mxu0 %v2695
    %2697 = vmatprep.subr.mxu0 0.0
    %v2698 = vand.u32 %v1010, 4294901760
    %2699 = vmatpush1.msra.mxu0 %v2698
    %2700 = vmatprep.subr.mxu0 0.0
    %2701 = vmatpush1.msra.mxu0 0.0
    %2702 = vmatprep.subr.mxu0 0.0
    %2703 = vmatpush1.msra.mxu0 0.0
    %2704 = vmatprep.subr.mxu0 0.0
    %2705 = vmatpush1.msra.mxu0 0.0
    %2706 = vmatprep.subr.mxu0 0.0
    %2707 = vmatpush1.msra.mxu0 0.0
    %2708 = vmatprep.subr.mxu0 0.0
    %2709 = vmatpush1.msra.mxu0 0.0
    %2710 = vmatprep.subr.mxu0 0.0
    %2711 = vmatpush1.msra.mxu0 0.0
    %2712 = vmatprep.subr.mxu0 0.0
    %2713 = vmatpush1.msra.mxu0 0.0
    %2714 = vmatprep.subr.mxu0 0.0
    %2715 = vmatpush1.msra.mxu0 0.0
    %2716 = vmatprep.subr.mxu0 0.0
    %2717 = vmatpush1.msra.mxu0 0.0
    %2718 = vmatprep.subr.mxu0 0.0
    %2719 = vmatpush1.msra.mxu0 0.0
    %2720 = vmatprep.subr.mxu0 0.0
    %2721 = vmatpush1.msra.mxu0 0.0
    %2722 = vmatprep.subr.mxu0 0.0
    %2723 = vmatpush1.msra.mxu0 0.0
    %2724 = vmatprep.subr.mxu0 0.0
    %2725 = vmatpush1.msra.mxu0 0.0
    %2726 = vmatprep.subr.mxu0 0.0
    %2727 = vmatpush1.msra.mxu0 0.0
    %2728 = vmatprep.subr.mxu0 0.0
    %2729 = vmatpush1.msra.mxu0 0.0
    %2730 = vmatprep.subr.mxu0 0.0
    %2731 = vmatpush1.msra.mxu0 0.0
    %2732 = vmatprep.subr.mxu0 0.0
    %2733 = vmatpush1.msra.mxu0 0.0
    %2734 = vmatprep.subr.mxu0 0.0
    %2735 = vmatpush1.msra.mxu0 0.0
    %2736 = vmatprep.subr.mxu0 0.0
    %2737 = vmatpush1.msra.mxu0 0.0
    %2738 = vmatprep.subr.mxu0 0.0
    %2739 = vmatpush1.msra.mxu0 0.0
    %2740 = vmatprep.subr.mxu0 0.0
    %2741 = vmatpush1.msra.mxu0 0.0
    %2742 = vmatprep.subr.mxu0 0.0
    %2743 = vmatpush1.msra.mxu0 0.0
    %2744 = vmatprep.subr.mxu0 0.0
    %2745 = vmatpush1.msra.mxu0 0.0
    %2746 = vmatprep.subr.mxu0 0.0
    %2747 = vmatpush1.msra.mxu0 0.0
    %2748 = vmatprep.subr.mxu0 0.0
    %2749 = vmatpush1.msra.mxu0 0.0
    %2750 = vmatprep.subr.mxu0 0.0
    %2751 = vmatpush1.msra.mxu0 0.0
    %2752 = vmatprep.subr.mxu0 0.0
    %2753 = vmatpush1.msra.mxu0 0.0
    %2754 = vmatprep.subr.mxu0 0.0
    %2755 = vmatpush1.msra.mxu0 0.0
    %2756 = vmatprep.subr.mxu0 0.0
    %2757 = vmatpush1.msra.mxu0 0.0
    %2758 = vmatprep.subr.mxu0 0.0
    %2759 = vmatpush1.msra.mxu0 0.0
    %2760 = vmatprep.mubr.f32.mxu0 0.0
    %v2761 = vand.u32 %v2647, 4294901760
    %v2762 = vsub.f32 %v2647, %v2761
    %v2763 = vand.u32 %v2762, 4294901760
    %v2764 = vsub.f32 %v2762, %v2763
    %v2765 = vand.u32 %v2764, 4294901760
    %2766 = vmatmul.mubr.f32.gmra.mrb[0].mxu0 %v2765
    %v2767 = vpop.f32.mrb[0].mxu0
    %v2768 = vadd.f32 %v2552, %v2767
    %v2769 = vpop.f32.mrb[0].mxu0
    %2770 = vmatprep.mubr.f32.mxu0 0.0
    %v2771 = vand.u32 %v2650, 4294901760
    %v2772 = vsub.f32 %v2650, %v2771
    %v2773 = vand.u32 %v2772, 4294901760
    %v2774 = vsub.f32 %v2772, %v2773
    %v2775 = vand.u32 %v2774, 4294901760
    %2776 = vmatmul.mubr.f32.gmra.mrb[0].mxu0 %v2775
    %v2777 = vpop.f32.mrb[0].mxu0
    %v2778 = vadd.f32 %v2558, %v2777
    %v2779 = vpop.f32.mrb[0].mxu0
    %2780 = vmatprep.mubr.f32.mxu0 0.0
    %v2781 = vand.u32 %v2653, 4294901760
    %v2782 = vsub.f32 %v2653, %v2781
    %v2783 = vand.u32 %v2782, 4294901760
    %v2784 = vsub.f32 %v2782, %v2783
    %v2785 = vand.u32 %v2784, 4294901760
    %2786 = vmatmul.mubr.f32.gmra.mrb[0].mxu0 %v2785
    %v2787 = vpop.f32.mrb[0].mxu0
    %v2788 = vadd.f32 %v2564, %v2787
    %v2789 = vpop.f32.mrb[0].mxu0
    %2790 = vmatprep.mubr.f32.mxu0 0.0
    %v2791 = vand.u32 %v2656, 4294901760
    %v2792 = vsub.f32 %v2656, %v2791
    %v2793 = vand.u32 %v2792, 4294901760
    %v2794 = vsub.f32 %v2792, %v2793
    %v2795 = vand.u32 %v2794, 4294901760
    %2796 = vmatmul.mubr.f32.gmra.mrb[0].mxu0 %v2795
    %v2797 = vpop.f32.mrb[0].mxu0
    %v2798 = vadd.f32 %v2570, %v2797
    %v2799 = vpop.f32.mrb[0].mxu0
    %2800 = vmatprep.mubr.f32.mxu0 0.0
    %v2801 = vand.u32 %v2659, 4294901760
    %v2802 = vsub.f32 %v2659, %v2801
    %v2803 = vand.u32 %v2802, 4294901760
    %v2804 = vsub.f32 %v2802, %v2803
    %v2805 = vand.u32 %v2804, 4294901760
    %2806 = vmatmul.mubr.f32.gmra.mrb[0].mxu0 %v2805
    %v2807 = vpop.f32.mrb[0].mxu0
    %v2808 = vadd.f32 %v2576, %v2807
    %v2809 = vpop.f32.mrb[0].mxu0
    %2810 = vmatprep.mubr.f32.mxu0 0.0
    %v2811 = vand.u32 %v2662, 4294901760
    %v2812 = vsub.f32 %v2662, %v2811
    %v2813 = vand.u32 %v2812, 4294901760
    %v2814 = vsub.f32 %v2812, %v2813
    %v2815 = vand.u32 %v2814, 4294901760
    %2816 = vmatmul.mubr.f32.gmra.mrb[0].mxu0 %v2815
    %v2817 = vpop.f32.mrb[0].mxu0
    %v2818 = vadd.f32 %v2582, %v2817
    %v2819 = vpop.f32.mrb[0].mxu0
    %2820 = vmatprep.mubr.f32.mxu0 0.0
    %v2821 = vand.u32 %v2665, 4294901760
    %v2822 = vsub.f32 %v2665, %v2821
    %v2823 = vand.u32 %v2822, 4294901760
    %v2824 = vsub.f32 %v2822, %v2823
    %v2825 = vand.u32 %v2824, 4294901760
    %2826 = vmatmul.mubr.f32.gmra.mrb[0].mxu0 %v2825
    %v2827 = vpop.f32.mrb[0].mxu0
    %v2828 = vadd.f32 %v2588, %v2827
    %v2829 = vpop.f32.mrb[0].mxu0
    %2830 = vmatprep.mubr.f32.mxu0 0.0
    %v2831 = vand.u32 %v2668, 4294901760
    %v2832 = vsub.f32 %v2668, %v2831
    %v2833 = vand.u32 %v2832, 4294901760
    %v2834 = vsub.f32 %v2832, %v2833
    %v2835 = vand.u32 %v2834, 4294901760
    %2836 = vmatmul.mubr.f32.gmra.mrb[0].mxu0 %v2835
    %v2837 = vpop.f32.mrb[0].mxu0
    %v2838 = vadd.f32 %v2594, %v2837
    %v2839 = vpop.f32.mrb[0].mxu0
    %2840 = vmatprep.mubr.f32.mxu0 0.0
    %v2841 = vand.u32 %v2671, 4294901760
    %v2842 = vsub.f32 %v2671, %v2841
    %v2843 = vand.u32 %v2842, 4294901760
    %v2844 = vsub.f32 %v2842, %v2843
    %v2845 = vand.u32 %v2844, 4294901760
    %2846 = vmatmul.mubr.f32.gmra.mrb[0].mxu0 %v2845
    %v2847 = vpop.f32.mrb[0].mxu0
    %v2848 = vadd.f32 %v2600, %v2847
    %v2849 = vpop.f32.mrb[0].mxu0
    %2850 = vmatprep.mubr.f32.mxu0 0.0
    %v2851 = vand.u32 %v2674, 4294901760
    %v2852 = vsub.f32 %v2674, %v2851
    %v2853 = vand.u32 %v2852, 4294901760
    %v2854 = vsub.f32 %v2852, %v2853
    %v2855 = vand.u32 %v2854, 4294901760
    %2856 = vmatmul.mubr.f32.gmra.mrb[0].mxu0 %v2855
    %v2857 = vpop.f32.mrb[0].mxu0
    %v2858 = vadd.f32 %v2606, %v2857
    %v2859 = vpop.f32.mrb[0].mxu0
    %2860 = vmatprep.mubr.f32.mxu0 0.0
    %v2861 = vand.u32 %v2677, 4294901760
    %v2862 = vsub.f32 %v2677, %v2861
    %v2863 = vand.u32 %v2862, 4294901760
    %v2864 = vsub.f32 %v2862, %v2863
    %v2865 = vand.u32 %v2864, 4294901760
    %2866 = vmatmul.mubr.f32.gmra.mrb[0].mxu0 %v2865
    %v2867 = vpop.f32.mrb[0].mxu0
    %v2868 = vadd.f32 %v2612, %v2867
    %v2869 = vpop.f32.mrb[0].mxu0
    %2870 = vmatprep.mubr.f32.mxu0 0.0
    %v2871 = vand.u32 %v2680, 4294901760
    %v2872 = vsub.f32 %v2680, %v2871
    %v2873 = vand.u32 %v2872, 4294901760
    %v2874 = vsub.f32 %v2872, %v2873
    %v2875 = vand.u32 %v2874, 4294901760
    %2876 = vmatmul.mubr.f32.gmra.mrb[0].mxu0 %v2875
    %v2877 = vpop.f32.mrb[0].mxu0
    %v2878 = vadd.f32 %v2618, %v2877
    %v2879 = vpop.f32.mrb[0].mxu0
    %2880 = vmatprep.mubr.f32.mxu0 0.0
    %v2881 = vand.u32 %v2683, 4294901760
    %v2882 = vsub.f32 %v2683, %v2881
    %v2883 = vand.u32 %v2882, 4294901760
    %v2884 = vsub.f32 %v2882, %v2883
    %v2885 = vand.u32 %v2884, 4294901760
    %2886 = vmatmul.mubr.f32.gmra.mrb[0].mxu0 %v2885
    %v2887 = vpop.f32.mrb[0].mxu0
    %v2888 = vadd.f32 %v2624, %v2887
    %v2889 = vpop.f32.mrb[0].mxu0
    %2890 = vmatprep.mubr.f32.mxu0 0.0
    %v2891 = vand.u32 %v2686, 4294901760
    %v2892 = vsub.f32 %v2686, %v2891
    %v2893 = vand.u32 %v2892, 4294901760
    %v2894 = vsub.f32 %v2892, %v2893
    %v2895 = vand.u32 %v2894, 4294901760
    %2896 = vmatmul.mubr.f32.gmra.mrb[0].mxu0 %v2895
    %v2897 = vpop.f32.mrb[0].mxu0
    %v2898 = vadd.f32 %v2630, %v2897
    %v2899 = vpop.f32.mrb[0].mxu0
    %2900 = vmatprep.mubr.f32.mxu0 0.0
    %v2901 = vand.u32 %v2689, 4294901760
    %v2902 = vsub.f32 %v2689, %v2901
    %v2903 = vand.u32 %v2902, 4294901760
    %v2904 = vsub.f32 %v2902, %v2903
    %v2905 = vand.u32 %v2904, 4294901760
    %2906 = vmatmul.mubr.f32.gmra.mrb[0].mxu0 %v2905
    %v2907 = vpop.f32.mrb[0].mxu0
    %v2908 = vadd.f32 %v2636, %v2907
    %v2909 = vpop.f32.mrb[0].mxu0
    %2910 = vmatprep.mubr.f32.mxu0 0.0
    %v2911 = vand.u32 %v2692, 4294901760
    %v2912 = vsub.f32 %v2692, %v2911
    %v2913 = vand.u32 %v2912, 4294901760
    %v2914 = vsub.f32 %v2912, %v2913
    %v2915 = vand.u32 %v2914, 4294901760
    %2916 = vmatmul.mubr.f32.gmra.mrb[0].mxu0 %v2915
    %v2917 = vpop.f32.mrb[0].mxu0
    %v2918 = vadd.f32 %v2642, %v2917
    %v2919 = vpop.f32.mrb[0].mxu0
    %2920 = vdwg.mxu0
    %2921 = vmatprep.subr.mxu0 0.0
    %v2922 = vand.u32 %v1004, 4294901760
    %v2923 = vsub.f32 %v1004, %v2922
    %v2924 = vand.u32 %v2923, 4294901760
    %v2925 = vsub.f32 %v2923, %v2924
    %v2926 = vand.u32 %v2925, 4294901760
    %2927 = vmatpush1.msra.mxu0 %v2926
    %2928 = vmatprep.subr.mxu0 0.0
    %v2929 = vand.u32 %v1010, 4294901760
    %v2930 = vsub.f32 %v1010, %v2929
    %v2931 = vand.u32 %v2930, 4294901760
    %v2932 = vsub.f32 %v2930, %v2931
    %v2933 = vand.u32 %v2932, 4294901760
    %2934 = vmatpush1.msra.mxu0 %v2933
    %2935 = vmatprep.subr.mxu0 0.0
    %2936 = vmatpush1.msra.mxu0 0.0
    %2937 = vmatprep.subr.mxu0 0.0
    %2938 = vmatpush1.msra.mxu0 0.0
    %2939 = vmatprep.subr.mxu0 0.0
    %2940 = vmatpush1.msra.mxu0 0.0
    %2941 = vmatprep.subr.mxu0 0.0
    %2942 = vmatpush1.msra.mxu0 0.0
    %2943 = vmatprep.subr.mxu0 0.0
    %2944 = vmatpush1.msra.mxu0 0.0
    %2945 = vmatprep.subr.mxu0 0.0
    %2946 = vmatpush1.msra.mxu0 0.0
    %2947 = vmatprep.subr.mxu0 0.0
    %2948 = vmatpush1.msra.mxu0 0.0
    %2949 = vmatprep.subr.mxu0 0.0
    %2950 = vmatpush1.msra.mxu0 0.0
    %2951 = vmatprep.subr.mxu0 0.0
    %2952 = vmatpush1.msra.mxu0 0.0
    %2953 = vmatprep.subr.mxu0 0.0
    %2954 = vmatpush1.msra.mxu0 0.0
    %2955 = vmatprep.subr.mxu0 0.0
    %2956 = vmatpush1.msra.mxu0 0.0
    %2957 = vmatprep.subr.mxu0 0.0
    %2958 = vmatpush1.msra.mxu0 0.0
    %2959 = vmatprep.subr.mxu0 0.0
    %2960 = vmatpush1.msra.mxu0 0.0
    %2961 = vmatprep.subr.mxu0 0.0
    %2962 = vmatpush1.msra.mxu0 0.0
    %2963 = vmatprep.subr.mxu0 0.0
    %2964 = vmatpush1.msra.mxu0 0.0
    %2965 = vmatprep.subr.mxu0 0.0
    %2966 = vmatpush1.msra.mxu0 0.0
    %2967 = vmatprep.subr.mxu0 0.0
    %2968 = vmatpush1.msra.mxu0 0.0
    %2969 = vmatprep.subr.mxu0 0.0
    %2970 = vmatpush1.msra.mxu0 0.0
    %2971 = vmatprep.subr.mxu0 0.0
    %2972 = vmatpush1.msra.mxu0 0.0
    %2973 = vmatprep.subr.mxu0 0.0
    %2974 = vmatpush1.msra.mxu0 0.0
    %2975 = vmatprep.subr.mxu0 0.0
    %2976 = vmatpush1.msra.mxu0 0.0
    %2977 = vmatprep.subr.mxu0 0.0
    %2978 = vmatpush1.msra.mxu0 0.0
    %2979 = vmatprep.subr.mxu0 0.0
    %2980 = vmatpush1.msra.mxu0 0.0
    %2981 = vmatprep.subr.mxu0 0.0
    %2982 = vmatpush1.msra.mxu0 0.0
    %2983 = vmatprep.subr.mxu0 0.0
    %2984 = vmatpush1.msra.mxu0 0.0
    %2985 = vmatprep.subr.mxu0 0.0
    %2986 = vmatpush1.msra.mxu0 0.0
    %2987 = vmatprep.subr.mxu0 0.0
    %2988 = vmatpush1.msra.mxu0 0.0
    %2989 = vmatprep.subr.mxu0 0.0
    %2990 = vmatpush1.msra.mxu0 0.0
    %2991 = vmatprep.subr.mxu0 0.0
    %2992 = vmatpush1.msra.mxu0 0.0
    %2993 = vmatprep.subr.mxu0 0.0
    %2994 = vmatpush1.msra.mxu0 0.0
    %2995 = vmatprep.mubr.f32.mxu0 0.0
    %v2996 = vand.u32 %v2647, 4294901760
    %2997 = vmatmul.mubr.f32.gmra.mrb[0].mxu0 %v2996
    %v2998 = vpop.f32.mrb[0].mxu0
    %v2999 = vadd.f32 %v2768, %v2998
    %v3000 = vpop.f32.mrb[0].mxu0
    %3001 = vmatprep.mubr.f32.mxu0 0.0
    %v3002 = vand.u32 %v2650, 4294901760
    %3003 = vmatmul.mubr.f32.gmra.mrb[0].mxu0 %v3002
    %v3004 = vpop.f32.mrb[0].mxu0
    %v3005 = vadd.f32 %v2778, %v3004
    %v3006 = vpop.f32.mrb[0].mxu0
    %3007 = vmatprep.mubr.f32.mxu0 0.0
    %v3008 = vand.u32 %v2653, 4294901760
    %3009 = vmatmul.mubr.f32.gmra.mrb[0].mxu0 %v3008
    %v3010 = vpop.f32.mrb[0].mxu0
    %v3011 = vadd.f32 %v2788, %v3010
    %v3012 = vpop.f32.mrb[0].mxu0
    %3013 = vmatprep.mubr.f32.mxu0 0.0
    %v3014 = vand.u32 %v2656, 4294901760
    %3015 = vmatmul.mubr.f32.gmra.mrb[0].mxu0 %v3014
    %v3016 = vpop.f32.mrb[0].mxu0
    %v3017 = vadd.f32 %v2798, %v3016
    %v3018 = vpop.f32.mrb[0].mxu0
    %3019 = vmatprep.mubr.f32.mxu0 0.0
    %v3020 = vand.u32 %v2659, 4294901760
    %3021 = vmatmul.mubr.f32.gmra.mrb[0].mxu0 %v3020
    %v3022 = vpop.f32.mrb[0].mxu0
    %v3023 = vadd.f32 %v2808, %v3022
    %v3024 = vpop.f32.mrb[0].mxu0
    %3025 = vmatprep.mubr.f32.mxu0 0.0
    %v3026 = vand.u32 %v2662, 4294901760
    %3027 = vmatmul.mubr.f32.gmra.mrb[0].mxu0 %v3026
    %v3028 = vpop.f32.mrb[0].mxu0
    %v3029 = vadd.f32 %v2818, %v3028
    %v3030 = vpop.f32.mrb[0].mxu0
    %3031 = vmatprep.mubr.f32.mxu0 0.0
    %v3032 = vand.u32 %v2665, 4294901760
    %3033 = vmatmul.mubr.f32.gmra.mrb[0].mxu0 %v3032
    %v3034 = vpop.f32.mrb[0].mxu0
    %v3035 = vadd.f32 %v2828, %v3034
    %v3036 = vpop.f32.mrb[0].mxu0
    %3037 = vmatprep.mubr.f32.mxu0 0.0
    %v3038 = vand.u32 %v2668, 4294901760
    %3039 = vmatmul.mubr.f32.gmra.mrb[0].mxu0 %v3038
    %v3040 = vpop.f32.mrb[0].mxu0
    %v3041 = vadd.f32 %v2838, %v3040
    %v3042 = vpop.f32.mrb[0].mxu0
    %3043 = vmatprep.mubr.f32.mxu0 0.0
    %v3044 = vand.u32 %v2671, 4294901760
    %3045 = vmatmul.mubr.f32.gmra.mrb[0].mxu0 %v3044
    %v3046 = vpop.f32.mrb[0].mxu0
    %v3047 = vadd.f32 %v2848, %v3046
    %v3048 = vpop.f32.mrb[0].mxu0
    %3049 = vmatprep.mubr.f32.mxu0 0.0
    %v3050 = vand.u32 %v2674, 4294901760
    %3051 = vmatmul.mubr.f32.gmra.mrb[0].mxu0 %v3050
    %v3052 = vpop.f32.mrb[0].mxu0
    %v3053 = vadd.f32 %v2858, %v3052
    %v3054 = vpop.f32.mrb[0].mxu0
    %3055 = vmatprep.mubr.f32.mxu0 0.0
    %v3056 = vand.u32 %v2677, 4294901760
    %3057 = vmatmul.mubr.f32.gmra.mrb[0].mxu0 %v3056
    %v3058 = vpop.f32.mrb[0].mxu0
    %v3059 = vadd.f32 %v2868, %v3058
    %v3060 = vpop.f32.mrb[0].mxu0
    %3061 = vmatprep.mubr.f32.mxu0 0.0
    %v3062 = vand.u32 %v2680, 4294901760
    %3063 = vmatmul.mubr.f32.gmra.mrb[0].mxu0 %v3062
    %v3064 = vpop.f32.mrb[0].mxu0
    %v3065 = vadd.f32 %v2878, %v3064
    %v3066 = vpop.f32.mrb[0].mxu0
    %3067 = vmatprep.mubr.f32.mxu0 0.0
    %v3068 = vand.u32 %v2683, 4294901760
    %3069 = vmatmul.mubr.f32.gmra.mrb[0].mxu0 %v3068
    %v3070 = vpop.f32.mrb[0].mxu0
    %v3071 = vadd.f32 %v2888, %v3070
    %v3072 = vpop.f32.mrb[0].mxu0
    %3073 = vmatprep.mubr.f32.mxu0 0.0
    %v3074 = vand.u32 %v2686, 4294901760
    %3075 = vmatmul.mubr.f32.gmra.mrb[0].mxu0 %v3074
    %v3076 = vpop.f32.mrb[0].mxu0
    %v3077 = vadd.f32 %v2898, %v3076
    %v3078 = vpop.f32.mrb[0].mxu0
    %3079 = vmatprep.mubr.f32.mxu0 0.0
    %v3080 = vand.u32 %v2689, 4294901760
    %3081 = vmatmul.mubr.f32.gmra.mrb[0].mxu0 %v3080
    %v3082 = vpop.f32.mrb[0].mxu0
    %v3083 = vadd.f32 %v2908, %v3082
    %v3084 = vpop.f32.mrb[0].mxu0
    %3085 = vmatprep.mubr.f32.mxu0 0.0
    %v3086 = vand.u32 %v2692, 4294901760
    %3087 = vmatmul.mubr.f32.gmra.mrb[0].mxu0 %v3086
    %v3088 = vpop.f32.mrb[0].mxu0
    %v3089 = vadd.f32 %v2918, %v3088
    %v3090 = vpop.f32.mrb[0].mxu0
    %3091 = vdwg.mxu0
    %3092 = vmatprep.subr.mxu0 0.0
    %v3093 = vand.u32 %v1004, 4294901760
    %v3094 = vsub.f32 %v1004, %v3093
    %3095 = vmatpush1.msra.mxu0 %v3094
    %3096 = vmatprep.subr.mxu0 0.0
    %v3097 = vand.u32 %v1010, 4294901760
    %v3098 = vsub.f32 %v1010, %v3097
    %3099 = vmatpush1.msra.mxu0 %v3098
    %3100 = vmatprep.subr.mxu0 0.0
    %3101 = vmatpush1.msra.mxu0 0.0
    %3102 = vmatprep.subr.mxu0 0.0
    %3103 = vmatpush1.msra.mxu0 0.0
    %3104 = vmatprep.subr.mxu0 0.0
    %3105 = vmatpush1.msra.mxu0 0.0
    %3106 = vmatprep.subr.mxu0 0.0
    %3107 = vmatpush1.msra.mxu0 0.0
    %3108 = vmatprep.subr.mxu0 0.0
    %3109 = vmatpush1.msra.mxu0 0.0
    %3110 = vmatprep.subr.mxu0 0.0
    %3111 = vmatpush1.msra.mxu0 0.0
    %3112 = vmatprep.subr.mxu0 0.0
    %3113 = vmatpush1.msra.mxu0 0.0
    %3114 = vmatprep.subr.mxu0 0.0
    %3115 = vmatpush1.msra.mxu0 0.0
    %3116 = vmatprep.subr.mxu0 0.0
    %3117 = vmatpush1.msra.mxu0 0.0
    %3118 = vmatprep.subr.mxu0 0.0
    %3119 = vmatpush1.msra.mxu0 0.0
    %3120 = vmatprep.subr.mxu0 0.0
    %3121 = vmatpush1.msra.mxu0 0.0
    %3122 = vmatprep.subr.mxu0 0.0
    %3123 = vmatpush1.msra.mxu0 0.0
    %3124 = vmatprep.subr.mxu0 0.0
    %3125 = vmatpush1.msra.mxu0 0.0
    %3126 = vmatprep.subr.mxu0 0.0
    %3127 = vmatpush1.msra.mxu0 0.0
    %3128 = vmatprep.subr.mxu0 0.0
    %3129 = vmatpush1.msra.mxu0 0.0
    %3130 = vmatprep.subr.mxu0 0.0
    %3131 = vmatpush1.msra.mxu0 0.0
    %3132 = vmatprep.subr.mxu0 0.0
    %3133 = vmatpush1.msra.mxu0 0.0
    %3134 = vmatprep.subr.mxu0 0.0
    %3135 = vmatpush1.msra.mxu0 0.0
    %3136 = vmatprep.subr.mxu0 0.0
    %3137 = vmatpush1.msra.mxu0 0.0
    %3138 = vmatprep.subr.mxu0 0.0
    %3139 = vmatpush1.msra.mxu0 0.0
    %3140 = vmatprep.subr.mxu0 0.0
    %3141 = vmatpush1.msra.mxu0 0.0
    %3142 = vmatprep.subr.mxu0 0.0
    %3143 = vmatpush1.msra.mxu0 0.0
    %3144 = vmatprep.subr.mxu0 0.0
    %3145 = vmatpush1.msra.mxu0 0.0
    %3146 = vmatprep.subr.mxu0 0.0
    %3147 = vmatpush1.msra.mxu0 0.0
    %3148 = vmatprep.subr.mxu0 0.0
    %3149 = vmatpush1.msra.mxu0 0.0
    %3150 = vmatprep.subr.mxu0 0.0
    %3151 = vmatpush1.msra.mxu0 0.0
    %3152 = vmatprep.subr.mxu0 0.0
    %3153 = vmatpush1.msra.mxu0 0.0
    %3154 = vmatprep.subr.mxu0 0.0
    %3155 = vmatpush1.msra.mxu0 0.0
    %3156 = vmatprep.subr.mxu0 0.0
    %3157 = vmatpush1.msra.mxu0 0.0
    %3158 = vmatprep.subr.mxu0 0.0
    %3159 = vmatpush1.msra.mxu0 0.0
    %3160 = vmatprep.mubr.f32.mxu0 0.0
    %v3161 = vand.u32 %v2647, 4294901760
    %v3162 = vsub.f32 %v2647, %v3161
    %3163 = vmatmul.mubr.f32.gmra.mrb[0].mxu0 %v3162
    %v3164 = vpop.f32.mrb[0].mxu0
    %v3165 = vadd.f32 %v2999, %v3164
    %v3166 = vpop.f32.mrb[0].mxu0
    %3167 = vmatprep.mubr.f32.mxu0 0.0
    %v3168 = vand.u32 %v2650, 4294901760
    %v3169 = vsub.f32 %v2650, %v3168
    %3170 = vmatmul.mubr.f32.gmra.mrb[0].mxu0 %v3169
    %v3171 = vpop.f32.mrb[0].mxu0
    %v3172 = vadd.f32 %v3005, %v3171
    %v3173 = vpop.f32.mrb[0].mxu0
    %3174 = vmatprep.mubr.f32.mxu0 0.0
    %v3175 = vand.u32 %v2653, 4294901760
    %v3176 = vsub.f32 %v2653, %v3175
    %3177 = vmatmul.mubr.f32.gmra.mrb[0].mxu0 %v3176
    %v3178 = vpop.f32.mrb[0].mxu0
    %v3179 = vadd.f32 %v3011, %v3178
    %v3180 = vpop.f32.mrb[0].mxu0
    %3181 = vmatprep.mubr.f32.mxu0 0.0
    %v3182 = vand.u32 %v2656, 4294901760
    %v3183 = vsub.f32 %v2656, %v3182
    %3184 = vmatmul.mubr.f32.gmra.mrb[0].mxu0 %v3183
    %v3185 = vpop.f32.mrb[0].mxu0
    %v3186 = vadd.f32 %v3017, %v3185
    %v3187 = vpop.f32.mrb[0].mxu0
    %3188 = vmatprep.mubr.f32.mxu0 0.0
    %v3189 = vand.u32 %v2659, 4294901760
    %v3190 = vsub.f32 %v2659, %v3189
    %3191 = vmatmul.mubr.f32.gmra.mrb[0].mxu0 %v3190
    %v3192 = vpop.f32.mrb[0].mxu0
    %v3193 = vadd.f32 %v3023, %v3192
    %v3194 = vpop.f32.mrb[0].mxu0
    %3195 = vmatprep.mubr.f32.mxu0 0.0
    %v3196 = vand.u32 %v2662, 4294901760
    %v3197 = vsub.f32 %v2662, %v3196
    %3198 = vmatmul.mubr.f32.gmra.mrb[0].mxu0 %v3197
    %v3199 = vpop.f32.mrb[0].mxu0
    %v3200 = vadd.f32 %v3029, %v3199
    %v3201 = vpop.f32.mrb[0].mxu0
    %3202 = vmatprep.mubr.f32.mxu0 0.0
    %v3203 = vand.u32 %v2665, 4294901760
    %v3204 = vsub.f32 %v2665, %v3203
    %3205 = vmatmul.mubr.f32.gmra.mrb[0].mxu0 %v3204
    %v3206 = vpop.f32.mrb[0].mxu0
    %v3207 = vadd.f32 %v3035, %v3206
    %v3208 = vpop.f32.mrb[0].mxu0
    %3209 = vmatprep.mubr.f32.mxu0 0.0
    %v3210 = vand.u32 %v2668, 4294901760
    %v3211 = vsub.f32 %v2668, %v3210
    %3212 = vmatmul.mubr.f32.gmra.mrb[0].mxu0 %v3211
    %v3213 = vpop.f32.mrb[0].mxu0
    %v3214 = vadd.f32 %v3041, %v3213
    %v3215 = vpop.f32.mrb[0].mxu0
    %3216 = vmatprep.mubr.f32.mxu0 0.0
    %v3217 = vand.u32 %v2671, 4294901760
    %v3218 = vsub.f32 %v2671, %v3217
    %3219 = vmatmul.mubr.f32.gmra.mrb[0].mxu0 %v3218
    %v3220 = vpop.f32.mrb[0].mxu0
    %v3221 = vadd.f32 %v3047, %v3220
    %v3222 = vpop.f32.mrb[0].mxu0
    %3223 = vmatprep.mubr.f32.mxu0 0.0
    %v3224 = vand.u32 %v2674, 4294901760
    %v3225 = vsub.f32 %v2674, %v3224
    %3226 = vmatmul.mubr.f32.gmra.mrb[0].mxu0 %v3225
    %v3227 = vpop.f32.mrb[0].mxu0
    %v3228 = vadd.f32 %v3053, %v3227
    %v3229 = vpop.f32.mrb[0].mxu0
    %3230 = vmatprep.mubr.f32.mxu0 0.0
    %v3231 = vand.u32 %v2677, 4294901760
    %v3232 = vsub.f32 %v2677, %v3231
    %3233 = vmatmul.mubr.f32.gmra.mrb[0].mxu0 %v3232
    %v3234 = vpop.f32.mrb[0].mxu0
    %v3235 = vadd.f32 %v3059, %v3234
    %v3236 = vpop.f32.mrb[0].mxu0
    %3237 = vmatprep.mubr.f32.mxu0 0.0
    %v3238 = vand.u32 %v2680, 4294901760
    %v3239 = vsub.f32 %v2680, %v3238
    %3240 = vmatmul.mubr.f32.gmra.mrb[0].mxu0 %v3239
    %v3241 = vpop.f32.mrb[0].mxu0
    %v3242 = vadd.f32 %v3065, %v3241
    %v3243 = vpop.f32.mrb[0].mxu0
    %3244 = vmatprep.mubr.f32.mxu0 0.0
    %v3245 = vand.u32 %v2683, 4294901760
    %v3246 = vsub.f32 %v2683, %v3245
    %3247 = vmatmul.mubr.f32.gmra.mrb[0].mxu0 %v3246
    %v3248 = vpop.f32.mrb[0].mxu0
    %v3249 = vadd.f32 %v3071, %v3248
    %v3250 = vpop.f32.mrb[0].mxu0
    %3251 = vmatprep.mubr.f32.mxu0 0.0
    %v3252 = vand.u32 %v2686, 4294901760
    %v3253 = vsub.f32 %v2686, %v3252
    %3254 = vmatmul.mubr.f32.gmra.mrb[0].mxu0 %v3253
    %v3255 = vpop.f32.mrb[0].mxu0
    %v3256 = vadd.f32 %v3077, %v3255
    %v3257 = vpop.f32.mrb[0].mxu0
    %3258 = vmatprep.mubr.f32.mxu0 0.0
    %v3259 = vand.u32 %v2689, 4294901760
    %v3260 = vsub.f32 %v2689, %v3259
    %3261 = vmatmul.mubr.f32.gmra.mrb[0].mxu0 %v3260
    %v3262 = vpop.f32.mrb[0].mxu0
    %v3263 = vadd.f32 %v3083, %v3262
    %v3264 = vpop.f32.mrb[0].mxu0
    %3265 = vmatprep.mubr.f32.mxu0 0.0
    %v3266 = vand.u32 %v2692, 4294901760
    %v3267 = vsub.f32 %v2692, %v3266
    %3268 = vmatmul.mubr.f32.gmra.mrb[0].mxu0 %v3267
    %v3269 = vpop.f32.mrb[0].mxu0
    %v3270 = vadd.f32 %v3089, %v3269
    %v3271 = vpop.f32.mrb[0].mxu0
    %3272 = vdwg.mxu0
    %3273 = vmatprep.subr.mxu0 0.0
    %v3274 = vand.u32 %v1004, 4294901760
    %3275 = vmatpush1.msra.mxu0 %v3274
    %3276 = vmatprep.subr.mxu0 0.0
    %v3277 = vand.u32 %v1010, 4294901760
    %3278 = vmatpush1.msra.mxu0 %v3277
    %3279 = vmatprep.subr.mxu0 0.0
    %3280 = vmatpush1.msra.mxu0 0.0
    %3281 = vmatprep.subr.mxu0 0.0
    %3282 = vmatpush1.msra.mxu0 0.0
    %3283 = vmatprep.subr.mxu0 0.0
    %3284 = vmatpush1.msra.mxu0 0.0
    %3285 = vmatprep.subr.mxu0 0.0
    %3286 = vmatpush1.msra.mxu0 0.0
    %3287 = vmatprep.subr.mxu0 0.0
    %3288 = vmatpush1.msra.mxu0 0.0
    %3289 = vmatprep.subr.mxu0 0.0
    %3290 = vmatpush1.msra.mxu0 0.0
    %3291 = vmatprep.subr.mxu0 0.0
    %3292 = vmatpush1.msra.mxu0 0.0
    %3293 = vmatprep.subr.mxu0 0.0
    %3294 = vmatpush1.msra.mxu0 0.0
    %3295 = vmatprep.subr.mxu0 0.0
    %3296 = vmatpush1.msra.mxu0 0.0
    %3297 = vmatprep.subr.mxu0 0.0
    %3298 = vmatpush1.msra.mxu0 0.0
    %3299 = vmatprep.subr.mxu0 0.0
    %3300 = vmatpush1.msra.mxu0 0.0
    %3301 = vmatprep.subr.mxu0 0.0
    %3302 = vmatpush1.msra.mxu0 0.0
    %3303 = vmatprep.subr.mxu0 0.0
    %3304 = vmatpush1.msra.mxu0 0.0
    %3305 = vmatprep.subr.mxu0 0.0
    %3306 = vmatpush1.msra.mxu0 0.0
    %3307 = vmatprep.subr.mxu0 0.0
    %3308 = vmatpush1.msra.mxu0 0.0
    %3309 = vmatprep.subr.mxu0 0.0
    %3310 = vmatpush1.msra.mxu0 0.0
    %3311 = vmatprep.subr.mxu0 0.0
    %3312 = vmatpush1.msra.mxu0 0.0
    %3313 = vmatprep.subr.mxu0 0.0
    %3314 = vmatpush1.msra.mxu0 0.0
    %3315 = vmatprep.subr.mxu0 0.0
    %3316 = vmatpush1.msra.mxu0 0.0
    %3317 = vmatprep.subr.mxu0 0.0
    %3318 = vmatpush1.msra.mxu0 0.0
    %3319 = vmatprep.subr.mxu0 0.0
    %3320 = vmatpush1.msra.mxu0 0.0
    %3321 = vmatprep.subr.mxu0 0.0
    %3322 = vmatpush1.msra.mxu0 0.0
    %3323 = vmatprep.subr.mxu0 0.0
    %3324 = vmatpush1.msra.mxu0 0.0
    %3325 = vmatprep.subr.mxu0 0.0
    %3326 = vmatpush1.msra.mxu0 0.0
    %3327 = vmatprep.subr.mxu0 0.0
    %3328 = vmatpush1.msra.mxu0 0.0
    %3329 = vmatprep.subr.mxu0 0.0
    %3330 = vmatpush1.msra.mxu0 0.0
    %3331 = vmatprep.subr.mxu0 0.0
    %3332 = vmatpush1.msra.mxu0 0.0
    %3333 = vmatprep.subr.mxu0 0.0
    %3334 = vmatpush1.msra.mxu0 0.0
    %3335 = vmatprep.subr.mxu0 0.0
    %3336 = vmatpush1.msra.mxu0 0.0
    %3337 = vmatprep.subr.mxu0 0.0
    %3338 = vmatpush1.msra.mxu0 0.0
    %3339 = vmatprep.mubr.f32.mxu0 0.0
    %v3340 = vand.u32 %v2647, 4294901760
    %v3341 = vsub.f32 %v2647, %v3340
    %v3342 = vand.u32 %v3341, 4294901760
    %3343 = vmatmul.mubr.f32.gmra.mrb[0].mxu0 %v3342
    %v3344 = vpop.f32.mrb[0].mxu0
    %v3345 = vadd.f32 %v3165, %v3344
    %v3346 = vpop.f32.mrb[0].mxu0
    %3347 = vmatprep.mubr.f32.mxu0 0.0
    %v3348 = vand.u32 %v2650, 4294901760
    %v3349 = vsub.f32 %v2650, %v3348
    %v3350 = vand.u32 %v3349, 4294901760
    %3351 = vmatmul.mubr.f32.gmra.mrb[0].mxu0 %v3350
    %v3352 = vpop.f32.mrb[0].mxu0
    %v3353 = vadd.f32 %v3172, %v3352
    %v3354 = vpop.f32.mrb[0].mxu0
    %3355 = vmatprep.mubr.f32.mxu0 0.0
    %v3356 = vand.u32 %v2653, 4294901760
    %v3357 = vsub.f32 %v2653, %v3356
    %v3358 = vand.u32 %v3357, 4294901760
    %3359 = vmatmul.mubr.f32.gmra.mrb[0].mxu0 %v3358
    %v3360 = vpop.f32.mrb[0].mxu0
    %v3361 = vadd.f32 %v3179, %v3360
    %v3362 = vpop.f32.mrb[0].mxu0
    %3363 = vmatprep.mubr.f32.mxu0 0.0
    %v3364 = vand.u32 %v2656, 4294901760
    %v3365 = vsub.f32 %v2656, %v3364
    %v3366 = vand.u32 %v3365, 4294901760
    %3367 = vmatmul.mubr.f32.gmra.mrb[0].mxu0 %v3366
    %v3368 = vpop.f32.mrb[0].mxu0
    %v3369 = vadd.f32 %v3186, %v3368
    %v3370 = vpop.f32.mrb[0].mxu0
    %3371 = vmatprep.mubr.f32.mxu0 0.0
    %v3372 = vand.u32 %v2659, 4294901760
    %v3373 = vsub.f32 %v2659, %v3372
    %v3374 = vand.u32 %v3373, 4294901760
    %3375 = vmatmul.mubr.f32.gmra.mrb[0].mxu0 %v3374
    %v3376 = vpop.f32.mrb[0].mxu0
    %v3377 = vadd.f32 %v3193, %v3376
    %v3378 = vpop.f32.mrb[0].mxu0
    %3379 = vmatprep.mubr.f32.mxu0 0.0
    %v3380 = vand.u32 %v2662, 4294901760
    %v3381 = vsub.f32 %v2662, %v3380
    %v3382 = vand.u32 %v3381, 4294901760
    %3383 = vmatmul.mubr.f32.gmra.mrb[0].mxu0 %v3382
    %v3384 = vpop.f32.mrb[0].mxu0
    %v3385 = vadd.f32 %v3200, %v3384
    %v3386 = vpop.f32.mrb[0].mxu0
    %3387 = vmatprep.mubr.f32.mxu0 0.0
    %v3388 = vand.u32 %v2665, 4294901760
    %v3389 = vsub.f32 %v2665, %v3388
    %v3390 = vand.u32 %v3389, 4294901760
    %3391 = vmatmul.mubr.f32.gmra.mrb[0].mxu0 %v3390
    %v3392 = vpop.f32.mrb[0].mxu0
    %v3393 = vadd.f32 %v3207, %v3392
    %v3394 = vpop.f32.mrb[0].mxu0
    %3395 = vmatprep.mubr.f32.mxu0 0.0
    %v3396 = vand.u32 %v2668, 4294901760
    %v3397 = vsub.f32 %v2668, %v3396
    %v3398 = vand.u32 %v3397, 4294901760
    %3399 = vmatmul.mubr.f32.gmra.mrb[0].mxu0 %v3398
    %v3400 = vpop.f32.mrb[0].mxu0
    %v3401 = vadd.f32 %v3214, %v3400
    %v3402 = vpop.f32.mrb[0].mxu0
    %3403 = vmatprep.mubr.f32.mxu0 0.0
    %v3404 = vand.u32 %v2671, 4294901760
    %v3405 = vsub.f32 %v2671, %v3404
    %v3406 = vand.u32 %v3405, 4294901760
    %3407 = vmatmul.mubr.f32.gmra.mrb[0].mxu0 %v3406
    %v3408 = vpop.f32.mrb[0].mxu0
    %v3409 = vadd.f32 %v3221, %v3408
    %v3410 = vpop.f32.mrb[0].mxu0
    %3411 = vmatprep.mubr.f32.mxu0 0.0
    %v3412 = vand.u32 %v2674, 4294901760
    %v3413 = vsub.f32 %v2674, %v3412
    %v3414 = vand.u32 %v3413, 4294901760
    %3415 = vmatmul.mubr.f32.gmra.mrb[0].mxu0 %v3414
    %v3416 = vpop.f32.mrb[0].mxu0
    %v3417 = vadd.f32 %v3228, %v3416
    %v3418 = vpop.f32.mrb[0].mxu0
    %3419 = vmatprep.mubr.f32.mxu0 0.0
    %v3420 = vand.u32 %v2677, 4294901760
    %v3421 = vsub.f32 %v2677, %v3420
    %v3422 = vand.u32 %v3421, 4294901760
    %3423 = vmatmul.mubr.f32.gmra.mrb[0].mxu0 %v3422
    %v3424 = vpop.f32.mrb[0].mxu0
    %v3425 = vadd.f32 %v3235, %v3424
    %v3426 = vpop.f32.mrb[0].mxu0
    %3427 = vmatprep.mubr.f32.mxu0 0.0
    %v3428 = vand.u32 %v2680, 4294901760
    %v3429 = vsub.f32 %v2680, %v3428
    %v3430 = vand.u32 %v3429, 4294901760
    %3431 = vmatmul.mubr.f32.gmra.mrb[0].mxu0 %v3430
    %v3432 = vpop.f32.mrb[0].mxu0
    %v3433 = vadd.f32 %v3242, %v3432
    %v3434 = vpop.f32.mrb[0].mxu0
    %3435 = vmatprep.mubr.f32.mxu0 0.0
    %v3436 = vand.u32 %v2683, 4294901760
    %v3437 = vsub.f32 %v2683, %v3436
    %v3438 = vand.u32 %v3437, 4294901760
    %3439 = vmatmul.mubr.f32.gmra.mrb[0].mxu0 %v3438
    %v3440 = vpop.f32.mrb[0].mxu0
    %v3441 = vadd.f32 %v3249, %v3440
    %v3442 = vpop.f32.mrb[0].mxu0
    %3443 = vmatprep.mubr.f32.mxu0 0.0
    %v3444 = vand.u32 %v2686, 4294901760
    %v3445 = vsub.f32 %v2686, %v3444
    %v3446 = vand.u32 %v3445, 4294901760
    %3447 = vmatmul.mubr.f32.gmra.mrb[0].mxu0 %v3446
    %v3448 = vpop.f32.mrb[0].mxu0
    %v3449 = vadd.f32 %v3256, %v3448
    %v3450 = vpop.f32.mrb[0].mxu0
    %3451 = vmatprep.mubr.f32.mxu0 0.0
    %v3452 = vand.u32 %v2689, 4294901760
    %v3453 = vsub.f32 %v2689, %v3452
    %v3454 = vand.u32 %v3453, 4294901760
    %3455 = vmatmul.mubr.f32.gmra.mrb[0].mxu0 %v3454
    %v3456 = vpop.f32.mrb[0].mxu0
    %v3457 = vadd.f32 %v3263, %v3456
    %v3458 = vpop.f32.mrb[0].mxu0
    %3459 = vmatprep.mubr.f32.mxu0 0.0
    %v3460 = vand.u32 %v2692, 4294901760
    %v3461 = vsub.f32 %v2692, %v3460
    %v3462 = vand.u32 %v3461, 4294901760
    %3463 = vmatmul.mubr.f32.gmra.mrb[0].mxu0 %v3462
    %v3464 = vpop.f32.mrb[0].mxu0
    %v3465 = vadd.f32 %v3270, %v3464
    %v3466 = vpop.f32.mrb[0].mxu0
    %3467 = vdwg.mxu0
    %3468 = vmatprep.subr.mxu0 0.0
    %v3469 = vand.u32 %v1004, 4294901760
    %v3470 = vsub.f32 %v1004, %v3469
    %v3471 = vand.u32 %v3470, 4294901760
    %3472 = vmatpush1.msra.mxu0 %v3471
    %3473 = vmatprep.subr.mxu0 0.0
    %v3474 = vand.u32 %v1010, 4294901760
    %v3475 = vsub.f32 %v1010, %v3474
    %v3476 = vand.u32 %v3475, 4294901760
    %3477 = vmatpush1.msra.mxu0 %v3476
    %3478 = vmatprep.subr.mxu0 0.0
    %3479 = vmatpush1.msra.mxu0 0.0
    %3480 = vmatprep.subr.mxu0 0.0
    %3481 = vmatpush1.msra.mxu0 0.0
    %3482 = vmatprep.subr.mxu0 0.0
    %3483 = vmatpush1.msra.mxu0 0.0
    %3484 = vmatprep.subr.mxu0 0.0
    %3485 = vmatpush1.msra.mxu0 0.0
    %3486 = vmatprep.subr.mxu0 0.0
    %3487 = vmatpush1.msra.mxu0 0.0
    %3488 = vmatprep.subr.mxu0 0.0
    %3489 = vmatpush1.msra.mxu0 0.0
    %3490 = vmatprep.subr.mxu0 0.0
    %3491 = vmatpush1.msra.mxu0 0.0
    %3492 = vmatprep.subr.mxu0 0.0
    %3493 = vmatpush1.msra.mxu0 0.0
    %3494 = vmatprep.subr.mxu0 0.0
    %3495 = vmatpush1.msra.mxu0 0.0
    %3496 = vmatprep.subr.mxu0 0.0
    %3497 = vmatpush1.msra.mxu0 0.0
    %3498 = vmatprep.subr.mxu0 0.0
    %3499 = vmatpush1.msra.mxu0 0.0
    %3500 = vmatprep.subr.mxu0 0.0
    %3501 = vmatpush1.msra.mxu0 0.0
    %3502 = vmatprep.subr.mxu0 0.0
    %3503 = vmatpush1.msra.mxu0 0.0
    %3504 = vmatprep.subr.mxu0 0.0
    %3505 = vmatpush1.msra.mxu0 0.0
    %3506 = vmatprep.subr.mxu0 0.0
    %3507 = vmatpush1.msra.mxu0 0.0
    %3508 = vmatprep.subr.mxu0 0.0
    %3509 = vmatpush1.msra.mxu0 0.0
    %3510 = vmatprep.subr.mxu0 0.0
    %3511 = vmatpush1.msra.mxu0 0.0
    %3512 = vmatprep.subr.mxu0 0.0
    %3513 = vmatpush1.msra.mxu0 0.0
    %3514 = vmatprep.subr.mxu0 0.0
    %3515 = vmatpush1.msra.mxu0 0.0
    %3516 = vmatprep.subr.mxu0 0.0
    %3517 = vmatpush1.msra.mxu0 0.0
    %3518 = vmatprep.subr.mxu0 0.0
    %3519 = vmatpush1.msra.mxu0 0.0
    %3520 = vmatprep.subr.mxu0 0.0
    %3521 = vmatpush1.msra.mxu0 0.0
    %3522 = vmatprep.subr.mxu0 0.0
    %3523 = vmatpush1.msra.mxu0 0.0
    %3524 = vmatprep.subr.mxu0 0.0
    %3525 = vmatpush1.msra.mxu0 0.0
    %3526 = vmatprep.subr.mxu0 0.0
    %3527 = vmatpush1.msra.mxu0 0.0
    %3528 = vmatprep.subr.mxu0 0.0
    %3529 = vmatpush1.msra.mxu0 0.0
    %3530 = vmatprep.subr.mxu0 0.0
    %3531 = vmatpush1.msra.mxu0 0.0
    %3532 = vmatprep.subr.mxu0 0.0
    %3533 = vmatpush1.msra.mxu0 0.0
    %3534 = vmatprep.subr.mxu0 0.0
    %3535 = vmatpush1.msra.mxu0 0.0
    %3536 = vmatprep.subr.mxu0 0.0
    %3537 = vmatpush1.msra.mxu0 0.0
    %3538 = vmatprep.mubr.f32.mxu0 0.0
    %v3539 = vand.u32 %v2647, 4294901760
    %3540 = vmatmul.mubr.f32.gmra.mrb[0].mxu0 %v3539
    %v3541 = vpop.f32.mrb[0].mxu0
    %v3542 = vadd.f32 %v3345, %v3541
    %v3543 = vpop.f32.mrb[0].mxu0
    %3544 = vmatprep.mubr.f32.mxu0 0.0
    %v3545 = vand.u32 %v2650, 4294901760
    %3546 = vmatmul.mubr.f32.gmra.mrb[0].mxu0 %v3545
    %v3547 = vpop.f32.mrb[0].mxu0
    %v3548 = vadd.f32 %v3353, %v3547
    %v3549 = vpop.f32.mrb[0].mxu0
    %3550 = vmatprep.mubr.f32.mxu0 0.0
    %v3551 = vand.u32 %v2653, 4294901760
    %3552 = vmatmul.mubr.f32.gmra.mrb[0].mxu0 %v3551
    %v3553 = vpop.f32.mrb[0].mxu0
    %v3554 = vadd.f32 %v3361, %v3553
    %v3555 = vpop.f32.mrb[0].mxu0
    %3556 = vmatprep.mubr.f32.mxu0 0.0
    %v3557 = vand.u32 %v2656, 4294901760
    %3558 = vmatmul.mubr.f32.gmra.mrb[0].mxu0 %v3557
    %v3559 = vpop.f32.mrb[0].mxu0
    %v3560 = vadd.f32 %v3369, %v3559
    %v3561 = vpop.f32.mrb[0].mxu0
    %3562 = vmatprep.mubr.f32.mxu0 0.0
    %v3563 = vand.u32 %v2659, 4294901760
    %3564 = vmatmul.mubr.f32.gmra.mrb[0].mxu0 %v3563
    %v3565 = vpop.f32.mrb[0].mxu0
    %v3566 = vadd.f32 %v3377, %v3565
    %v3567 = vpop.f32.mrb[0].mxu0
    %3568 = vmatprep.mubr.f32.mxu0 0.0
    %v3569 = vand.u32 %v2662, 4294901760
    %3570 = vmatmul.mubr.f32.gmra.mrb[0].mxu0 %v3569
    %v3571 = vpop.f32.mrb[0].mxu0
    %v3572 = vadd.f32 %v3385, %v3571
    %v3573 = vpop.f32.mrb[0].mxu0
    %3574 = vmatprep.mubr.f32.mxu0 0.0
    %v3575 = vand.u32 %v2665, 4294901760
    %3576 = vmatmul.mubr.f32.gmra.mrb[0].mxu0 %v3575
    %v3577 = vpop.f32.mrb[0].mxu0
    %v3578 = vadd.f32 %v3393, %v3577
    %v3579 = vpop.f32.mrb[0].mxu0
    %3580 = vmatprep.mubr.f32.mxu0 0.0
    %v3581 = vand.u32 %v2668, 4294901760
    %3582 = vmatmul.mubr.f32.gmra.mrb[0].mxu0 %v3581
    %v3583 = vpop.f32.mrb[0].mxu0
    %v3584 = vadd.f32 %v3401, %v3583
    %v3585 = vpop.f32.mrb[0].mxu0
    %3586 = vmatprep.mubr.f32.mxu0 0.0
    %v3587 = vand.u32 %v2671, 4294901760
    %3588 = vmatmul.mubr.f32.gmra.mrb[0].mxu0 %v3587
    %v3589 = vpop.f32.mrb[0].mxu0
    %v3590 = vadd.f32 %v3409, %v3589
    %v3591 = vpop.f32.mrb[0].mxu0
    %3592 = vmatprep.mubr.f32.mxu0 0.0
    %v3593 = vand.u32 %v2674, 4294901760
    %3594 = vmatmul.mubr.f32.gmra.mrb[0].mxu0 %v3593
    %v3595 = vpop.f32.mrb[0].mxu0
    %v3596 = vadd.f32 %v3417, %v3595
    %v3597 = vpop.f32.mrb[0].mxu0
    %3598 = vmatprep.mubr.f32.mxu0 0.0
    %v3599 = vand.u32 %v2677, 4294901760
    %3600 = vmatmul.mubr.f32.gmra.mrb[0].mxu0 %v3599
    %v3601 = vpop.f32.mrb[0].mxu0
    %v3602 = vadd.f32 %v3425, %v3601
    %v3603 = vpop.f32.mrb[0].mxu0
    %3604 = vmatprep.mubr.f32.mxu0 0.0
    %v3605 = vand.u32 %v2680, 4294901760
    %3606 = vmatmul.mubr.f32.gmra.mrb[0].mxu0 %v3605
    %v3607 = vpop.f32.mrb[0].mxu0
    %v3608 = vadd.f32 %v3433, %v3607
    %v3609 = vpop.f32.mrb[0].mxu0
    %3610 = vmatprep.mubr.f32.mxu0 0.0
    %v3611 = vand.u32 %v2683, 4294901760
    %3612 = vmatmul.mubr.f32.gmra.mrb[0].mxu0 %v3611
    %v3613 = vpop.f32.mrb[0].mxu0
    %v3614 = vadd.f32 %v3441, %v3613
    %v3615 = vpop.f32.mrb[0].mxu0
    %3616 = vmatprep.mubr.f32.mxu0 0.0
    %v3617 = vand.u32 %v2686, 4294901760
    %3618 = vmatmul.mubr.f32.gmra.mrb[0].mxu0 %v3617
    %v3619 = vpop.f32.mrb[0].mxu0
    %v3620 = vadd.f32 %v3449, %v3619
    %v3621 = vpop.f32.mrb[0].mxu0
    %3622 = vmatprep.mubr.f32.mxu0 0.0
    %v3623 = vand.u32 %v2689, 4294901760
    %3624 = vmatmul.mubr.f32.gmra.mrb[0].mxu0 %v3623
    %v3625 = vpop.f32.mrb[0].mxu0
    %v3626 = vadd.f32 %v3457, %v3625
    %v3627 = vpop.f32.mrb[0].mxu0
    %3628 = vmatprep.mubr.f32.mxu0 0.0
    %v3629 = vand.u32 %v2692, 4294901760
    %3630 = vmatmul.mubr.f32.gmra.mrb[0].mxu0 %v3629
    %v3631 = vpop.f32.mrb[0].mxu0
    %v3632 = vadd.f32 %v3465, %v3631
    %v3633 = vpop.f32.mrb[0].mxu0
    %3634 = vdwg.mxu0
    %3635 = vmatprep.subr.mxu0 0.0
    %v3636 = vand.u32 %v1004, 4294901760
    %3637 = vmatpush1.msra.mxu0 %v3636
    %3638 = vmatprep.subr.mxu0 0.0
    %v3639 = vand.u32 %v1010, 4294901760
    %3640 = vmatpush1.msra.mxu0 %v3639
    %3641 = vmatprep.subr.mxu0 0.0
    %3642 = vmatpush1.msra.mxu0 0.0
    %3643 = vmatprep.subr.mxu0 0.0
    %3644 = vmatpush1.msra.mxu0 0.0
    %3645 = vmatprep.subr.mxu0 0.0
    %3646 = vmatpush1.msra.mxu0 0.0
    %3647 = vmatprep.subr.mxu0 0.0
    %3648 = vmatpush1.msra.mxu0 0.0
    %3649 = vmatprep.subr.mxu0 0.0
    %3650 = vmatpush1.msra.mxu0 0.0
    %3651 = vmatprep.subr.mxu0 0.0
    %3652 = vmatpush1.msra.mxu0 0.0
    %3653 = vmatprep.subr.mxu0 0.0
    %3654 = vmatpush1.msra.mxu0 0.0
    %3655 = vmatprep.subr.mxu0 0.0
    %3656 = vmatpush1.msra.mxu0 0.0
    %3657 = vmatprep.subr.mxu0 0.0
    %3658 = vmatpush1.msra.mxu0 0.0
    %3659 = vmatprep.subr.mxu0 0.0
    %3660 = vmatpush1.msra.mxu0 0.0
    %3661 = vmatprep.subr.mxu0 0.0
    %3662 = vmatpush1.msra.mxu0 0.0
    %3663 = vmatprep.subr.mxu0 0.0
    %3664 = vmatpush1.msra.mxu0 0.0
    %3665 = vmatprep.subr.mxu0 0.0
    %3666 = vmatpush1.msra.mxu0 0.0
    %3667 = vmatprep.subr.mxu0 0.0
    %3668 = vmatpush1.msra.mxu0 0.0
    %3669 = vmatprep.subr.mxu0 0.0
    %3670 = vmatpush1.msra.mxu0 0.0
    %3671 = vmatprep.subr.mxu0 0.0
    %3672 = vmatpush1.msra.mxu0 0.0
    %3673 = vmatprep.subr.mxu0 0.0
    %3674 = vmatpush1.msra.mxu0 0.0
    %3675 = vmatprep.subr.mxu0 0.0
    %3676 = vmatpush1.msra.mxu0 0.0
    %3677 = vmatprep.subr.mxu0 0.0
    %3678 = vmatpush1.msra.mxu0 0.0
    %3679 = vmatprep.subr.mxu0 0.0
    %3680 = vmatpush1.msra.mxu0 0.0
    %3681 = vmatprep.subr.mxu0 0.0
    %3682 = vmatpush1.msra.mxu0 0.0
    %3683 = vmatprep.subr.mxu0 0.0
    %3684 = vmatpush1.msra.mxu0 0.0
    %3685 = vmatprep.subr.mxu0 0.0
    %3686 = vmatpush1.msra.mxu0 0.0
    %3687 = vmatprep.subr.mxu0 0.0
    %3688 = vmatpush1.msra.mxu0 0.0
    %3689 = vmatprep.subr.mxu0 0.0
    %3690 = vmatpush1.msra.mxu0 0.0
    %3691 = vmatprep.subr.mxu0 0.0
    %3692 = vmatpush1.msra.mxu0 0.0
    %3693 = vmatprep.subr.mxu0 0.0
    %3694 = vmatpush1.msra.mxu0 0.0
    %3695 = vmatprep.subr.mxu0 0.0
    %3696 = vmatpush1.msra.mxu0 0.0
    %3697 = vmatprep.subr.mxu0 0.0
    %3698 = vmatpush1.msra.mxu0 0.0
    %3699 = vmatprep.subr.mxu0 0.0
    %3700 = vmatpush1.msra.mxu0 0.0
    %3701 = vmatprep.mubr.f32.mxu0 0.0
    %v3702 = vand.u32 %v2647, 4294901760
    %3703 = vmatmul.mubr.f32.gmra.mrb[0].mxu0 %v3702
    %v3704 = vpop.f32.mrb[0].mxu0
    %v3705 = vadd.f32 %v3542, %v3704
    %v3706 = vpop.f32.mrb[0].mxu0
    %3707 = vmatprep.mubr.f32.mxu0 0.0
    %v3708 = vand.u32 %v2650, 4294901760
    %3709 = vmatmul.mubr.f32.gmra.mrb[0].mxu0 %v3708
    %v3710 = vpop.f32.mrb[0].mxu0
    %v3711 = vadd.f32 %v3548, %v3710
    %v3712 = vpop.f32.mrb[0].mxu0
    %3713 = vmatprep.mubr.f32.mxu0 0.0
    %v3714 = vand.u32 %v2653, 4294901760
    %3715 = vmatmul.mubr.f32.gmra.mrb[0].mxu0 %v3714
    %v3716 = vpop.f32.mrb[0].mxu0
    %v3717 = vadd.f32 %v3554, %v3716
    %v3718 = vpop.f32.mrb[0].mxu0
    %3719 = vmatprep.mubr.f32.mxu0 0.0
    %v3720 = vand.u32 %v2656, 4294901760
    %3721 = vmatmul.mubr.f32.gmra.mrb[0].mxu0 %v3720
    %v3722 = vpop.f32.mrb[0].mxu0
    %v3723 = vadd.f32 %v3560, %v3722
    %v3724 = vpop.f32.mrb[0].mxu0
    %3725 = vmatprep.mubr.f32.mxu0 0.0
    %v3726 = vand.u32 %v2659, 4294901760
    %3727 = vmatmul.mubr.f32.gmra.mrb[0].mxu0 %v3726
    %v3728 = vpop.f32.mrb[0].mxu0
    %v3729 = vadd.f32 %v3566, %v3728
    %v3730 = vpop.f32.mrb[0].mxu0
    %3731 = vmatprep.mubr.f32.mxu0 0.0
    %v3732 = vand.u32 %v2662, 4294901760
    %3733 = vmatmul.mubr.f32.gmra.mrb[0].mxu0 %v3732
    %v3734 = vpop.f32.mrb[0].mxu0
    %v3735 = vadd.f32 %v3572, %v3734
    %v3736 = vpop.f32.mrb[0].mxu0
    %3737 = vmatprep.mubr.f32.mxu0 0.0
    %v3738 = vand.u32 %v2665, 4294901760
    %3739 = vmatmul.mubr.f32.gmra.mrb[0].mxu0 %v3738
    %v3740 = vpop.f32.mrb[0].mxu0
    %v3741 = vadd.f32 %v3578, %v3740
    %v3742 = vpop.f32.mrb[0].mxu0
    %3743 = vmatprep.mubr.f32.mxu0 0.0
    %v3744 = vand.u32 %v2668, 4294901760
    %3745 = vmatmul.mubr.f32.gmra.mrb[0].mxu0 %v3744
    %v3746 = vpop.f32.mrb[0].mxu0
    %v3747 = vadd.f32 %v3584, %v3746
    %v3748 = vpop.f32.mrb[0].mxu0
    %3749 = vmatprep.mubr.f32.mxu0 0.0
    %v3750 = vand.u32 %v2671, 4294901760
    %3751 = vmatmul.mubr.f32.gmra.mrb[0].mxu0 %v3750
    %v3752 = vpop.f32.mrb[0].mxu0
    %v3753 = vadd.f32 %v3590, %v3752
    %v3754 = vpop.f32.mrb[0].mxu0
    %3755 = vmatprep.mubr.f32.mxu0 0.0
    %v3756 = vand.u32 %v2674, 4294901760
    %3757 = vmatmul.mubr.f32.gmra.mrb[0].mxu0 %v3756
    %v3758 = vpop.f32.mrb[0].mxu0
    %v3759 = vadd.f32 %v3596, %v3758
    %v3760 = vpop.f32.mrb[0].mxu0
    %3761 = vmatprep.mubr.f32.mxu0 0.0
    %v3762 = vand.u32 %v2677, 4294901760
    %3763 = vmatmul.mubr.f32.gmra.mrb[0].mxu0 %v3762
    %v3764 = vpop.f32.mrb[0].mxu0
    %v3765 = vadd.f32 %v3602, %v3764
    %v3766 = vpop.f32.mrb[0].mxu0
    %3767 = vmatprep.mubr.f32.mxu0 0.0
    %v3768 = vand.u32 %v2680, 4294901760
    %3769 = vmatmul.mubr.f32.gmra.mrb[0].mxu0 %v3768
    %v3770 = vpop.f32.mrb[0].mxu0
    %v3771 = vadd.f32 %v3608, %v3770
    %v3772 = vpop.f32.mrb[0].mxu0
    %3773 = vmatprep.mubr.f32.mxu0 0.0
    %v3774 = vand.u32 %v2683, 4294901760
    %3775 = vmatmul.mubr.f32.gmra.mrb[0].mxu0 %v3774
    %v3776 = vpop.f32.mrb[0].mxu0
    %v3777 = vadd.f32 %v3614, %v3776
    %v3778 = vpop.f32.mrb[0].mxu0
    %3779 = vmatprep.mubr.f32.mxu0 0.0
    %v3780 = vand.u32 %v2686, 4294901760
    %3781 = vmatmul.mubr.f32.gmra.mrb[0].mxu0 %v3780
    %v3782 = vpop.f32.mrb[0].mxu0
    %v3783 = vadd.f32 %v3620, %v3782
    %v3784 = vpop.f32.mrb[0].mxu0
    %3785 = vmatprep.mubr.f32.mxu0 0.0
    %v3786 = vand.u32 %v2689, 4294901760
    %3787 = vmatmul.mubr.f32.gmra.mrb[0].mxu0 %v3786
    %v3788 = vpop.f32.mrb[0].mxu0
    %v3789 = vadd.f32 %v3626, %v3788
    %v3790 = vpop.f32.mrb[0].mxu0
    %3791 = vmatprep.mubr.f32.mxu0 0.0
    %v3792 = vand.u32 %v2692, 4294901760
    %3793 = vmatmul.mubr.f32.gmra.mrb[0].mxu0 %v3792
    %v3794 = vpop.f32.mrb[0].mxu0
    %v3795 = vadd.f32 %v3632, %v3794
    %v3796 = vpop.f32.mrb[0].mxu0
    %3797 = vdwg.mxu0
    %v3798 = vld [vmem:[%s9] sm:$0xff]
    %v3799 = vld [vmem:[%s9 + $0x8] sm:$0xff]
    %v3800 = vld [vmem:[%s9 + $0x10] sm:$0xff]
    %v3801 = vld [vmem:[%s9 + $0x18] sm:$0xff]
    %v3802 = vld [vmem:[%s9 + $0x20] sm:$0xff]
    %v3803 = vld [vmem:[%s9 + $0x28] sm:$0xff]
    %v3804 = vld [vmem:[%s9 + $0x30] sm:$0xff]
    %v3805 = vld [vmem:[%s9 + $0x38] sm:$0xff]
    %vm3806 = vcmask 523264
    %v3808 = vsel %vm3806, %v3705, 0
    %v3811 = vsel %vm3806, %v3711, 0
    %v3814 = vsel %vm3806, %v3717, 0
    %v3817 = vsel %vm3806, %v3723, 0
    %v3820 = vsel %vm3806, %v3729, 0
    %v3823 = vsel %vm3806, %v3735, 0
    %v3826 = vsel %vm3806, %v3741, 0
    %v3829 = vsel %vm3806, %v3747, 0
    %v3832 = vsel %vm3806, %v3753, 0
    %v3835 = vsel %vm3806, %v3759, 0
    %v3838 = vsel %vm3806, %v3765, 0
    %v3841 = vsel %vm3806, %v3771, 0
    %v3844 = vsel %vm3806, %v3777, 0
    %v3847 = vsel %vm3806, %v3783, 0
    %v3850 = vsel %vm3806, %v3789, 0
    %v3853 = vsel %vm3806, %v3795, 0
    %3855 = vmatprep.subr.mxu0 0.0
    %v3856 = vand.u32 %v3798, 4294901760
    %3857 = vmatpush1.msra.mxu0 %v3856
    %3858 = vmatprep.subr.mxu0 0.0
    %v3859 = vand.u32 %v3799, 4294901760
    %3860 = vmatpush1.msra.mxu0 %v3859
    %3861 = vmatprep.subr.mxu0 0.0
    %v3862 = vand.u32 %v3800, 4294901760
    %3863 = vmatpush1.msra.mxu0 %v3862
    %3864 = vmatprep.subr.mxu0 0.0
    %v3865 = vand.u32 %v3801, 4294901760
    %3866 = vmatpush1.msra.mxu0 %v3865
    %3867 = vmatprep.subr.mxu0 0.0
    %v3868 = vand.u32 %v3802, 4294901760
    %3869 = vmatpush1.msra.mxu0 %v3868
    %3870 = vmatprep.subr.mxu0 0.0
    %v3871 = vand.u32 %v3803, 4294901760
    %3872 = vmatpush1.msra.mxu0 %v3871
    %3873 = vmatprep.subr.mxu0 0.0
    %v3874 = vand.u32 %v3804, 4294901760
    %3875 = vmatpush1.msra.mxu0 %v3874
    %3876 = vmatprep.subr.mxu0 0.0
    %v3877 = vand.u32 %v3805, 4294901760
    %3878 = vmatpush1.msra.mxu0 %v3877
    %3879 = vmatprep.subr.mxu0 0.0
    %3880 = vmatpush1.msra.mxu0 0.0
    %3881 = vmatprep.subr.mxu0 0.0
    %3882 = vmatpush1.msra.mxu0 0.0
    %3883 = vmatprep.subr.mxu0 0.0
    %3884 = vmatpush1.msra.mxu0 0.0
    %3885 = vmatprep.subr.mxu0 0.0
    %3886 = vmatpush1.msra.mxu0 0.0
    %3887 = vmatprep.subr.mxu0 0.0
    %3888 = vmatpush1.msra.mxu0 0.0
    %3889 = vmatprep.subr.mxu0 0.0
    %3890 = vmatpush1.msra.mxu0 0.0
    %3891 = vmatprep.subr.mxu0 0.0
    %3892 = vmatpush1.msra.mxu0 0.0
    %3893 = vmatprep.subr.mxu0 0.0
    %3894 = vmatpush1.msra.mxu0 0.0
    %3895 = vmatprep.subr.mxu0 0.0
    %3896 = vmatpush1.msra.mxu0 0.0
    %3897 = vmatprep.subr.mxu0 0.0
    %3898 = vmatpush1.msra.mxu0 0.0
    %3899 = vmatprep.subr.mxu0 0.0
    %3900 = vmatpush1.msra.mxu0 0.0
    %3901 = vmatprep.subr.mxu0 0.0
    %3902 = vmatpush1.msra.mxu0 0.0
    %3903 = vmatprep.subr.mxu0 0.0
    %3904 = vmatpush1.msra.mxu0 0.0
    %3905 = vmatprep.subr.mxu0 0.0
    %3906 = vmatpush1.msra.mxu0 0.0
    %3907 = vmatprep.subr.mxu0 0.0
    %3908 = vmatpush1.msra.mxu0 0.0
    %3909 = vmatprep.subr.mxu0 0.0
    %3910 = vmatpush1.msra.mxu0 0.0
    %3911 = vmatprep.subr.mxu0 0.0
    %3912 = vmatpush1.msra.mxu0 0.0
    %3913 = vmatprep.subr.mxu0 0.0
    %3914 = vmatpush1.msra.mxu0 0.0
    %3915 = vmatprep.subr.mxu0 0.0
    %3916 = vmatpush1.msra.mxu0 0.0
    %3917 = vmatprep.subr.mxu0 0.0
    %3918 = vmatpush1.msra.mxu0 0.0
    %3919 = vmatprep.subr.mxu0 0.0
    %3920 = vmatpush1.msra.mxu0 0.0
    %3921 = vmatprep.subr.mxu0 0.0
    %3922 = vmatpush1.msra.mxu0 0.0
    %3923 = vmatprep.subr.mxu0 0.0
    %3924 = vmatpush1.msra.mxu0 0.0
    %3925 = vmatprep.subr.mxu0 0.0
    %3926 = vmatpush1.msra.mxu0 0.0
    %3927 = vmatprep.mubr.f32.mxu0 0.0
    %v3928 = vand.u32 %v3808, 4294901760
    %v3929 = vsub.f32 %v3808, %v3928
    %v3930 = vand.u32 %v3929, 4294901760
    %v3931 = vsub.f32 %v3929, %v3930
    %v3932 = vand.u32 %v3931, 4294901760
    %3933 = vmatmul.mubr.f32.gmra.mrb[0].mxu0 %v3932
    %v3934 = vpop.f32.mrb[0].mxu0
    %v3935 = vadd.f32 0.0, %v3934
    %v3936 = vpop.f32.mrb[0].mxu0
    %3937 = vmatprep.mubr.f32.mxu0 0.0
    %v3938 = vand.u32 %v3811, 4294901760
    %v3939 = vsub.f32 %v3811, %v3938
    %v3940 = vand.u32 %v3939, 4294901760
    %v3941 = vsub.f32 %v3939, %v3940
    %v3942 = vand.u32 %v3941, 4294901760
    %3943 = vmatmul.mubr.f32.gmra.mrb[0].mxu0 %v3942
    %v3944 = vpop.f32.mrb[0].mxu0
    %v3945 = vadd.f32 0.0, %v3944
    %v3946 = vpop.f32.mrb[0].mxu0
    %3947 = vmatprep.mubr.f32.mxu0 0.0
    %v3948 = vand.u32 %v3814, 4294901760
    %v3949 = vsub.f32 %v3814, %v3948
    %v3950 = vand.u32 %v3949, 4294901760
    %v3951 = vsub.f32 %v3949, %v3950
    %v3952 = vand.u32 %v3951, 4294901760
    %3953 = vmatmul.mubr.f32.gmra.mrb[0].mxu0 %v3952
    %v3954 = vpop.f32.mrb[0].mxu0
    %v3955 = vadd.f32 0.0, %v3954
    %v3956 = vpop.f32.mrb[0].mxu0
    %3957 = vmatprep.mubr.f32.mxu0 0.0
    %v3958 = vand.u32 %v3817, 4294901760
    %v3959 = vsub.f32 %v3817, %v3958
    %v3960 = vand.u32 %v3959, 4294901760
    %v3961 = vsub.f32 %v3959, %v3960
    %v3962 = vand.u32 %v3961, 4294901760
    %3963 = vmatmul.mubr.f32.gmra.mrb[0].mxu0 %v3962
    %v3964 = vpop.f32.mrb[0].mxu0
    %v3965 = vadd.f32 0.0, %v3964
    %v3966 = vpop.f32.mrb[0].mxu0
    %3967 = vmatprep.mubr.f32.mxu0 0.0
    %v3968 = vand.u32 %v3820, 4294901760
    %v3969 = vsub.f32 %v3820, %v3968
    %v3970 = vand.u32 %v3969, 4294901760
    %v3971 = vsub.f32 %v3969, %v3970
    %v3972 = vand.u32 %v3971, 4294901760
    %3973 = vmatmul.mubr.f32.gmra.mrb[0].mxu0 %v3972
    %v3974 = vpop.f32.mrb[0].mxu0
    %v3975 = vadd.f32 0.0, %v3974
    %v3976 = vpop.f32.mrb[0].mxu0
    %3977 = vmatprep.mubr.f32.mxu0 0.0
    %v3978 = vand.u32 %v3823, 4294901760
    %v3979 = vsub.f32 %v3823, %v3978
    %v3980 = vand.u32 %v3979, 4294901760
    %v3981 = vsub.f32 %v3979, %v3980
    %v3982 = vand.u32 %v3981, 4294901760
    %3983 = vmatmul.mubr.f32.gmra.mrb[0].mxu0 %v3982
    %v3984 = vpop.f32.mrb[0].mxu0
    %v3985 = vadd.f32 0.0, %v3984
    %v3986 = vpop.f32.mrb[0].mxu0
    %3987 = vmatprep.mubr.f32.mxu0 0.0
    %v3988 = vand.u32 %v3826, 4294901760
    %v3989 = vsub.f32 %v3826, %v3988
    %v3990 = vand.u32 %v3989, 4294901760
    %v3991 = vsub.f32 %v3989, %v3990
    %v3992 = vand.u32 %v3991, 4294901760
    %3993 = vmatmul.mubr.f32.gmra.mrb[0].mxu0 %v3992
    %v3994 = vpop.f32.mrb[0].mxu0
    %v3995 = vadd.f32 0.0, %v3994
    %v3996 = vpop.f32.mrb[0].mxu0
    %3997 = vmatprep.mubr.f32.mxu0 0.0
    %v3998 = vand.u32 %v3829, 4294901760
    %v3999 = vsub.f32 %v3829, %v3998
    %v4000 = vand.u32 %v3999, 4294901760
    %v4001 = vsub.f32 %v3999, %v4000
    %v4002 = vand.u32 %v4001, 4294901760
    %4003 = vmatmul.mubr.f32.gmra.mrb[0].mxu0 %v4002
    %v4004 = vpop.f32.mrb[0].mxu0
    %v4005 = vadd.f32 0.0, %v4004
    %v4006 = vpop.f32.mrb[0].mxu0
    %4007 = vmatprep.mubr.f32.mxu0 0.0
    %v4008 = vand.u32 %v3832, 4294901760
    %v4009 = vsub.f32 %v3832, %v4008
    %v4010 = vand.u32 %v4009, 4294901760
    %v4011 = vsub.f32 %v4009, %v4010
    %v4012 = vand.u32 %v4011, 4294901760
    %4013 = vmatmul.mubr.f32.gmra.mrb[0].mxu0 %v4012
    %v4014 = vpop.f32.mrb[0].mxu0
    %v4015 = vadd.f32 0.0, %v4014
    %v4016 = vpop.f32.mrb[0].mxu0
    %4017 = vmatprep.mubr.f32.mxu0 0.0
    %v4018 = vand.u32 %v3835, 4294901760
    %v4019 = vsub.f32 %v3835, %v4018
    %v4020 = vand.u32 %v4019, 4294901760
    %v4021 = vsub.f32 %v4019, %v4020
    %v4022 = vand.u32 %v4021, 4294901760
    %4023 = vmatmul.mubr.f32.gmra.mrb[0].mxu0 %v4022
    %v4024 = vpop.f32.mrb[0].mxu0
    %v4025 = vadd.f32 0.0, %v4024
    %v4026 = vpop.f32.mrb[0].mxu0
    %4027 = vmatprep.mubr.f32.mxu0 0.0
    %v4028 = vand.u32 %v3838, 4294901760
    %v4029 = vsub.f32 %v3838, %v4028
    %v4030 = vand.u32 %v4029, 4294901760
    %v4031 = vsub.f32 %v4029, %v4030
    %v4032 = vand.u32 %v4031, 4294901760
    %4033 = vmatmul.mubr.f32.gmra.mrb[0].mxu0 %v4032
    %v4034 = vpop.f32.mrb[0].mxu0
    %v4035 = vadd.f32 0.0, %v4034
    %v4036 = vpop.f32.mrb[0].mxu0
    %4037 = vmatprep.mubr.f32.mxu0 0.0
    %v4038 = vand.u32 %v3841, 4294901760
    %v4039 = vsub.f32 %v3841, %v4038
    %v4040 = vand.u32 %v4039, 4294901760
    %v4041 = vsub.f32 %v4039, %v4040
    %v4042 = vand.u32 %v4041, 4294901760
    %4043 = vmatmul.mubr.f32.gmra.mrb[0].mxu0 %v4042
    %v4044 = vpop.f32.mrb[0].mxu0
    %v4045 = vadd.f32 0.0, %v4044
    %v4046 = vpop.f32.mrb[0].mxu0
    %4047 = vmatprep.mubr.f32.mxu0 0.0
    %v4048 = vand.u32 %v3844, 4294901760
    %v4049 = vsub.f32 %v3844, %v4048
    %v4050 = vand.u32 %v4049, 4294901760
    %v4051 = vsub.f32 %v4049, %v4050
    %v4052 = vand.u32 %v4051, 4294901760
    %4053 = vmatmul.mubr.f32.gmra.mrb[0].mxu0 %v4052
    %v4054 = vpop.f32.mrb[0].mxu0
    %v4055 = vadd.f32 0.0, %v4054
    %v4056 = vpop.f32.mrb[0].mxu0
    %4057 = vmatprep.mubr.f32.mxu0 0.0
    %v4058 = vand.u32 %v3847, 4294901760
    %v4059 = vsub.f32 %v3847, %v4058
    %v4060 = vand.u32 %v4059, 4294901760
    %v4061 = vsub.f32 %v4059, %v4060
    %v4062 = vand.u32 %v4061, 4294901760
    %4063 = vmatmul.mubr.f32.gmra.mrb[0].mxu0 %v4062
    %v4064 = vpop.f32.mrb[0].mxu0
    %v4065 = vadd.f32 0.0, %v4064
    %v4066 = vpop.f32.mrb[0].mxu0
    %4067 = vmatprep.mubr.f32.mxu0 0.0
    %v4068 = vand.u32 %v3850, 4294901760
    %v4069 = vsub.f32 %v3850, %v4068
    %v4070 = vand.u32 %v4069, 4294901760
    %v4071 = vsub.f32 %v4069, %v4070
    %v4072 = vand.u32 %v4071, 4294901760
    %4073 = vmatmul.mubr.f32.gmra.mrb[0].mxu0 %v4072
    %v4074 = vpop.f32.mrb[0].mxu0
    %v4075 = vadd.f32 0.0, %v4074
    %v4076 = vpop.f32.mrb[0].mxu0
    %4077 = vmatprep.mubr.f32.mxu0 0.0
    %v4078 = vand.u32 %v3853, 4294901760
    %v4079 = vsub.f32 %v3853, %v4078
    %v4080 = vand.u32 %v4079, 4294901760
    %v4081 = vsub.f32 %v4079, %v4080
    %v4082 = vand.u32 %v4081, 4294901760
    %4083 = vmatmul.mubr.f32.gmra.mrb[0].mxu0 %v4082
    %v4084 = vpop.f32.mrb[0].mxu0
    %v4085 = vadd.f32 0.0, %v4084
    %v4086 = vpop.f32.mrb[0].mxu0
    %4087 = vdwg.mxu0
    %4088 = vmatprep.subr.mxu0 0.0
    %v4089 = vand.u32 %v3798, 4294901760
    %v4090 = vsub.f32 %v3798, %v4089
    %v4091 = vand.u32 %v4090, 4294901760
    %v4092 = vsub.f32 %v4090, %v4091
    %v4093 = vand.u32 %v4092, 4294901760
    %4094 = vmatpush1.msra.mxu0 %v4093
    %4095 = vmatprep.subr.mxu0 0.0
    %v4096 = vand.u32 %v3799, 4294901760
    %v4097 = vsub.f32 %v3799, %v4096
    %v4098 = vand.u32 %v4097, 4294901760
    %v4099 = vsub.f32 %v4097, %v4098
    %v4100 = vand.u32 %v4099, 4294901760
    %4101 = vmatpush1.msra.mxu0 %v4100
    %4102 = vmatprep.subr.mxu0 0.0
    %v4103 = vand.u32 %v3800, 4294901760
    %v4104 = vsub.f32 %v3800, %v4103
    %v4105 = vand.u32 %v4104, 4294901760
    %v4106 = vsub.f32 %v4104, %v4105
    %v4107 = vand.u32 %v4106, 4294901760
    %4108 = vmatpush1.msra.mxu0 %v4107
    %4109 = vmatprep.subr.mxu0 0.0
    %v4110 = vand.u32 %v3801, 4294901760
    %v4111 = vsub.f32 %v3801, %v4110
    %v4112 = vand.u32 %v4111, 4294901760
    %v4113 = vsub.f32 %v4111, %v4112
    %v4114 = vand.u32 %v4113, 4294901760
    %4115 = vmatpush1.msra.mxu0 %v4114
    %4116 = vmatprep.subr.mxu0 0.0
    %v4117 = vand.u32 %v3802, 4294901760
    %v4118 = vsub.f32 %v3802, %v4117
    %v4119 = vand.u32 %v4118, 4294901760
    %v4120 = vsub.f32 %v4118, %v4119
    %v4121 = vand.u32 %v4120, 4294901760
    %4122 = vmatpush1.msra.mxu0 %v4121
    %4123 = vmatprep.subr.mxu0 0.0
    %v4124 = vand.u32 %v3803, 4294901760
    %v4125 = vsub.f32 %v3803, %v4124
    %v4126 = vand.u32 %v4125, 4294901760
    %v4127 = vsub.f32 %v4125, %v4126
    %v4128 = vand.u32 %v4127, 4294901760
    %4129 = vmatpush1.msra.mxu0 %v4128
    %4130 = vmatprep.subr.mxu0 0.0
    %v4131 = vand.u32 %v3804, 4294901760
    %v4132 = vsub.f32 %v3804, %v4131
    %v4133 = vand.u32 %v4132, 4294901760
    %v4134 = vsub.f32 %v4132, %v4133
    %v4135 = vand.u32 %v4134, 4294901760
    %4136 = vmatpush1.msra.mxu0 %v4135
    %4137 = vmatprep.subr.mxu0 0.0
    %v4138 = vand.u32 %v3805, 4294901760
    %v4139 = vsub.f32 %v3805, %v4138
    %v4140 = vand.u32 %v4139, 4294901760
    %v4141 = vsub.f32 %v4139, %v4140
    %v4142 = vand.u32 %v4141, 4294901760
    %4143 = vmatpush1.msra.mxu0 %v4142
    %4144 = vmatprep.subr.mxu0 0.0
    %4145 = vmatpush1.msra.mxu0 0.0
    %4146 = vmatprep.subr.mxu0 0.0
    %4147 = vmatpush1.msra.mxu0 0.0
    %4148 = vmatprep.subr.mxu0 0.0
    %4149 = vmatpush1.msra.mxu0 0.0
    %4150 = vmatprep.subr.mxu0 0.0
    %4151 = vmatpush1.msra.mxu0 0.0
    %4152 = vmatprep.subr.mxu0 0.0
    %4153 = vmatpush1.msra.mxu0 0.0
    %4154 = vmatprep.subr.mxu0 0.0
    %4155 = vmatpush1.msra.mxu0 0.0
    %4156 = vmatprep.subr.mxu0 0.0
    %4157 = vmatpush1.msra.mxu0 0.0
    %4158 = vmatprep.subr.mxu0 0.0
    %4159 = vmatpush1.msra.mxu0 0.0
    %4160 = vmatprep.subr.mxu0 0.0
    %4161 = vmatpush1.msra.mxu0 0.0
    %4162 = vmatprep.subr.mxu0 0.0
    %4163 = vmatpush1.msra.mxu0 0.0
    %4164 = vmatprep.subr.mxu0 0.0
    %4165 = vmatpush1.msra.mxu0 0.0
    %4166 = vmatprep.subr.mxu0 0.0
    %4167 = vmatpush1.msra.mxu0 0.0
    %4168 = vmatprep.subr.mxu0 0.0
    %4169 = vmatpush1.msra.mxu0 0.0
    %4170 = vmatprep.subr.mxu0 0.0
    %4171 = vmatpush1.msra.mxu0 0.0
    %4172 = vmatprep.subr.mxu0 0.0
    %4173 = vmatpush1.msra.mxu0 0.0
    %4174 = vmatprep.subr.mxu0 0.0
    %4175 = vmatpush1.msra.mxu0 0.0
    %4176 = vmatprep.subr.mxu0 0.0
    %4177 = vmatpush1.msra.mxu0 0.0
    %4178 = vmatprep.subr.mxu0 0.0
    %4179 = vmatpush1.msra.mxu0 0.0
    %4180 = vmatprep.subr.mxu0 0.0
    %4181 = vmatpush1.msra.mxu0 0.0
    %4182 = vmatprep.subr.mxu0 0.0
    %4183 = vmatpush1.msra.mxu0 0.0
    %4184 = vmatprep.subr.mxu0 0.0
    %4185 = vmatpush1.msra.mxu0 0.0
    %4186 = vmatprep.subr.mxu0 0.0
    %4187 = vmatpush1.msra.mxu0 0.0
    %4188 = vmatprep.subr.mxu0 0.0
    %4189 = vmatpush1.msra.mxu0 0.0
    %4190 = vmatprep.subr.mxu0 0.0
    %4191 = vmatpush1.msra.mxu0 0.0
    %4192 = vmatprep.mubr.f32.mxu0 0.0
    %v4193 = vand.u32 %v3808, 4294901760
    %4194 = vmatmul.mubr.f32.gmra.mrb[0].mxu0 %v4193
    %v4195 = vpop.f32.mrb[0].mxu0
    %v4196 = vadd.f32 %v3935, %v4195
    %v4197 = vpop.f32.mrb[0].mxu0
    %4198 = vmatprep.mubr.f32.mxu0 0.0
    %v4199 = vand.u32 %v3811, 4294901760
    %4200 = vmatmul.mubr.f32.gmra.mrb[0].mxu0 %v4199
    %v4201 = vpop.f32.mrb[0].mxu0
    %v4202 = vadd.f32 %v3945, %v4201
    %v4203 = vpop.f32.mrb[0].mxu0
    %4204 = vmatprep.mubr.f32.mxu0 0.0
    %v4205 = vand.u32 %v3814, 4294901760
    %4206 = vmatmul.mubr.f32.gmra.mrb[0].mxu0 %v4205
    %v4207 = vpop.f32.mrb[0].mxu0
    %v4208 = vadd.f32 %v3955, %v4207
    %v4209 = vpop.f32.mrb[0].mxu0
    %4210 = vmatprep.mubr.f32.mxu0 0.0
    %v4211 = vand.u32 %v3817, 4294901760
    %4212 = vmatmul.mubr.f32.gmra.mrb[0].mxu0 %v4211
    %v4213 = vpop.f32.mrb[0].mxu0
    %v4214 = vadd.f32 %v3965, %v4213
    %v4215 = vpop.f32.mrb[0].mxu0
    %4216 = vmatprep.mubr.f32.mxu0 0.0
    %v4217 = vand.u32 %v3820, 4294901760
    %4218 = vmatmul.mubr.f32.gmra.mrb[0].mxu0 %v4217
    %v4219 = vpop.f32.mrb[0].mxu0
    %v4220 = vadd.f32 %v3975, %v4219
    %v4221 = vpop.f32.mrb[0].mxu0
    %4222 = vmatprep.mubr.f32.mxu0 0.0
    %v4223 = vand.u32 %v3823, 4294901760
    %4224 = vmatmul.mubr.f32.gmra.mrb[0].mxu0 %v4223
    %v4225 = vpop.f32.mrb[0].mxu0
    %v4226 = vadd.f32 %v3985, %v4225
    %v4227 = vpop.f32.mrb[0].mxu0
    %4228 = vmatprep.mubr.f32.mxu0 0.0
    %v4229 = vand.u32 %v3826, 4294901760
    %4230 = vmatmul.mubr.f32.gmra.mrb[0].mxu0 %v4229
    %v4231 = vpop.f32.mrb[0].mxu0
    %v4232 = vadd.f32 %v3995, %v4231
    %v4233 = vpop.f32.mrb[0].mxu0
    %4234 = vmatprep.mubr.f32.mxu0 0.0
    %v4235 = vand.u32 %v3829, 4294901760
    %4236 = vmatmul.mubr.f32.gmra.mrb[0].mxu0 %v4235
    %v4237 = vpop.f32.mrb[0].mxu0
    %v4238 = vadd.f32 %v4005, %v4237
    %v4239 = vpop.f32.mrb[0].mxu0
    %4240 = vmatprep.mubr.f32.mxu0 0.0
    %v4241 = vand.u32 %v3832, 4294901760
    %4242 = vmatmul.mubr.f32.gmra.mrb[0].mxu0 %v4241
    %v4243 = vpop.f32.mrb[0].mxu0
    %v4244 = vadd.f32 %v4015, %v4243
    %v4245 = vpop.f32.mrb[0].mxu0
    %4246 = vmatprep.mubr.f32.mxu0 0.0
    %v4247 = vand.u32 %v3835, 4294901760
    %4248 = vmatmul.mubr.f32.gmra.mrb[0].mxu0 %v4247
    %v4249 = vpop.f32.mrb[0].mxu0
    %v4250 = vadd.f32 %v4025, %v4249
    %v4251 = vpop.f32.mrb[0].mxu0
    %4252 = vmatprep.mubr.f32.mxu0 0.0
    %v4253 = vand.u32 %v3838, 4294901760
    %4254 = vmatmul.mubr.f32.gmra.mrb[0].mxu0 %v4253
    %v4255 = vpop.f32.mrb[0].mxu0
    %v4256 = vadd.f32 %v4035, %v4255
    %v4257 = vpop.f32.mrb[0].mxu0
    %4258 = vmatprep.mubr.f32.mxu0 0.0
    %v4259 = vand.u32 %v3841, 4294901760
    %4260 = vmatmul.mubr.f32.gmra.mrb[0].mxu0 %v4259
    %v4261 = vpop.f32.mrb[0].mxu0
    %v4262 = vadd.f32 %v4045, %v4261
    %v4263 = vpop.f32.mrb[0].mxu0
    %4264 = vmatprep.mubr.f32.mxu0 0.0
    %v4265 = vand.u32 %v3844, 4294901760
    %4266 = vmatmul.mubr.f32.gmra.mrb[0].mxu0 %v4265
    %v4267 = vpop.f32.mrb[0].mxu0
    %v4268 = vadd.f32 %v4055, %v4267
    %v4269 = vpop.f32.mrb[0].mxu0
    %4270 = vmatprep.mubr.f32.mxu0 0.0
    %v4271 = vand.u32 %v3847, 4294901760
    %4272 = vmatmul.mubr.f32.gmra.mrb[0].mxu0 %v4271
    %v4273 = vpop.f32.mrb[0].mxu0
    %v4274 = vadd.f32 %v4065, %v4273
    %v4275 = vpop.f32.mrb[0].mxu0
    %4276 = vmatprep.mubr.f32.mxu0 0.0
    %v4277 = vand.u32 %v3850, 4294901760
    %4278 = vmatmul.mubr.f32.gmra.mrb[0].mxu0 %v4277
    %v4279 = vpop.f32.mrb[0].mxu0
    %v4280 = vadd.f32 %v4075, %v4279
    %v4281 = vpop.f32.mrb[0].mxu0
    %4282 = vmatprep.mubr.f32.mxu0 0.0
    %v4283 = vand.u32 %v3853, 4294901760
    %4284 = vmatmul.mubr.f32.gmra.mrb[0].mxu0 %v4283
    %v4285 = vpop.f32.mrb[0].mxu0
    %v4286 = vadd.f32 %v4085, %v4285
    %v4287 = vpop.f32.mrb[0].mxu0
    %4288 = vdwg.mxu0
    %4289 = vmatprep.subr.mxu0 0.0
    %v4290 = vand.u32 %v3798, 4294901760
    %v4291 = vsub.f32 %v3798, %v4290
    %4292 = vmatpush1.msra.mxu0 %v4291
    %4293 = vmatprep.subr.mxu0 0.0
    %v4294 = vand.u32 %v3799, 4294901760
    %v4295 = vsub.f32 %v3799, %v4294
    %4296 = vmatpush1.msra.mxu0 %v4295
    %4297 = vmatprep.subr.mxu0 0.0
    %v4298 = vand.u32 %v3800, 4294901760
    %v4299 = vsub.f32 %v3800, %v4298
    %4300 = vmatpush1.msra.mxu0 %v4299
    %4301 = vmatprep.subr.mxu0 0.0
    %v4302 = vand.u32 %v3801, 4294901760
    %v4303 = vsub.f32 %v3801, %v4302
    %4304 = vmatpush1.msra.mxu0 %v4303
    %4305 = vmatprep.subr.mxu0 0.0
    %v4306 = vand.u32 %v3802, 4294901760
    %v4307 = vsub.f32 %v3802, %v4306
    %4308 = vmatpush1.msra.mxu0 %v4307
    %4309 = vmatprep.subr.mxu0 0.0
    %v4310 = vand.u32 %v3803, 4294901760
    %v4311 = vsub.f32 %v3803, %v4310
    %4312 = vmatpush1.msra.mxu0 %v4311
    %4313 = vmatprep.subr.mxu0 0.0
    %v4314 = vand.u32 %v3804, 4294901760
    %v4315 = vsub.f32 %v3804, %v4314
    %4316 = vmatpush1.msra.mxu0 %v4315
    %4317 = vmatprep.subr.mxu0 0.0
    %v4318 = vand.u32 %v3805, 4294901760
    %v4319 = vsub.f32 %v3805, %v4318
    %4320 = vmatpush1.msra.mxu0 %v4319
    %4321 = vmatprep.subr.mxu0 0.0
    %4322 = vmatpush1.msra.mxu0 0.0
    %4323 = vmatprep.subr.mxu0 0.0
    %4324 = vmatpush1.msra.mxu0 0.0
    %4325 = vmatprep.subr.mxu0 0.0
    %4326 = vmatpush1.msra.mxu0 0.0
    %4327 = vmatprep.subr.mxu0 0.0
    %4328 = vmatpush1.msra.mxu0 0.0
    %4329 = vmatprep.subr.mxu0 0.0
    %4330 = vmatpush1.msra.mxu0 0.0
    %4331 = vmatprep.subr.mxu0 0.0
    %4332 = vmatpush1.msra.mxu0 0.0
    %4333 = vmatprep.subr.mxu0 0.0
    %4334 = vmatpush1.msra.mxu0 0.0
    %4335 = vmatprep.subr.mxu0 0.0
    %4336 = vmatpush1.msra.mxu0 0.0
    %4337 = vmatprep.subr.mxu0 0.0
    %4338 = vmatpush1.msra.mxu0 0.0
    %4339 = vmatprep.subr.mxu0 0.0
    %4340 = vmatpush1.msra.mxu0 0.0
    %4341 = vmatprep.subr.mxu0 0.0
    %4342 = vmatpush1.msra.mxu0 0.0
    %4343 = vmatprep.subr.mxu0 0.0
    %4344 = vmatpush1.msra.mxu0 0.0
    %4345 = vmatprep.subr.mxu0 0.0
    %4346 = vmatpush1.msra.mxu0 0.0
    %4347 = vmatprep.subr.mxu0 0.0
    %4348 = vmatpush1.msra.mxu0 0.0
    %4349 = vmatprep.subr.mxu0 0.0
    %4350 = vmatpush1.msra.mxu0 0.0
    %4351 = vmatprep.subr.mxu0 0.0
    %4352 = vmatpush1.msra.mxu0 0.0
    %4353 = vmatprep.subr.mxu0 0.0
    %4354 = vmatpush1.msra.mxu0 0.0
    %4355 = vmatprep.subr.mxu0 0.0
    %4356 = vmatpush1.msra.mxu0 0.0
    %4357 = vmatprep.subr.mxu0 0.0
    %4358 = vmatpush1.msra.mxu0 0.0
    %4359 = vmatprep.subr.mxu0 0.0
    %4360 = vmatpush1.msra.mxu0 0.0
    %4361 = vmatprep.subr.mxu0 0.0
    %4362 = vmatpush1.msra.mxu0 0.0
    %4363 = vmatprep.subr.mxu0 0.0
    %4364 = vmatpush1.msra.mxu0 0.0
    %4365 = vmatprep.subr.mxu0 0.0
    %4366 = vmatpush1.msra.mxu0 0.0
    %4367 = vmatprep.subr.mxu0 0.0
    %4368 = vmatpush1.msra.mxu0 0.0
    %4369 = vmatprep.mubr.f32.mxu0 0.0
    %v4370 = vand.u32 %v3808, 4294901760
    %v4371 = vsub.f32 %v3808, %v4370
    %4372 = vmatmul.mubr.f32.gmra.mrb[0].mxu0 %v4371
    %v4373 = vpop.f32.mrb[0].mxu0
    %v4374 = vadd.f32 %v4196, %v4373
    %v4375 = vpop.f32.mrb[0].mxu0
    %4376 = vmatprep.mubr.f32.mxu0 0.0
    %v4377 = vand.u32 %v3811, 4294901760
    %v4378 = vsub.f32 %v3811, %v4377
    %4379 = vmatmul.mubr.f32.gmra.mrb[0].mxu0 %v4378
    %v4380 = vpop.f32.mrb[0].mxu0
    %v4381 = vadd.f32 %v4202, %v4380
    %v4382 = vpop.f32.mrb[0].mxu0
    %4383 = vmatprep.mubr.f32.mxu0 0.0
    %v4384 = vand.u32 %v3814, 4294901760
    %v4385 = vsub.f32 %v3814, %v4384
    %4386 = vmatmul.mubr.f32.gmra.mrb[0].mxu0 %v4385
    %v4387 = vpop.f32.mrb[0].mxu0
    %v4388 = vadd.f32 %v4208, %v4387
    %v4389 = vpop.f32.mrb[0].mxu0
    %4390 = vmatprep.mubr.f32.mxu0 0.0
    %v4391 = vand.u32 %v3817, 4294901760
    %v4392 = vsub.f32 %v3817, %v4391
    %4393 = vmatmul.mubr.f32.gmra.mrb[0].mxu0 %v4392
    %v4394 = vpop.f32.mrb[0].mxu0
    %v4395 = vadd.f32 %v4214, %v4394
    %v4396 = vpop.f32.mrb[0].mxu0
    %4397 = vmatprep.mubr.f32.mxu0 0.0
    %v4398 = vand.u32 %v3820, 4294901760
    %v4399 = vsub.f32 %v3820, %v4398
    %4400 = vmatmul.mubr.f32.gmra.mrb[0].mxu0 %v4399
    %v4401 = vpop.f32.mrb[0].mxu0
    %v4402 = vadd.f32 %v4220, %v4401
    %v4403 = vpop.f32.mrb[0].mxu0
    %4404 = vmatprep.mubr.f32.mxu0 0.0
    %v4405 = vand.u32 %v3823, 4294901760
    %v4406 = vsub.f32 %v3823, %v4405
    %4407 = vmatmul.mubr.f32.gmra.mrb[0].mxu0 %v4406
    %v4408 = vpop.f32.mrb[0].mxu0
    %v4409 = vadd.f32 %v4226, %v4408
    %v4410 = vpop.f32.mrb[0].mxu0
    %4411 = vmatprep.mubr.f32.mxu0 0.0
    %v4412 = vand.u32 %v3826, 4294901760
    %v4413 = vsub.f32 %v3826, %v4412
    %4414 = vmatmul.mubr.f32.gmra.mrb[0].mxu0 %v4413
    %v4415 = vpop.f32.mrb[0].mxu0
    %v4416 = vadd.f32 %v4232, %v4415
    %v4417 = vpop.f32.mrb[0].mxu0
    %4418 = vmatprep.mubr.f32.mxu0 0.0
    %v4419 = vand.u32 %v3829, 4294901760
    %v4420 = vsub.f32 %v3829, %v4419
    %4421 = vmatmul.mubr.f32.gmra.mrb[0].mxu0 %v4420
    %v4422 = vpop.f32.mrb[0].mxu0
    %v4423 = vadd.f32 %v4238, %v4422
    %v4424 = vpop.f32.mrb[0].mxu0
    %4425 = vmatprep.mubr.f32.mxu0 0.0
    %v4426 = vand.u32 %v3832, 4294901760
    %v4427 = vsub.f32 %v3832, %v4426
    %4428 = vmatmul.mubr.f32.gmra.mrb[0].mxu0 %v4427
    %v4429 = vpop.f32.mrb[0].mxu0
    %v4430 = vadd.f32 %v4244, %v4429
    %v4431 = vpop.f32.mrb[0].mxu0
    %4432 = vmatprep.mubr.f32.mxu0 0.0
    %v4433 = vand.u32 %v3835, 4294901760
    %v4434 = vsub.f32 %v3835, %v4433
    %4435 = vmatmul.mubr.f32.gmra.mrb[0].mxu0 %v4434
    %v4436 = vpop.f32.mrb[0].mxu0
    %v4437 = vadd.f32 %v4250, %v4436
    %v4438 = vpop.f32.mrb[0].mxu0
    %4439 = vmatprep.mubr.f32.mxu0 0.0
    %v4440 = vand.u32 %v3838, 4294901760
    %v4441 = vsub.f32 %v3838, %v4440
    %4442 = vmatmul.mubr.f32.gmra.mrb[0].mxu0 %v4441
    %v4443 = vpop.f32.mrb[0].mxu0
    %v4444 = vadd.f32 %v4256, %v4443
    %v4445 = vpop.f32.mrb[0].mxu0
    %4446 = vmatprep.mubr.f32.mxu0 0.0
    %v4447 = vand.u32 %v3841, 4294901760
    %v4448 = vsub.f32 %v3841, %v4447
    %4449 = vmatmul.mubr.f32.gmra.mrb[0].mxu0 %v4448
    %v4450 = vpop.f32.mrb[0].mxu0
    %v4451 = vadd.f32 %v4262, %v4450
    %v4452 = vpop.f32.mrb[0].mxu0
    %4453 = vmatprep.mubr.f32.mxu0 0.0
    %v4454 = vand.u32 %v3844, 4294901760
    %v4455 = vsub.f32 %v3844, %v4454
    %4456 = vmatmul.mubr.f32.gmra.mrb[0].mxu0 %v4455
    %v4457 = vpop.f32.mrb[0].mxu0
    %v4458 = vadd.f32 %v4268, %v4457
    %v4459 = vpop.f32.mrb[0].mxu0
    %4460 = vmatprep.mubr.f32.mxu0 0.0
    %v4461 = vand.u32 %v3847, 4294901760
    %v4462 = vsub.f32 %v3847, %v4461
    %4463 = vmatmul.mubr.f32.gmra.mrb[0].mxu0 %v4462
    %v4464 = vpop.f32.mrb[0].mxu0
    %v4465 = vadd.f32 %v4274, %v4464
    %v4466 = vpop.f32.mrb[0].mxu0
    %4467 = vmatprep.mubr.f32.mxu0 0.0
    %v4468 = vand.u32 %v3850, 4294901760
    %v4469 = vsub.f32 %v3850, %v4468
    %4470 = vmatmul.mubr.f32.gmra.mrb[0].mxu0 %v4469
    %v4471 = vpop.f32.mrb[0].mxu0
    %v4472 = vadd.f32 %v4280, %v4471
    %v4473 = vpop.f32.mrb[0].mxu0
    %4474 = vmatprep.mubr.f32.mxu0 0.0
    %v4475 = vand.u32 %v3853, 4294901760
    %v4476 = vsub.f32 %v3853, %v4475
    %4477 = vmatmul.mubr.f32.gmra.mrb[0].mxu0 %v4476
    %v4478 = vpop.f32.mrb[0].mxu0
    %v4479 = vadd.f32 %v4286, %v4478
    %v4480 = vpop.f32.mrb[0].mxu0
    %4481 = vdwg.mxu0
    %4482 = vmatprep.subr.mxu0 0.0
    %v4483 = vand.u32 %v3798, 4294901760
    %4484 = vmatpush1.msra.mxu0 %v4483
    %4485 = vmatprep.subr.mxu0 0.0
    %v4486 = vand.u32 %v3799, 4294901760
    %4487 = vmatpush1.msra.mxu0 %v4486
    %4488 = vmatprep.subr.mxu0 0.0
    %v4489 = vand.u32 %v3800, 4294901760
    %4490 = vmatpush1.msra.mxu0 %v4489
    %4491 = vmatprep.subr.mxu0 0.0
    %v4492 = vand.u32 %v3801, 4294901760
    %4493 = vmatpush1.msra.mxu0 %v4492
    %4494 = vmatprep.subr.mxu0 0.0
    %v4495 = vand.u32 %v3802, 4294901760
    %4496 = vmatpush1.msra.mxu0 %v4495
    %4497 = vmatprep.subr.mxu0 0.0
    %v4498 = vand.u32 %v3803, 4294901760
    %4499 = vmatpush1.msra.mxu0 %v4498
    %4500 = vmatprep.subr.mxu0 0.0
    %v4501 = vand.u32 %v3804, 4294901760
    %4502 = vmatpush1.msra.mxu0 %v4501
    %4503 = vmatprep.subr.mxu0 0.0
    %v4504 = vand.u32 %v3805, 4294901760
    %4505 = vmatpush1.msra.mxu0 %v4504
    %4506 = vmatprep.subr.mxu0 0.0
    %4507 = vmatpush1.msra.mxu0 0.0
    %4508 = vmatprep.subr.mxu0 0.0
    %4509 = vmatpush1.msra.mxu0 0.0
    %4510 = vmatprep.subr.mxu0 0.0
    %4511 = vmatpush1.msra.mxu0 0.0
    %4512 = vmatprep.subr.mxu0 0.0
    %4513 = vmatpush1.msra.mxu0 0.0
    %4514 = vmatprep.subr.mxu0 0.0
    %4515 = vmatpush1.msra.mxu0 0.0
    %4516 = vmatprep.subr.mxu0 0.0
    %4517 = vmatpush1.msra.mxu0 0.0
    %4518 = vmatprep.subr.mxu0 0.0
    %4519 = vmatpush1.msra.mxu0 0.0
    %4520 = vmatprep.subr.mxu0 0.0
    %4521 = vmatpush1.msra.mxu0 0.0
    %4522 = vmatprep.subr.mxu0 0.0
    %4523 = vmatpush1.msra.mxu0 0.0
    %4524 = vmatprep.subr.mxu0 0.0
    %4525 = vmatpush1.msra.mxu0 0.0
    %4526 = vmatprep.subr.mxu0 0.0
    %4527 = vmatpush1.msra.mxu0 0.0
    %4528 = vmatprep.subr.mxu0 0.0
    %4529 = vmatpush1.msra.mxu0 0.0
    %4530 = vmatprep.subr.mxu0 0.0
    %4531 = vmatpush1.msra.mxu0 0.0
    %4532 = vmatprep.subr.mxu0 0.0
    %4533 = vmatpush1.msra.mxu0 0.0
    %4534 = vmatprep.subr.mxu0 0.0
    %4535 = vmatpush1.msra.mxu0 0.0
    %4536 = vmatprep.subr.mxu0 0.0
    %4537 = vmatpush1.msra.mxu0 0.0
    %4538 = vmatprep.subr.mxu0 0.0
    %4539 = vmatpush1.msra.mxu0 0.0
    %4540 = vmatprep.subr.mxu0 0.0
    %4541 = vmatpush1.msra.mxu0 0.0
    %4542 = vmatprep.subr.mxu0 0.0
    %4543 = vmatpush1.msra.mxu0 0.0
    %4544 = vmatprep.subr.mxu0 0.0
    %4545 = vmatpush1.msra.mxu0 0.0
    %4546 = vmatprep.subr.mxu0 0.0
    %4547 = vmatpush1.msra.mxu0 0.0
    %4548 = vmatprep.subr.mxu0 0.0
    %4549 = vmatpush1.msra.mxu0 0.0
    %4550 = vmatprep.subr.mxu0 0.0
    %4551 = vmatpush1.msra.mxu0 0.0
    %4552 = vmatprep.subr.mxu0 0.0
    %4553 = vmatpush1.msra.mxu0 0.0
    %4554 = vmatprep.mubr.f32.mxu0 0.0
    %v4555 = vand.u32 %v3808, 4294901760
    %v4556 = vsub.f32 %v3808, %v4555
    %v4557 = vand.u32 %v4556, 4294901760
    %4558 = vmatmul.mubr.f32.gmra.mrb[0].mxu0 %v4557
    %v4559 = vpop.f32.mrb[0].mxu0
    %v4560 = vadd.f32 %v4374, %v4559
    %v4561 = vpop.f32.mrb[0].mxu0
    %4562 = vmatprep.mubr.f32.mxu0 0.0
    %v4563 = vand.u32 %v3811, 4294901760
    %v4564 = vsub.f32 %v3811, %v4563
    %v4565 = vand.u32 %v4564, 4294901760
    %4566 = vmatmul.mubr.f32.gmra.mrb[0].mxu0 %v4565
    %v4567 = vpop.f32.mrb[0].mxu0
    %v4568 = vadd.f32 %v4381, %v4567
    %v4569 = vpop.f32.mrb[0].mxu0
    %4570 = vmatprep.mubr.f32.mxu0 0.0
    %v4571 = vand.u32 %v3814, 4294901760
    %v4572 = vsub.f32 %v3814, %v4571
    %v4573 = vand.u32 %v4572, 4294901760
    %4574 = vmatmul.mubr.f32.gmra.mrb[0].mxu0 %v4573
    %v4575 = vpop.f32.mrb[0].mxu0
    %v4576 = vadd.f32 %v4388, %v4575
    %v4577 = vpop.f32.mrb[0].mxu0
    %4578 = vmatprep.mubr.f32.mxu0 0.0
    %v4579 = vand.u32 %v3817, 4294901760
    %v4580 = vsub.f32 %v3817, %v4579
    %v4581 = vand.u32 %v4580, 4294901760
    %4582 = vmatmul.mubr.f32.gmra.mrb[0].mxu0 %v4581
    %v4583 = vpop.f32.mrb[0].mxu0
    %v4584 = vadd.f32 %v4395, %v4583
    %v4585 = vpop.f32.mrb[0].mxu0
    %4586 = vmatprep.mubr.f32.mxu0 0.0
    %v4587 = vand.u32 %v3820, 4294901760
    %v4588 = vsub.f32 %v3820, %v4587
    %v4589 = vand.u32 %v4588, 4294901760
    %4590 = vmatmul.mubr.f32.gmra.mrb[0].mxu0 %v4589
    %v4591 = vpop.f32.mrb[0].mxu0
    %v4592 = vadd.f32 %v4402, %v4591
    %v4593 = vpop.f32.mrb[0].mxu0
    %4594 = vmatprep.mubr.f32.mxu0 0.0
    %v4595 = vand.u32 %v3823, 4294901760
    %v4596 = vsub.f32 %v3823, %v4595
    %v4597 = vand.u32 %v4596, 4294901760
    %4598 = vmatmul.mubr.f32.gmra.mrb[0].mxu0 %v4597
    %v4599 = vpop.f32.mrb[0].mxu0
    %v4600 = vadd.f32 %v4409, %v4599
    %v4601 = vpop.f32.mrb[0].mxu0
    %4602 = vmatprep.mubr.f32.mxu0 0.0
    %v4603 = vand.u32 %v3826, 4294901760
    %v4604 = vsub.f32 %v3826, %v4603
    %v4605 = vand.u32 %v4604, 4294901760
    %4606 = vmatmul.mubr.f32.gmra.mrb[0].mxu0 %v4605
    %v4607 = vpop.f32.mrb[0].mxu0
    %v4608 = vadd.f32 %v4416, %v4607
    %v4609 = vpop.f32.mrb[0].mxu0
    %4610 = vmatprep.mubr.f32.mxu0 0.0
    %v4611 = vand.u32 %v3829, 4294901760
    %v4612 = vsub.f32 %v3829, %v4611
    %v4613 = vand.u32 %v4612, 4294901760
    %4614 = vmatmul.mubr.f32.gmra.mrb[0].mxu0 %v4613
    %v4615 = vpop.f32.mrb[0].mxu0
    %v4616 = vadd.f32 %v4423, %v4615
    %v4617 = vpop.f32.mrb[0].mxu0
    %4618 = vmatprep.mubr.f32.mxu0 0.0
    %v4619 = vand.u32 %v3832, 4294901760
    %v4620 = vsub.f32 %v3832, %v4619
    %v4621 = vand.u32 %v4620, 4294901760
    %4622 = vmatmul.mubr.f32.gmra.mrb[0].mxu0 %v4621
    %v4623 = vpop.f32.mrb[0].mxu0
    %v4624 = vadd.f32 %v4430, %v4623
    %v4625 = vpop.f32.mrb[0].mxu0
    %4626 = vmatprep.mubr.f32.mxu0 0.0
    %v4627 = vand.u32 %v3835, 4294901760
    %v4628 = vsub.f32 %v3835, %v4627
    %v4629 = vand.u32 %v4628, 4294901760
    %4630 = vmatmul.mubr.f32.gmra.mrb[0].mxu0 %v4629
    %v4631 = vpop.f32.mrb[0].mxu0
    %v4632 = vadd.f32 %v4437, %v4631
    %v4633 = vpop.f32.mrb[0].mxu0
    %4634 = vmatprep.mubr.f32.mxu0 0.0
    %v4635 = vand.u32 %v3838, 4294901760
    %v4636 = vsub.f32 %v3838, %v4635
    %v4637 = vand.u32 %v4636, 4294901760
    %4638 = vmatmul.mubr.f32.gmra.mrb[0].mxu0 %v4637
    %v4639 = vpop.f32.mrb[0].mxu0
    %v4640 = vadd.f32 %v4444, %v4639
    %v4641 = vpop.f32.mrb[0].mxu0
    %4642 = vmatprep.mubr.f32.mxu0 0.0
    %v4643 = vand.u32 %v3841, 4294901760
    %v4644 = vsub.f32 %v3841, %v4643
    %v4645 = vand.u32 %v4644, 4294901760
    %4646 = vmatmul.mubr.f32.gmra.mrb[0].mxu0 %v4645
    %v4647 = vpop.f32.mrb[0].mxu0
    %v4648 = vadd.f32 %v4451, %v4647
    %v4649 = vpop.f32.mrb[0].mxu0
    %4650 = vmatprep.mubr.f32.mxu0 0.0
    %v4651 = vand.u32 %v3844, 4294901760
    %v4652 = vsub.f32 %v3844, %v4651
    %v4653 = vand.u32 %v4652, 4294901760
    %4654 = vmatmul.mubr.f32.gmra.mrb[0].mxu0 %v4653
    %v4655 = vpop.f32.mrb[0].mxu0
    %v4656 = vadd.f32 %v4458, %v4655
    %v4657 = vpop.f32.mrb[0].mxu0
    %4658 = vmatprep.mubr.f32.mxu0 0.0
    %v4659 = vand.u32 %v3847, 4294901760
    %v4660 = vsub.f32 %v3847, %v4659
    %v4661 = vand.u32 %v4660, 4294901760
    %4662 = vmatmul.mubr.f32.gmra.mrb[0].mxu0 %v4661
    %v4663 = vpop.f32.mrb[0].mxu0
    %v4664 = vadd.f32 %v4465, %v4663
    %v4665 = vpop.f32.mrb[0].mxu0
    %4666 = vmatprep.mubr.f32.mxu0 0.0
    %v4667 = vand.u32 %v3850, 4294901760
    %v4668 = vsub.f32 %v3850, %v4667
    %v4669 = vand.u32 %v4668, 4294901760
    %4670 = vmatmul.mubr.f32.gmra.mrb[0].mxu0 %v4669
    %v4671 = vpop.f32.mrb[0].mxu0
    %v4672 = vadd.f32 %v4472, %v4671
    %v4673 = vpop.f32.mrb[0].mxu0
    %4674 = vmatprep.mubr.f32.mxu0 0.0
    %v4675 = vand.u32 %v3853, 4294901760
    %v4676 = vsub.f32 %v3853, %v4675
    %v4677 = vand.u32 %v4676, 4294901760
    %4678 = vmatmul.mubr.f32.gmra.mrb[0].mxu0 %v4677
    %v4679 = vpop.f32.mrb[0].mxu0
    %v4680 = vadd.f32 %v4479, %v4679
    %v4681 = vpop.f32.mrb[0].mxu0
    %4682 = vdwg.mxu0
    %4683 = vmatprep.subr.mxu0 0.0
    %v4684 = vand.u32 %v3798, 4294901760
    %v4685 = vsub.f32 %v3798, %v4684
    %v4686 = vand.u32 %v4685, 4294901760
    %4687 = vmatpush1.msra.mxu0 %v4686
    %4688 = vmatprep.subr.mxu0 0.0
    %v4689 = vand.u32 %v3799, 4294901760
    %v4690 = vsub.f32 %v3799, %v4689
    %v4691 = vand.u32 %v4690, 4294901760
    %4692 = vmatpush1.msra.mxu0 %v4691
    %4693 = vmatprep.subr.mxu0 0.0
    %v4694 = vand.u32 %v3800, 4294901760
    %v4695 = vsub.f32 %v3800, %v4694
    %v4696 = vand.u32 %v4695, 4294901760
    %4697 = vmatpush1.msra.mxu0 %v4696
    %4698 = vmatprep.subr.mxu0 0.0
    %v4699 = vand.u32 %v3801, 4294901760
    %v4700 = vsub.f32 %v3801, %v4699
    %v4701 = vand.u32 %v4700, 4294901760
    %4702 = vmatpush1.msra.mxu0 %v4701
    %4703 = vmatprep.subr.mxu0 0.0
    %v4704 = vand.u32 %v3802, 4294901760
    %v4705 = vsub.f32 %v3802, %v4704
    %v4706 = vand.u32 %v4705, 4294901760
    %4707 = vmatpush1.msra.mxu0 %v4706
    %4708 = vmatprep.subr.mxu0 0.0
    %v4709 = vand.u32 %v3803, 4294901760
    %v4710 = vsub.f32 %v3803, %v4709
    %v4711 = vand.u32 %v4710, 4294901760
    %4712 = vmatpush1.msra.mxu0 %v4711
    %4713 = vmatprep.subr.mxu0 0.0
    %v4714 = vand.u32 %v3804, 4294901760
    %v4715 = vsub.f32 %v3804, %v4714
    %v4716 = vand.u32 %v4715, 4294901760
    %4717 = vmatpush1.msra.mxu0 %v4716
    %4718 = vmatprep.subr.mxu0 0.0
    %v4719 = vand.u32 %v3805, 4294901760
    %v4720 = vsub.f32 %v3805, %v4719
    %v4721 = vand.u32 %v4720, 4294901760
    %4722 = vmatpush1.msra.mxu0 %v4721
    %4723 = vmatprep.subr.mxu0 0.0
    %4724 = vmatpush1.msra.mxu0 0.0
    %4725 = vmatprep.subr.mxu0 0.0
    %4726 = vmatpush1.msra.mxu0 0.0
    %4727 = vmatprep.subr.mxu0 0.0
    %4728 = vmatpush1.msra.mxu0 0.0
    %4729 = vmatprep.subr.mxu0 0.0
    %4730 = vmatpush1.msra.mxu0 0.0
    %4731 = vmatprep.subr.mxu0 0.0
    %4732 = vmatpush1.msra.mxu0 0.0
    %4733 = vmatprep.subr.mxu0 0.0
    %4734 = vmatpush1.msra.mxu0 0.0
    %4735 = vmatprep.subr.mxu0 0.0
    %4736 = vmatpush1.msra.mxu0 0.0
    %4737 = vmatprep.subr.mxu0 0.0
    %4738 = vmatpush1.msra.mxu0 0.0
    %4739 = vmatprep.subr.mxu0 0.0
    %4740 = vmatpush1.msra.mxu0 0.0
    %4741 = vmatprep.subr.mxu0 0.0
    %4742 = vmatpush1.msra.mxu0 0.0
    %4743 = vmatprep.subr.mxu0 0.0
    %4744 = vmatpush1.msra.mxu0 0.0
    %4745 = vmatprep.subr.mxu0 0.0
    %4746 = vmatpush1.msra.mxu0 0.0
    %4747 = vmatprep.subr.mxu0 0.0
    %4748 = vmatpush1.msra.mxu0 0.0
    %4749 = vmatprep.subr.mxu0 0.0
    %4750 = vmatpush1.msra.mxu0 0.0
    %4751 = vmatprep.subr.mxu0 0.0
    %4752 = vmatpush1.msra.mxu0 0.0
    %4753 = vmatprep.subr.mxu0 0.0
    %4754 = vmatpush1.msra.mxu0 0.0
    %4755 = vmatprep.subr.mxu0 0.0
    %4756 = vmatpush1.msra.mxu0 0.0
    %4757 = vmatprep.subr.mxu0 0.0
    %4758 = vmatpush1.msra.mxu0 0.0
    %4759 = vmatprep.subr.mxu0 0.0
    %4760 = vmatpush1.msra.mxu0 0.0
    %4761 = vmatprep.subr.mxu0 0.0
    %4762 = vmatpush1.msra.mxu0 0.0
    %4763 = vmatprep.subr.mxu0 0.0
    %4764 = vmatpush1.msra.mxu0 0.0
    %4765 = vmatprep.subr.mxu0 0.0
    %4766 = vmatpush1.msra.mxu0 0.0
    %4767 = vmatprep.subr.mxu0 0.0
    %4768 = vmatpush1.msra.mxu0 0.0
    %4769 = vmatprep.subr.mxu0 0.0
    %4770 = vmatpush1.msra.mxu0 0.0
    %4771 = vmatprep.mubr.f32.mxu0 0.0
    %v4772 = vand.u32 %v3808, 4294901760
    %4773 = vmatmul.mubr.f32.gmra.mrb[0].mxu0 %v4772
    %v4774 = vpop.f32.mrb[0].mxu0
    %v4775 = vadd.f32 %v4560, %v4774
    %v4776 = vpop.f32.mrb[0].mxu0
    %4777 = vmatprep.mubr.f32.mxu0 0.0
    %v4778 = vand.u32 %v3811, 4294901760
    %4779 = vmatmul.mubr.f32.gmra.mrb[0].mxu0 %v4778
    %v4780 = vpop.f32.mrb[0].mxu0
    %v4781 = vadd.f32 %v4568, %v4780
    %v4782 = vpop.f32.mrb[0].mxu0
    %4783 = vmatprep.mubr.f32.mxu0 0.0
    %v4784 = vand.u32 %v3814, 4294901760
    %4785 = vmatmul.mubr.f32.gmra.mrb[0].mxu0 %v4784
    %v4786 = vpop.f32.mrb[0].mxu0
    %v4787 = vadd.f32 %v4576, %v4786
    %v4788 = vpop.f32.mrb[0].mxu0
    %4789 = vmatprep.mubr.f32.mxu0 0.0
    %v4790 = vand.u32 %v3817, 4294901760
    %4791 = vmatmul.mubr.f32.gmra.mrb[0].mxu0 %v4790
    %v4792 = vpop.f32.mrb[0].mxu0
    %v4793 = vadd.f32 %v4584, %v4792
    %v4794 = vpop.f32.mrb[0].mxu0
    %4795 = vmatprep.mubr.f32.mxu0 0.0
    %v4796 = vand.u32 %v3820, 4294901760
    %4797 = vmatmul.mubr.f32.gmra.mrb[0].mxu0 %v4796
    %v4798 = vpop.f32.mrb[0].mxu0
    %v4799 = vadd.f32 %v4592, %v4798
    %v4800 = vpop.f32.mrb[0].mxu0
    %4801 = vmatprep.mubr.f32.mxu0 0.0
    %v4802 = vand.u32 %v3823, 4294901760
    %4803 = vmatmul.mubr.f32.gmra.mrb[0].mxu0 %v4802
    %v4804 = vpop.f32.mrb[0].mxu0
    %v4805 = vadd.f32 %v4600, %v4804
    %v4806 = vpop.f32.mrb[0].mxu0
    %4807 = vmatprep.mubr.f32.mxu0 0.0
    %v4808 = vand.u32 %v3826, 4294901760
    %4809 = vmatmul.mubr.f32.gmra.mrb[0].mxu0 %v4808
    %v4810 = vpop.f32.mrb[0].mxu0
    %v4811 = vadd.f32 %v4608, %v4810
    %v4812 = vpop.f32.mrb[0].mxu0
    %4813 = vmatprep.mubr.f32.mxu0 0.0
    %v4814 = vand.u32 %v3829, 4294901760
    %4815 = vmatmul.mubr.f32.gmra.mrb[0].mxu0 %v4814
    %v4816 = vpop.f32.mrb[0].mxu0
    %v4817 = vadd.f32 %v4616, %v4816
    %v4818 = vpop.f32.mrb[0].mxu0
    %4819 = vmatprep.mubr.f32.mxu0 0.0
    %v4820 = vand.u32 %v3832, 4294901760
    %4821 = vmatmul.mubr.f32.gmra.mrb[0].mxu0 %v4820
    %v4822 = vpop.f32.mrb[0].mxu0
    %v4823 = vadd.f32 %v4624, %v4822
    %v4824 = vpop.f32.mrb[0].mxu0
    %4825 = vmatprep.mubr.f32.mxu0 0.0
    %v4826 = vand.u32 %v3835, 4294901760
    %4827 = vmatmul.mubr.f32.gmra.mrb[0].mxu0 %v4826
    %v4828 = vpop.f32.mrb[0].mxu0
    %v4829 = vadd.f32 %v4632, %v4828
    %v4830 = vpop.f32.mrb[0].mxu0
    %4831 = vmatprep.mubr.f32.mxu0 0.0
    %v4832 = vand.u32 %v3838, 4294901760
    %4833 = vmatmul.mubr.f32.gmra.mrb[0].mxu0 %v4832
    %v4834 = vpop.f32.mrb[0].mxu0
    %v4835 = vadd.f32 %v4640, %v4834
    %v4836 = vpop.f32.mrb[0].mxu0
    %4837 = vmatprep.mubr.f32.mxu0 0.0
    %v4838 = vand.u32 %v3841, 4294901760
    %4839 = vmatmul.mubr.f32.gmra.mrb[0].mxu0 %v4838
    %v4840 = vpop.f32.mrb[0].mxu0
    %v4841 = vadd.f32 %v4648, %v4840
    %v4842 = vpop.f32.mrb[0].mxu0
    %4843 = vmatprep.mubr.f32.mxu0 0.0
    %v4844 = vand.u32 %v3844, 4294901760
    %4845 = vmatmul.mubr.f32.gmra.mrb[0].mxu0 %v4844
    %v4846 = vpop.f32.mrb[0].mxu0
    %v4847 = vadd.f32 %v4656, %v4846
    %v4848 = vpop.f32.mrb[0].mxu0
    %4849 = vmatprep.mubr.f32.mxu0 0.0
    %v4850 = vand.u32 %v3847, 4294901760
    %4851 = vmatmul.mubr.f32.gmra.mrb[0].mxu0 %v4850
    %v4852 = vpop.f32.mrb[0].mxu0
    %v4853 = vadd.f32 %v4664, %v4852
    %v4854 = vpop.f32.mrb[0].mxu0
    %4855 = vmatprep.mubr.f32.mxu0 0.0
    %v4856 = vand.u32 %v3850, 4294901760
    %4857 = vmatmul.mubr.f32.gmra.mrb[0].mxu0 %v4856
    %v4858 = vpop.f32.mrb[0].mxu0
    %v4859 = vadd.f32 %v4672, %v4858
    %v4860 = vpop.f32.mrb[0].mxu0
    %4861 = vmatprep.mubr.f32.mxu0 0.0
    %v4862 = vand.u32 %v3853, 4294901760
    %4863 = vmatmul.mubr.f32.gmra.mrb[0].mxu0 %v4862
    %v4864 = vpop.f32.mrb[0].mxu0
    %v4865 = vadd.f32 %v4680, %v4864
    %v4866 = vpop.f32.mrb[0].mxu0
    %4867 = vdwg.mxu0
    %4868 = vmatprep.subr.mxu0 0.0
    %v4869 = vand.u32 %v3798, 4294901760
    %4870 = vmatpush1.msra.mxu0 %v4869
    %4871 = vmatprep.subr.mxu0 0.0
    %v4872 = vand.u32 %v3799, 4294901760
    %4873 = vmatpush1.msra.mxu0 %v4872
    %4874 = vmatprep.subr.mxu0 0.0
    %v4875 = vand.u32 %v3800, 4294901760
    %4876 = vmatpush1.msra.mxu0 %v4875
    %4877 = vmatprep.subr.mxu0 0.0
    %v4878 = vand.u32 %v3801, 4294901760
    %4879 = vmatpush1.msra.mxu0 %v4878
    %4880 = vmatprep.subr.mxu0 0.0
    %v4881 = vand.u32 %v3802, 4294901760
    %4882 = vmatpush1.msra.mxu0 %v4881
    %4883 = vmatprep.subr.mxu0 0.0
    %v4884 = vand.u32 %v3803, 4294901760
    %4885 = vmatpush1.msra.mxu0 %v4884
    %4886 = vmatprep.subr.mxu0 0.0
    %v4887 = vand.u32 %v3804, 4294901760
    %4888 = vmatpush1.msra.mxu0 %v4887
    %4889 = vmatprep.subr.mxu0 0.0
    %v4890 = vand.u32 %v3805, 4294901760
    %4891 = vmatpush1.msra.mxu0 %v4890
    %4892 = vmatprep.subr.mxu0 0.0
    %4893 = vmatpush1.msra.mxu0 0.0
    %4894 = vmatprep.subr.mxu0 0.0
    %4895 = vmatpush1.msra.mxu0 0.0
    %4896 = vmatprep.subr.mxu0 0.0
    %4897 = vmatpush1.msra.mxu0 0.0
    %4898 = vmatprep.subr.mxu0 0.0
    %4899 = vmatpush1.msra.mxu0 0.0
    %4900 = vmatprep.subr.mxu0 0.0
    %4901 = vmatpush1.msra.mxu0 0.0
    %4902 = vmatprep.subr.mxu0 0.0
    %4903 = vmatpush1.msra.mxu0 0.0
    %4904 = vmatprep.subr.mxu0 0.0
    %4905 = vmatpush1.msra.mxu0 0.0
    %4906 = vmatprep.subr.mxu0 0.0
    %4907 = vmatpush1.msra.mxu0 0.0
    %4908 = vmatprep.subr.mxu0 0.0
    %4909 = vmatpush1.msra.mxu0 0.0
    %4910 = vmatprep.subr.mxu0 0.0
    %4911 = vmatpush1.msra.mxu0 0.0
    %4912 = vmatprep.subr.mxu0 0.0
    %4913 = vmatpush1.msra.mxu0 0.0
    %4914 = vmatprep.subr.mxu0 0.0
    %4915 = vmatpush1.msra.mxu0 0.0
    %4916 = vmatprep.subr.mxu0 0.0
    %4917 = vmatpush1.msra.mxu0 0.0
    %4918 = vmatprep.subr.mxu0 0.0
    %4919 = vmatpush1.msra.mxu0 0.0
    %4920 = vmatprep.subr.mxu0 0.0
    %4921 = vmatpush1.msra.mxu0 0.0
    %4922 = vmatprep.subr.mxu0 0.0
    %4923 = vmatpush1.msra.mxu0 0.0
    %4924 = vmatprep.subr.mxu0 0.0
    %4925 = vmatpush1.msra.mxu0 0.0
    %4926 = vmatprep.subr.mxu0 0.0
    %4927 = vmatpush1.msra.mxu0 0.0
    %4928 = vmatprep.subr.mxu0 0.0
    %4929 = vmatpush1.msra.mxu0 0.0
    %4930 = vmatprep.subr.mxu0 0.0
    %4931 = vmatpush1.msra.mxu0 0.0
    %4932 = vmatprep.subr.mxu0 0.0
    %4933 = vmatpush1.msra.mxu0 0.0
    %4934 = vmatprep.subr.mxu0 0.0
    %4935 = vmatpush1.msra.mxu0 0.0
    %4936 = vmatprep.subr.mxu0 0.0
    %4937 = vmatpush1.msra.mxu0 0.0
    %4938 = vmatprep.subr.mxu0 0.0
    %4939 = vmatpush1.msra.mxu0 0.0
    %4940 = vmatprep.mubr.f32.mxu0 0.0
    %v4941 = vand.u32 %v3808, 4294901760
    %4942 = vmatmul.mubr.f32.gmra.mrb[0].mxu0 %v4941
    %v4943 = vpop.f32.mrb[0].mxu0
    %v4944 = vadd.f32 %v4775, %v4943
    %v4945 = vpop.f32.mrb[0].mxu0
    %4946 = vmatprep.mubr.f32.mxu0 0.0
    %v4947 = vand.u32 %v3811, 4294901760
    %4948 = vmatmul.mubr.f32.gmra.mrb[0].mxu0 %v4947
    %v4949 = vpop.f32.mrb[0].mxu0
    %v4950 = vadd.f32 %v4781, %v4949
    %v4951 = vpop.f32.mrb[0].mxu0
    %4952 = vmatprep.mubr.f32.mxu0 0.0
    %v4953 = vand.u32 %v3814, 4294901760
    %4954 = vmatmul.mubr.f32.gmra.mrb[0].mxu0 %v4953
    %v4955 = vpop.f32.mrb[0].mxu0
    %v4956 = vadd.f32 %v4787, %v4955
    %v4957 = vpop.f32.mrb[0].mxu0
    %4958 = vmatprep.mubr.f32.mxu0 0.0
    %v4959 = vand.u32 %v3817, 4294901760
    %4960 = vmatmul.mubr.f32.gmra.mrb[0].mxu0 %v4959
    %v4961 = vpop.f32.mrb[0].mxu0
    %v4962 = vadd.f32 %v4793, %v4961
    %v4963 = vpop.f32.mrb[0].mxu0
    %4964 = vmatprep.mubr.f32.mxu0 0.0
    %v4965 = vand.u32 %v3820, 4294901760
    %4966 = vmatmul.mubr.f32.gmra.mrb[0].mxu0 %v4965
    %v4967 = vpop.f32.mrb[0].mxu0
    %v4968 = vadd.f32 %v4799, %v4967
    %v4969 = vpop.f32.mrb[0].mxu0
    %4970 = vmatprep.mubr.f32.mxu0 0.0
    %v4971 = vand.u32 %v3823, 4294901760
    %4972 = vmatmul.mubr.f32.gmra.mrb[0].mxu0 %v4971
    %v4973 = vpop.f32.mrb[0].mxu0
    %v4974 = vadd.f32 %v4805, %v4973
    %v4975 = vpop.f32.mrb[0].mxu0
    %4976 = vmatprep.mubr.f32.mxu0 0.0
    %v4977 = vand.u32 %v3826, 4294901760
    %4978 = vmatmul.mubr.f32.gmra.mrb[0].mxu0 %v4977
    %v4979 = vpop.f32.mrb[0].mxu0
    %v4980 = vadd.f32 %v4811, %v4979
    %v4981 = vpop.f32.mrb[0].mxu0
    %4982 = vmatprep.mubr.f32.mxu0 0.0
    %v4983 = vand.u32 %v3829, 4294901760
    %4984 = vmatmul.mubr.f32.gmra.mrb[0].mxu0 %v4983
    %v4985 = vpop.f32.mrb[0].mxu0
    %v4986 = vadd.f32 %v4817, %v4985
    %v4987 = vpop.f32.mrb[0].mxu0
    %4988 = vmatprep.mubr.f32.mxu0 0.0
    %v4989 = vand.u32 %v3832, 4294901760
    %4990 = vmatmul.mubr.f32.gmra.mrb[0].mxu0 %v4989
    %v4991 = vpop.f32.mrb[0].mxu0
    %v4992 = vadd.f32 %v4823, %v4991
    %v4993 = vpop.f32.mrb[0].mxu0
    %4994 = vmatprep.mubr.f32.mxu0 0.0
    %v4995 = vand.u32 %v3835, 4294901760
    %4996 = vmatmul.mubr.f32.gmra.mrb[0].mxu0 %v4995
    %v4997 = vpop.f32.mrb[0].mxu0
    %v4998 = vadd.f32 %v4829, %v4997
    %v4999 = vpop.f32.mrb[0].mxu0
    %5000 = vmatprep.mubr.f32.mxu0 0.0
    %v5001 = vand.u32 %v3838, 4294901760
    %5002 = vmatmul.mubr.f32.gmra.mrb[0].mxu0 %v5001
    %v5003 = vpop.f32.mrb[0].mxu0
    %v5004 = vadd.f32 %v4835, %v5003
    %v5005 = vpop.f32.mrb[0].mxu0
    %5006 = vmatprep.mubr.f32.mxu0 0.0
    %v5007 = vand.u32 %v3841, 4294901760
    %5008 = vmatmul.mubr.f32.gmra.mrb[0].mxu0 %v5007
    %v5009 = vpop.f32.mrb[0].mxu0
    %v5010 = vadd.f32 %v4841, %v5009
    %v5011 = vpop.f32.mrb[0].mxu0
    %5012 = vmatprep.mubr.f32.mxu0 0.0
    %v5013 = vand.u32 %v3844, 4294901760
    %5014 = vmatmul.mubr.f32.gmra.mrb[0].mxu0 %v5013
    %v5015 = vpop.f32.mrb[0].mxu0
    %v5016 = vadd.f32 %v4847, %v5015
    %v5017 = vpop.f32.mrb[0].mxu0
    %5018 = vmatprep.mubr.f32.mxu0 0.0
    %v5019 = vand.u32 %v3847, 4294901760
    %5020 = vmatmul.mubr.f32.gmra.mrb[0].mxu0 %v5019
    %v5021 = vpop.f32.mrb[0].mxu0
    %v5022 = vadd.f32 %v4853, %v5021
    %v5023 = vpop.f32.mrb[0].mxu0
    %5024 = vmatprep.mubr.f32.mxu0 0.0
    %v5025 = vand.u32 %v3850, 4294901760
    %5026 = vmatmul.mubr.f32.gmra.mrb[0].mxu0 %v5025
    %v5027 = vpop.f32.mrb[0].mxu0
    %v5028 = vadd.f32 %v4859, %v5027
    %v5029 = vpop.f32.mrb[0].mxu0
    %5030 = vmatprep.mubr.f32.mxu0 0.0
    %v5031 = vand.u32 %v3853, 4294901760
    %5032 = vmatmul.mubr.f32.gmra.mrb[0].mxu0 %v5031
    %v5033 = vpop.f32.mrb[0].mxu0
    %v5034 = vadd.f32 %v4865, %v5033
    %v5035 = vpop.f32.mrb[0].mxu0
    %5036 = vdwg.mxu0
    %vm5037 = vcmp.gt.f32.partialorder %v4944, 0.0
    %vm5038 = vcmp.gt.f32.partialorder %v4950, 0.0
    %vm5039 = vcmp.gt.f32.partialorder %v4956, 0.0
    %vm5040 = vcmp.gt.f32.partialorder %v4962, 0.0
    %vm5041 = vcmp.gt.f32.partialorder %v4968, 0.0
    %vm5042 = vcmp.gt.f32.partialorder %v4974, 0.0
    %vm5043 = vcmp.gt.f32.partialorder %v4980, 0.0
    %vm5044 = vcmp.gt.f32.partialorder %v4986, 0.0
    %vm5045 = vcmp.gt.f32.partialorder %v4992, 0.0
    %vm5046 = vcmp.gt.f32.partialorder %v4998, 0.0
    %vm5047 = vcmp.gt.f32.partialorder %v5004, 0.0
    %vm5048 = vcmp.gt.f32.partialorder %v5010, 0.0
    %vm5049 = vcmp.gt.f32.partialorder %v5016, 0.0
    %vm5050 = vcmp.gt.f32.partialorder %v5022, 0.0
    %vm5051 = vcmp.gt.f32.partialorder %v5028, 0.0
    %vm5052 = vcmp.gt.f32.partialorder %v5034, 0.0
    %v5053 = vmul.f32 %v4944, 0.2
    %v5054 = vmul.f32 %v4950, 0.2
    %v5055 = vmul.f32 %v4956, 0.2
    %v5056 = vmul.f32 %v4962, 0.2
    %v5057 = vmul.f32 %v4968, 0.2
    %v5058 = vmul.f32 %v4974, 0.2
    %v5059 = vmul.f32 %v4980, 0.2
    %v5060 = vmul.f32 %v4986, 0.2
    %v5061 = vmul.f32 %v4992, 0.2
    %v5062 = vmul.f32 %v4998, 0.2
    %v5063 = vmul.f32 %v5004, 0.2
    %v5064 = vmul.f32 %v5010, 0.2
    %v5065 = vmul.f32 %v5016, 0.2
    %v5066 = vmul.f32 %v5022, 0.2
    %v5067 = vmul.f32 %v5028, 0.2
    %v5068 = vmul.f32 %v5034, 0.2
    %v5069 = vsel %vm5037, %v4944, %v5053
    %v5070 = vsel %vm5038, %v4950, %v5054
    %v5071 = vsel %vm5039, %v4956, %v5055
    %v5072 = vsel %vm5040, %v4962, %v5056
    %v5073 = vsel %vm5041, %v4968, %v5057
    %v5074 = vsel %vm5042, %v4974, %v5058
    %v5075 = vsel %vm5043, %v4980, %v5059
    %v5076 = vsel %vm5044, %v4986, %v5060
    %v5077 = vsel %vm5045, %v4992, %v5061
    %v5078 = vsel %vm5046, %v4998, %v5062
    %v5079 = vsel %vm5047, %v5004, %v5063
    %v5080 = vsel %vm5048, %v5010, %v5064
    %v5081 = vsel %vm5049, %v5016, %v5065
    %v5082 = vsel %vm5050, %v5022, %v5066
    %v5083 = vsel %vm5051, %v5028, %v5067
    %v5084 = vsel %vm5052, %v5034, %v5068
    %v5085 = vadd.s32 %v377, 8
    %v5086 = vadd.s32 %v377, 16
    %v5087 = vadd.s32 %v377, 24
    %v5088 = vadd.s32 %v377, 32
    %v5089 = vadd.s32 %v377, 40
    %v5090 = vadd.s32 %v377, 48
    %v5091 = vadd.s32 %v377, 56
    %v5092 = vadd.s32 %v377, 64
    %v5093 = vadd.s32 %v377, 72
    %v5094 = vadd.s32 %v377, 80
    %v5095 = vadd.s32 %v377, 88
    %v5096 = vadd.s32 %v377, 96
    %v5097 = vadd.s32 %v377, 104
    %v5098 = vadd.s32 %v377, 112
    %v5099 = vadd.s32 %v377, 120
    %vm5100 = vcmp.lt.s32.totalorder %v377, 64
    %vm5101 = vcmp.lt.s32.totalorder %v5085, 64
    %vm5102 = vcmp.lt.s32.totalorder %v5086, 64
    %vm5103 = vcmp.lt.s32.totalorder %v5087, 64
    %vm5104 = vcmp.lt.s32.totalorder %v5088, 64
    %vm5105 = vcmp.lt.s32.totalorder %v5089, 64
    %vm5106 = vcmp.lt.s32.totalorder %v5090, 64
    %vm5107 = vcmp.lt.s32.totalorder %v5091, 64
    %vm5108 = vcmp.lt.s32.totalorder %v5092, 64
    %vm5109 = vcmp.lt.s32.totalorder %v5093, 64
    %vm5110 = vcmp.lt.s32.totalorder %v5094, 64
    %vm5111 = vcmp.lt.s32.totalorder %v5095, 64
    %vm5112 = vcmp.lt.s32.totalorder %v5096, 64
    %vm5113 = vcmp.lt.s32.totalorder %v5097, 64
    %vm5114 = vcmp.lt.s32.totalorder %v5098, 64
    %vm5115 = vcmp.lt.s32.totalorder %v5099, 64
    %vm5116 = vcmp.lt.s32.totalorder %v183, 2
    %vm5117 = vmxor %vm5100, %vm5116
    %vm5118 = vmxor %vm5101, %vm5116
    %vm5119 = vmxor %vm5102, %vm5116
    %vm5120 = vmxor %vm5103, %vm5116
    %vm5121 = vmxor %vm5104, %vm5116
    %vm5122 = vmxor %vm5105, %vm5116
    %vm5123 = vmxor %vm5106, %vm5116
    %vm5124 = vmxor %vm5107, %vm5116
    %vm5125 = vmxor %vm5108, %vm5116
    %vm5126 = vmxor %vm5109, %vm5116
    %vm5127 = vmxor %vm5110, %vm5116
    %vm5128 = vmxor %vm5111, %vm5116
    %vm5129 = vmxor %vm5112, %vm5116
    %vm5130 = vmxor %vm5113, %vm5116
    %vm5131 = vmxor %vm5114, %vm5116
    %vm5132 = vmxor %vm5115, %vm5116
    %vm5133 = vmxor %vm5117, 1
    %vm5134 = vmxor %vm5118, 1
    %vm5135 = vmxor %vm5119, 1
    %vm5136 = vmxor %vm5120, 1
    %vm5137 = vmxor %vm5121, 1
    %vm5138 = vmxor %vm5122, 1
    %vm5139 = vmxor %vm5123, 1
    %vm5140 = vmxor %vm5124, 1
    %vm5141 = vmxor %vm5125, 1
    %vm5142 = vmxor %vm5126, 1
    %vm5143 = vmxor %vm5127, 1
    %vm5144 = vmxor %vm5128, 1
    %vm5145 = vmxor %vm5129, 1
    %vm5146 = vmxor %vm5130, 1
    %vm5147 = vmxor %vm5131, 1
    %vm5148 = vmxor %vm5132, 1
    %v5149 = vsel %vm5133, 1, 0
    %v5150 = vsel %vm5134, 1, 0
    %v5151 = vsel %vm5135, 1, 0
    %v5152 = vsel %vm5136, 1, 0
    %v5153 = vsel %vm5137, 1, 0
    %v5154 = vsel %vm5138, 1, 0
    %v5155 = vsel %vm5139, 1, 0
    %v5156 = vsel %vm5140, 1, 0
    %v5157 = vsel %vm5141, 1, 0
    %v5158 = vsel %vm5142, 1, 0
    %v5159 = vsel %vm5143, 1, 0
    %v5160 = vsel %vm5144, 1, 0
    %v5161 = vsel %vm5145, 1, 0
    %v5162 = vsel %vm5146, 1, 0
    %v5163 = vsel %vm5147, 1, 0
    %v5164 = vsel %vm5148, 1, 0
    %v5165 = vcvt.s32.f32 %v5149
    %v5166 = vcvt.s32.f32 %v5150
    %v5167 = vcvt.s32.f32 %v5151
    %v5168 = vcvt.s32.f32 %v5152
    %v5169 = vcvt.s32.f32 %v5153
    %v5170 = vcvt.s32.f32 %v5154
    %v5171 = vcvt.s32.f32 %v5155
    %v5172 = vcvt.s32.f32 %v5156
    %v5173 = vcvt.s32.f32 %v5157
    %v5174 = vcvt.s32.f32 %v5158
    %v5175 = vcvt.s32.f32 %v5159
    %v5176 = vcvt.s32.f32 %v5160
    %v5177 = vcvt.s32.f32 %v5161
    %v5178 = vcvt.s32.f32 %v5162
    %v5179 = vcvt.s32.f32 %v5163
    %v5180 = vcvt.s32.f32 %v5164
    %vm5181 = vcmask 31744
    %v5182 = vsel %vm5181, %v5069, -inf
    %v5183 = vsel %vm5181, %v5070, -inf
    %v5184 = vsel %vm5181, %v5071, -inf
    %v5185 = vsel %vm5181, %v5072, -inf
    %v5186 = vsel %vm5181, %v5073, -inf
    %v5187 = vmax.f32 %v5182, %v5186
    %v5188 = vsel %vm5181, %v5074, -inf
    %v5189 = vmax.f32 %v5183, %v5188
    %v5190 = vsel %vm5181, %v5075, -inf
    %v5191 = vmax.f32 %v5184, %v5190
    %v5192 = vsel %vm5181, %v5076, -inf
    %v5193 = vmax.f32 %v5185, %v5192
    %v5194 = vsel %vm5181, %v5077, -inf
    %v5195 = vmax.f32 %v5187, %v5194
    %v5196 = vsel %vm5181, %v5078, -inf
    %v5197 = vmax.f32 %v5189, %v5196
    %v5198 = vsel %vm5181, %v5079, -inf
    %v5199 = vmax.f32 %v5191, %v5198
    %v5200 = vsel %vm5181, %v5080, -inf
    %v5201 = vmax.f32 %v5193, %v5200
    %v5202 = vsel %vm5181, %v5081, -inf
    %v5203 = vmax.f32 %v5195, %v5202
    %v5204 = vsel %vm5181, %v5082, -inf
    %v5205 = vmax.f32 %v5197, %v5204
    %v5206 = vsel %vm5181, %v5083, -inf
    %v5207 = vmax.f32 %v5199, %v5206
    %v5208 = vsel %vm5181, %v5084, -inf
    %v5209 = vmax.f32 %v5201, %v5208
    %v5210 = vmax.f32 %v5203, %v5205
    %v5211 = vmax.f32 %v5207, %v5209
    %v5212 = vmax.f32 %v5210, %v5211
    %v5213 = vrot.slane %v5212, 4
    %v5214 = vmax.f32 %v5212, %v5213
    %v5215 = vrot.slane %v5214, 2
    %v5216 = vmax.f32 %v5214, %v5215
    %v5217 = vrot.slane %v5216, 1
    %v5218 = vmax.f32 %v5216, %v5217
    %v5219 = vsub.f32 %v5069, %v5218
    %v5220 = vsub.f32 %v5070, %v5218
    %v5221 = vsub.f32 %v5071, %v5218
    %v5222 = vsub.f32 %v5072, %v5218
    %v5223 = vsub.f32 %v5073, %v5218
    %v5224 = vsub.f32 %v5074, %v5218
    %v5225 = vsub.f32 %v5075, %v5218
    %v5226 = vsub.f32 %v5076, %v5218
    %v5227 = vsub.f32 %v5077, %v5218
    %v5228 = vsub.f32 %v5078, %v5218
    %v5229 = vsub.f32 %v5079, %v5218
    %v5230 = vsub.f32 %v5080, %v5218
    %v5231 = vsub.f32 %v5081, %v5218
    %v5232 = vsub.f32 %v5082, %v5218
    %v5233 = vsub.f32 %v5083, %v5218
    %v5234 = vsub.f32 %v5084, %v5218
    %v5235 = vmul.f32 %v5219, 1.442695
    %v5236 = vpow.pop %v5235
    %v5237 = vmul.f32 %v5220, 1.442695
    %v5238 = vpow.pop %v5237
    %v5239 = vmul.f32 %v5221, 1.442695
    %v5240 = vpow.pop %v5239
    %v5241 = vmul.f32 %v5222, 1.442695
    %v5242 = vpow.pop %v5241
    %v5243 = vmul.f32 %v5223, 1.442695
    %v5244 = vpow.pop %v5243
    %v5245 = vmul.f32 %v5224, 1.442695
    %v5246 = vpow.pop %v5245
    %v5247 = vmul.f32 %v5225, 1.442695
    %v5248 = vpow.pop %v5247
    %v5249 = vmul.f32 %v5226, 1.442695
    %v5250 = vpow.pop %v5249
    %v5251 = vmul.f32 %v5227, 1.442695
    %v5252 = vpow.pop %v5251
    %v5253 = vmul.f32 %v5228, 1.442695
    %v5254 = vpow.pop %v5253
    %v5255 = vmul.f32 %v5229, 1.442695
    %v5256 = vpow.pop %v5255
    %v5257 = vmul.f32 %v5230, 1.442695
    %v5258 = vpow.pop %v5257
    %v5259 = vmul.f32 %v5231, 1.442695
    %v5260 = vpow.pop %v5259
    %v5261 = vmul.f32 %v5232, 1.442695
    %v5262 = vpow.pop %v5261
    %v5263 = vmul.f32 %v5233, 1.442695
    %v5264 = vpow.pop %v5263
    %v5265 = vmul.f32 %v5234, 1.442695
    %v5266 = vpow.pop %v5265
    %v5267 = vmul.f32 %v5236, %v5165
    %v5268 = vmul.f32 %v5238, %v5166
    %v5269 = vmul.f32 %v5240, %v5167
    %v5270 = vmul.f32 %v5242, %v5168
    %v5271 = vmul.f32 %v5244, %v5169
    %v5272 = vmul.f32 %v5246, %v5170
    %v5273 = vmul.f32 %v5248, %v5171
    %v5274 = vmul.f32 %v5250, %v5172
    %v5275 = vmul.f32 %v5252, %v5173
    %v5276 = vmul.f32 %v5254, %v5174
    %v5277 = vmul.f32 %v5256, %v5175
    %v5278 = vmul.f32 %v5258, %v5176
    %v5279 = vmul.f32 %v5260, %v5177
    %v5280 = vmul.f32 %v5262, %v5178
    %v5281 = vmul.f32 %v5264, %v5179
    %v5282 = vmul.f32 %v5266, %v5180
    %5283 = vmatprep.subr.mxu0 0.0
    %v5284 = vand.u32 %v5267, 4294901760
    %5285 = vmatpush1.msra.mxu0 %v5284
    %5286 = vmatprep.subr.mxu0 0.0
    %v5287 = vand.u32 %v5268, 4294901760
    %5288 = vmatpush1.msra.mxu0 %v5287
    %5289 = vmatprep.subr.mxu0 0.0
    %v5290 = vand.u32 %v5269, 4294901760
    %5291 = vmatpush1.msra.mxu0 %v5290
    %5292 = vmatprep.subr.mxu0 0.0
    %v5293 = vand.u32 %v5270, 4294901760
    %5294 = vmatpush1.msra.mxu0 %v5293
    %5295 = vmatprep.subr.mxu0 0.0
    %v5296 = vand.u32 %v5271, 4294901760
    %5297 = vmatpush1.msra.mxu0 %v5296
    %5298 = vmatprep.subr.mxu0 0.0
    %v5299 = vand.u32 %v5272, 4294901760
    %5300 = vmatpush1.msra.mxu0 %v5299
    %5301 = vmatprep.subr.mxu0 0.0
    %v5302 = vand.u32 %v5273, 4294901760
    %5303 = vmatpush1.msra.mxu0 %v5302
    %5304 = vmatprep.subr.mxu0 0.0
    %v5305 = vand.u32 %v5274, 4294901760
    %5306 = vmatpush1.msra.mxu0 %v5305
    %5307 = vmatprep.subr.mxu0 0.0
    %v5308 = vand.u32 %v5275, 4294901760
    %5309 = vmatpush1.msra.mxu0 %v5308
    %5310 = vmatprep.subr.mxu0 0.0
    %v5311 = vand.u32 %v5276, 4294901760
    %5312 = vmatpush1.msra.mxu0 %v5311
    %5313 = vmatprep.subr.mxu0 0.0
    %v5314 = vand.u32 %v5277, 4294901760
    %5315 = vmatpush1.msra.mxu0 %v5314
    %5316 = vmatprep.subr.mxu0 0.0
    %v5317 = vand.u32 %v5278, 4294901760
    %5318 = vmatpush1.msra.mxu0 %v5317
    %5319 = vmatprep.subr.mxu0 0.0
    %v5320 = vand.u32 %v5279, 4294901760
    %5321 = vmatpush1.msra.mxu0 %v5320
    %5322 = vmatprep.subr.mxu0 0.0
    %v5323 = vand.u32 %v5280, 4294901760
    %5324 = vmatpush1.msra.mxu0 %v5323
    %5325 = vmatprep.subr.mxu0 0.0
    %v5326 = vand.u32 %v5281, 4294901760
    %5327 = vmatpush1.msra.mxu0 %v5326
    %5328 = vmatprep.subr.mxu0 0.0
    %v5329 = vand.u32 %v5282, 4294901760
    %5330 = vmatpush1.msra.mxu0 %v5329
    %5331 = vmatprep.subr.mxu0 0.0
    %5332 = vmatpush1.msra.mxu0 0.0
    %5333 = vmatprep.subr.mxu0 0.0
    %5334 = vmatpush1.msra.mxu0 0.0
    %5335 = vmatprep.subr.mxu0 0.0
    %5336 = vmatpush1.msra.mxu0 0.0
    %5337 = vmatprep.subr.mxu0 0.0
    %5338 = vmatpush1.msra.mxu0 0.0
    %5339 = vmatprep.subr.mxu0 0.0
    %5340 = vmatpush1.msra.mxu0 0.0
    %5341 = vmatprep.subr.mxu0 0.0
    %5342 = vmatpush1.msra.mxu0 0.0
    %5343 = vmatprep.subr.mxu0 0.0
    %5344 = vmatpush1.msra.mxu0 0.0
    %5345 = vmatprep.subr.mxu0 0.0
    %5346 = vmatpush1.msra.mxu0 0.0
    %5347 = vmatprep.subr.mxu0 0.0
    %5348 = vmatpush1.msra.mxu0 0.0
    %5349 = vmatprep.subr.mxu0 0.0
    %5350 = vmatpush1.msra.mxu0 0.0
    %5351 = vmatprep.subr.mxu0 0.0
    %5352 = vmatpush1.msra.mxu0 0.0
    %5353 = vmatprep.subr.mxu0 0.0
    %5354 = vmatpush1.msra.mxu0 0.0
    %5355 = vmatprep.subr.mxu0 0.0
    %5356 = vmatpush1.msra.mxu0 0.0
    %5357 = vmatprep.subr.mxu0 0.0
    %5358 = vmatpush1.msra.mxu0 0.0
    %5359 = vmatprep.subr.mxu0 0.0
    %5360 = vmatpush1.msra.mxu0 0.0
    %5361 = vmatprep.subr.mxu0 0.0
    %5362 = vmatpush1.msra.mxu0 0.0
    %5363 = vmatprep.mubr.f32.mxu0 0.0
    %v5364 = vand.u32 %v384, 4294901760
    %v5365 = vsub.f32 %v384, %v5364
    %v5366 = vand.u32 %v5365, 4294901760
    %v5367 = vsub.f32 %v5365, %v5366
    %v5368 = vand.u32 %v5367, 4294901760
    %5369 = vmatmul.mubr.f32.gmra.mrb[0].mxu0 %v5368
    %v5370 = vpop.f32.mrb[0].mxu0
    %v5371 = vadd.f32 0.0, %v5370
    %v5372 = vpop.f32.mrb[0].mxu0
    %5373 = vdwg.mxu0
    %5374 = vmatprep.subr.mxu0 0.0
    %v5375 = vand.u32 %v5267, 4294901760
    %v5376 = vsub.f32 %v5267, %v5375
    %v5377 = vand.u32 %v5376, 4294901760
    %v5378 = vsub.f32 %v5376, %v5377
    %v5379 = vand.u32 %v5378, 4294901760
    %5380 = vmatpush1.msra.mxu0 %v5379
    %5381 = vmatprep.subr.mxu0 0.0
    %v5382 = vand.u32 %v5268, 4294901760
    %v5383 = vsub.f32 %v5268, %v5382
    %v5384 = vand.u32 %v5383, 4294901760
    %v5385 = vsub.f32 %v5383, %v5384
    %v5386 = vand.u32 %v5385, 4294901760
    %5387 = vmatpush1.msra.mxu0 %v5386
    %5388 = vmatprep.subr.mxu0 0.0
    %v5389 = vand.u32 %v5269, 4294901760
    %v5390 = vsub.f32 %v5269, %v5389
    %v5391 = vand.u32 %v5390, 4294901760
    %v5392 = vsub.f32 %v5390, %v5391
    %v5393 = vand.u32 %v5392, 4294901760
    %5394 = vmatpush1.msra.mxu0 %v5393
    %5395 = vmatprep.subr.mxu0 0.0
    %v5396 = vand.u32 %v5270, 4294901760
    %v5397 = vsub.f32 %v5270, %v5396
    %v5398 = vand.u32 %v5397, 4294901760
    %v5399 = vsub.f32 %v5397, %v5398
    %v5400 = vand.u32 %v5399, 4294901760
    %5401 = vmatpush1.msra.mxu0 %v5400
    %5402 = vmatprep.subr.mxu0 0.0
    %v5403 = vand.u32 %v5271, 4294901760
    %v5404 = vsub.f32 %v5271, %v5403
    %v5405 = vand.u32 %v5404, 4294901760
    %v5406 = vsub.f32 %v5404, %v5405
    %v5407 = vand.u32 %v5406, 4294901760
    %5408 = vmatpush1.msra.mxu0 %v5407
    %5409 = vmatprep.subr.mxu0 0.0
    %v5410 = vand.u32 %v5272, 4294901760
    %v5411 = vsub.f32 %v5272, %v5410
    %v5412 = vand.u32 %v5411, 4294901760
    %v5413 = vsub.f32 %v5411, %v5412
    %v5414 = vand.u32 %v5413, 4294901760
    %5415 = vmatpush1.msra.mxu0 %v5414
    %5416 = vmatprep.subr.mxu0 0.0
    %v5417 = vand.u32 %v5273, 4294901760
    %v5418 = vsub.f32 %v5273, %v5417
    %v5419 = vand.u32 %v5418, 4294901760
    %v5420 = vsub.f32 %v5418, %v5419
    %v5421 = vand.u32 %v5420, 4294901760
    %5422 = vmatpush1.msra.mxu0 %v5421
    %5423 = vmatprep.subr.mxu0 0.0
    %v5424 = vand.u32 %v5274, 4294901760
    %v5425 = vsub.f32 %v5274, %v5424
    %v5426 = vand.u32 %v5425, 4294901760
    %v5427 = vsub.f32 %v5425, %v5426
    %v5428 = vand.u32 %v5427, 4294901760
    %5429 = vmatpush1.msra.mxu0 %v5428
    %5430 = vmatprep.subr.mxu0 0.0
    %v5431 = vand.u32 %v5275, 4294901760
    %v5432 = vsub.f32 %v5275, %v5431
    %v5433 = vand.u32 %v5432, 4294901760
    %v5434 = vsub.f32 %v5432, %v5433
    %v5435 = vand.u32 %v5434, 4294901760
    %5436 = vmatpush1.msra.mxu0 %v5435
    %5437 = vmatprep.subr.mxu0 0.0
    %v5438 = vand.u32 %v5276, 4294901760
    %v5439 = vsub.f32 %v5276, %v5438
    %v5440 = vand.u32 %v5439, 4294901760
    %v5441 = vsub.f32 %v5439, %v5440
    %v5442 = vand.u32 %v5441, 4294901760
    %5443 = vmatpush1.msra.mxu0 %v5442
    %5444 = vmatprep.subr.mxu0 0.0
    %v5445 = vand.u32 %v5277, 4294901760
    %v5446 = vsub.f32 %v5277, %v5445
    %v5447 = vand.u32 %v5446, 4294901760
    %v5448 = vsub.f32 %v5446, %v5447
    %v5449 = vand.u32 %v5448, 4294901760
    %5450 = vmatpush1.msra.mxu0 %v5449
    %5451 = vmatprep.subr.mxu0 0.0
    %v5452 = vand.u32 %v5278, 4294901760
    %v5453 = vsub.f32 %v5278, %v5452
    %v5454 = vand.u32 %v5453, 4294901760
    %v5455 = vsub.f32 %v5453, %v5454
    %v5456 = vand.u32 %v5455, 4294901760
    %5457 = vmatpush1.msra.mxu0 %v5456
    %5458 = vmatprep.subr.mxu0 0.0
    %v5459 = vand.u32 %v5279, 4294901760
    %v5460 = vsub.f32 %v5279, %v5459
    %v5461 = vand.u32 %v5460, 4294901760
    %v5462 = vsub.f32 %v5460, %v5461
    %v5463 = vand.u32 %v5462, 4294901760
    %5464 = vmatpush1.msra.mxu0 %v5463
    %5465 = vmatprep.subr.mxu0 0.0
    %v5466 = vand.u32 %v5280, 4294901760
    %v5467 = vsub.f32 %v5280, %v5466
    %v5468 = vand.u32 %v5467, 4294901760
    %v5469 = vsub.f32 %v5467, %v5468
    %v5470 = vand.u32 %v5469, 4294901760
    %5471 = vmatpush1.msra.mxu0 %v5470
    %5472 = vmatprep.subr.mxu0 0.0
    %v5473 = vand.u32 %v5281, 4294901760
    %v5474 = vsub.f32 %v5281, %v5473
    %v5475 = vand.u32 %v5474, 4294901760
    %v5476 = vsub.f32 %v5474, %v5475
    %v5477 = vand.u32 %v5476, 4294901760
    %5478 = vmatpush1.msra.mxu0 %v5477
    %5479 = vmatprep.subr.mxu0 0.0
    %v5480 = vand.u32 %v5282, 4294901760
    %v5481 = vsub.f32 %v5282, %v5480
    %v5482 = vand.u32 %v5481, 4294901760
    %v5483 = vsub.f32 %v5481, %v5482
    %v5484 = vand.u32 %v5483, 4294901760
    %5485 = vmatpush1.msra.mxu0 %v5484
    %5486 = vmatprep.subr.mxu0 0.0
    %5487 = vmatpush1.msra.mxu0 0.0
    %5488 = vmatprep.subr.mxu0 0.0
    %5489 = vmatpush1.msra.mxu0 0.0
    %5490 = vmatprep.subr.mxu0 0.0
    %5491 = vmatpush1.msra.mxu0 0.0
    %5492 = vmatprep.subr.mxu0 0.0
    %5493 = vmatpush1.msra.mxu0 0.0
    %5494 = vmatprep.subr.mxu0 0.0
    %5495 = vmatpush1.msra.mxu0 0.0
    %5496 = vmatprep.subr.mxu0 0.0
    %5497 = vmatpush1.msra.mxu0 0.0
    %5498 = vmatprep.subr.mxu0 0.0
    %5499 = vmatpush1.msra.mxu0 0.0
    %5500 = vmatprep.subr.mxu0 0.0
    %5501 = vmatpush1.msra.mxu0 0.0
    %5502 = vmatprep.subr.mxu0 0.0
    %5503 = vmatpush1.msra.mxu0 0.0
    %5504 = vmatprep.subr.mxu0 0.0
    %5505 = vmatpush1.msra.mxu0 0.0
    %5506 = vmatprep.subr.mxu0 0.0
    %5507 = vmatpush1.msra.mxu0 0.0
    %5508 = vmatprep.subr.mxu0 0.0
    %5509 = vmatpush1.msra.mxu0 0.0
    %5510 = vmatprep.subr.mxu0 0.0
    %5511 = vmatpush1.msra.mxu0 0.0
    %5512 = vmatprep.subr.mxu0 0.0
    %5513 = vmatpush1.msra.mxu0 0.0
    %5514 = vmatprep.subr.mxu0 0.0
    %5515 = vmatpush1.msra.mxu0 0.0
    %5516 = vmatprep.subr.mxu0 0.0
    %5517 = vmatpush1.msra.mxu0 0.0
    %5518 = vmatprep.mubr.f32.mxu0 0.0
    %v5519 = vand.u32 %v384, 4294901760
    %5520 = vmatmul.mubr.f32.gmra.mrb[0].mxu0 %v5519
    %v5521 = vpop.f32.mrb[0].mxu0
    %v5522 = vadd.f32 %v5371, %v5521
    %v5523 = vpop.f32.mrb[0].mxu0
    %5524 = vdwg.mxu0
    %5525 = vmatprep.subr.mxu0 0.0
    %v5526 = vand.u32 %v5267, 4294901760
    %v5527 = vsub.f32 %v5267, %v5526
    %5528 = vmatpush1.msra.mxu0 %v5527
    %5529 = vmatprep.subr.mxu0 0.0
    %v5530 = vand.u32 %v5268, 4294901760
    %v5531 = vsub.f32 %v5268, %v5530
    %5532 = vmatpush1.msra.mxu0 %v5531
    %5533 = vmatprep.subr.mxu0 0.0
    %v5534 = vand.u32 %v5269, 4294901760
    %v5535 = vsub.f32 %v5269, %v5534
    %5536 = vmatpush1.msra.mxu0 %v5535
    %5537 = vmatprep.subr.mxu0 0.0
    %v5538 = vand.u32 %v5270, 4294901760
    %v5539 = vsub.f32 %v5270, %v5538
    %5540 = vmatpush1.msra.mxu0 %v5539
    %5541 = vmatprep.subr.mxu0 0.0
    %v5542 = vand.u32 %v5271, 4294901760
    %v5543 = vsub.f32 %v5271, %v5542
    %5544 = vmatpush1.msra.mxu0 %v5543
    %5545 = vmatprep.subr.mxu0 0.0
    %v5546 = vand.u32 %v5272, 4294901760
    %v5547 = vsub.f32 %v5272, %v5546
    %5548 = vmatpush1.msra.mxu0 %v5547
    %5549 = vmatprep.subr.mxu0 0.0
    %v5550 = vand.u32 %v5273, 4294901760
    %v5551 = vsub.f32 %v5273, %v5550
    %5552 = vmatpush1.msra.mxu0 %v5551
    %5553 = vmatprep.subr.mxu0 0.0
    %v5554 = vand.u32 %v5274, 4294901760
    %v5555 = vsub.f32 %v5274, %v5554
    %5556 = vmatpush1.msra.mxu0 %v5555
    %5557 = vmatprep.subr.mxu0 0.0
    %v5558 = vand.u32 %v5275, 4294901760
    %v5559 = vsub.f32 %v5275, %v5558
    %5560 = vmatpush1.msra.mxu0 %v5559
    %5561 = vmatprep.subr.mxu0 0.0
    %v5562 = vand.u32 %v5276, 4294901760
    %v5563 = vsub.f32 %v5276, %v5562
    %5564 = vmatpush1.msra.mxu0 %v5563
    %5565 = vmatprep.subr.mxu0 0.0
    %v5566 = vand.u32 %v5277, 4294901760
    %v5567 = vsub.f32 %v5277, %v5566
    %5568 = vmatpush1.msra.mxu0 %v5567
    %5569 = vmatprep.subr.mxu0 0.0
    %v5570 = vand.u32 %v5278, 4294901760
    %v5571 = vsub.f32 %v5278, %v5570
    %5572 = vmatpush1.msra.mxu0 %v5571
    %5573 = vmatprep.subr.mxu0 0.0
    %v5574 = vand.u32 %v5279, 4294901760
    %v5575 = vsub.f32 %v5279, %v5574
    %5576 = vmatpush1.msra.mxu0 %v5575
    %5577 = vmatprep.subr.mxu0 0.0
    %v5578 = vand.u32 %v5280, 4294901760
    %v5579 = vsub.f32 %v5280, %v5578
    %5580 = vmatpush1.msra.mxu0 %v5579
    %5581 = vmatprep.subr.mxu0 0.0
    %v5582 = vand.u32 %v5281, 4294901760
    %v5583 = vsub.f32 %v5281, %v5582
    %5584 = vmatpush1.msra.mxu0 %v5583
    %5585 = vmatprep.subr.mxu0 0.0
    %v5586 = vand.u32 %v5282, 4294901760
    %v5587 = vsub.f32 %v5282, %v5586
    %5588 = vmatpush1.msra.mxu0 %v5587
    %5589 = vmatprep.subr.mxu0 0.0
    %5590 = vmatpush1.msra.mxu0 0.0
    %5591 = vmatprep.subr.mxu0 0.0
    %5592 = vmatpush1.msra.mxu0 0.0
    %5593 = vmatprep.subr.mxu0 0.0
    %5594 = vmatpush1.msra.mxu0 0.0
    %5595 = vmatprep.subr.mxu0 0.0
    %5596 = vmatpush1.msra.mxu0 0.0
    %5597 = vmatprep.subr.mxu0 0.0
    %5598 = vmatpush1.msra.mxu0 0.0
    %5599 = vmatprep.subr.mxu0 0.0
    %5600 = vmatpush1.msra.mxu0 0.0
    %5601 = vmatprep.subr.mxu0 0.0
    %5602 = vmatpush1.msra.mxu0 0.0
    %5603 = vmatprep.subr.mxu0 0.0
    %5604 = vmatpush1.msra.mxu0 0.0
    %5605 = vmatprep.subr.mxu0 0.0
    %5606 = vmatpush1.msra.mxu0 0.0
    %5607 = vmatprep.subr.mxu0 0.0
    %5608 = vmatpush1.msra.mxu0 0.0
    %5609 = vmatprep.subr.mxu0 0.0
    %5610 = vmatpush1.msra.mxu0 0.0
    %5611 = vmatprep.subr.mxu0 0.0
    %5612 = vmatpush1.msra.mxu0 0.0
    %5613 = vmatprep.subr.mxu0 0.0
    %5614 = vmatpush1.msra.mxu0 0.0
    %5615 = vmatprep.subr.mxu0 0.0
    %5616 = vmatpush1.msra.mxu0 0.0
    %5617 = vmatprep.subr.mxu0 0.0
    %5618 = vmatpush1.msra.mxu0 0.0
    %5619 = vmatprep.subr.mxu0 0.0
    %5620 = vmatpush1.msra.mxu0 0.0
    %5621 = vmatprep.mubr.f32.mxu0 0.0
    %v5622 = vand.u32 %v384, 4294901760
    %v5623 = vsub.f32 %v384, %v5622
    %5624 = vmatmul.mubr.f32.gmra.mrb[0].mxu0 %v5623
    %v5625 = vpop.f32.mrb[0].mxu0
    %v5626 = vadd.f32 %v5522, %v5625
    %v5627 = vpop.f32.mrb[0].mxu0
    %5628 = vdwg.mxu0
    %5629 = vmatprep.subr.mxu0 0.0
    %v5630 = vand.u32 %v5267, 4294901760
    %5631 = vmatpush1.msra.mxu0 %v5630
    %5632 = vmatprep.subr.mxu0 0.0
    %v5633 = vand.u32 %v5268, 4294901760
    %5634 = vmatpush1.msra.mxu0 %v5633
    %5635 = vmatprep.subr.mxu0 0.0
    %v5636 = vand.u32 %v5269, 4294901760
    %5637 = vmatpush1.msra.mxu0 %v5636
    %5638 = vmatprep.subr.mxu0 0.0
    %v5639 = vand.u32 %v5270, 4294901760
    %5640 = vmatpush1.msra.mxu0 %v5639
    %5641 = vmatprep.subr.mxu0 0.0
    %v5642 = vand.u32 %v5271, 4294901760
    %5643 = vmatpush1.msra.mxu0 %v5642
    %5644 = vmatprep.subr.mxu0 0.0
    %v5645 = vand.u32 %v5272, 4294901760
    %5646 = vmatpush1.msra.mxu0 %v5645
    %5647 = vmatprep.subr.mxu0 0.0
    %v5648 = vand.u32 %v5273, 4294901760
    %5649 = vmatpush1.msra.mxu0 %v5648
    %5650 = vmatprep.subr.mxu0 0.0
    %v5651 = vand.u32 %v5274, 4294901760
    %5652 = vmatpush1.msra.mxu0 %v5651
    %5653 = vmatprep.subr.mxu0 0.0
    %v5654 = vand.u32 %v5275, 4294901760
    %5655 = vmatpush1.msra.mxu0 %v5654
    %5656 = vmatprep.subr.mxu0 0.0
    %v5657 = vand.u32 %v5276, 4294901760
    %5658 = vmatpush1.msra.mxu0 %v5657
    %5659 = vmatprep.subr.mxu0 0.0
    %v5660 = vand.u32 %v5277, 4294901760
    %5661 = vmatpush1.msra.mxu0 %v5660
    %5662 = vmatprep.subr.mxu0 0.0
    %v5663 = vand.u32 %v5278, 4294901760
    %5664 = vmatpush1.msra.mxu0 %v5663
    %5665 = vmatprep.subr.mxu0 0.0
    %v5666 = vand.u32 %v5279, 4294901760
    %5667 = vmatpush1.msra.mxu0 %v5666
    %5668 = vmatprep.subr.mxu0 0.0
    %v5669 = vand.u32 %v5280, 4294901760
    %5670 = vmatpush1.msra.mxu0 %v5669
    %5671 = vmatprep.subr.mxu0 0.0
    %v5672 = vand.u32 %v5281, 4294901760
    %5673 = vmatpush1.msra.mxu0 %v5672
    %5674 = vmatprep.subr.mxu0 0.0
    %v5675 = vand.u32 %v5282, 4294901760
    %5676 = vmatpush1.msra.mxu0 %v5675
    %5677 = vmatprep.subr.mxu0 0.0
    %5678 = vmatpush1.msra.mxu0 0.0
    %5679 = vmatprep.subr.mxu0 0.0
    %5680 = vmatpush1.msra.mxu0 0.0
    %5681 = vmatprep.subr.mxu0 0.0
    %5682 = vmatpush1.msra.mxu0 0.0
    %5683 = vmatprep.subr.mxu0 0.0
    %5684 = vmatpush1.msra.mxu0 0.0
    %5685 = vmatprep.subr.mxu0 0.0
    %5686 = vmatpush1.msra.mxu0 0.0
    %5687 = vmatprep.subr.mxu0 0.0
    %5688 = vmatpush1.msra.mxu0 0.0
    %5689 = vmatprep.subr.mxu0 0.0
    %5690 = vmatpush1.msra.mxu0 0.0
    %5691 = vmatprep.subr.mxu0 0.0
    %5692 = vmatpush1.msra.mxu0 0.0
    %5693 = vmatprep.subr.mxu0 0.0
    %5694 = vmatpush1.msra.mxu0 0.0
    %5695 = vmatprep.subr.mxu0 0.0
    %5696 = vmatpush1.msra.mxu0 0.0
    %5697 = vmatprep.subr.mxu0 0.0
    %5698 = vmatpush1.msra.mxu0 0.0
    %5699 = vmatprep.subr.mxu0 0.0
    %5700 = vmatpush1.msra.mxu0 0.0
    %5701 = vmatprep.subr.mxu0 0.0
    %5702 = vmatpush1.msra.mxu0 0.0
    %5703 = vmatprep.subr.mxu0 0.0
    %5704 = vmatpush1.msra.mxu0 0.0
    %5705 = vmatprep.subr.mxu0 0.0
    %5706 = vmatpush1.msra.mxu0 0.0
    %5707 = vmatprep.subr.mxu0 0.0
    %5708 = vmatpush1.msra.mxu0 0.0
    %5709 = vmatprep.mubr.f32.mxu0 0.0
    %v5710 = vand.u32 %v384, 4294901760
    %v5711 = vsub.f32 %v384, %v5710
    %v5712 = vand.u32 %v5711, 4294901760
    %5713 = vmatmul.mubr.f32.gmra.mrb[0].mxu0 %v5712
    %v5714 = vpop.f32.mrb[0].mxu0
    %v5715 = vadd.f32 %v5626, %v5714
    %v5716 = vpop.f32.mrb[0].mxu0
    %5717 = vdwg.mxu0
    %5718 = vmatprep.subr.mxu0 0.0
    %v5719 = vand.u32 %v5267, 4294901760
    %v5720 = vsub.f32 %v5267, %v5719
    %v5721 = vand.u32 %v5720, 4294901760
    %5722 = vmatpush1.msra.mxu0 %v5721
    %5723 = vmatprep.subr.mxu0 0.0
    %v5724 = vand.u32 %v5268, 4294901760
    %v5725 = vsub.f32 %v5268, %v5724
    %v5726 = vand.u32 %v5725, 4294901760
    %5727 = vmatpush1.msra.mxu0 %v5726
    %5728 = vmatprep.subr.mxu0 0.0
    %v5729 = vand.u32 %v5269, 4294901760
    %v5730 = vsub.f32 %v5269, %v5729
    %v5731 = vand.u32 %v5730, 4294901760
    %5732 = vmatpush1.msra.mxu0 %v5731
    %5733 = vmatprep.subr.mxu0 0.0
    %v5734 = vand.u32 %v5270, 4294901760
    %v5735 = vsub.f32 %v5270, %v5734
    %v5736 = vand.u32 %v5735, 4294901760
    %5737 = vmatpush1.msra.mxu0 %v5736
    %5738 = vmatprep.subr.mxu0 0.0
    %v5739 = vand.u32 %v5271, 4294901760
    %v5740 = vsub.f32 %v5271, %v5739
    %v5741 = vand.u32 %v5740, 4294901760
    %5742 = vmatpush1.msra.mxu0 %v5741
    %5743 = vmatprep.subr.mxu0 0.0
    %v5744 = vand.u32 %v5272, 4294901760
    %v5745 = vsub.f32 %v5272, %v5744
    %v5746 = vand.u32 %v5745, 4294901760
    %5747 = vmatpush1.msra.mxu0 %v5746
    %5748 = vmatprep.subr.mxu0 0.0
    %v5749 = vand.u32 %v5273, 4294901760
    %v5750 = vsub.f32 %v5273, %v5749
    %v5751 = vand.u32 %v5750, 4294901760
    %5752 = vmatpush1.msra.mxu0 %v5751
    %5753 = vmatprep.subr.mxu0 0.0
    %v5754 = vand.u32 %v5274, 4294901760
    %v5755 = vsub.f32 %v5274, %v5754
    %v5756 = vand.u32 %v5755, 4294901760
    %5757 = vmatpush1.msra.mxu0 %v5756
    %5758 = vmatprep.subr.mxu0 0.0
    %v5759 = vand.u32 %v5275, 4294901760
    %v5760 = vsub.f32 %v5275, %v5759
    %v5761 = vand.u32 %v5760, 4294901760
    %5762 = vmatpush1.msra.mxu0 %v5761
    %5763 = vmatprep.subr.mxu0 0.0
    %v5764 = vand.u32 %v5276, 4294901760
    %v5765 = vsub.f32 %v5276, %v5764
    %v5766 = vand.u32 %v5765, 4294901760
    %5767 = vmatpush1.msra.mxu0 %v5766
    %5768 = vmatprep.subr.mxu0 0.0
    %v5769 = vand.u32 %v5277, 4294901760
    %v5770 = vsub.f32 %v5277, %v5769
    %v5771 = vand.u32 %v5770, 4294901760
    %5772 = vmatpush1.msra.mxu0 %v5771
    %5773 = vmatprep.subr.mxu0 0.0
    %v5774 = vand.u32 %v5278, 4294901760
    %v5775 = vsub.f32 %v5278, %v5774
    %v5776 = vand.u32 %v5775, 4294901760
    %5777 = vmatpush1.msra.mxu0 %v5776
    %5778 = vmatprep.subr.mxu0 0.0
    %v5779 = vand.u32 %v5279, 4294901760
    %v5780 = vsub.f32 %v5279, %v5779
    %v5781 = vand.u32 %v5780, 4294901760
    %5782 = vmatpush1.msra.mxu0 %v5781
    %5783 = vmatprep.subr.mxu0 0.0
    %v5784 = vand.u32 %v5280, 4294901760
    %v5785 = vsub.f32 %v5280, %v5784
    %v5786 = vand.u32 %v5785, 4294901760
    %5787 = vmatpush1.msra.mxu0 %v5786
    %5788 = vmatprep.subr.mxu0 0.0
    %v5789 = vand.u32 %v5281, 4294901760
    %v5790 = vsub.f32 %v5281, %v5789
    %v5791 = vand.u32 %v5790, 4294901760
    %5792 = vmatpush1.msra.mxu0 %v5791
    %5793 = vmatprep.subr.mxu0 0.0
    %v5794 = vand.u32 %v5282, 4294901760
    %v5795 = vsub.f32 %v5282, %v5794
    %v5796 = vand.u32 %v5795, 4294901760
    %5797 = vmatpush1.msra.mxu0 %v5796
    %5798 = vmatprep.subr.mxu0 0.0
    %5799 = vmatpush1.msra.mxu0 0.0
    %5800 = vmatprep.subr.mxu0 0.0
    %5801 = vmatpush1.msra.mxu0 0.0
    %5802 = vmatprep.subr.mxu0 0.0
    %5803 = vmatpush1.msra.mxu0 0.0
    %5804 = vmatprep.subr.mxu0 0.0
    %5805 = vmatpush1.msra.mxu0 0.0
    %5806 = vmatprep.subr.mxu0 0.0
    %5807 = vmatpush1.msra.mxu0 0.0
    %5808 = vmatprep.subr.mxu0 0.0
    %5809 = vmatpush1.msra.mxu0 0.0
    %5810 = vmatprep.subr.mxu0 0.0
    %5811 = vmatpush1.msra.mxu0 0.0
    %5812 = vmatprep.subr.mxu0 0.0
    %5813 = vmatpush1.msra.mxu0 0.0
    %5814 = vmatprep.subr.mxu0 0.0
    %5815 = vmatpush1.msra.mxu0 0.0
    %5816 = vmatprep.subr.mxu0 0.0
    %5817 = vmatpush1.msra.mxu0 0.0
    %5818 = vmatprep.subr.mxu0 0.0
    %5819 = vmatpush1.msra.mxu0 0.0
    %5820 = vmatprep.subr.mxu0 0.0
    %5821 = vmatpush1.msra.mxu0 0.0
    %5822 = vmatprep.subr.mxu0 0.0
    %5823 = vmatpush1.msra.mxu0 0.0
    %5824 = vmatprep.subr.mxu0 0.0
    %5825 = vmatpush1.msra.mxu0 0.0
    %5826 = vmatprep.subr.mxu0 0.0
    %5827 = vmatpush1.msra.mxu0 0.0
    %5828 = vmatprep.subr.mxu0 0.0
    %5829 = vmatpush1.msra.mxu0 0.0
    %5830 = vmatprep.mubr.f32.mxu0 0.0
    %v5831 = vand.u32 %v384, 4294901760
    %5832 = vmatmul.mubr.f32.gmra.mrb[0].mxu0 %v5831
    %v5833 = vpop.f32.mrb[0].mxu0
    %v5834 = vadd.f32 %v5715, %v5833
    %v5835 = vpop.f32.mrb[0].mxu0
    %5836 = vdwg.mxu0
    %5837 = vmatprep.subr.mxu0 0.0
    %v5838 = vand.u32 %v5267, 4294901760
    %5839 = vmatpush1.msra.mxu0 %v5838
    %5840 = vmatprep.subr.mxu0 0.0
    %v5841 = vand.u32 %v5268, 4294901760
    %5842 = vmatpush1.msra.mxu0 %v5841
    %5843 = vmatprep.subr.mxu0 0.0
    %v5844 = vand.u32 %v5269, 4294901760
    %5845 = vmatpush1.msra.mxu0 %v5844
    %5846 = vmatprep.subr.mxu0 0.0
    %v5847 = vand.u32 %v5270, 4294901760
    %5848 = vmatpush1.msra.mxu0 %v5847
    %5849 = vmatprep.subr.mxu0 0.0
    %v5850 = vand.u32 %v5271, 4294901760
    %5851 = vmatpush1.msra.mxu0 %v5850
    %5852 = vmatprep.subr.mxu0 0.0
    %v5853 = vand.u32 %v5272, 4294901760
    %5854 = vmatpush1.msra.mxu0 %v5853
    %5855 = vmatprep.subr.mxu0 0.0
    %v5856 = vand.u32 %v5273, 4294901760
    %5857 = vmatpush1.msra.mxu0 %v5856
    %5858 = vmatprep.subr.mxu0 0.0
    %v5859 = vand.u32 %v5274, 4294901760
    %5860 = vmatpush1.msra.mxu0 %v5859
    %5861 = vmatprep.subr.mxu0 0.0
    %v5862 = vand.u32 %v5275, 4294901760
    %5863 = vmatpush1.msra.mxu0 %v5862
    %5864 = vmatprep.subr.mxu0 0.0
    %v5865 = vand.u32 %v5276, 4294901760
    %5866 = vmatpush1.msra.mxu0 %v5865
    %5867 = vmatprep.subr.mxu0 0.0
    %v5868 = vand.u32 %v5277, 4294901760
    %5869 = vmatpush1.msra.mxu0 %v5868
    %5870 = vmatprep.subr.mxu0 0.0
    %v5871 = vand.u32 %v5278, 4294901760
    %5872 = vmatpush1.msra.mxu0 %v5871
    %5873 = vmatprep.subr.mxu0 0.0
    %v5874 = vand.u32 %v5279, 4294901760
    %5875 = vmatpush1.msra.mxu0 %v5874
    %5876 = vmatprep.subr.mxu0 0.0
    %v5877 = vand.u32 %v5280, 4294901760
    %5878 = vmatpush1.msra.mxu0 %v5877
    %5879 = vmatprep.subr.mxu0 0.0
    %v5880 = vand.u32 %v5281, 4294901760
    %5881 = vmatpush1.msra.mxu0 %v5880
    %5882 = vmatprep.subr.mxu0 0.0
    %v5883 = vand.u32 %v5282, 4294901760
    %5884 = vmatpush1.msra.mxu0 %v5883
    %5885 = vmatprep.subr.mxu0 0.0
    %5886 = vmatpush1.msra.mxu0 0.0
    %5887 = vmatprep.subr.mxu0 0.0
    %5888 = vmatpush1.msra.mxu0 0.0
    %5889 = vmatprep.subr.mxu0 0.0
    %5890 = vmatpush1.msra.mxu0 0.0
    %5891 = vmatprep.subr.mxu0 0.0
    %5892 = vmatpush1.msra.mxu0 0.0
    %5893 = vmatprep.subr.mxu0 0.0
    %5894 = vmatpush1.msra.mxu0 0.0
    %5895 = vmatprep.subr.mxu0 0.0
    %5896 = vmatpush1.msra.mxu0 0.0
    %5897 = vmatprep.subr.mxu0 0.0
    %5898 = vmatpush1.msra.mxu0 0.0
    %5899 = vmatprep.subr.mxu0 0.0
    %5900 = vmatpush1.msra.mxu0 0.0
    %5901 = vmatprep.subr.mxu0 0.0
    %5902 = vmatpush1.msra.mxu0 0.0
    %5903 = vmatprep.subr.mxu0 0.0
    %5904 = vmatpush1.msra.mxu0 0.0
    %5905 = vmatprep.subr.mxu0 0.0
    %5906 = vmatpush1.msra.mxu0 0.0
    %5907 = vmatprep.subr.mxu0 0.0
    %5908 = vmatpush1.msra.mxu0 0.0
    %5909 = vmatprep.subr.mxu0 0.0
    %5910 = vmatpush1.msra.mxu0 0.0
    %5911 = vmatprep.subr.mxu0 0.0
    %5912 = vmatpush1.msra.mxu0 0.0
    %5913 = vmatprep.subr.mxu0 0.0
    %5914 = vmatpush1.msra.mxu0 0.0
    %5915 = vmatprep.subr.mxu0 0.0
    %5916 = vmatpush1.msra.mxu0 0.0
    %5917 = vmatprep.mubr.f32.mxu0 0.0
    %v5918 = vand.u32 %v384, 4294901760
    %5919 = vmatmul.mubr.f32.gmra.mrb[0].mxu0 %v5918
    %v5920 = vpop.f32.mrb[0].mxu0
    %v5921 = vadd.f32 %v5834, %v5920
    %v5922 = vpop.f32.mrb[0].mxu0
    %5923 = vdwg.mxu0
    %v5925 = vsel %vm1505, %v465, 0
    %v5928 = vsel %vm1505, %v466, 0
    %v5931 = vsel %vm1505, %v467, 0
    %v5934 = vsel %vm1505, %v468, 0
    %v5937 = vsel %vm1505, %v469, 0
    %v5940 = vsel %vm1505, %v470, 0
    %v5943 = vsel %vm1505, %v471, 0
    %v5946 = vsel %vm1505, %v472, 0
    %v5949 = vsel %vm1505, %v473, 0
    %v5952 = vsel %vm1505, %v474, 0
    %v5955 = vsel %vm1505, %v475, 0
    %v5958 = vsel %vm1505, %v476, 0
    %v5961 = vsel %vm1505, %v477, 0
    %v5964 = vsel %vm1505, %v478, 0
    %v5967 = vsel %vm1505, %v479, 0
    %v5970 = vsel %vm1505, %v480, 0
    %5972 = vmatprep.subr.mxu0 0.0
    %v5973 = vand.u32 %v5921, 4294901760
    %5974 = vmatpush1.msra.mxu0 %v5973
    %5975 = vmatprep.subr.mxu0 0.0
    %5976 = vmatpush1.msra.mxu0 0.0
    %5977 = vmatprep.subr.mxu0 0.0
    %5978 = vmatpush1.msra.mxu0 0.0
    %5979 = vmatprep.subr.mxu0 0.0
    %5980 = vmatpush1.msra.mxu0 0.0
    %5981 = vmatprep.subr.mxu0 0.0
    %5982 = vmatpush1.msra.mxu0 0.0
    %5983 = vmatprep.subr.mxu0 0.0
    %5984 = vmatpush1.msra.mxu0 0.0
    %5985 = vmatprep.subr.mxu0 0.0
    %5986 = vmatpush1.msra.mxu0 0.0
    %5987 = vmatprep.subr.mxu0 0.0
    %5988 = vmatpush1.msra.mxu0 0.0
    %5989 = vmatprep.subr.mxu0 0.0
    %5990 = vmatpush1.msra.mxu0 0.0
    %5991 = vmatprep.subr.mxu0 0.0
    %5992 = vmatpush1.msra.mxu0 0.0
    %5993 = vmatprep.subr.mxu0 0.0
    %5994 = vmatpush1.msra.mxu0 0.0
    %5995 = vmatprep.subr.mxu0 0.0
    %5996 = vmatpush1.msra.mxu0 0.0
    %5997 = vmatprep.subr.mxu0 0.0
    %5998 = vmatpush1.msra.mxu0 0.0
    %5999 = vmatprep.subr.mxu0 0.0
    %6000 = vmatpush1.msra.mxu0 0.0
    %6001 = vmatprep.subr.mxu0 0.0
    %6002 = vmatpush1.msra.mxu0 0.0
    %6003 = vmatprep.subr.mxu0 0.0
    %6004 = vmatpush1.msra.mxu0 0.0
    %6005 = vmatprep.subr.mxu0 0.0
    %6006 = vmatpush1.msra.mxu0 0.0
    %6007 = vmatprep.subr.mxu0 0.0
    %6008 = vmatpush1.msra.mxu0 0.0
    %6009 = vmatprep.subr.mxu0 0.0
    %6010 = vmatpush1.msra.mxu0 0.0
    %6011 = vmatprep.subr.mxu0 0.0
    %6012 = vmatpush1.msra.mxu0 0.0
    %6013 = vmatprep.subr.mxu0 0.0
    %6014 = vmatpush1.msra.mxu0 0.0
    %6015 = vmatprep.subr.mxu0 0.0
    %6016 = vmatpush1.msra.mxu0 0.0
    %6017 = vmatprep.subr.mxu0 0.0
    %6018 = vmatpush1.msra.mxu0 0.0
    %6019 = vmatprep.subr.mxu0 0.0
    %6020 = vmatpush1.msra.mxu0 0.0
    %6021 = vmatprep.subr.mxu0 0.0
    %6022 = vmatpush1.msra.mxu0 0.0
    %6023 = vmatprep.subr.mxu0 0.0
    %6024 = vmatpush1.msra.mxu0 0.0
    %6025 = vmatprep.subr.mxu0 0.0
    %6026 = vmatpush1.msra.mxu0 0.0
    %6027 = vmatprep.subr.mxu0 0.0
    %6028 = vmatpush1.msra.mxu0 0.0
    %6029 = vmatprep.subr.mxu0 0.0
    %6030 = vmatpush1.msra.mxu0 0.0
    %6031 = vmatprep.subr.mxu0 0.0
    %6032 = vmatpush1.msra.mxu0 0.0
    %6033 = vmatprep.subr.mxu0 0.0
    %6034 = vmatpush1.msra.mxu0 0.0
    %6035 = vmatprep.subr.mxu0 0.0
    %6036 = vmatpush1.msra.mxu0 0.0
    %6037 = vmatprep.mubr.f32.mxu0 0.0
    %v6038 = vand.u32 %v5925, 4294901760
    %v6039 = vsub.f32 %v5925, %v6038
    %v6040 = vand.u32 %v6039, 4294901760
    %v6041 = vsub.f32 %v6039, %v6040
    %v6042 = vand.u32 %v6041, 4294901760
    %6043 = vmatmul.mubr.f32.gmra.mrb[0].mxu0 %v6042
    %v6044 = vpop.f32.mrb[0].mxu0
    %v6045 = vadd.f32 0.0, %v6044
    %v6046 = vpop.f32.mrb[0].mxu0
    %6047 = vmatprep.mubr.f32.mxu0 0.0
    %v6048 = vand.u32 %v5928, 4294901760
    %v6049 = vsub.f32 %v5928, %v6048
    %v6050 = vand.u32 %v6049, 4294901760
    %v6051 = vsub.f32 %v6049, %v6050
    %v6052 = vand.u32 %v6051, 4294901760
    %6053 = vmatmul.mubr.f32.gmra.mrb[0].mxu0 %v6052
    %v6054 = vpop.f32.mrb[0].mxu0
    %v6055 = vadd.f32 0.0, %v6054
    %v6056 = vpop.f32.mrb[0].mxu0
    %6057 = vmatprep.mubr.f32.mxu0 0.0
    %v6058 = vand.u32 %v5931, 4294901760
    %v6059 = vsub.f32 %v5931, %v6058
    %v6060 = vand.u32 %v6059, 4294901760
    %v6061 = vsub.f32 %v6059, %v6060
    %v6062 = vand.u32 %v6061, 4294901760
    %6063 = vmatmul.mubr.f32.gmra.mrb[0].mxu0 %v6062
    %v6064 = vpop.f32.mrb[0].mxu0
    %v6065 = vadd.f32 0.0, %v6064
    %v6066 = vpop.f32.mrb[0].mxu0
    %6067 = vmatprep.mubr.f32.mxu0 0.0
    %v6068 = vand.u32 %v5934, 4294901760
    %v6069 = vsub.f32 %v5934, %v6068
    %v6070 = vand.u32 %v6069, 4294901760
    %v6071 = vsub.f32 %v6069, %v6070
    %v6072 = vand.u32 %v6071, 4294901760
    %6073 = vmatmul.mubr.f32.gmra.mrb[0].mxu0 %v6072
    %v6074 = vpop.f32.mrb[0].mxu0
    %v6075 = vadd.f32 0.0, %v6074
    %v6076 = vpop.f32.mrb[0].mxu0
    %6077 = vmatprep.mubr.f32.mxu0 0.0
    %v6078 = vand.u32 %v5937, 4294901760
    %v6079 = vsub.f32 %v5937, %v6078
    %v6080 = vand.u32 %v6079, 4294901760
    %v6081 = vsub.f32 %v6079, %v6080
    %v6082 = vand.u32 %v6081, 4294901760
    %6083 = vmatmul.mubr.f32.gmra.mrb[0].mxu0 %v6082
    %v6084 = vpop.f32.mrb[0].mxu0
    %v6085 = vadd.f32 0.0, %v6084
    %v6086 = vpop.f32.mrb[0].mxu0
    %6087 = vmatprep.mubr.f32.mxu0 0.0
    %v6088 = vand.u32 %v5940, 4294901760
    %v6089 = vsub.f32 %v5940, %v6088
    %v6090 = vand.u32 %v6089, 4294901760
    %v6091 = vsub.f32 %v6089, %v6090
    %v6092 = vand.u32 %v6091, 4294901760
    %6093 = vmatmul.mubr.f32.gmra.mrb[0].mxu0 %v6092
    %v6094 = vpop.f32.mrb[0].mxu0
    %v6095 = vadd.f32 0.0, %v6094
    %v6096 = vpop.f32.mrb[0].mxu0
    %6097 = vmatprep.mubr.f32.mxu0 0.0
    %v6098 = vand.u32 %v5943, 4294901760
    %v6099 = vsub.f32 %v5943, %v6098
    %v6100 = vand.u32 %v6099, 4294901760
    %v6101 = vsub.f32 %v6099, %v6100
    %v6102 = vand.u32 %v6101, 4294901760
    %6103 = vmatmul.mubr.f32.gmra.mrb[0].mxu0 %v6102
    %v6104 = vpop.f32.mrb[0].mxu0
    %v6105 = vadd.f32 0.0, %v6104
    %v6106 = vpop.f32.mrb[0].mxu0
    %6107 = vmatprep.mubr.f32.mxu0 0.0
    %v6108 = vand.u32 %v5946, 4294901760
    %v6109 = vsub.f32 %v5946, %v6108
    %v6110 = vand.u32 %v6109, 4294901760
    %v6111 = vsub.f32 %v6109, %v6110
    %v6112 = vand.u32 %v6111, 4294901760
    %6113 = vmatmul.mubr.f32.gmra.mrb[0].mxu0 %v6112
    %v6114 = vpop.f32.mrb[0].mxu0
    %v6115 = vadd.f32 0.0, %v6114
    %v6116 = vpop.f32.mrb[0].mxu0
    %6117 = vmatprep.mubr.f32.mxu0 0.0
    %v6118 = vand.u32 %v5949, 4294901760
    %v6119 = vsub.f32 %v5949, %v6118
    %v6120 = vand.u32 %v6119, 4294901760
    %v6121 = vsub.f32 %v6119, %v6120
    %v6122 = vand.u32 %v6121, 4294901760
    %6123 = vmatmul.mubr.f32.gmra.mrb[0].mxu0 %v6122
    %v6124 = vpop.f32.mrb[0].mxu0
    %v6125 = vadd.f32 0.0, %v6124
    %v6126 = vpop.f32.mrb[0].mxu0
    %6127 = vmatprep.mubr.f32.mxu0 0.0
    %v6128 = vand.u32 %v5952, 4294901760
    %v6129 = vsub.f32 %v5952, %v6128
    %v6130 = vand.u32 %v6129, 4294901760
    %v6131 = vsub.f32 %v6129, %v6130
    %v6132 = vand.u32 %v6131, 4294901760
    %6133 = vmatmul.mubr.f32.gmra.mrb[0].mxu0 %v6132
    %v6134 = vpop.f32.mrb[0].mxu0
    %v6135 = vadd.f32 0.0, %v6134
    %v6136 = vpop.f32.mrb[0].mxu0
    %6137 = vmatprep.mubr.f32.mxu0 0.0
    %v6138 = vand.u32 %v5955, 4294901760
    %v6139 = vsub.f32 %v5955, %v6138
    %v6140 = vand.u32 %v6139, 4294901760
    %v6141 = vsub.f32 %v6139, %v6140
    %v6142 = vand.u32 %v6141, 4294901760
    %6143 = vmatmul.mubr.f32.gmra.mrb[0].mxu0 %v6142
    %v6144 = vpop.f32.mrb[0].mxu0
    %v6145 = vadd.f32 0.0, %v6144
    %v6146 = vpop.f32.mrb[0].mxu0
    %6147 = vmatprep.mubr.f32.mxu0 0.0
    %v6148 = vand.u32 %v5958, 4294901760
    %v6149 = vsub.f32 %v5958, %v6148
    %v6150 = vand.u32 %v6149, 4294901760
    %v6151 = vsub.f32 %v6149, %v6150
    %v6152 = vand.u32 %v6151, 4294901760
    %6153 = vmatmul.mubr.f32.gmra.mrb[0].mxu0 %v6152
    %v6154 = vpop.f32.mrb[0].mxu0
    %v6155 = vadd.f32 0.0, %v6154
    %v6156 = vpop.f32.mrb[0].mxu0
    %6157 = vmatprep.mubr.f32.mxu0 0.0
    %v6158 = vand.u32 %v5961, 4294901760
    %v6159 = vsub.f32 %v5961, %v6158
    %v6160 = vand.u32 %v6159, 4294901760
    %v6161 = vsub.f32 %v6159, %v6160
    %v6162 = vand.u32 %v6161, 4294901760
    %6163 = vmatmul.mubr.f32.gmra.mrb[0].mxu0 %v6162
    %v6164 = vpop.f32.mrb[0].mxu0
    %v6165 = vadd.f32 0.0, %v6164
    %v6166 = vpop.f32.mrb[0].mxu0
    %6167 = vmatprep.mubr.f32.mxu0 0.0
    %v6168 = vand.u32 %v5964, 4294901760
    %v6169 = vsub.f32 %v5964, %v6168
    %v6170 = vand.u32 %v6169, 4294901760
    %v6171 = vsub.f32 %v6169, %v6170
    %v6172 = vand.u32 %v6171, 4294901760
    %6173 = vmatmul.mubr.f32.gmra.mrb[0].mxu0 %v6172
    %v6174 = vpop.f32.mrb[0].mxu0
    %v6175 = vadd.f32 0.0, %v6174
    %v6176 = vpop.f32.mrb[0].mxu0
    %6177 = vmatprep.mubr.f32.mxu0 0.0
    %v6178 = vand.u32 %v5967, 4294901760
    %v6179 = vsub.f32 %v5967, %v6178
    %v6180 = vand.u32 %v6179, 4294901760
    %v6181 = vsub.f32 %v6179, %v6180
    %v6182 = vand.u32 %v6181, 4294901760
    %6183 = vmatmul.mubr.f32.gmra.mrb[0].mxu0 %v6182
    %v6184 = vpop.f32.mrb[0].mxu0
    %v6185 = vadd.f32 0.0, %v6184
    %v6186 = vpop.f32.mrb[0].mxu0
    %6187 = vmatprep.mubr.f32.mxu0 0.0
    %v6188 = vand.u32 %v5970, 4294901760
    %v6189 = vsub.f32 %v5970, %v6188
    %v6190 = vand.u32 %v6189, 4294901760
    %v6191 = vsub.f32 %v6189, %v6190
    %v6192 = vand.u32 %v6191, 4294901760
    %6193 = vmatmul.mubr.f32.gmra.mrb[0].mxu0 %v6192
    %v6194 = vpop.f32.mrb[0].mxu0
    %v6195 = vadd.f32 0.0, %v6194
    %v6196 = vpop.f32.mrb[0].mxu0
    %6197 = vdwg.mxu0
    %6198 = vmatprep.subr.mxu0 0.0
    %v6199 = vand.u32 %v5921, 4294901760
    %v6200 = vsub.f32 %v5921, %v6199
    %v6201 = vand.u32 %v6200, 4294901760
    %v6202 = vsub.f32 %v6200, %v6201
    %v6203 = vand.u32 %v6202, 4294901760
    %6204 = vmatpush1.msra.mxu0 %v6203
    %6205 = vmatprep.subr.mxu0 0.0
    %6206 = vmatpush1.msra.mxu0 0.0
    %6207 = vmatprep.subr.mxu0 0.0
    %6208 = vmatpush1.msra.mxu0 0.0
    %6209 = vmatprep.subr.mxu0 0.0
    %6210 = vmatpush1.msra.mxu0 0.0
    %6211 = vmatprep.subr.mxu0 0.0
    %6212 = vmatpush1.msra.mxu0 0.0
    %6213 = vmatprep.subr.mxu0 0.0
    %6214 = vmatpush1.msra.mxu0 0.0
    %6215 = vmatprep.subr.mxu0 0.0
    %6216 = vmatpush1.msra.mxu0 0.0
    %6217 = vmatprep.subr.mxu0 0.0
    %6218 = vmatpush1.msra.mxu0 0.0
    %6219 = vmatprep.subr.mxu0 0.0
    %6220 = vmatpush1.msra.mxu0 0.0
    %6221 = vmatprep.subr.mxu0 0.0
    %6222 = vmatpush1.msra.mxu0 0.0
    %6223 = vmatprep.subr.mxu0 0.0
    %6224 = vmatpush1.msra.mxu0 0.0
    %6225 = vmatprep.subr.mxu0 0.0
    %6226 = vmatpush1.msra.mxu0 0.0
    %6227 = vmatprep.subr.mxu0 0.0
    %6228 = vmatpush1.msra.mxu0 0.0
    %6229 = vmatprep.subr.mxu0 0.0
    %6230 = vmatpush1.msra.mxu0 0.0
    %6231 = vmatprep.subr.mxu0 0.0
    %6232 = vmatpush1.msra.mxu0 0.0
    %6233 = vmatprep.subr.mxu0 0.0
    %6234 = vmatpush1.msra.mxu0 0.0
    %6235 = vmatprep.subr.mxu0 0.0
    %6236 = vmatpush1.msra.mxu0 0.0
    %6237 = vmatprep.subr.mxu0 0.0
    %6238 = vmatpush1.msra.mxu0 0.0
    %6239 = vmatprep.subr.mxu0 0.0
    %6240 = vmatpush1.msra.mxu0 0.0
    %6241 = vmatprep.subr.mxu0 0.0
    %6242 = vmatpush1.msra.mxu0 0.0
    %6243 = vmatprep.subr.mxu0 0.0
    %6244 = vmatpush1.msra.mxu0 0.0
    %6245 = vmatprep.subr.mxu0 0.0
    %6246 = vmatpush1.msra.mxu0 0.0
    %6247 = vmatprep.subr.mxu0 0.0
    %6248 = vmatpush1.msra.mxu0 0.0
    %6249 = vmatprep.subr.mxu0 0.0
    %6250 = vmatpush1.msra.mxu0 0.0
    %6251 = vmatprep.subr.mxu0 0.0
    %6252 = vmatpush1.msra.mxu0 0.0
    %6253 = vmatprep.subr.mxu0 0.0
    %6254 = vmatpush1.msra.mxu0 0.0
    %6255 = vmatprep.subr.mxu0 0.0
    %6256 = vmatpush1.msra.mxu0 0.0
    %6257 = vmatprep.subr.mxu0 0.0
    %6258 = vmatpush1.msra.mxu0 0.0
    %6259 = vmatprep.subr.mxu0 0.0
    %6260 = vmatpush1.msra.mxu0 0.0
    %6261 = vmatprep.subr.mxu0 0.0
    %6262 = vmatpush1.msra.mxu0 0.0
    %6263 = vmatprep.subr.mxu0 0.0
    %6264 = vmatpush1.msra.mxu0 0.0
    %6265 = vmatprep.subr.mxu0 0.0
    %6266 = vmatpush1.msra.mxu0 0.0
    %6267 = vmatprep.mubr.f32.mxu0 0.0
    %v6268 = vand.u32 %v5925, 4294901760
    %6269 = vmatmul.mubr.f32.gmra.mrb[0].mxu0 %v6268
    %v6270 = vpop.f32.mrb[0].mxu0
    %v6271 = vadd.f32 %v6045, %v6270
    %v6272 = vpop.f32.mrb[0].mxu0
    %6273 = vmatprep.mubr.f32.mxu0 0.0
    %v6274 = vand.u32 %v5928, 4294901760
    %6275 = vmatmul.mubr.f32.gmra.mrb[0].mxu0 %v6274
    %v6276 = vpop.f32.mrb[0].mxu0
    %v6277 = vadd.f32 %v6055, %v6276
    %v6278 = vpop.f32.mrb[0].mxu0
    %6279 = vmatprep.mubr.f32.mxu0 0.0
    %v6280 = vand.u32 %v5931, 4294901760
    %6281 = vmatmul.mubr.f32.gmra.mrb[0].mxu0 %v6280
    %v6282 = vpop.f32.mrb[0].mxu0
    %v6283 = vadd.f32 %v6065, %v6282
    %v6284 = vpop.f32.mrb[0].mxu0
    %6285 = vmatprep.mubr.f32.mxu0 0.0
    %v6286 = vand.u32 %v5934, 4294901760
    %6287 = vmatmul.mubr.f32.gmra.mrb[0].mxu0 %v6286
    %v6288 = vpop.f32.mrb[0].mxu0
    %v6289 = vadd.f32 %v6075, %v6288
    %v6290 = vpop.f32.mrb[0].mxu0
    %6291 = vmatprep.mubr.f32.mxu0 0.0
    %v6292 = vand.u32 %v5937, 4294901760
    %6293 = vmatmul.mubr.f32.gmra.mrb[0].mxu0 %v6292
    %v6294 = vpop.f32.mrb[0].mxu0
    %v6295 = vadd.f32 %v6085, %v6294
    %v6296 = vpop.f32.mrb[0].mxu0
    %6297 = vmatprep.mubr.f32.mxu0 0.0
    %v6298 = vand.u32 %v5940, 4294901760
    %6299 = vmatmul.mubr.f32.gmra.mrb[0].mxu0 %v6298
    %v6300 = vpop.f32.mrb[0].mxu0
    %v6301 = vadd.f32 %v6095, %v6300
    %v6302 = vpop.f32.mrb[0].mxu0
    %6303 = vmatprep.mubr.f32.mxu0 0.0
    %v6304 = vand.u32 %v5943, 4294901760
    %6305 = vmatmul.mubr.f32.gmra.mrb[0].mxu0 %v6304
    %v6306 = vpop.f32.mrb[0].mxu0
    %v6307 = vadd.f32 %v6105, %v6306
    %v6308 = vpop.f32.mrb[0].mxu0
    %6309 = vmatprep.mubr.f32.mxu0 0.0
    %v6310 = vand.u32 %v5946, 4294901760
    %6311 = vmatmul.mubr.f32.gmra.mrb[0].mxu0 %v6310
    %v6312 = vpop.f32.mrb[0].mxu0
    %v6313 = vadd.f32 %v6115, %v6312
    %v6314 = vpop.f32.mrb[0].mxu0
    %6315 = vmatprep.mubr.f32.mxu0 0.0
    %v6316 = vand.u32 %v5949, 4294901760
    %6317 = vmatmul.mubr.f32.gmra.mrb[0].mxu0 %v6316
    %v6318 = vpop.f32.mrb[0].mxu0
    %v6319 = vadd.f32 %v6125, %v6318
    %v6320 = vpop.f32.mrb[0].mxu0
    %6321 = vmatprep.mubr.f32.mxu0 0.0
    %v6322 = vand.u32 %v5952, 4294901760
    %6323 = vmatmul.mubr.f32.gmra.mrb[0].mxu0 %v6322
    %v6324 = vpop.f32.mrb[0].mxu0
    %v6325 = vadd.f32 %v6135, %v6324
    %v6326 = vpop.f32.mrb[0].mxu0
    %6327 = vmatprep.mubr.f32.mxu0 0.0
    %v6328 = vand.u32 %v5955, 4294901760
    %6329 = vmatmul.mubr.f32.gmra.mrb[0].mxu0 %v6328
    %v6330 = vpop.f32.mrb[0].mxu0
    %v6331 = vadd.f32 %v6145, %v6330
    %v6332 = vpop.f32.mrb[0].mxu0
    %6333 = vmatprep.mubr.f32.mxu0 0.0
    %v6334 = vand.u32 %v5958, 4294901760
    %6335 = vmatmul.mubr.f32.gmra.mrb[0].mxu0 %v6334
    %v6336 = vpop.f32.mrb[0].mxu0
    %v6337 = vadd.f32 %v6155, %v6336
    %v6338 = vpop.f32.mrb[0].mxu0
    %6339 = vmatprep.mubr.f32.mxu0 0.0
    %v6340 = vand.u32 %v5961, 4294901760
    %6341 = vmatmul.mubr.f32.gmra.mrb[0].mxu0 %v6340
    %v6342 = vpop.f32.mrb[0].mxu0
    %v6343 = vadd.f32 %v6165, %v6342
    %v6344 = vpop.f32.mrb[0].mxu0
    %6345 = vmatprep.mubr.f32.mxu0 0.0
    %v6346 = vand.u32 %v5964, 4294901760
    %6347 = vmatmul.mubr.f32.gmra.mrb[0].mxu0 %v6346
    %v6348 = vpop.f32.mrb[0].mxu0
    %v6349 = vadd.f32 %v6175, %v6348
    %v6350 = vpop.f32.mrb[0].mxu0
    %6351 = vmatprep.mubr.f32.mxu0 0.0
    %v6352 = vand.u32 %v5967, 4294901760
    %6353 = vmatmul.mubr.f32.gmra.mrb[0].mxu0 %v6352
    %v6354 = vpop.f32.mrb[0].mxu0
    %v6355 = vadd.f32 %v6185, %v6354
    %v6356 = vpop.f32.mrb[0].mxu0
    %6357 = vmatprep.mubr.f32.mxu0 0.0
    %v6358 = vand.u32 %v5970, 4294901760
    %6359 = vmatmul.mubr.f32.gmra.mrb[0].mxu0 %v6358
    %v6360 = vpop.f32.mrb[0].mxu0
    %v6361 = vadd.f32 %v6195, %v6360
    %v6362 = vpop.f32.mrb[0].mxu0
    %6363 = vdwg.mxu0
    %6364 = vmatprep.subr.mxu0 0.0
    %v6365 = vand.u32 %v5921, 4294901760
    %v6366 = vsub.f32 %v5921, %v6365
    %6367 = vmatpush1.msra.mxu0 %v6366
    %6368 = vmatprep.subr.mxu0 0.0
    %6369 = vmatpush1.msra.mxu0 0.0
    %6370 = vmatprep.subr.mxu0 0.0
    %6371 = vmatpush1.msra.mxu0 0.0
    %6372 = vmatprep.subr.mxu0 0.0
    %6373 = vmatpush1.msra.mxu0 0.0
    %6374 = vmatprep.subr.mxu0 0.0
    %6375 = vmatpush1.msra.mxu0 0.0
    %6376 = vmatprep.subr.mxu0 0.0
    %6377 = vmatpush1.msra.mxu0 0.0
    %6378 = vmatprep.subr.mxu0 0.0
    %6379 = vmatpush1.msra.mxu0 0.0
    %6380 = vmatprep.subr.mxu0 0.0
    %6381 = vmatpush1.msra.mxu0 0.0
    %6382 = vmatprep.subr.mxu0 0.0
    %6383 = vmatpush1.msra.mxu0 0.0
    %6384 = vmatprep.subr.mxu0 0.0
    %6385 = vmatpush1.msra.mxu0 0.0
    %6386 = vmatprep.subr.mxu0 0.0
    %6387 = vmatpush1.msra.mxu0 0.0
    %6388 = vmatprep.subr.mxu0 0.0
    %6389 = vmatpush1.msra.mxu0 0.0
    %6390 = vmatprep.subr.mxu0 0.0
    %6391 = vmatpush1.msra.mxu0 0.0
    %6392 = vmatprep.subr.mxu0 0.0
    %6393 = vmatpush1.msra.mxu0 0.0
    %6394 = vmatprep.subr.mxu0 0.0
    %6395 = vmatpush1.msra.mxu0 0.0
    %6396 = vmatprep.subr.mxu0 0.0
    %6397 = vmatpush1.msra.mxu0 0.0
    %6398 = vmatprep.subr.mxu0 0.0
    %6399 = vmatpush1.msra.mxu0 0.0
    %6400 = vmatprep.subr.mxu0 0.0
    %6401 = vmatpush1.msra.mxu0 0.0
    %6402 = vmatprep.subr.mxu0 0.0
    %6403 = vmatpush1.msra.mxu0 0.0
    %6404 = vmatprep.subr.mxu0 0.0
    %6405 = vmatpush1.msra.mxu0 0.0
    %6406 = vmatprep.subr.mxu0 0.0
    %6407 = vmatpush1.msra.mxu0 0.0
    %6408 = vmatprep.subr.mxu0 0.0
    %6409 = vmatpush1.msra.mxu0 0.0
    %6410 = vmatprep.subr.mxu0 0.0
    %6411 = vmatpush1.msra.mxu0 0.0
    %6412 = vmatprep.subr.mxu0 0.0
    %6413 = vmatpush1.msra.mxu0 0.0
    %6414 = vmatprep.subr.mxu0 0.0
    %6415 = vmatpush1.msra.mxu0 0.0
    %6416 = vmatprep.subr.mxu0 0.0
    %6417 = vmatpush1.msra.mxu0 0.0
    %6418 = vmatprep.subr.mxu0 0.0
    %6419 = vmatpush1.msra.mxu0 0.0
    %6420 = vmatprep.subr.mxu0 0.0
    %6421 = vmatpush1.msra.mxu0 0.0
    %6422 = vmatprep.subr.mxu0 0.0
    %6423 = vmatpush1.msra.mxu0 0.0
    %6424 = vmatprep.subr.mxu0 0.0
    %6425 = vmatpush1.msra.mxu0 0.0
    %6426 = vmatprep.subr.mxu0 0.0
    %6427 = vmatpush1.msra.mxu0 0.0
    %6428 = vmatprep.subr.mxu0 0.0
    %6429 = vmatpush1.msra.mxu0 0.0
    %6430 = vmatprep.mubr.f32.mxu0 0.0
    %v6431 = vand.u32 %v5925, 4294901760
    %v6432 = vsub.f32 %v5925, %v6431
    %6433 = vmatmul.mubr.f32.gmra.mrb[0].mxu0 %v6432
    %v6434 = vpop.f32.mrb[0].mxu0
    %v6435 = vadd.f32 %v6271, %v6434
    %v6436 = vpop.f32.mrb[0].mxu0
    %6437 = vmatprep.mubr.f32.mxu0 0.0
    %v6438 = vand.u32 %v5928, 4294901760
    %v6439 = vsub.f32 %v5928, %v6438
    %6440 = vmatmul.mubr.f32.gmra.mrb[0].mxu0 %v6439
    %v6441 = vpop.f32.mrb[0].mxu0
    %v6442 = vadd.f32 %v6277, %v6441
    %v6443 = vpop.f32.mrb[0].mxu0
    %6444 = vmatprep.mubr.f32.mxu0 0.0
    %v6445 = vand.u32 %v5931, 4294901760
    %v6446 = vsub.f32 %v5931, %v6445
    %6447 = vmatmul.mubr.f32.gmra.mrb[0].mxu0 %v6446
    %v6448 = vpop.f32.mrb[0].mxu0
    %v6449 = vadd.f32 %v6283, %v6448
    %v6450 = vpop.f32.mrb[0].mxu0
    %6451 = vmatprep.mubr.f32.mxu0 0.0
    %v6452 = vand.u32 %v5934, 4294901760
    %v6453 = vsub.f32 %v5934, %v6452
    %6454 = vmatmul.mubr.f32.gmra.mrb[0].mxu0 %v6453
    %v6455 = vpop.f32.mrb[0].mxu0
    %v6456 = vadd.f32 %v6289, %v6455
    %v6457 = vpop.f32.mrb[0].mxu0
    %6458 = vmatprep.mubr.f32.mxu0 0.0
    %v6459 = vand.u32 %v5937, 4294901760
    %v6460 = vsub.f32 %v5937, %v6459
    %6461 = vmatmul.mubr.f32.gmra.mrb[0].mxu0 %v6460
    %v6462 = vpop.f32.mrb[0].mxu0
    %v6463 = vadd.f32 %v6295, %v6462
    %v6464 = vpop.f32.mrb[0].mxu0
    %6465 = vmatprep.mubr.f32.mxu0 0.0
    %v6466 = vand.u32 %v5940, 4294901760
    %v6467 = vsub.f32 %v5940, %v6466
    %6468 = vmatmul.mubr.f32.gmra.mrb[0].mxu0 %v6467
    %v6469 = vpop.f32.mrb[0].mxu0
    %v6470 = vadd.f32 %v6301, %v6469
    %v6471 = vpop.f32.mrb[0].mxu0
    %6472 = vmatprep.mubr.f32.mxu0 0.0
    %v6473 = vand.u32 %v5943, 4294901760
    %v6474 = vsub.f32 %v5943, %v6473
    %6475 = vmatmul.mubr.f32.gmra.mrb[0].mxu0 %v6474
    %v6476 = vpop.f32.mrb[0].mxu0
    %v6477 = vadd.f32 %v6307, %v6476
    %v6478 = vpop.f32.mrb[0].mxu0
    %6479 = vmatprep.mubr.f32.mxu0 0.0
    %v6480 = vand.u32 %v5946, 4294901760
    %v6481 = vsub.f32 %v5946, %v6480
    %6482 = vmatmul.mubr.f32.gmra.mrb[0].mxu0 %v6481
    %v6483 = vpop.f32.mrb[0].mxu0
    %v6484 = vadd.f32 %v6313, %v6483
    %v6485 = vpop.f32.mrb[0].mxu0
    %6486 = vmatprep.mubr.f32.mxu0 0.0
    %v6487 = vand.u32 %v5949, 4294901760
    %v6488 = vsub.f32 %v5949, %v6487
    %6489 = vmatmul.mubr.f32.gmra.mrb[0].mxu0 %v6488
    %v6490 = vpop.f32.mrb[0].mxu0
    %v6491 = vadd.f32 %v6319, %v6490
    %v6492 = vpop.f32.mrb[0].mxu0
    %6493 = vmatprep.mubr.f32.mxu0 0.0
    %v6494 = vand.u32 %v5952, 4294901760
    %v6495 = vsub.f32 %v5952, %v6494
    %6496 = vmatmul.mubr.f32.gmra.mrb[0].mxu0 %v6495
    %v6497 = vpop.f32.mrb[0].mxu0
    %v6498 = vadd.f32 %v6325, %v6497
    %v6499 = vpop.f32.mrb[0].mxu0
    %6500 = vmatprep.mubr.f32.mxu0 0.0
    %v6501 = vand.u32 %v5955, 4294901760
    %v6502 = vsub.f32 %v5955, %v6501
    %6503 = vmatmul.mubr.f32.gmra.mrb[0].mxu0 %v6502
    %v6504 = vpop.f32.mrb[0].mxu0
    %v6505 = vadd.f32 %v6331, %v6504
    %v6506 = vpop.f32.mrb[0].mxu0
    %6507 = vmatprep.mubr.f32.mxu0 0.0
    %v6508 = vand.u32 %v5958, 4294901760
    %v6509 = vsub.f32 %v5958, %v6508
    %6510 = vmatmul.mubr.f32.gmra.mrb[0].mxu0 %v6509
    %v6511 = vpop.f32.mrb[0].mxu0
    %v6512 = vadd.f32 %v6337, %v6511
    %v6513 = vpop.f32.mrb[0].mxu0
    %6514 = vmatprep.mubr.f32.mxu0 0.0
    %v6515 = vand.u32 %v5961, 4294901760
    %v6516 = vsub.f32 %v5961, %v6515
    %6517 = vmatmul.mubr.f32.gmra.mrb[0].mxu0 %v6516
    %v6518 = vpop.f32.mrb[0].mxu0
    %v6519 = vadd.f32 %v6343, %v6518
    %v6520 = vpop.f32.mrb[0].mxu0
    %6521 = vmatprep.mubr.f32.mxu0 0.0
    %v6522 = vand.u32 %v5964, 4294901760
    %v6523 = vsub.f32 %v5964, %v6522
    %6524 = vmatmul.mubr.f32.gmra.mrb[0].mxu0 %v6523
    %v6525 = vpop.f32.mrb[0].mxu0
    %v6526 = vadd.f32 %v6349, %v6525
    %v6527 = vpop.f32.mrb[0].mxu0
    %6528 = vmatprep.mubr.f32.mxu0 0.0
    %v6529 = vand.u32 %v5967, 4294901760
    %v6530 = vsub.f32 %v5967, %v6529
    %6531 = vmatmul.mubr.f32.gmra.mrb[0].mxu0 %v6530
    %v6532 = vpop.f32.mrb[0].mxu0
    %v6533 = vadd.f32 %v6355, %v6532
    %v6534 = vpop.f32.mrb[0].mxu0
    %6535 = vmatprep.mubr.f32.mxu0 0.0
    %v6536 = vand.u32 %v5970, 4294901760
    %v6537 = vsub.f32 %v5970, %v6536
    %6538 = vmatmul.mubr.f32.gmra.mrb[0].mxu0 %v6537
    %v6539 = vpop.f32.mrb[0].mxu0
    %v6540 = vadd.f32 %v6361, %v6539
    %v6541 = vpop.f32.mrb[0].mxu0
    %6542 = vdwg.mxu0
    %6543 = vmatprep.subr.mxu0 0.0
    %v6544 = vand.u32 %v5921, 4294901760
    %6545 = vmatpush1.msra.mxu0 %v6544
    %6546 = vmatprep.subr.mxu0 0.0
    %6547 = vmatpush1.msra.mxu0 0.0
    %6548 = vmatprep.subr.mxu0 0.0
    %6549 = vmatpush1.msra.mxu0 0.0
    %6550 = vmatprep.subr.mxu0 0.0
    %6551 = vmatpush1.msra.mxu0 0.0
    %6552 = vmatprep.subr.mxu0 0.0
    %6553 = vmatpush1.msra.mxu0 0.0
    %6554 = vmatprep.subr.mxu0 0.0
    %6555 = vmatpush1.msra.mxu0 0.0
    %6556 = vmatprep.subr.mxu0 0.0
    %6557 = vmatpush1.msra.mxu0 0.0
    %6558 = vmatprep.subr.mxu0 0.0
    %6559 = vmatpush1.msra.mxu0 0.0
    %6560 = vmatprep.subr.mxu0 0.0
    %6561 = vmatpush1.msra.mxu0 0.0
    %6562 = vmatprep.subr.mxu0 0.0
    %6563 = vmatpush1.msra.mxu0 0.0
    %6564 = vmatprep.subr.mxu0 0.0
    %6565 = vmatpush1.msra.mxu0 0.0
    %6566 = vmatprep.subr.mxu0 0.0
    %6567 = vmatpush1.msra.mxu0 0.0
    %6568 = vmatprep.subr.mxu0 0.0
    %6569 = vmatpush1.msra.mxu0 0.0
    %6570 = vmatprep.subr.mxu0 0.0
    %6571 = vmatpush1.msra.mxu0 0.0
    %6572 = vmatprep.subr.mxu0 0.0
    %6573 = vmatpush1.msra.mxu0 0.0
    %6574 = vmatprep.subr.mxu0 0.0
    %6575 = vmatpush1.msra.mxu0 0.0
    %6576 = vmatprep.subr.mxu0 0.0
    %6577 = vmatpush1.msra.mxu0 0.0
    %6578 = vmatprep.subr.mxu0 0.0
    %6579 = vmatpush1.msra.mxu0 0.0
    %6580 = vmatprep.subr.mxu0 0.0
    %6581 = vmatpush1.msra.mxu0 0.0
    %6582 = vmatprep.subr.mxu0 0.0
    %6583 = vmatpush1.msra.mxu0 0.0
    %6584 = vmatprep.subr.mxu0 0.0
    %6585 = vmatpush1.msra.mxu0 0.0
    %6586 = vmatprep.subr.mxu0 0.0
    %6587 = vmatpush1.msra.mxu0 0.0
    %6588 = vmatprep.subr.mxu0 0.0
    %6589 = vmatpush1.msra.mxu0 0.0
    %6590 = vmatprep.subr.mxu0 0.0
    %6591 = vmatpush1.msra.mxu0 0.0
    %6592 = vmatprep.subr.mxu0 0.0
    %6593 = vmatpush1.msra.mxu0 0.0
    %6594 = vmatprep.subr.mxu0 0.0
    %6595 = vmatpush1.msra.mxu0 0.0
    %6596 = vmatprep.subr.mxu0 0.0
    %6597 = vmatpush1.msra.mxu0 0.0
    %6598 = vmatprep.subr.mxu0 0.0
    %6599 = vmatpush1.msra.mxu0 0.0
    %6600 = vmatprep.subr.mxu0 0.0
    %6601 = vmatpush1.msra.mxu0 0.0
    %6602 = vmatprep.subr.mxu0 0.0
    %6603 = vmatpush1.msra.mxu0 0.0
    %6604 = vmatprep.subr.mxu0 0.0
    %6605 = vmatpush1.msra.mxu0 0.0
    %6606 = vmatprep.subr.mxu0 0.0
    %6607 = vmatpush1.msra.mxu0 0.0
    %6608 = vmatprep.mubr.f32.mxu0 0.0
    %v6609 = vand.u32 %v5925, 4294901760
    %v6610 = vsub.f32 %v5925, %v6609
    %v6611 = vand.u32 %v6610, 4294901760
    %6612 = vmatmul.mubr.f32.gmra.mrb[0].mxu0 %v6611
    %v6613 = vpop.f32.mrb[0].mxu0
    %v6614 = vadd.f32 %v6435, %v6613
    %v6615 = vpop.f32.mrb[0].mxu0
    %6616 = vmatprep.mubr.f32.mxu0 0.0
    %v6617 = vand.u32 %v5928, 4294901760
    %v6618 = vsub.f32 %v5928, %v6617
    %v6619 = vand.u32 %v6618, 4294901760
    %6620 = vmatmul.mubr.f32.gmra.mrb[0].mxu0 %v6619
    %v6621 = vpop.f32.mrb[0].mxu0
    %v6622 = vadd.f32 %v6442, %v6621
    %v6623 = vpop.f32.mrb[0].mxu0
    %6624 = vmatprep.mubr.f32.mxu0 0.0
    %v6625 = vand.u32 %v5931, 4294901760
    %v6626 = vsub.f32 %v5931, %v6625
    %v6627 = vand.u32 %v6626, 4294901760
    %6628 = vmatmul.mubr.f32.gmra.mrb[0].mxu0 %v6627
    %v6629 = vpop.f32.mrb[0].mxu0
    %v6630 = vadd.f32 %v6449, %v6629
    %v6631 = vpop.f32.mrb[0].mxu0
    %6632 = vmatprep.mubr.f32.mxu0 0.0
    %v6633 = vand.u32 %v5934, 4294901760
    %v6634 = vsub.f32 %v5934, %v6633
    %v6635 = vand.u32 %v6634, 4294901760
    %6636 = vmatmul.mubr.f32.gmra.mrb[0].mxu0 %v6635
    %v6637 = vpop.f32.mrb[0].mxu0
    %v6638 = vadd.f32 %v6456, %v6637
    %v6639 = vpop.f32.mrb[0].mxu0
    %6640 = vmatprep.mubr.f32.mxu0 0.0
    %v6641 = vand.u32 %v5937, 4294901760
    %v6642 = vsub.f32 %v5937, %v6641
    %v6643 = vand.u32 %v6642, 4294901760
    %6644 = vmatmul.mubr.f32.gmra.mrb[0].mxu0 %v6643
    %v6645 = vpop.f32.mrb[0].mxu0
    %v6646 = vadd.f32 %v6463, %v6645
    %v6647 = vpop.f32.mrb[0].mxu0
    %6648 = vmatprep.mubr.f32.mxu0 0.0
    %v6649 = vand.u32 %v5940, 4294901760
    %v6650 = vsub.f32 %v5940, %v6649
    %v6651 = vand.u32 %v6650, 4294901760
    %6652 = vmatmul.mubr.f32.gmra.mrb[0].mxu0 %v6651
    %v6653 = vpop.f32.mrb[0].mxu0
    %v6654 = vadd.f32 %v6470, %v6653
    %v6655 = vpop.f32.mrb[0].mxu0
    %6656 = vmatprep.mubr.f32.mxu0 0.0
    %v6657 = vand.u32 %v5943, 4294901760
    %v6658 = vsub.f32 %v5943, %v6657
    %v6659 = vand.u32 %v6658, 4294901760
    %6660 = vmatmul.mubr.f32.gmra.mrb[0].mxu0 %v6659
    %v6661 = vpop.f32.mrb[0].mxu0
    %v6662 = vadd.f32 %v6477, %v6661
    %v6663 = vpop.f32.mrb[0].mxu0
    %6664 = vmatprep.mubr.f32.mxu0 0.0
    %v6665 = vand.u32 %v5946, 4294901760
    %v6666 = vsub.f32 %v5946, %v6665
    %v6667 = vand.u32 %v6666, 4294901760
    %6668 = vmatmul.mubr.f32.gmra.mrb[0].mxu0 %v6667
    %v6669 = vpop.f32.mrb[0].mxu0
    %v6670 = vadd.f32 %v6484, %v6669
    %v6671 = vpop.f32.mrb[0].mxu0
    %6672 = vmatprep.mubr.f32.mxu0 0.0
    %v6673 = vand.u32 %v5949, 4294901760
    %v6674 = vsub.f32 %v5949, %v6673
    %v6675 = vand.u32 %v6674, 4294901760
    %6676 = vmatmul.mubr.f32.gmra.mrb[0].mxu0 %v6675
    %v6677 = vpop.f32.mrb[0].mxu0
    %v6678 = vadd.f32 %v6491, %v6677
    %v6679 = vpop.f32.mrb[0].mxu0
    %6680 = vmatprep.mubr.f32.mxu0 0.0
    %v6681 = vand.u32 %v5952, 4294901760
    %v6682 = vsub.f32 %v5952, %v6681
    %v6683 = vand.u32 %v6682, 4294901760
    %6684 = vmatmul.mubr.f32.gmra.mrb[0].mxu0 %v6683
    %v6685 = vpop.f32.mrb[0].mxu0
    %v6686 = vadd.f32 %v6498, %v6685
    %v6687 = vpop.f32.mrb[0].mxu0
    %6688 = vmatprep.mubr.f32.mxu0 0.0
    %v6689 = vand.u32 %v5955, 4294901760
    %v6690 = vsub.f32 %v5955, %v6689
    %v6691 = vand.u32 %v6690, 4294901760
    %6692 = vmatmul.mubr.f32.gmra.mrb[0].mxu0 %v6691
    %v6693 = vpop.f32.mrb[0].mxu0
    %v6694 = vadd.f32 %v6505, %v6693
    %v6695 = vpop.f32.mrb[0].mxu0
    %6696 = vmatprep.mubr.f32.mxu0 0.0
    %v6697 = vand.u32 %v5958, 4294901760
    %v6698 = vsub.f32 %v5958, %v6697
    %v6699 = vand.u32 %v6698, 4294901760
    %6700 = vmatmul.mubr.f32.gmra.mrb[0].mxu0 %v6699
    %v6701 = vpop.f32.mrb[0].mxu0
    %v6702 = vadd.f32 %v6512, %v6701
    %v6703 = vpop.f32.mrb[0].mxu0
    %6704 = vmatprep.mubr.f32.mxu0 0.0
    %v6705 = vand.u32 %v5961, 4294901760
    %v6706 = vsub.f32 %v5961, %v6705
    %v6707 = vand.u32 %v6706, 4294901760
    %6708 = vmatmul.mubr.f32.gmra.mrb[0].mxu0 %v6707
    %v6709 = vpop.f32.mrb[0].mxu0
    %v6710 = vadd.f32 %v6519, %v6709
    %v6711 = vpop.f32.mrb[0].mxu0
    %6712 = vmatprep.mubr.f32.mxu0 0.0
    %v6713 = vand.u32 %v5964, 4294901760
    %v6714 = vsub.f32 %v5964, %v6713
    %v6715 = vand.u32 %v6714, 4294901760
    %6716 = vmatmul.mubr.f32.gmra.mrb[0].mxu0 %v6715
    %v6717 = vpop.f32.mrb[0].mxu0
    %v6718 = vadd.f32 %v6526, %v6717
    %v6719 = vpop.f32.mrb[0].mxu0
    %6720 = vmatprep.mubr.f32.mxu0 0.0
    %v6721 = vand.u32 %v5967, 4294901760
    %v6722 = vsub.f32 %v5967, %v6721
    %v6723 = vand.u32 %v6722, 4294901760
    %6724 = vmatmul.mubr.f32.gmra.mrb[0].mxu0 %v6723
    %v6725 = vpop.f32.mrb[0].mxu0
    %v6726 = vadd.f32 %v6533, %v6725
    %v6727 = vpop.f32.mrb[0].mxu0
    %6728 = vmatprep.mubr.f32.mxu0 0.0
    %v6729 = vand.u32 %v5970, 4294901760
    %v6730 = vsub.f32 %v5970, %v6729
    %v6731 = vand.u32 %v6730, 4294901760
    %6732 = vmatmul.mubr.f32.gmra.mrb[0].mxu0 %v6731
    %v6733 = vpop.f32.mrb[0].mxu0
    %v6734 = vadd.f32 %v6540, %v6733
    %v6735 = vpop.f32.mrb[0].mxu0
    %6736 = vdwg.mxu0
    %6737 = vmatprep.subr.mxu0 0.0
    %v6738 = vand.u32 %v5921, 4294901760
    %v6739 = vsub.f32 %v5921, %v6738
    %v6740 = vand.u32 %v6739, 4294901760
    %6741 = vmatpush1.msra.mxu0 %v6740
    %6742 = vmatprep.subr.mxu0 0.0
    %6743 = vmatpush1.msra.mxu0 0.0
    %6744 = vmatprep.subr.mxu0 0.0
    %6745 = vmatpush1.msra.mxu0 0.0
    %6746 = vmatprep.subr.mxu0 0.0
    %6747 = vmatpush1.msra.mxu0 0.0
    %6748 = vmatprep.subr.mxu0 0.0
    %6749 = vmatpush1.msra.mxu0 0.0
    %6750 = vmatprep.subr.mxu0 0.0
    %6751 = vmatpush1.msra.mxu0 0.0
    %6752 = vmatprep.subr.mxu0 0.0
    %6753 = vmatpush1.msra.mxu0 0.0
    %6754 = vmatprep.subr.mxu0 0.0
    %6755 = vmatpush1.msra.mxu0 0.0
    %6756 = vmatprep.subr.mxu0 0.0
    %6757 = vmatpush1.msra.mxu0 0.0
    %6758 = vmatprep.subr.mxu0 0.0
    %6759 = vmatpush1.msra.mxu0 0.0
    %6760 = vmatprep.subr.mxu0 0.0
    %6761 = vmatpush1.msra.mxu0 0.0
    %6762 = vmatprep.subr.mxu0 0.0
    %6763 = vmatpush1.msra.mxu0 0.0
    %6764 = vmatprep.subr.mxu0 0.0
    %6765 = vmatpush1.msra.mxu0 0.0
    %6766 = vmatprep.subr.mxu0 0.0
    %6767 = vmatpush1.msra.mxu0 0.0
    %6768 = vmatprep.subr.mxu0 0.0
    %6769 = vmatpush1.msra.mxu0 0.0
    %6770 = vmatprep.subr.mxu0 0.0
    %6771 = vmatpush1.msra.mxu0 0.0
    %6772 = vmatprep.subr.mxu0 0.0
    %6773 = vmatpush1.msra.mxu0 0.0
    %6774 = vmatprep.subr.mxu0 0.0
    %6775 = vmatpush1.msra.mxu0 0.0
    %6776 = vmatprep.subr.mxu0 0.0
    %6777 = vmatpush1.msra.mxu0 0.0
    %6778 = vmatprep.subr.mxu0 0.0
    %6779 = vmatpush1.msra.mxu0 0.0
    %6780 = vmatprep.subr.mxu0 0.0
    %6781 = vmatpush1.msra.mxu0 0.0
    %6782 = vmatprep.subr.mxu0 0.0
    %6783 = vmatpush1.msra.mxu0 0.0
    %6784 = vmatprep.subr.mxu0 0.0
    %6785 = vmatpush1.msra.mxu0 0.0
    %6786 = vmatprep.subr.mxu0 0.0
    %6787 = vmatpush1.msra.mxu0 0.0
    %6788 = vmatprep.subr.mxu0 0.0
    %6789 = vmatpush1.msra.mxu0 0.0
    %6790 = vmatprep.subr.mxu0 0.0
    %6791 = vmatpush1.msra.mxu0 0.0
    %6792 = vmatprep.subr.mxu0 0.0
    %6793 = vmatpush1.msra.mxu0 0.0
    %6794 = vmatprep.subr.mxu0 0.0
    %6795 = vmatpush1.msra.mxu0 0.0
    %6796 = vmatprep.subr.mxu0 0.0
    %6797 = vmatpush1.msra.mxu0 0.0
    %6798 = vmatprep.subr.mxu0 0.0
    %6799 = vmatpush1.msra.mxu0 0.0
    %6800 = vmatprep.subr.mxu0 0.0
    %6801 = vmatpush1.msra.mxu0 0.0
    %6802 = vmatprep.subr.mxu0 0.0
    %6803 = vmatpush1.msra.mxu0 0.0
    %6804 = vmatprep.mubr.f32.mxu0 0.0
    %v6805 = vand.u32 %v5925, 4294901760
    %6806 = vmatmul.mubr.f32.gmra.mrb[0].mxu0 %v6805
    %v6807 = vpop.f32.mrb[0].mxu0
    %v6808 = vadd.f32 %v6614, %v6807
    %v6809 = vpop.f32.mrb[0].mxu0
    %6810 = vmatprep.mubr.f32.mxu0 0.0
    %v6811 = vand.u32 %v5928, 4294901760
    %6812 = vmatmul.mubr.f32.gmra.mrb[0].mxu0 %v6811
    %v6813 = vpop.f32.mrb[0].mxu0
    %v6814 = vadd.f32 %v6622, %v6813
    %v6815 = vpop.f32.mrb[0].mxu0
    %6816 = vmatprep.mubr.f32.mxu0 0.0
    %v6817 = vand.u32 %v5931, 4294901760
    %6818 = vmatmul.mubr.f32.gmra.mrb[0].mxu0 %v6817
    %v6819 = vpop.f32.mrb[0].mxu0
    %v6820 = vadd.f32 %v6630, %v6819
    %v6821 = vpop.f32.mrb[0].mxu0
    %6822 = vmatprep.mubr.f32.mxu0 0.0
    %v6823 = vand.u32 %v5934, 4294901760
    %6824 = vmatmul.mubr.f32.gmra.mrb[0].mxu0 %v6823
    %v6825 = vpop.f32.mrb[0].mxu0
    %v6826 = vadd.f32 %v6638, %v6825
    %v6827 = vpop.f32.mrb[0].mxu0
    %6828 = vmatprep.mubr.f32.mxu0 0.0
    %v6829 = vand.u32 %v5937, 4294901760
    %6830 = vmatmul.mubr.f32.gmra.mrb[0].mxu0 %v6829
    %v6831 = vpop.f32.mrb[0].mxu0
    %v6832 = vadd.f32 %v6646, %v6831
    %v6833 = vpop.f32.mrb[0].mxu0
    %6834 = vmatprep.mubr.f32.mxu0 0.0
    %v6835 = vand.u32 %v5940, 4294901760
    %6836 = vmatmul.mubr.f32.gmra.mrb[0].mxu0 %v6835
    %v6837 = vpop.f32.mrb[0].mxu0
    %v6838 = vadd.f32 %v6654, %v6837
    %v6839 = vpop.f32.mrb[0].mxu0
    %6840 = vmatprep.mubr.f32.mxu0 0.0
    %v6841 = vand.u32 %v5943, 4294901760
    %6842 = vmatmul.mubr.f32.gmra.mrb[0].mxu0 %v6841
    %v6843 = vpop.f32.mrb[0].mxu0
    %v6844 = vadd.f32 %v6662, %v6843
    %v6845 = vpop.f32.mrb[0].mxu0
    %6846 = vmatprep.mubr.f32.mxu0 0.0
    %v6847 = vand.u32 %v5946, 4294901760
    %6848 = vmatmul.mubr.f32.gmra.mrb[0].mxu0 %v6847
    %v6849 = vpop.f32.mrb[0].mxu0
    %v6850 = vadd.f32 %v6670, %v6849
    %v6851 = vpop.f32.mrb[0].mxu0
    %6852 = vmatprep.mubr.f32.mxu0 0.0
    %v6853 = vand.u32 %v5949, 4294901760
    %6854 = vmatmul.mubr.f32.gmra.mrb[0].mxu0 %v6853
    %v6855 = vpop.f32.mrb[0].mxu0
    %v6856 = vadd.f32 %v6678, %v6855
    %v6857 = vpop.f32.mrb[0].mxu0
    %6858 = vmatprep.mubr.f32.mxu0 0.0
    %v6859 = vand.u32 %v5952, 4294901760
    %6860 = vmatmul.mubr.f32.gmra.mrb[0].mxu0 %v6859
    %v6861 = vpop.f32.mrb[0].mxu0
    %v6862 = vadd.f32 %v6686, %v6861
    %v6863 = vpop.f32.mrb[0].mxu0
    %6864 = vmatprep.mubr.f32.mxu0 0.0
    %v6865 = vand.u32 %v5955, 4294901760
    %6866 = vmatmul.mubr.f32.gmra.mrb[0].mxu0 %v6865
    %v6867 = vpop.f32.mrb[0].mxu0
    %v6868 = vadd.f32 %v6694, %v6867
    %v6869 = vpop.f32.mrb[0].mxu0
    %6870 = vmatprep.mubr.f32.mxu0 0.0
    %v6871 = vand.u32 %v5958, 4294901760
    %6872 = vmatmul.mubr.f32.gmra.mrb[0].mxu0 %v6871
    %v6873 = vpop.f32.mrb[0].mxu0
    %v6874 = vadd.f32 %v6702, %v6873
    %v6875 = vpop.f32.mrb[0].mxu0
    %6876 = vmatprep.mubr.f32.mxu0 0.0
    %v6877 = vand.u32 %v5961, 4294901760
    %6878 = vmatmul.mubr.f32.gmra.mrb[0].mxu0 %v6877
    %v6879 = vpop.f32.mrb[0].mxu0
    %v6880 = vadd.f32 %v6710, %v6879
    %v6881 = vpop.f32.mrb[0].mxu0
    %6882 = vmatprep.mubr.f32.mxu0 0.0
    %v6883 = vand.u32 %v5964, 4294901760
    %6884 = vmatmul.mubr.f32.gmra.mrb[0].mxu0 %v6883
    %v6885 = vpop.f32.mrb[0].mxu0
    %v6886 = vadd.f32 %v6718, %v6885
    %v6887 = vpop.f32.mrb[0].mxu0
    %6888 = vmatprep.mubr.f32.mxu0 0.0
    %v6889 = vand.u32 %v5967, 4294901760
    %6890 = vmatmul.mubr.f32.gmra.mrb[0].mxu0 %v6889
    %v6891 = vpop.f32.mrb[0].mxu0
    %v6892 = vadd.f32 %v6726, %v6891
    %v6893 = vpop.f32.mrb[0].mxu0
    %6894 = vmatprep.mubr.f32.mxu0 0.0
    %v6895 = vand.u32 %v5970, 4294901760
    %6896 = vmatmul.mubr.f32.gmra.mrb[0].mxu0 %v6895
    %v6897 = vpop.f32.mrb[0].mxu0
    %v6898 = vadd.f32 %v6734, %v6897
    %v6899 = vpop.f32.mrb[0].mxu0
    %6900 = vdwg.mxu0
    %6901 = vmatprep.subr.mxu0 0.0
    %v6902 = vand.u32 %v5921, 4294901760
    %6903 = vmatpush1.msra.mxu0 %v6902
    %6904 = vmatprep.subr.mxu0 0.0
    %6905 = vmatpush1.msra.mxu0 0.0
    %6906 = vmatprep.subr.mxu0 0.0
    %6907 = vmatpush1.msra.mxu0 0.0
    %6908 = vmatprep.subr.mxu0 0.0
    %6909 = vmatpush1.msra.mxu0 0.0
    %6910 = vmatprep.subr.mxu0 0.0
    %6911 = vmatpush1.msra.mxu0 0.0
    %6912 = vmatprep.subr.mxu0 0.0
    %6913 = vmatpush1.msra.mxu0 0.0
    %6914 = vmatprep.subr.mxu0 0.0
    %6915 = vmatpush1.msra.mxu0 0.0
    %6916 = vmatprep.subr.mxu0 0.0
    %6917 = vmatpush1.msra.mxu0 0.0
    %6918 = vmatprep.subr.mxu0 0.0
    %6919 = vmatpush1.msra.mxu0 0.0
    %6920 = vmatprep.subr.mxu0 0.0
    %6921 = vmatpush1.msra.mxu0 0.0
    %6922 = vmatprep.subr.mxu0 0.0
    %6923 = vmatpush1.msra.mxu0 0.0
    %6924 = vmatprep.subr.mxu0 0.0
    %6925 = vmatpush1.msra.mxu0 0.0
    %6926 = vmatprep.subr.mxu0 0.0
    %6927 = vmatpush1.msra.mxu0 0.0
    %6928 = vmatprep.subr.mxu0 0.0
    %6929 = vmatpush1.msra.mxu0 0.0
    %6930 = vmatprep.subr.mxu0 0.0
    %6931 = vmatpush1.msra.mxu0 0.0
    %6932 = vmatprep.subr.mxu0 0.0
    %6933 = vmatpush1.msra.mxu0 0.0
    %6934 = vmatprep.subr.mxu0 0.0
    %6935 = vmatpush1.msra.mxu0 0.0
    %6936 = vmatprep.subr.mxu0 0.0
    %6937 = vmatpush1.msra.mxu0 0.0
    %6938 = vmatprep.subr.mxu0 0.0
    %6939 = vmatpush1.msra.mxu0 0.0
    %6940 = vmatprep.subr.mxu0 0.0
    %6941 = vmatpush1.msra.mxu0 0.0
    %6942 = vmatprep.subr.mxu0 0.0
    %6943 = vmatpush1.msra.mxu0 0.0
    %6944 = vmatprep.subr.mxu0 0.0
    %6945 = vmatpush1.msra.mxu0 0.0
    %6946 = vmatprep.subr.mxu0 0.0
    %6947 = vmatpush1.msra.mxu0 0.0
    %6948 = vmatprep.subr.mxu0 0.0
    %6949 = vmatpush1.msra.mxu0 0.0
    %6950 = vmatprep.subr.mxu0 0.0
    %6951 = vmatpush1.msra.mxu0 0.0
    %6952 = vmatprep.subr.mxu0 0.0
    %6953 = vmatpush1.msra.mxu0 0.0
    %6954 = vmatprep.subr.mxu0 0.0
    %6955 = vmatpush1.msra.mxu0 0.0
    %6956 = vmatprep.subr.mxu0 0.0
    %6957 = vmatpush1.msra.mxu0 0.0
    %6958 = vmatprep.subr.mxu0 0.0
    %6959 = vmatpush1.msra.mxu0 0.0
    %6960 = vmatprep.subr.mxu0 0.0
    %6961 = vmatpush1.msra.mxu0 0.0
    %6962 = vmatprep.subr.mxu0 0.0
    %6963 = vmatpush1.msra.mxu0 0.0
    %6964 = vmatprep.subr.mxu0 0.0
    %6965 = vmatpush1.msra.mxu0 0.0
    %6966 = vmatprep.mubr.f32.mxu0 0.0
    %v6967 = vand.u32 %v5925, 4294901760
    %6968 = vmatmul.mubr.f32.gmra.mrb[0].mxu0 %v6967
    %v6969 = vpop.f32.mrb[0].mxu0
    %v6970 = vadd.f32 %v6808, %v6969
    %v6971 = vpop.f32.mrb[0].mxu0
    %6972 = vmatprep.mubr.f32.mxu0 0.0
    %v6973 = vand.u32 %v5928, 4294901760
    %6974 = vmatmul.mubr.f32.gmra.mrb[0].mxu0 %v6973
    %v6975 = vpop.f32.mrb[0].mxu0
    %v6976 = vadd.f32 %v6814, %v6975
    %v6977 = vpop.f32.mrb[0].mxu0
    %6978 = vmatprep.mubr.f32.mxu0 0.0
    %v6979 = vand.u32 %v5931, 4294901760
    %6980 = vmatmul.mubr.f32.gmra.mrb[0].mxu0 %v6979
    %v6981 = vpop.f32.mrb[0].mxu0
    %v6982 = vadd.f32 %v6820, %v6981
    %v6983 = vpop.f32.mrb[0].mxu0
    %6984 = vmatprep.mubr.f32.mxu0 0.0
    %v6985 = vand.u32 %v5934, 4294901760
    %6986 = vmatmul.mubr.f32.gmra.mrb[0].mxu0 %v6985
    %v6987 = vpop.f32.mrb[0].mxu0
    %v6988 = vadd.f32 %v6826, %v6987
    %v6989 = vpop.f32.mrb[0].mxu0
    %6990 = vmatprep.mubr.f32.mxu0 0.0
    %v6991 = vand.u32 %v5937, 4294901760
    %6992 = vmatmul.mubr.f32.gmra.mrb[0].mxu0 %v6991
    %v6993 = vpop.f32.mrb[0].mxu0
    %v6994 = vadd.f32 %v6832, %v6993
    %v6995 = vpop.f32.mrb[0].mxu0
    %6996 = vmatprep.mubr.f32.mxu0 0.0
    %v6997 = vand.u32 %v5940, 4294901760
    %6998 = vmatmul.mubr.f32.gmra.mrb[0].mxu0 %v6997
    %v6999 = vpop.f32.mrb[0].mxu0
    %v7000 = vadd.f32 %v6838, %v6999
    %v7001 = vpop.f32.mrb[0].mxu0
    %7002 = vmatprep.mubr.f32.mxu0 0.0
    %v7003 = vand.u32 %v5943, 4294901760
    %7004 = vmatmul.mubr.f32.gmra.mrb[0].mxu0 %v7003
    %v7005 = vpop.f32.mrb[0].mxu0
    %v7006 = vadd.f32 %v6844, %v7005
    %v7007 = vpop.f32.mrb[0].mxu0
    %7008 = vmatprep.mubr.f32.mxu0 0.0
    %v7009 = vand.u32 %v5946, 4294901760
    %7010 = vmatmul.mubr.f32.gmra.mrb[0].mxu0 %v7009
    %v7011 = vpop.f32.mrb[0].mxu0
    %v7012 = vadd.f32 %v6850, %v7011
    %v7013 = vpop.f32.mrb[0].mxu0
    %7014 = vmatprep.mubr.f32.mxu0 0.0
    %v7015 = vand.u32 %v5949, 4294901760
    %7016 = vmatmul.mubr.f32.gmra.mrb[0].mxu0 %v7015
    %v7017 = vpop.f32.mrb[0].mxu0
    %v7018 = vadd.f32 %v6856, %v7017
    %v7019 = vpop.f32.mrb[0].mxu0
    %7020 = vmatprep.mubr.f32.mxu0 0.0
    %v7021 = vand.u32 %v5952, 4294901760
    %7022 = vmatmul.mubr.f32.gmra.mrb[0].mxu0 %v7021
    %v7023 = vpop.f32.mrb[0].mxu0
    %v7024 = vadd.f32 %v6862, %v7023
    %v7025 = vpop.f32.mrb[0].mxu0
    %7026 = vmatprep.mubr.f32.mxu0 0.0
    %v7027 = vand.u32 %v5955, 4294901760
    %7028 = vmatmul.mubr.f32.gmra.mrb[0].mxu0 %v7027
    %v7029 = vpop.f32.mrb[0].mxu0
    %v7030 = vadd.f32 %v6868, %v7029
    %v7031 = vpop.f32.mrb[0].mxu0
    %7032 = vmatprep.mubr.f32.mxu0 0.0
    %v7033 = vand.u32 %v5958, 4294901760
    %7034 = vmatmul.mubr.f32.gmra.mrb[0].mxu0 %v7033
    %v7035 = vpop.f32.mrb[0].mxu0
    %v7036 = vadd.f32 %v6874, %v7035
    %v7037 = vpop.f32.mrb[0].mxu0
    %7038 = vmatprep.mubr.f32.mxu0 0.0
    %v7039 = vand.u32 %v5961, 4294901760
    %7040 = vmatmul.mubr.f32.gmra.mrb[0].mxu0 %v7039
    %v7041 = vpop.f32.mrb[0].mxu0
    %v7042 = vadd.f32 %v6880, %v7041
    %v7043 = vpop.f32.mrb[0].mxu0
    %7044 = vmatprep.mubr.f32.mxu0 0.0
    %v7045 = vand.u32 %v5964, 4294901760
    %7046 = vmatmul.mubr.f32.gmra.mrb[0].mxu0 %v7045
    %v7047 = vpop.f32.mrb[0].mxu0
    %v7048 = vadd.f32 %v6886, %v7047
    %v7049 = vpop.f32.mrb[0].mxu0
    %7050 = vmatprep.mubr.f32.mxu0 0.0
    %v7051 = vand.u32 %v5967, 4294901760
    %7052 = vmatmul.mubr.f32.gmra.mrb[0].mxu0 %v7051
    %v7053 = vpop.f32.mrb[0].mxu0
    %v7054 = vadd.f32 %v6892, %v7053
    %v7055 = vpop.f32.mrb[0].mxu0
    %7056 = vmatprep.mubr.f32.mxu0 0.0
    %v7057 = vand.u32 %v5970, 4294901760
    %7058 = vmatmul.mubr.f32.gmra.mrb[0].mxu0 %v7057
    %v7059 = vpop.f32.mrb[0].mxu0
    %v7060 = vadd.f32 %v6898, %v7059
    %v7061 = vpop.f32.mrb[0].mxu0
    %7062 = vdwg.mxu0
    %v7063 = vrcp.pop %v6970
    %v7064 = vmul.f32 %v5267, %v7063
    %v7065 = vrcp.pop %v6976
    %v7066 = vmul.f32 %v5268, %v7065
    %v7067 = vrcp.pop %v6982
    %v7068 = vmul.f32 %v5269, %v7067
    %v7069 = vrcp.pop %v6988
    %v7070 = vmul.f32 %v5270, %v7069
    %v7071 = vrcp.pop %v6994
    %v7072 = vmul.f32 %v5271, %v7071
    %v7073 = vrcp.pop %v7000
    %v7074 = vmul.f32 %v5272, %v7073
    %v7075 = vrcp.pop %v7006
    %v7076 = vmul.f32 %v5273, %v7075
    %v7077 = vrcp.pop %v7012
    %v7078 = vmul.f32 %v5274, %v7077
    %v7079 = vrcp.pop %v7018
    %v7080 = vmul.f32 %v5275, %v7079
    %v7081 = vrcp.pop %v7024
    %v7082 = vmul.f32 %v5276, %v7081
    %v7083 = vrcp.pop %v7030
    %v7084 = vmul.f32 %v5277, %v7083
    %v7085 = vrcp.pop %v7036
    %v7086 = vmul.f32 %v5278, %v7085
    %v7087 = vrcp.pop %v7042
    %v7088 = vmul.f32 %v5279, %v7087
    %v7089 = vrcp.pop %v7048
    %v7090 = vmul.f32 %v5280, %v7089
    %v7091 = vrcp.pop %v7054
    %v7092 = vmul.f32 %v5281, %v7091
    %v7093 = vrcp.pop %v7060
    %v7094 = vmul.f32 %v5282, %v7093
    %v7095 = vmul.u32 %v377, 16
    %vm7096 = vcmp.ge.s32.totalorder %v183, %v7095
    %v7097 = vadd.s32 %v7095, 16
    %vm7098 = vcmp.lt.s32.totalorder %v183, %v7097
    %vm7099 = vmand %vm7096, %vm7098
    %v7100 = vsel %vm7099, 1, 0
    %v7101 = vcvt.s32.f32 %v7100
    %v7103 = vsel %vm5181, %v7064, 0
    %v7106 = vsel %vm5181, %v7066, 0
    %v7109 = vsel %vm5181, %v7068, 0
    %v7112 = vsel %vm5181, %v7070, 0
    %v7115 = vsel %vm5181, %v7072, 0
    %v7118 = vsel %vm5181, %v7074, 0
    %v7121 = vsel %vm5181, %v7076, 0
    %v7124 = vsel %vm5181, %v7078, 0
    %v7127 = vsel %vm5181, %v7080, 0
    %v7130 = vsel %vm5181, %v7082, 0
    %v7133 = vsel %vm5181, %v7084, 0
    %v7136 = vsel %vm5181, %v7086, 0
    %v7139 = vsel %vm5181, %v7088, 0
    %v7142 = vsel %vm5181, %v7090, 0
    %v7145 = vsel %vm5181, %v7092, 0
    %v7148 = vsel %vm5181, %v7094, 0
    %vm7150 = vcmask 1043456
    %v7152 = vsel %vm7150, %v7101, 0
    %7154 = vmatprep.subr.mxu0 0.0
    %v7155 = vand.u32 %v7152, 4294901760
    %7156 = vmatpush1.msra.mxu0 %v7155
    %7157 = vmatprep.subr.mxu0 0.0
    %7158 = vmatpush1.msra.mxu0 0.0
    %7159 = vmatprep.subr.mxu0 0.0
    %7160 = vmatpush1.msra.mxu0 0.0
    %7161 = vmatprep.subr.mxu0 0.0
    %7162 = vmatpush1.msra.mxu0 0.0
    %7163 = vmatprep.subr.mxu0 0.0
    %7164 = vmatpush1.msra.mxu0 0.0
    %7165 = vmatprep.subr.mxu0 0.0
    %7166 = vmatpush1.msra.mxu0 0.0
    %7167 = vmatprep.subr.mxu0 0.0
    %7168 = vmatpush1.msra.mxu0 0.0
    %7169 = vmatprep.subr.mxu0 0.0
    %7170 = vmatpush1.msra.mxu0 0.0
    %7171 = vmatprep.subr.mxu0 0.0
    %7172 = vmatpush1.msra.mxu0 0.0
    %7173 = vmatprep.subr.mxu0 0.0
    %7174 = vmatpush1.msra.mxu0 0.0
    %7175 = vmatprep.subr.mxu0 0.0
    %7176 = vmatpush1.msra.mxu0 0.0
    %7177 = vmatprep.subr.mxu0 0.0
    %7178 = vmatpush1.msra.mxu0 0.0
    %7179 = vmatprep.subr.mxu0 0.0
    %7180 = vmatpush1.msra.mxu0 0.0
    %7181 = vmatprep.subr.mxu0 0.0
    %7182 = vmatpush1.msra.mxu0 0.0
    %7183 = vmatprep.subr.mxu0 0.0
    %7184 = vmatpush1.msra.mxu0 0.0
    %7185 = vmatprep.subr.mxu0 0.0
    %7186 = vmatpush1.msra.mxu0 0.0
    %7187 = vmatprep.subr.mxu0 0.0
    %7188 = vmatpush1.msra.mxu0 0.0
    %7189 = vmatprep.subr.mxu0 0.0
    %7190 = vmatpush1.msra.mxu0 0.0
    %7191 = vmatprep.subr.mxu0 0.0
    %7192 = vmatpush1.msra.mxu0 0.0
    %7193 = vmatprep.subr.mxu0 0.0
    %7194 = vmatpush1.msra.mxu0 0.0
    %7195 = vmatprep.subr.mxu0 0.0
    %7196 = vmatpush1.msra.mxu0 0.0
    %7197 = vmatprep.subr.mxu0 0.0
    %7198 = vmatpush1.msra.mxu0 0.0
    %7199 = vmatprep.subr.mxu0 0.0
    %7200 = vmatpush1.msra.mxu0 0.0
    %7201 = vmatprep.subr.mxu0 0.0
    %7202 = vmatpush1.msra.mxu0 0.0
    %7203 = vmatprep.subr.mxu0 0.0
    %7204 = vmatpush1.msra.mxu0 0.0
    %7205 = vmatprep.subr.mxu0 0.0
    %7206 = vmatpush1.msra.mxu0 0.0
    %7207 = vmatprep.subr.mxu0 0.0
    %7208 = vmatpush1.msra.mxu0 0.0
    %7209 = vmatprep.subr.mxu0 0.0
    %7210 = vmatpush1.msra.mxu0 0.0
    %7211 = vmatprep.subr.mxu0 0.0
    %7212 = vmatpush1.msra.mxu0 0.0
    %7213 = vmatprep.subr.mxu0 0.0
    %7214 = vmatpush1.msra.mxu0 0.0
    %7215 = vmatprep.subr.mxu0 0.0
    %7216 = vmatpush1.msra.mxu0 0.0
    %7217 = vmatprep.subr.mxu0 0.0
    %7218 = vmatpush1.msra.mxu0 0.0
    %7219 = vmatprep.mubr.f32.mxu0 0.0
    %v7220 = vand.u32 %v7103, 4294901760
    %v7221 = vsub.f32 %v7103, %v7220
    %v7222 = vand.u32 %v7221, 4294901760
    %v7223 = vsub.f32 %v7221, %v7222
    %v7224 = vand.u32 %v7223, 4294901760
    %7225 = vmatmul.mubr.f32.gmra.mrb[0].mxu0 %v7224
    %v7226 = vpop.f32.mrb[0].mxu0
    %v7227 = vadd.f32 0.0, %v7226
    %v7228 = vpop.f32.mrb[0].mxu0
    %7229 = vmatprep.mubr.f32.mxu0 0.0
    %v7230 = vand.u32 %v7106, 4294901760
    %v7231 = vsub.f32 %v7106, %v7230
    %v7232 = vand.u32 %v7231, 4294901760
    %v7233 = vsub.f32 %v7231, %v7232
    %v7234 = vand.u32 %v7233, 4294901760
    %7235 = vmatmul.mubr.f32.gmra.mrb[0].mxu0 %v7234
    %v7236 = vpop.f32.mrb[0].mxu0
    %v7237 = vadd.f32 0.0, %v7236
    %v7238 = vpop.f32.mrb[0].mxu0
    %7239 = vmatprep.mubr.f32.mxu0 0.0
    %v7240 = vand.u32 %v7109, 4294901760
    %v7241 = vsub.f32 %v7109, %v7240
    %v7242 = vand.u32 %v7241, 4294901760
    %v7243 = vsub.f32 %v7241, %v7242
    %v7244 = vand.u32 %v7243, 4294901760
    %7245 = vmatmul.mubr.f32.gmra.mrb[0].mxu0 %v7244
    %v7246 = vpop.f32.mrb[0].mxu0
    %v7247 = vadd.f32 0.0, %v7246
    %v7248 = vpop.f32.mrb[0].mxu0
    %7249 = vmatprep.mubr.f32.mxu0 0.0
    %v7250 = vand.u32 %v7112, 4294901760
    %v7251 = vsub.f32 %v7112, %v7250
    %v7252 = vand.u32 %v7251, 4294901760
    %v7253 = vsub.f32 %v7251, %v7252
    %v7254 = vand.u32 %v7253, 4294901760
    %7255 = vmatmul.mubr.f32.gmra.mrb[0].mxu0 %v7254
    %v7256 = vpop.f32.mrb[0].mxu0
    %v7257 = vadd.f32 0.0, %v7256
    %v7258 = vpop.f32.mrb[0].mxu0
    %7259 = vmatprep.mubr.f32.mxu0 0.0
    %v7260 = vand.u32 %v7115, 4294901760
    %v7261 = vsub.f32 %v7115, %v7260
    %v7262 = vand.u32 %v7261, 4294901760
    %v7263 = vsub.f32 %v7261, %v7262
    %v7264 = vand.u32 %v7263, 4294901760
    %7265 = vmatmul.mubr.f32.gmra.mrb[0].mxu0 %v7264
    %v7266 = vpop.f32.mrb[0].mxu0
    %v7267 = vadd.f32 0.0, %v7266
    %v7268 = vpop.f32.mrb[0].mxu0
    %7269 = vmatprep.mubr.f32.mxu0 0.0
    %v7270 = vand.u32 %v7118, 4294901760
    %v7271 = vsub.f32 %v7118, %v7270
    %v7272 = vand.u32 %v7271, 4294901760
    %v7273 = vsub.f32 %v7271, %v7272
    %v7274 = vand.u32 %v7273, 4294901760
    %7275 = vmatmul.mubr.f32.gmra.mrb[0].mxu0 %v7274
    %v7276 = vpop.f32.mrb[0].mxu0
    %v7277 = vadd.f32 0.0, %v7276
    %v7278 = vpop.f32.mrb[0].mxu0
    %7279 = vmatprep.mubr.f32.mxu0 0.0
    %v7280 = vand.u32 %v7121, 4294901760
    %v7281 = vsub.f32 %v7121, %v7280
    %v7282 = vand.u32 %v7281, 4294901760
    %v7283 = vsub.f32 %v7281, %v7282
    %v7284 = vand.u32 %v7283, 4294901760
    %7285 = vmatmul.mubr.f32.gmra.mrb[0].mxu0 %v7284
    %v7286 = vpop.f32.mrb[0].mxu0
    %v7287 = vadd.f32 0.0, %v7286
    %v7288 = vpop.f32.mrb[0].mxu0
    %7289 = vmatprep.mubr.f32.mxu0 0.0
    %v7290 = vand.u32 %v7124, 4294901760
    %v7291 = vsub.f32 %v7124, %v7290
    %v7292 = vand.u32 %v7291, 4294901760
    %v7293 = vsub.f32 %v7291, %v7292
    %v7294 = vand.u32 %v7293, 4294901760
    %7295 = vmatmul.mubr.f32.gmra.mrb[0].mxu0 %v7294
    %v7296 = vpop.f32.mrb[0].mxu0
    %v7297 = vadd.f32 0.0, %v7296
    %v7298 = vpop.f32.mrb[0].mxu0
    %7299 = vmatprep.mubr.f32.mxu0 0.0
    %v7300 = vand.u32 %v7127, 4294901760
    %v7301 = vsub.f32 %v7127, %v7300
    %v7302 = vand.u32 %v7301, 4294901760
    %v7303 = vsub.f32 %v7301, %v7302
    %v7304 = vand.u32 %v7303, 4294901760
    %7305 = vmatmul.mubr.f32.gmra.mrb[0].mxu0 %v7304
    %v7306 = vpop.f32.mrb[0].mxu0
    %v7307 = vadd.f32 0.0, %v7306
    %v7308 = vpop.f32.mrb[0].mxu0
    %7309 = vmatprep.mubr.f32.mxu0 0.0
    %v7310 = vand.u32 %v7130, 4294901760
    %v7311 = vsub.f32 %v7130, %v7310
    %v7312 = vand.u32 %v7311, 4294901760
    %v7313 = vsub.f32 %v7311, %v7312
    %v7314 = vand.u32 %v7313, 4294901760
    %7315 = vmatmul.mubr.f32.gmra.mrb[0].mxu0 %v7314
    %v7316 = vpop.f32.mrb[0].mxu0
    %v7317 = vadd.f32 0.0, %v7316
    %v7318 = vpop.f32.mrb[0].mxu0
    %7319 = vmatprep.mubr.f32.mxu0 0.0
    %v7320 = vand.u32 %v7133, 4294901760
    %v7321 = vsub.f32 %v7133, %v7320
    %v7322 = vand.u32 %v7321, 4294901760
    %v7323 = vsub.f32 %v7321, %v7322
    %v7324 = vand.u32 %v7323, 4294901760
    %7325 = vmatmul.mubr.f32.gmra.mrb[0].mxu0 %v7324
    %v7326 = vpop.f32.mrb[0].mxu0
    %v7327 = vadd.f32 0.0, %v7326
    %v7328 = vpop.f32.mrb[0].mxu0
    %7329 = vmatprep.mubr.f32.mxu0 0.0
    %v7330 = vand.u32 %v7136, 4294901760
    %v7331 = vsub.f32 %v7136, %v7330
    %v7332 = vand.u32 %v7331, 4294901760
    %v7333 = vsub.f32 %v7331, %v7332
    %v7334 = vand.u32 %v7333, 4294901760
    %7335 = vmatmul.mubr.f32.gmra.mrb[0].mxu0 %v7334
    %v7336 = vpop.f32.mrb[0].mxu0
    %v7337 = vadd.f32 0.0, %v7336
    %v7338 = vpop.f32.mrb[0].mxu0
    %7339 = vmatprep.mubr.f32.mxu0 0.0
    %v7340 = vand.u32 %v7139, 4294901760
    %v7341 = vsub.f32 %v7139, %v7340
    %v7342 = vand.u32 %v7341, 4294901760
    %v7343 = vsub.f32 %v7341, %v7342
    %v7344 = vand.u32 %v7343, 4294901760
    %7345 = vmatmul.mubr.f32.gmra.mrb[0].mxu0 %v7344
    %v7346 = vpop.f32.mrb[0].mxu0
    %v7347 = vadd.f32 0.0, %v7346
    %v7348 = vpop.f32.mrb[0].mxu0
    %7349 = vmatprep.mubr.f32.mxu0 0.0
    %v7350 = vand.u32 %v7142, 4294901760
    %v7351 = vsub.f32 %v7142, %v7350
    %v7352 = vand.u32 %v7351, 4294901760
    %v7353 = vsub.f32 %v7351, %v7352
    %v7354 = vand.u32 %v7353, 4294901760
    %7355 = vmatmul.mubr.f32.gmra.mrb[0].mxu0 %v7354
    %v7356 = vpop.f32.mrb[0].mxu0
    %v7357 = vadd.f32 0.0, %v7356
    %v7358 = vpop.f32.mrb[0].mxu0
    %7359 = vmatprep.mubr.f32.mxu0 0.0
    %v7360 = vand.u32 %v7145, 4294901760
    %v7361 = vsub.f32 %v7145, %v7360
    %v7362 = vand.u32 %v7361, 4294901760
    %v7363 = vsub.f32 %v7361, %v7362
    %v7364 = vand.u32 %v7363, 4294901760
    %7365 = vmatmul.mubr.f32.gmra.mrb[0].mxu0 %v7364
    %v7366 = vpop.f32.mrb[0].mxu0
    %v7367 = vadd.f32 0.0, %v7366
    %v7368 = vpop.f32.mrb[0].mxu0
    %7369 = vmatprep.mubr.f32.mxu0 0.0
    %v7370 = vand.u32 %v7148, 4294901760
    %v7371 = vsub.f32 %v7148, %v7370
    %v7372 = vand.u32 %v7371, 4294901760
    %v7373 = vsub.f32 %v7371, %v7372
    %v7374 = vand.u32 %v7373, 4294901760
    %7375 = vmatmul.mubr.f32.gmra.mrb[0].mxu0 %v7374
    %v7376 = vpop.f32.mrb[0].mxu0
    %v7377 = vadd.f32 0.0, %v7376
    %v7378 = vpop.f32.mrb[0].mxu0
    %7379 = vdwg.mxu0
    %7380 = vmatprep.subr.mxu0 0.0
    %v7381 = vand.u32 %v7152, 4294901760
    %v7382 = vsub.f32 %v7152, %v7381
    %v7383 = vand.u32 %v7382, 4294901760
    %v7384 = vsub.f32 %v7382, %v7383
    %v7385 = vand.u32 %v7384, 4294901760
    %7386 = vmatpush1.msra.mxu0 %v7385
    %7387 = vmatprep.subr.mxu0 0.0
    %7388 = vmatpush1.msra.mxu0 0.0
    %7389 = vmatprep.subr.mxu0 0.0
    %7390 = vmatpush1.msra.mxu0 0.0
    %7391 = vmatprep.subr.mxu0 0.0
    %7392 = vmatpush1.msra.mxu0 0.0
    %7393 = vmatprep.subr.mxu0 0.0
    %7394 = vmatpush1.msra.mxu0 0.0
    %7395 = vmatprep.subr.mxu0 0.0
    %7396 = vmatpush1.msra.mxu0 0.0
    %7397 = vmatprep.subr.mxu0 0.0
    %7398 = vmatpush1.msra.mxu0 0.0
    %7399 = vmatprep.subr.mxu0 0.0
    %7400 = vmatpush1.msra.mxu0 0.0
    %7401 = vmatprep.subr.mxu0 0.0
    %7402 = vmatpush1.msra.mxu0 0.0
    %7403 = vmatprep.subr.mxu0 0.0
    %7404 = vmatpush1.msra.mxu0 0.0
    %7405 = vmatprep.subr.mxu0 0.0
    %7406 = vmatpush1.msra.mxu0 0.0
    %7407 = vmatprep.subr.mxu0 0.0
    %7408 = vmatpush1.msra.mxu0 0.0
    %7409 = vmatprep.subr.mxu0 0.0
    %7410 = vmatpush1.msra.mxu0 0.0
    %7411 = vmatprep.subr.mxu0 0.0
    %7412 = vmatpush1.msra.mxu0 0.0
    %7413 = vmatprep.subr.mxu0 0.0
    %7414 = vmatpush1.msra.mxu0 0.0
    %7415 = vmatprep.subr.mxu0 0.0
    %7416 = vmatpush1.msra.mxu0 0.0
    %7417 = vmatprep.subr.mxu0 0.0
    %7418 = vmatpush1.msra.mxu0 0.0
    %7419 = vmatprep.subr.mxu0 0.0
    %7420 = vmatpush1.msra.mxu0 0.0
    %7421 = vmatprep.subr.mxu0 0.0
    %7422 = vmatpush1.msra.mxu0 0.0
    %7423 = vmatprep.subr.mxu0 0.0
    %7424 = vmatpush1.msra.mxu0 0.0
    %7425 = vmatprep.subr.mxu0 0.0
    %7426 = vmatpush1.msra.mxu0 0.0
    %7427 = vmatprep.subr.mxu0 0.0
    %7428 = vmatpush1.msra.mxu0 0.0
    %7429 = vmatprep.subr.mxu0 0.0
    %7430 = vmatpush1.msra.mxu0 0.0
    %7431 = vmatprep.subr.mxu0 0.0
    %7432 = vmatpush1.msra.mxu0 0.0
    %7433 = vmatprep.subr.mxu0 0.0
    %7434 = vmatpush1.msra.mxu0 0.0
    %7435 = vmatprep.subr.mxu0 0.0
    %7436 = vmatpush1.msra.mxu0 0.0
    %7437 = vmatprep.subr.mxu0 0.0
    %7438 = vmatpush1.msra.mxu0 0.0
    %7439 = vmatprep.subr.mxu0 0.0
    %7440 = vmatpush1.msra.mxu0 0.0
    %7441 = vmatprep.subr.mxu0 0.0
    %7442 = vmatpush1.msra.mxu0 0.0
    %7443 = vmatprep.subr.mxu0 0.0
    %7444 = vmatpush1.msra.mxu0 0.0
    %7445 = vmatprep.subr.mxu0 0.0
    %7446 = vmatpush1.msra.mxu0 0.0
    %7447 = vmatprep.subr.mxu0 0.0
    %7448 = vmatpush1.msra.mxu0 0.0
    %7449 = vmatprep.mubr.f32.mxu0 0.0
    %v7450 = vand.u32 %v7103, 4294901760
    %7451 = vmatmul.mubr.f32.gmra.mrb[0].mxu0 %v7450
    %v7452 = vpop.f32.mrb[0].mxu0
    %v7453 = vadd.f32 %v7227, %v7452
    %v7454 = vpop.f32.mrb[0].mxu0
    %7455 = vmatprep.mubr.f32.mxu0 0.0
    %v7456 = vand.u32 %v7106, 4294901760
    %7457 = vmatmul.mubr.f32.gmra.mrb[0].mxu0 %v7456
    %v7458 = vpop.f32.mrb[0].mxu0
    %v7459 = vadd.f32 %v7237, %v7458
    %v7460 = vpop.f32.mrb[0].mxu0
    %7461 = vmatprep.mubr.f32.mxu0 0.0
    %v7462 = vand.u32 %v7109, 4294901760
    %7463 = vmatmul.mubr.f32.gmra.mrb[0].mxu0 %v7462
    %v7464 = vpop.f32.mrb[0].mxu0
    %v7465 = vadd.f32 %v7247, %v7464
    %v7466 = vpop.f32.mrb[0].mxu0
    %7467 = vmatprep.mubr.f32.mxu0 0.0
    %v7468 = vand.u32 %v7112, 4294901760
    %7469 = vmatmul.mubr.f32.gmra.mrb[0].mxu0 %v7468
    %v7470 = vpop.f32.mrb[0].mxu0
    %v7471 = vadd.f32 %v7257, %v7470
    %v7472 = vpop.f32.mrb[0].mxu0
    %7473 = vmatprep.mubr.f32.mxu0 0.0
    %v7474 = vand.u32 %v7115, 4294901760
    %7475 = vmatmul.mubr.f32.gmra.mrb[0].mxu0 %v7474
    %v7476 = vpop.f32.mrb[0].mxu0
    %v7477 = vadd.f32 %v7267, %v7476
    %v7478 = vpop.f32.mrb[0].mxu0
    %7479 = vmatprep.mubr.f32.mxu0 0.0
    %v7480 = vand.u32 %v7118, 4294901760
    %7481 = vmatmul.mubr.f32.gmra.mrb[0].mxu0 %v7480
    %v7482 = vpop.f32.mrb[0].mxu0
    %v7483 = vadd.f32 %v7277, %v7482
    %v7484 = vpop.f32.mrb[0].mxu0
    %7485 = vmatprep.mubr.f32.mxu0 0.0
    %v7486 = vand.u32 %v7121, 4294901760
    %7487 = vmatmul.mubr.f32.gmra.mrb[0].mxu0 %v7486
    %v7488 = vpop.f32.mrb[0].mxu0
    %v7489 = vadd.f32 %v7287, %v7488
    %v7490 = vpop.f32.mrb[0].mxu0
    %7491 = vmatprep.mubr.f32.mxu0 0.0
    %v7492 = vand.u32 %v7124, 4294901760
    %7493 = vmatmul.mubr.f32.gmra.mrb[0].mxu0 %v7492
    %v7494 = vpop.f32.mrb[0].mxu0
    %v7495 = vadd.f32 %v7297, %v7494
    %v7496 = vpop.f32.mrb[0].mxu0
    %7497 = vmatprep.mubr.f32.mxu0 0.0
    %v7498 = vand.u32 %v7127, 4294901760
    %7499 = vmatmul.mubr.f32.gmra.mrb[0].mxu0 %v7498
    %v7500 = vpop.f32.mrb[0].mxu0
    %v7501 = vadd.f32 %v7307, %v7500
    %v7502 = vpop.f32.mrb[0].mxu0
    %7503 = vmatprep.mubr.f32.mxu0 0.0
    %v7504 = vand.u32 %v7130, 4294901760
    %7505 = vmatmul.mubr.f32.gmra.mrb[0].mxu0 %v7504
    %v7506 = vpop.f32.mrb[0].mxu0
    %v7507 = vadd.f32 %v7317, %v7506
    %v7508 = vpop.f32.mrb[0].mxu0
    %7509 = vmatprep.mubr.f32.mxu0 0.0
    %v7510 = vand.u32 %v7133, 4294901760
    %7511 = vmatmul.mubr.f32.gmra.mrb[0].mxu0 %v7510
    %v7512 = vpop.f32.mrb[0].mxu0
    %v7513 = vadd.f32 %v7327, %v7512
    %v7514 = vpop.f32.mrb[0].mxu0
    %7515 = vmatprep.mubr.f32.mxu0 0.0
    %v7516 = vand.u32 %v7136, 4294901760
    %7517 = vmatmul.mubr.f32.gmra.mrb[0].mxu0 %v7516
    %v7518 = vpop.f32.mrb[0].mxu0
    %v7519 = vadd.f32 %v7337, %v7518
    %v7520 = vpop.f32.mrb[0].mxu0
    %7521 = vmatprep.mubr.f32.mxu0 0.0
    %v7522 = vand.u32 %v7139, 4294901760
    %7523 = vmatmul.mubr.f32.gmra.mrb[0].mxu0 %v7522
    %v7524 = vpop.f32.mrb[0].mxu0
    %v7525 = vadd.f32 %v7347, %v7524
    %v7526 = vpop.f32.mrb[0].mxu0
    %7527 = vmatprep.mubr.f32.mxu0 0.0
    %v7528 = vand.u32 %v7142, 4294901760
    %7529 = vmatmul.mubr.f32.gmra.mrb[0].mxu0 %v7528
    %v7530 = vpop.f32.mrb[0].mxu0
    %v7531 = vadd.f32 %v7357, %v7530
    %v7532 = vpop.f32.mrb[0].mxu0
    %7533 = vmatprep.mubr.f32.mxu0 0.0
    %v7534 = vand.u32 %v7145, 4294901760
    %7535 = vmatmul.mubr.f32.gmra.mrb[0].mxu0 %v7534
    %v7536 = vpop.f32.mrb[0].mxu0
    %v7537 = vadd.f32 %v7367, %v7536
    %v7538 = vpop.f32.mrb[0].mxu0
    %7539 = vmatprep.mubr.f32.mxu0 0.0
    %v7540 = vand.u32 %v7148, 4294901760
    %7541 = vmatmul.mubr.f32.gmra.mrb[0].mxu0 %v7540
    %v7542 = vpop.f32.mrb[0].mxu0
    %v7543 = vadd.f32 %v7377, %v7542
    %v7544 = vpop.f32.mrb[0].mxu0
    %7545 = vdwg.mxu0
    %7546 = vmatprep.subr.mxu0 0.0
    %v7547 = vand.u32 %v7152, 4294901760
    %v7548 = vsub.f32 %v7152, %v7547
    %7549 = vmatpush1.msra.mxu0 %v7548
    %7550 = vmatprep.subr.mxu0 0.0
    %7551 = vmatpush1.msra.mxu0 0.0
    %7552 = vmatprep.subr.mxu0 0.0
    %7553 = vmatpush1.msra.mxu0 0.0
    %7554 = vmatprep.subr.mxu0 0.0
    %7555 = vmatpush1.msra.mxu0 0.0
    %7556 = vmatprep.subr.mxu0 0.0
    %7557 = vmatpush1.msra.mxu0 0.0
    %7558 = vmatprep.subr.mxu0 0.0
    %7559 = vmatpush1.msra.mxu0 0.0
    %7560 = vmatprep.subr.mxu0 0.0
    %7561 = vmatpush1.msra.mxu0 0.0
    %7562 = vmatprep.subr.mxu0 0.0
    %7563 = vmatpush1.msra.mxu0 0.0
    %7564 = vmatprep.subr.mxu0 0.0
    %7565 = vmatpush1.msra.mxu0 0.0
    %7566 = vmatprep.subr.mxu0 0.0
    %7567 = vmatpush1.msra.mxu0 0.0
    %7568 = vmatprep.subr.mxu0 0.0
    %7569 = vmatpush1.msra.mxu0 0.0
    %7570 = vmatprep.subr.mxu0 0.0
    %7571 = vmatpush1.msra.mxu0 0.0
    %7572 = vmatprep.subr.mxu0 0.0
    %7573 = vmatpush1.msra.mxu0 0.0
    %7574 = vmatprep.subr.mxu0 0.0
    %7575 = vmatpush1.msra.mxu0 0.0
    %7576 = vmatprep.subr.mxu0 0.0
    %7577 = vmatpush1.msra.mxu0 0.0
    %7578 = vmatprep.subr.mxu0 0.0
    %7579 = vmatpush1.msra.mxu0 0.0
    %7580 = vmatprep.subr.mxu0 0.0
    %7581 = vmatpush1.msra.mxu0 0.0
    %7582 = vmatprep.subr.mxu0 0.0
    %7583 = vmatpush1.msra.mxu0 0.0
    %7584 = vmatprep.subr.mxu0 0.0
    %7585 = vmatpush1.msra.mxu0 0.0
    %7586 = vmatprep.subr.mxu0 0.0
    %7587 = vmatpush1.msra.mxu0 0.0
    %7588 = vmatprep.subr.mxu0 0.0
    %7589 = vmatpush1.msra.mxu0 0.0
    %7590 = vmatprep.subr.mxu0 0.0
    %7591 = vmatpush1.msra.mxu0 0.0
    %7592 = vmatprep.subr.mxu0 0.0
    %7593 = vmatpush1.msra.mxu0 0.0
    %7594 = vmatprep.subr.mxu0 0.0
    %7595 = vmatpush1.msra.mxu0 0.0
    %7596 = vmatprep.subr.mxu0 0.0
    %7597 = vmatpush1.msra.mxu0 0.0
    %7598 = vmatprep.subr.mxu0 0.0
    %7599 = vmatpush1.msra.mxu0 0.0
    %7600 = vmatprep.subr.mxu0 0.0
    %7601 = vmatpush1.msra.mxu0 0.0
    %7602 = vmatprep.subr.mxu0 0.0
    %7603 = vmatpush1.msra.mxu0 0.0
    %7604 = vmatprep.subr.mxu0 0.0
    %7605 = vmatpush1.msra.mxu0 0.0
    %7606 = vmatprep.subr.mxu0 0.0
    %7607 = vmatpush1.msra.mxu0 0.0
    %7608 = vmatprep.subr.mxu0 0.0
    %7609 = vmatpush1.msra.mxu0 0.0
    %7610 = vmatprep.subr.mxu0 0.0
    %7611 = vmatpush1.msra.mxu0 0.0
    %7612 = vmatprep.mubr.f32.mxu0 0.0
    %v7613 = vand.u32 %v7103, 4294901760
    %v7614 = vsub.f32 %v7103, %v7613
    %7615 = vmatmul.mubr.f32.gmra.mrb[0].mxu0 %v7614
    %v7616 = vpop.f32.mrb[0].mxu0
    %v7617 = vadd.f32 %v7453, %v7616
    %v7618 = vpop.f32.mrb[0].mxu0
    %7619 = vmatprep.mubr.f32.mxu0 0.0
    %v7620 = vand.u32 %v7106, 4294901760
    %v7621 = vsub.f32 %v7106, %v7620
    %7622 = vmatmul.mubr.f32.gmra.mrb[0].mxu0 %v7621
    %v7623 = vpop.f32.mrb[0].mxu0
    %v7624 = vadd.f32 %v7459, %v7623
    %v7625 = vpop.f32.mrb[0].mxu0
    %7626 = vmatprep.mubr.f32.mxu0 0.0
    %v7627 = vand.u32 %v7109, 4294901760
    %v7628 = vsub.f32 %v7109, %v7627
    %7629 = vmatmul.mubr.f32.gmra.mrb[0].mxu0 %v7628
    %v7630 = vpop.f32.mrb[0].mxu0
    %v7631 = vadd.f32 %v7465, %v7630
    %v7632 = vpop.f32.mrb[0].mxu0
    %7633 = vmatprep.mubr.f32.mxu0 0.0
    %v7634 = vand.u32 %v7112, 4294901760
    %v7635 = vsub.f32 %v7112, %v7634
    %7636 = vmatmul.mubr.f32.gmra.mrb[0].mxu0 %v7635
    %v7637 = vpop.f32.mrb[0].mxu0
    %v7638 = vadd.f32 %v7471, %v7637
    %v7639 = vpop.f32.mrb[0].mxu0
    %7640 = vmatprep.mubr.f32.mxu0 0.0
    %v7641 = vand.u32 %v7115, 4294901760
    %v7642 = vsub.f32 %v7115, %v7641
    %7643 = vmatmul.mubr.f32.gmra.mrb[0].mxu0 %v7642
    %v7644 = vpop.f32.mrb[0].mxu0
    %v7645 = vadd.f32 %v7477, %v7644
    %v7646 = vpop.f32.mrb[0].mxu0
    %7647 = vmatprep.mubr.f32.mxu0 0.0
    %v7648 = vand.u32 %v7118, 4294901760
    %v7649 = vsub.f32 %v7118, %v7648
    %7650 = vmatmul.mubr.f32.gmra.mrb[0].mxu0 %v7649
    %v7651 = vpop.f32.mrb[0].mxu0
    %v7652 = vadd.f32 %v7483, %v7651
    %v7653 = vpop.f32.mrb[0].mxu0
    %7654 = vmatprep.mubr.f32.mxu0 0.0
    %v7655 = vand.u32 %v7121, 4294901760
    %v7656 = vsub.f32 %v7121, %v7655
    %7657 = vmatmul.mubr.f32.gmra.mrb[0].mxu0 %v7656
    %v7658 = vpop.f32.mrb[0].mxu0
    %v7659 = vadd.f32 %v7489, %v7658
    %v7660 = vpop.f32.mrb[0].mxu0
    %7661 = vmatprep.mubr.f32.mxu0 0.0
    %v7662 = vand.u32 %v7124, 4294901760
    %v7663 = vsub.f32 %v7124, %v7662
    %7664 = vmatmul.mubr.f32.gmra.mrb[0].mxu0 %v7663
    %v7665 = vpop.f32.mrb[0].mxu0
    %v7666 = vadd.f32 %v7495, %v7665
    %v7667 = vpop.f32.mrb[0].mxu0
    %7668 = vmatprep.mubr.f32.mxu0 0.0
    %v7669 = vand.u32 %v7127, 4294901760
    %v7670 = vsub.f32 %v7127, %v7669
    %7671 = vmatmul.mubr.f32.gmra.mrb[0].mxu0 %v7670
    %v7672 = vpop.f32.mrb[0].mxu0
    %v7673 = vadd.f32 %v7501, %v7672
    %v7674 = vpop.f32.mrb[0].mxu0
    %7675 = vmatprep.mubr.f32.mxu0 0.0
    %v7676 = vand.u32 %v7130, 4294901760
    %v7677 = vsub.f32 %v7130, %v7676
    %7678 = vmatmul.mubr.f32.gmra.mrb[0].mxu0 %v7677
    %v7679 = vpop.f32.mrb[0].mxu0
    %v7680 = vadd.f32 %v7507, %v7679
    %v7681 = vpop.f32.mrb[0].mxu0
    %7682 = vmatprep.mubr.f32.mxu0 0.0
    %v7683 = vand.u32 %v7133, 4294901760
    %v7684 = vsub.f32 %v7133, %v7683
    %7685 = vmatmul.mubr.f32.gmra.mrb[0].mxu0 %v7684
    %v7686 = vpop.f32.mrb[0].mxu0
    %v7687 = vadd.f32 %v7513, %v7686
    %v7688 = vpop.f32.mrb[0].mxu0
    %7689 = vmatprep.mubr.f32.mxu0 0.0
    %v7690 = vand.u32 %v7136, 4294901760
    %v7691 = vsub.f32 %v7136, %v7690
    %7692 = vmatmul.mubr.f32.gmra.mrb[0].mxu0 %v7691
    %v7693 = vpop.f32.mrb[0].mxu0
    %v7694 = vadd.f32 %v7519, %v7693
    %v7695 = vpop.f32.mrb[0].mxu0
    %7696 = vmatprep.mubr.f32.mxu0 0.0
    %v7697 = vand.u32 %v7139, 4294901760
    %v7698 = vsub.f32 %v7139, %v7697
    %7699 = vmatmul.mubr.f32.gmra.mrb[0].mxu0 %v7698
    %v7700 = vpop.f32.mrb[0].mxu0
    %v7701 = vadd.f32 %v7525, %v7700
    %v7702 = vpop.f32.mrb[0].mxu0
    %7703 = vmatprep.mubr.f32.mxu0 0.0
    %v7704 = vand.u32 %v7142, 4294901760
    %v7705 = vsub.f32 %v7142, %v7704
    %7706 = vmatmul.mubr.f32.gmra.mrb[0].mxu0 %v7705
    %v7707 = vpop.f32.mrb[0].mxu0
    %v7708 = vadd.f32 %v7531, %v7707
    %v7709 = vpop.f32.mrb[0].mxu0
    %7710 = vmatprep.mubr.f32.mxu0 0.0
    %v7711 = vand.u32 %v7145, 4294901760
    %v7712 = vsub.f32 %v7145, %v7711
    %7713 = vmatmul.mubr.f32.gmra.mrb[0].mxu0 %v7712
    %v7714 = vpop.f32.mrb[0].mxu0
    %v7715 = vadd.f32 %v7537, %v7714
    %v7716 = vpop.f32.mrb[0].mxu0
    %7717 = vmatprep.mubr.f32.mxu0 0.0
    %v7718 = vand.u32 %v7148, 4294901760
    %v7719 = vsub.f32 %v7148, %v7718
    %7720 = vmatmul.mubr.f32.gmra.mrb[0].mxu0 %v7719
    %v7721 = vpop.f32.mrb[0].mxu0
    %v7722 = vadd.f32 %v7543, %v7721
    %v7723 = vpop.f32.mrb[0].mxu0
    %7724 = vdwg.mxu0
    %7725 = vmatprep.subr.mxu0 0.0
    %v7726 = vand.u32 %v7152, 4294901760
    %7727 = vmatpush1.msra.mxu0 %v7726
    %7728 = vmatprep.subr.mxu0 0.0
    %7729 = vmatpush1.msra.mxu0 0.0
    %7730 = vmatprep.subr.mxu0 0.0
    %7731 = vmatpush1.msra.mxu0 0.0
    %7732 = vmatprep.subr.mxu0 0.0
    %7733 = vmatpush1.msra.mxu0 0.0
    %7734 = vmatprep.subr.mxu0 0.0
    %7735 = vmatpush1.msra.mxu0 0.0
    %7736 = vmatprep.subr.mxu0 0.0
    %7737 = vmatpush1.msra.mxu0 0.0
    %7738 = vmatprep.subr.mxu0 0.0
    %7739 = vmatpush1.msra.mxu0 0.0
    %7740 = vmatprep.subr.mxu0 0.0
    %7741 = vmatpush1.msra.mxu0 0.0
    %7742 = vmatprep.subr.mxu0 0.0
    %7743 = vmatpush1.msra.mxu0 0.0
    %7744 = vmatprep.subr.mxu0 0.0
    %7745 = vmatpush1.msra.mxu0 0.0
    %7746 = vmatprep.subr.mxu0 0.0
    %7747 = vmatpush1.msra.mxu0 0.0
    %7748 = vmatprep.subr.mxu0 0.0
    %7749 = vmatpush1.msra.mxu0 0.0
    %7750 = vmatprep.subr.mxu0 0.0
    %7751 = vmatpush1.msra.mxu0 0.0
    %7752 = vmatprep.subr.mxu0 0.0
    %7753 = vmatpush1.msra.mxu0 0.0
    %7754 = vmatprep.subr.mxu0 0.0
    %7755 = vmatpush1.msra.mxu0 0.0
    %7756 = vmatprep.subr.mxu0 0.0
    %7757 = vmatpush1.msra.mxu0 0.0
    %7758 = vmatprep.subr.mxu0 0.0
    %7759 = vmatpush1.msra.mxu0 0.0
    %7760 = vmatprep.subr.mxu0 0.0
    %7761 = vmatpush1.msra.mxu0 0.0
    %7762 = vmatprep.subr.mxu0 0.0
    %7763 = vmatpush1.msra.mxu0 0.0
    %7764 = vmatprep.subr.mxu0 0.0
    %7765 = vmatpush1.msra.mxu0 0.0
    %7766 = vmatprep.subr.mxu0 0.0
    %7767 = vmatpush1.msra.mxu0 0.0
    %7768 = vmatprep.subr.mxu0 0.0
    %7769 = vmatpush1.msra.mxu0 0.0
    %7770 = vmatprep.subr.mxu0 0.0
    %7771 = vmatpush1.msra.mxu0 0.0
    %7772 = vmatprep.subr.mxu0 0.0
    %7773 = vmatpush1.msra.mxu0 0.0
    %7774 = vmatprep.subr.mxu0 0.0
    %7775 = vmatpush1.msra.mxu0 0.0
    %7776 = vmatprep.subr.mxu0 0.0
    %7777 = vmatpush1.msra.mxu0 0.0
    %7778 = vmatprep.subr.mxu0 0.0
    %7779 = vmatpush1.msra.mxu0 0.0
    %7780 = vmatprep.subr.mxu0 0.0
    %7781 = vmatpush1.msra.mxu0 0.0
    %7782 = vmatprep.subr.mxu0 0.0
    %7783 = vmatpush1.msra.mxu0 0.0
    %7784 = vmatprep.subr.mxu0 0.0
    %7785 = vmatpush1.msra.mxu0 0.0
    %7786 = vmatprep.subr.mxu0 0.0
    %7787 = vmatpush1.msra.mxu0 0.0
    %7788 = vmatprep.subr.mxu0 0.0
    %7789 = vmatpush1.msra.mxu0 0.0
    %7790 = vmatprep.mubr.f32.mxu0 0.0
    %v7791 = vand.u32 %v7103, 4294901760
    %v7792 = vsub.f32 %v7103, %v7791
    %v7793 = vand.u32 %v7792, 4294901760
    %7794 = vmatmul.mubr.f32.gmra.mrb[0].mxu0 %v7793
    %v7795 = vpop.f32.mrb[0].mxu0
    %v7796 = vadd.f32 %v7617, %v7795
    %v7797 = vpop.f32.mrb[0].mxu0
    %7798 = vmatprep.mubr.f32.mxu0 0.0
    %v7799 = vand.u32 %v7106, 4294901760
    %v7800 = vsub.f32 %v7106, %v7799
    %v7801 = vand.u32 %v7800, 4294901760
    %7802 = vmatmul.mubr.f32.gmra.mrb[0].mxu0 %v7801
    %v7803 = vpop.f32.mrb[0].mxu0
    %v7804 = vadd.f32 %v7624, %v7803
    %v7805 = vpop.f32.mrb[0].mxu0
    %7806 = vmatprep.mubr.f32.mxu0 0.0
    %v7807 = vand.u32 %v7109, 4294901760
    %v7808 = vsub.f32 %v7109, %v7807
    %v7809 = vand.u32 %v7808, 4294901760
    %7810 = vmatmul.mubr.f32.gmra.mrb[0].mxu0 %v7809
    %v7811 = vpop.f32.mrb[0].mxu0
    %v7812 = vadd.f32 %v7631, %v7811
    %v7813 = vpop.f32.mrb[0].mxu0
    %7814 = vmatprep.mubr.f32.mxu0 0.0
    %v7815 = vand.u32 %v7112, 4294901760
    %v7816 = vsub.f32 %v7112, %v7815
    %v7817 = vand.u32 %v7816, 4294901760
    %7818 = vmatmul.mubr.f32.gmra.mrb[0].mxu0 %v7817
    %v7819 = vpop.f32.mrb[0].mxu0
    %v7820 = vadd.f32 %v7638, %v7819
    %v7821 = vpop.f32.mrb[0].mxu0
    %7822 = vmatprep.mubr.f32.mxu0 0.0
    %v7823 = vand.u32 %v7115, 4294901760
    %v7824 = vsub.f32 %v7115, %v7823
    %v7825 = vand.u32 %v7824, 4294901760
    %7826 = vmatmul.mubr.f32.gmra.mrb[0].mxu0 %v7825
    %v7827 = vpop.f32.mrb[0].mxu0
    %v7828 = vadd.f32 %v7645, %v7827
    %v7829 = vpop.f32.mrb[0].mxu0
    %7830 = vmatprep.mubr.f32.mxu0 0.0
    %v7831 = vand.u32 %v7118, 4294901760
    %v7832 = vsub.f32 %v7118, %v7831
    %v7833 = vand.u32 %v7832, 4294901760
    %7834 = vmatmul.mubr.f32.gmra.mrb[0].mxu0 %v7833
    %v7835 = vpop.f32.mrb[0].mxu0
    %v7836 = vadd.f32 %v7652, %v7835
    %v7837 = vpop.f32.mrb[0].mxu0
    %7838 = vmatprep.mubr.f32.mxu0 0.0
    %v7839 = vand.u32 %v7121, 4294901760
    %v7840 = vsub.f32 %v7121, %v7839
    %v7841 = vand.u32 %v7840, 4294901760
    %7842 = vmatmul.mubr.f32.gmra.mrb[0].mxu0 %v7841
    %v7843 = vpop.f32.mrb[0].mxu0
    %v7844 = vadd.f32 %v7659, %v7843
    %v7845 = vpop.f32.mrb[0].mxu0
    %7846 = vmatprep.mubr.f32.mxu0 0.0
    %v7847 = vand.u32 %v7124, 4294901760
    %v7848 = vsub.f32 %v7124, %v7847
    %v7849 = vand.u32 %v7848, 4294901760
    %7850 = vmatmul.mubr.f32.gmra.mrb[0].mxu0 %v7849
    %v7851 = vpop.f32.mrb[0].mxu0
    %v7852 = vadd.f32 %v7666, %v7851
    %v7853 = vpop.f32.mrb[0].mxu0
    %7854 = vmatprep.mubr.f32.mxu0 0.0
    %v7855 = vand.u32 %v7127, 4294901760
    %v7856 = vsub.f32 %v7127, %v7855
    %v7857 = vand.u32 %v7856, 4294901760
    %7858 = vmatmul.mubr.f32.gmra.mrb[0].mxu0 %v7857
    %v7859 = vpop.f32.mrb[0].mxu0
    %v7860 = vadd.f32 %v7673, %v7859
    %v7861 = vpop.f32.mrb[0].mxu0
    %7862 = vmatprep.mubr.f32.mxu0 0.0
    %v7863 = vand.u32 %v7130, 4294901760
    %v7864 = vsub.f32 %v7130, %v7863
    %v7865 = vand.u32 %v7864, 4294901760
    %7866 = vmatmul.mubr.f32.gmra.mrb[0].mxu0 %v7865
    %v7867 = vpop.f32.mrb[0].mxu0
    %v7868 = vadd.f32 %v7680, %v7867
    %v7869 = vpop.f32.mrb[0].mxu0
    %7870 = vmatprep.mubr.f32.mxu0 0.0
    %v7871 = vand.u32 %v7133, 4294901760
    %v7872 = vsub.f32 %v7133, %v7871
    %v7873 = vand.u32 %v7872, 4294901760
    %7874 = vmatmul.mubr.f32.gmra.mrb[0].mxu0 %v7873
    %v7875 = vpop.f32.mrb[0].mxu0
    %v7876 = vadd.f32 %v7687, %v7875
    %v7877 = vpop.f32.mrb[0].mxu0
    %7878 = vmatprep.mubr.f32.mxu0 0.0
    %v7879 = vand.u32 %v7136, 4294901760
    %v7880 = vsub.f32 %v7136, %v7879
    %v7881 = vand.u32 %v7880, 4294901760
    %7882 = vmatmul.mubr.f32.gmra.mrb[0].mxu0 %v7881
    %v7883 = vpop.f32.mrb[0].mxu0
    %v7884 = vadd.f32 %v7694, %v7883
    %v7885 = vpop.f32.mrb[0].mxu0
    %7886 = vmatprep.mubr.f32.mxu0 0.0
    %v7887 = vand.u32 %v7139, 4294901760
    %v7888 = vsub.f32 %v7139, %v7887
    %v7889 = vand.u32 %v7888, 4294901760
    %7890 = vmatmul.mubr.f32.gmra.mrb[0].mxu0 %v7889
    %v7891 = vpop.f32.mrb[0].mxu0
    %v7892 = vadd.f32 %v7701, %v7891
    %v7893 = vpop.f32.mrb[0].mxu0
    %7894 = vmatprep.mubr.f32.mxu0 0.0
    %v7895 = vand.u32 %v7142, 4294901760
    %v7896 = vsub.f32 %v7142, %v7895
    %v7897 = vand.u32 %v7896, 4294901760
    %7898 = vmatmul.mubr.f32.gmra.mrb[0].mxu0 %v7897
    %v7899 = vpop.f32.mrb[0].mxu0
    %v7900 = vadd.f32 %v7708, %v7899
    %v7901 = vpop.f32.mrb[0].mxu0
    %7902 = vmatprep.mubr.f32.mxu0 0.0
    %v7903 = vand.u32 %v7145, 4294901760
    %v7904 = vsub.f32 %v7145, %v7903
    %v7905 = vand.u32 %v7904, 4294901760
    %7906 = vmatmul.mubr.f32.gmra.mrb[0].mxu0 %v7905
    %v7907 = vpop.f32.mrb[0].mxu0
    %v7908 = vadd.f32 %v7715, %v7907
    %v7909 = vpop.f32.mrb[0].mxu0
    %7910 = vmatprep.mubr.f32.mxu0 0.0
    %v7911 = vand.u32 %v7148, 4294901760
    %v7912 = vsub.f32 %v7148, %v7911
    %v7913 = vand.u32 %v7912, 4294901760
    %7914 = vmatmul.mubr.f32.gmra.mrb[0].mxu0 %v7913
    %v7915 = vpop.f32.mrb[0].mxu0
    %v7916 = vadd.f32 %v7722, %v7915
    %v7917 = vpop.f32.mrb[0].mxu0
    %7918 = vdwg.mxu0
    %7919 = vmatprep.subr.mxu0 0.0
    %v7920 = vand.u32 %v7152, 4294901760
    %v7921 = vsub.f32 %v7152, %v7920
    %v7922 = vand.u32 %v7921, 4294901760
    %7923 = vmatpush1.msra.mxu0 %v7922
    %7924 = vmatprep.subr.mxu0 0.0
    %7925 = vmatpush1.msra.mxu0 0.0
    %7926 = vmatprep.subr.mxu0 0.0
    %7927 = vmatpush1.msra.mxu0 0.0
    %7928 = vmatprep.subr.mxu0 0.0
    %7929 = vmatpush1.msra.mxu0 0.0
    %7930 = vmatprep.subr.mxu0 0.0
    %7931 = vmatpush1.msra.mxu0 0.0
    %7932 = vmatprep.subr.mxu0 0.0
    %7933 = vmatpush1.msra.mxu0 0.0
    %7934 = vmatprep.subr.mxu0 0.0
    %7935 = vmatpush1.msra.mxu0 0.0
    %7936 = vmatprep.subr.mxu0 0.0
    %7937 = vmatpush1.msra.mxu0 0.0
    %7938 = vmatprep.subr.mxu0 0.0
    %7939 = vmatpush1.msra.mxu0 0.0
    %7940 = vmatprep.subr.mxu0 0.0
    %7941 = vmatpush1.msra.mxu0 0.0
    %7942 = vmatprep.subr.mxu0 0.0
    %7943 = vmatpush1.msra.mxu0 0.0
    %7944 = vmatprep.subr.mxu0 0.0
    %7945 = vmatpush1.msra.mxu0 0.0
    %7946 = vmatprep.subr.mxu0 0.0
    %7947 = vmatpush1.msra.mxu0 0.0
    %7948 = vmatprep.subr.mxu0 0.0
    %7949 = vmatpush1.msra.mxu0 0.0
    %7950 = vmatprep.subr.mxu0 0.0
    %7951 = vmatpush1.msra.mxu0 0.0
    %7952 = vmatprep.subr.mxu0 0.0
    %7953 = vmatpush1.msra.mxu0 0.0
    %7954 = vmatprep.subr.mxu0 0.0
    %7955 = vmatpush1.msra.mxu0 0.0
    %7956 = vmatprep.subr.mxu0 0.0
    %7957 = vmatpush1.msra.mxu0 0.0
    %7958 = vmatprep.subr.mxu0 0.0
    %7959 = vmatpush1.msra.mxu0 0.0
    %7960 = vmatprep.subr.mxu0 0.0
    %7961 = vmatpush1.msra.mxu0 0.0
    %7962 = vmatprep.subr.mxu0 0.0
    %7963 = vmatpush1.msra.mxu0 0.0
    %7964 = vmatprep.subr.mxu0 0.0
    %7965 = vmatpush1.msra.mxu0 0.0
    %7966 = vmatprep.subr.mxu0 0.0
    %7967 = vmatpush1.msra.mxu0 0.0
    %7968 = vmatprep.subr.mxu0 0.0
    %7969 = vmatpush1.msra.mxu0 0.0
    %7970 = vmatprep.subr.mxu0 0.0
    %7971 = vmatpush1.msra.mxu0 0.0
    %7972 = vmatprep.subr.mxu0 0.0
    %7973 = vmatpush1.msra.mxu0 0.0
    %7974 = vmatprep.subr.mxu0 0.0
    %7975 = vmatpush1.msra.mxu0 0.0
    %7976 = vmatprep.subr.mxu0 0.0
    %7977 = vmatpush1.msra.mxu0 0.0
    %7978 = vmatprep.subr.mxu0 0.0
    %7979 = vmatpush1.msra.mxu0 0.0
    %7980 = vmatprep.subr.mxu0 0.0
    %7981 = vmatpush1.msra.mxu0 0.0
    %7982 = vmatprep.subr.mxu0 0.0
    %7983 = vmatpush1.msra.mxu0 0.0
    %7984 = vmatprep.subr.mxu0 0.0
    %7985 = vmatpush1.msra.mxu0 0.0
    %7986 = vmatprep.mubr.f32.mxu0 0.0
    %v7987 = vand.u32 %v7103, 4294901760
    %7988 = vmatmul.mubr.f32.gmra.mrb[0].mxu0 %v7987
    %v7989 = vpop.f32.mrb[0].mxu0
    %v7990 = vadd.f32 %v7796, %v7989
    %v7991 = vpop.f32.mrb[0].mxu0
    %7992 = vmatprep.mubr.f32.mxu0 0.0
    %v7993 = vand.u32 %v7106, 4294901760
    %7994 = vmatmul.mubr.f32.gmra.mrb[0].mxu0 %v7993
    %v7995 = vpop.f32.mrb[0].mxu0
    %v7996 = vadd.f32 %v7804, %v7995
    %v7997 = vpop.f32.mrb[0].mxu0
    %7998 = vmatprep.mubr.f32.mxu0 0.0
    %v7999 = vand.u32 %v7109, 4294901760
    %8000 = vmatmul.mubr.f32.gmra.mrb[0].mxu0 %v7999
    %v8001 = vpop.f32.mrb[0].mxu0
    %v8002 = vadd.f32 %v7812, %v8001
    %v8003 = vpop.f32.mrb[0].mxu0
    %8004 = vmatprep.mubr.f32.mxu0 0.0
    %v8005 = vand.u32 %v7112, 4294901760
    %8006 = vmatmul.mubr.f32.gmra.mrb[0].mxu0 %v8005
    %v8007 = vpop.f32.mrb[0].mxu0
    %v8008 = vadd.f32 %v7820, %v8007
    %v8009 = vpop.f32.mrb[0].mxu0
    %8010 = vmatprep.mubr.f32.mxu0 0.0
    %v8011 = vand.u32 %v7115, 4294901760
    %8012 = vmatmul.mubr.f32.gmra.mrb[0].mxu0 %v8011
    %v8013 = vpop.f32.mrb[0].mxu0
    %v8014 = vadd.f32 %v7828, %v8013
    %v8015 = vpop.f32.mrb[0].mxu0
    %8016 = vmatprep.mubr.f32.mxu0 0.0
    %v8017 = vand.u32 %v7118, 4294901760
    %8018 = vmatmul.mubr.f32.gmra.mrb[0].mxu0 %v8017
    %v8019 = vpop.f32.mrb[0].mxu0
    %v8020 = vadd.f32 %v7836, %v8019
    %v8021 = vpop.f32.mrb[0].mxu0
    %8022 = vmatprep.mubr.f32.mxu0 0.0
    %v8023 = vand.u32 %v7121, 4294901760
    %8024 = vmatmul.mubr.f32.gmra.mrb[0].mxu0 %v8023
    %v8025 = vpop.f32.mrb[0].mxu0
    %v8026 = vadd.f32 %v7844, %v8025
    %v8027 = vpop.f32.mrb[0].mxu0
    %8028 = vmatprep.mubr.f32.mxu0 0.0
    %v8029 = vand.u32 %v7124, 4294901760
    %8030 = vmatmul.mubr.f32.gmra.mrb[0].mxu0 %v8029
    %v8031 = vpop.f32.mrb[0].mxu0
    %v8032 = vadd.f32 %v7852, %v8031
    %v8033 = vpop.f32.mrb[0].mxu0
    %8034 = vmatprep.mubr.f32.mxu0 0.0
    %v8035 = vand.u32 %v7127, 4294901760
    %8036 = vmatmul.mubr.f32.gmra.mrb[0].mxu0 %v8035
    %v8037 = vpop.f32.mrb[0].mxu0
    %v8038 = vadd.f32 %v7860, %v8037
    %v8039 = vpop.f32.mrb[0].mxu0
    %8040 = vmatprep.mubr.f32.mxu0 0.0
    %v8041 = vand.u32 %v7130, 4294901760
    %8042 = vmatmul.mubr.f32.gmra.mrb[0].mxu0 %v8041
    %v8043 = vpop.f32.mrb[0].mxu0
    %v8044 = vadd.f32 %v7868, %v8043
    %v8045 = vpop.f32.mrb[0].mxu0
    %8046 = vmatprep.mubr.f32.mxu0 0.0
    %v8047 = vand.u32 %v7133, 4294901760
    %8048 = vmatmul.mubr.f32.gmra.mrb[0].mxu0 %v8047
    %v8049 = vpop.f32.mrb[0].mxu0
    %v8050 = vadd.f32 %v7876, %v8049
    %v8051 = vpop.f32.mrb[0].mxu0
    %8052 = vmatprep.mubr.f32.mxu0 0.0
    %v8053 = vand.u32 %v7136, 4294901760
    %8054 = vmatmul.mubr.f32.gmra.mrb[0].mxu0 %v8053
    %v8055 = vpop.f32.mrb[0].mxu0
    %v8056 = vadd.f32 %v7884, %v8055
    %v8057 = vpop.f32.mrb[0].mxu0
    %8058 = vmatprep.mubr.f32.mxu0 0.0
    %v8059 = vand.u32 %v7139, 4294901760
    %8060 = vmatmul.mubr.f32.gmra.mrb[0].mxu0 %v8059
    %v8061 = vpop.f32.mrb[0].mxu0
    %v8062 = vadd.f32 %v7892, %v8061
    %v8063 = vpop.f32.mrb[0].mxu0
    %8064 = vmatprep.mubr.f32.mxu0 0.0
    %v8065 = vand.u32 %v7142, 4294901760
    %8066 = vmatmul.mubr.f32.gmra.mrb[0].mxu0 %v8065
    %v8067 = vpop.f32.mrb[0].mxu0
    %v8068 = vadd.f32 %v7900, %v8067
    %v8069 = vpop.f32.mrb[0].mxu0
    %8070 = vmatprep.mubr.f32.mxu0 0.0
    %v8071 = vand.u32 %v7145, 4294901760
    %8072 = vmatmul.mubr.f32.gmra.mrb[0].mxu0 %v8071
    %v8073 = vpop.f32.mrb[0].mxu0
    %v8074 = vadd.f32 %v7908, %v8073
    %v8075 = vpop.f32.mrb[0].mxu0
    %8076 = vmatprep.mubr.f32.mxu0 0.0
    %v8077 = vand.u32 %v7148, 4294901760
    %8078 = vmatmul.mubr.f32.gmra.mrb[0].mxu0 %v8077
    %v8079 = vpop.f32.mrb[0].mxu0
    %v8080 = vadd.f32 %v7916, %v8079
    %v8081 = vpop.f32.mrb[0].mxu0
    %8082 = vdwg.mxu0
    %8083 = vmatprep.subr.mxu0 0.0
    %v8084 = vand.u32 %v7152, 4294901760
    %8085 = vmatpush1.msra.mxu0 %v8084
    %8086 = vmatprep.subr.mxu0 0.0
    %8087 = vmatpush1.msra.mxu0 0.0
    %8088 = vmatprep.subr.mxu0 0.0
    %8089 = vmatpush1.msra.mxu0 0.0
    %8090 = vmatprep.subr.mxu0 0.0
    %8091 = vmatpush1.msra.mxu0 0.0
    %8092 = vmatprep.subr.mxu0 0.0
    %8093 = vmatpush1.msra.mxu0 0.0
    %8094 = vmatprep.subr.mxu0 0.0
    %8095 = vmatpush1.msra.mxu0 0.0
    %8096 = vmatprep.subr.mxu0 0.0
    %8097 = vmatpush1.msra.mxu0 0.0
    %8098 = vmatprep.subr.mxu0 0.0
    %8099 = vmatpush1.msra.mxu0 0.0
    %8100 = vmatprep.subr.mxu0 0.0
    %8101 = vmatpush1.msra.mxu0 0.0
    %8102 = vmatprep.subr.mxu0 0.0
    %8103 = vmatpush1.msra.mxu0 0.0
    %8104 = vmatprep.subr.mxu0 0.0
    %8105 = vmatpush1.msra.mxu0 0.0
    %8106 = vmatprep.subr.mxu0 0.0
    %8107 = vmatpush1.msra.mxu0 0.0
    %8108 = vmatprep.subr.mxu0 0.0
    %8109 = vmatpush1.msra.mxu0 0.0
    %8110 = vmatprep.subr.mxu0 0.0
    %8111 = vmatpush1.msra.mxu0 0.0
    %8112 = vmatprep.subr.mxu0 0.0
    %8113 = vmatpush1.msra.mxu0 0.0
    %8114 = vmatprep.subr.mxu0 0.0
    %8115 = vmatpush1.msra.mxu0 0.0
    %8116 = vmatprep.subr.mxu0 0.0
    %8117 = vmatpush1.msra.mxu0 0.0
    %8118 = vmatprep.subr.mxu0 0.0
    %8119 = vmatpush1.msra.mxu0 0.0
    %8120 = vmatprep.subr.mxu0 0.0
    %8121 = vmatpush1.msra.mxu0 0.0
    %8122 = vmatprep.subr.mxu0 0.0
    %8123 = vmatpush1.msra.mxu0 0.0
    %8124 = vmatprep.subr.mxu0 0.0
    %8125 = vmatpush1.msra.mxu0 0.0
    %8126 = vmatprep.subr.mxu0 0.0
    %8127 = vmatpush1.msra.mxu0 0.0
    %8128 = vmatprep.subr.mxu0 0.0
    %8129 = vmatpush1.msra.mxu0 0.0
    %8130 = vmatprep.subr.mxu0 0.0
    %8131 = vmatpush1.msra.mxu0 0.0
    %8132 = vmatprep.subr.mxu0 0.0
    %8133 = vmatpush1.msra.mxu0 0.0
    %8134 = vmatprep.subr.mxu0 0.0
    %8135 = vmatpush1.msra.mxu0 0.0
    %8136 = vmatprep.subr.mxu0 0.0
    %8137 = vmatpush1.msra.mxu0 0.0
    %8138 = vmatprep.subr.mxu0 0.0
    %8139 = vmatpush1.msra.mxu0 0.0
    %8140 = vmatprep.subr.mxu0 0.0
    %8141 = vmatpush1.msra.mxu0 0.0
    %8142 = vmatprep.subr.mxu0 0.0
    %8143 = vmatpush1.msra.mxu0 0.0
    %8144 = vmatprep.subr.mxu0 0.0
    %8145 = vmatpush1.msra.mxu0 0.0
    %8146 = vmatprep.subr.mxu0 0.0
    %8147 = vmatpush1.msra.mxu0 0.0
    %8148 = vmatprep.mubr.f32.mxu0 0.0
    %v8149 = vand.u32 %v7103, 4294901760
    %8150 = vmatmul.mubr.f32.gmra.mrb[0].mxu0 %v8149
    %v8151 = vpop.f32.mrb[0].mxu0
    %v8152 = vadd.f32 %v7990, %v8151
    %v8153 = vpop.f32.mrb[0].mxu0
    %8154 = vmatprep.mubr.f32.mxu0 0.0
    %v8155 = vand.u32 %v7106, 4294901760
    %8156 = vmatmul.mubr.f32.gmra.mrb[0].mxu0 %v8155
    %v8157 = vpop.f32.mrb[0].mxu0
    %v8158 = vadd.f32 %v7996, %v8157
    %v8159 = vpop.f32.mrb[0].mxu0
    %8160 = vmatprep.mubr.f32.mxu0 0.0
    %v8161 = vand.u32 %v7109, 4294901760
    %8162 = vmatmul.mubr.f32.gmra.mrb[0].mxu0 %v8161
    %v8163 = vpop.f32.mrb[0].mxu0
    %v8164 = vadd.f32 %v8002, %v8163
    %v8165 = vpop.f32.mrb[0].mxu0
    %8166 = vmatprep.mubr.f32.mxu0 0.0
    %v8167 = vand.u32 %v7112, 4294901760
    %8168 = vmatmul.mubr.f32.gmra.mrb[0].mxu0 %v8167
    %v8169 = vpop.f32.mrb[0].mxu0
    %v8170 = vadd.f32 %v8008, %v8169
    %v8171 = vpop.f32.mrb[0].mxu0
    %8172 = vmatprep.mubr.f32.mxu0 0.0
    %v8173 = vand.u32 %v7115, 4294901760
    %8174 = vmatmul.mubr.f32.gmra.mrb[0].mxu0 %v8173
    %v8175 = vpop.f32.mrb[0].mxu0
    %v8176 = vadd.f32 %v8014, %v8175
    %v8177 = vpop.f32.mrb[0].mxu0
    %8178 = vmatprep.mubr.f32.mxu0 0.0
    %v8179 = vand.u32 %v7118, 4294901760
    %8180 = vmatmul.mubr.f32.gmra.mrb[0].mxu0 %v8179
    %v8181 = vpop.f32.mrb[0].mxu0
    %v8182 = vadd.f32 %v8020, %v8181
    %v8183 = vpop.f32.mrb[0].mxu0
    %8184 = vmatprep.mubr.f32.mxu0 0.0
    %v8185 = vand.u32 %v7121, 4294901760
    %8186 = vmatmul.mubr.f32.gmra.mrb[0].mxu0 %v8185
    %v8187 = vpop.f32.mrb[0].mxu0
    %v8188 = vadd.f32 %v8026, %v8187
    %v8189 = vpop.f32.mrb[0].mxu0
    %8190 = vmatprep.mubr.f32.mxu0 0.0
    %v8191 = vand.u32 %v7124, 4294901760
    %8192 = vmatmul.mubr.f32.gmra.mrb[0].mxu0 %v8191
    %v8193 = vpop.f32.mrb[0].mxu0
    %v8194 = vadd.f32 %v8032, %v8193
    %v8195 = vpop.f32.mrb[0].mxu0
    %8196 = vmatprep.mubr.f32.mxu0 0.0
    %v8197 = vand.u32 %v7127, 4294901760
    %8198 = vmatmul.mubr.f32.gmra.mrb[0].mxu0 %v8197
    %v8199 = vpop.f32.mrb[0].mxu0
    %v8200 = vadd.f32 %v8038, %v8199
    %v8201 = vpop.f32.mrb[0].mxu0
    %8202 = vmatprep.mubr.f32.mxu0 0.0
    %v8203 = vand.u32 %v7130, 4294901760
    %8204 = vmatmul.mubr.f32.gmra.mrb[0].mxu0 %v8203
    %v8205 = vpop.f32.mrb[0].mxu0
    %v8206 = vadd.f32 %v8044, %v8205
    %v8207 = vpop.f32.mrb[0].mxu0
    %8208 = vmatprep.mubr.f32.mxu0 0.0
    %v8209 = vand.u32 %v7133, 4294901760
    %8210 = vmatmul.mubr.f32.gmra.mrb[0].mxu0 %v8209
    %v8211 = vpop.f32.mrb[0].mxu0
    %v8212 = vadd.f32 %v8050, %v8211
    %v8213 = vpop.f32.mrb[0].mxu0
    %8214 = vmatprep.mubr.f32.mxu0 0.0
    %v8215 = vand.u32 %v7136, 4294901760
    %8216 = vmatmul.mubr.f32.gmra.mrb[0].mxu0 %v8215
    %v8217 = vpop.f32.mrb[0].mxu0
    %v8218 = vadd.f32 %v8056, %v8217
    %v8219 = vpop.f32.mrb[0].mxu0
    %8220 = vmatprep.mubr.f32.mxu0 0.0
    %v8221 = vand.u32 %v7139, 4294901760
    %8222 = vmatmul.mubr.f32.gmra.mrb[0].mxu0 %v8221
    %v8223 = vpop.f32.mrb[0].mxu0
    %v8224 = vadd.f32 %v8062, %v8223
    %v8225 = vpop.f32.mrb[0].mxu0
    %8226 = vmatprep.mubr.f32.mxu0 0.0
    %v8227 = vand.u32 %v7142, 4294901760
    %8228 = vmatmul.mubr.f32.gmra.mrb[0].mxu0 %v8227
    %v8229 = vpop.f32.mrb[0].mxu0
    %v8230 = vadd.f32 %v8068, %v8229
    %v8231 = vpop.f32.mrb[0].mxu0
    %8232 = vmatprep.mubr.f32.mxu0 0.0
    %v8233 = vand.u32 %v7145, 4294901760
    %8234 = vmatmul.mubr.f32.gmra.mrb[0].mxu0 %v8233
    %v8235 = vpop.f32.mrb[0].mxu0
    %v8236 = vadd.f32 %v8074, %v8235
    %v8237 = vpop.f32.mrb[0].mxu0
    %8238 = vmatprep.mubr.f32.mxu0 0.0
    %v8239 = vand.u32 %v7148, 4294901760
    %8240 = vmatmul.mubr.f32.gmra.mrb[0].mxu0 %v8239
    %v8241 = vpop.f32.mrb[0].mxu0
    %v8242 = vadd.f32 %v8080, %v8241
    %v8243 = vpop.f32.mrb[0].mxu0
    %8244 = vdwg.mxu0
    %v8245 = vmul.f32 %v3705, %v8152
    %v8246 = vmul.f32 %v3711, %v8158
    %v8247 = vmul.f32 %v3717, %v8164
    %v8248 = vmul.f32 %v3723, %v8170
    %v8249 = vmul.f32 %v3729, %v8176
    %v8250 = vmul.f32 %v3735, %v8182
    %v8251 = vmul.f32 %v3741, %v8188
    %v8252 = vmul.f32 %v3747, %v8194
    %v8253 = vmul.f32 %v3753, %v8200
    %v8254 = vmul.f32 %v3759, %v8206
    %v8255 = vmul.f32 %v3765, %v8212
    %v8256 = vmul.f32 %v3771, %v8218
    %v8257 = vmul.f32 %v3777, %v8224
    %v8258 = vmul.f32 %v3783, %v8230
    %v8259 = vmul.f32 %v3789, %v8236
    %v8260 = vmul.f32 %v3795, %v8242
    %8261 = vmatprep.subr.mxu0 0.0
    %v8262 = vand.u32 %v8245, 4294901760
    %8263 = vmatpush1.msra.mxu0 %v8262
    %8264 = vmatprep.subr.mxu0 0.0
    %v8265 = vand.u32 %v8246, 4294901760
    %8266 = vmatpush1.msra.mxu0 %v8265
    %8267 = vmatprep.subr.mxu0 0.0
    %v8268 = vand.u32 %v8247, 4294901760
    %8269 = vmatpush1.msra.mxu0 %v8268
    %8270 = vmatprep.subr.mxu0 0.0
    %v8271 = vand.u32 %v8248, 4294901760
    %8272 = vmatpush1.msra.mxu0 %v8271
    %8273 = vmatprep.subr.mxu0 0.0
    %v8274 = vand.u32 %v8249, 4294901760
    %8275 = vmatpush1.msra.mxu0 %v8274
    %8276 = vmatprep.subr.mxu0 0.0
    %v8277 = vand.u32 %v8250, 4294901760
    %8278 = vmatpush1.msra.mxu0 %v8277
    %8279 = vmatprep.subr.mxu0 0.0
    %v8280 = vand.u32 %v8251, 4294901760
    %8281 = vmatpush1.msra.mxu0 %v8280
    %8282 = vmatprep.subr.mxu0 0.0
    %v8283 = vand.u32 %v8252, 4294901760
    %8284 = vmatpush1.msra.mxu0 %v8283
    %8285 = vmatprep.subr.mxu0 0.0
    %v8286 = vand.u32 %v8253, 4294901760
    %8287 = vmatpush1.msra.mxu0 %v8286
    %8288 = vmatprep.subr.mxu0 0.0
    %v8289 = vand.u32 %v8254, 4294901760
    %8290 = vmatpush1.msra.mxu0 %v8289
    %8291 = vmatprep.subr.mxu0 0.0
    %v8292 = vand.u32 %v8255, 4294901760
    %8293 = vmatpush1.msra.mxu0 %v8292
    %8294 = vmatprep.subr.mxu0 0.0
    %v8295 = vand.u32 %v8256, 4294901760
    %8296 = vmatpush1.msra.mxu0 %v8295
    %8297 = vmatprep.subr.mxu0 0.0
    %v8298 = vand.u32 %v8257, 4294901760
    %8299 = vmatpush1.msra.mxu0 %v8298
    %8300 = vmatprep.subr.mxu0 0.0
    %v8301 = vand.u32 %v8258, 4294901760
    %8302 = vmatpush1.msra.mxu0 %v8301
    %8303 = vmatprep.subr.mxu0 0.0
    %v8304 = vand.u32 %v8259, 4294901760
    %8305 = vmatpush1.msra.mxu0 %v8304
    %8306 = vmatprep.subr.mxu0 0.0
    %v8307 = vand.u32 %v8260, 4294901760
    %8308 = vmatpush1.msra.mxu0 %v8307
    %8309 = vmatprep.subr.mxu0 0.0
    %8310 = vmatpush1.msra.mxu0 0.0
    %8311 = vmatprep.subr.mxu0 0.0
    %8312 = vmatpush1.msra.mxu0 0.0
    %8313 = vmatprep.subr.mxu0 0.0
    %8314 = vmatpush1.msra.mxu0 0.0
    %8315 = vmatprep.subr.mxu0 0.0
    %8316 = vmatpush1.msra.mxu0 0.0
    %8317 = vmatprep.subr.mxu0 0.0
    %8318 = vmatpush1.msra.mxu0 0.0
    %8319 = vmatprep.subr.mxu0 0.0
    %8320 = vmatpush1.msra.mxu0 0.0
    %8321 = vmatprep.subr.mxu0 0.0
    %8322 = vmatpush1.msra.mxu0 0.0
    %8323 = vmatprep.subr.mxu0 0.0
    %8324 = vmatpush1.msra.mxu0 0.0
    %8325 = vmatprep.subr.mxu0 0.0
    %8326 = vmatpush1.msra.mxu0 0.0
    %8327 = vmatprep.subr.mxu0 0.0
    %8328 = vmatpush1.msra.mxu0 0.0
    %8329 = vmatprep.subr.mxu0 0.0
    %8330 = vmatpush1.msra.mxu0 0.0
    %8331 = vmatprep.subr.mxu0 0.0
    %8332 = vmatpush1.msra.mxu0 0.0
    %8333 = vmatprep.subr.mxu0 0.0
    %8334 = vmatpush1.msra.mxu0 0.0
    %8335 = vmatprep.subr.mxu0 0.0
    %8336 = vmatpush1.msra.mxu0 0.0
    %8337 = vmatprep.subr.mxu0 0.0
    %8338 = vmatpush1.msra.mxu0 0.0
    %8339 = vmatprep.subr.mxu0 0.0
    %8340 = vmatpush1.msra.mxu0 0.0
    %8341 = vmatprep.mubr.f32.mxu0 0.0
    %v8342 = vand.u32 %v384, 4294901760
    %v8343 = vsub.f32 %v384, %v8342
    %v8344 = vand.u32 %v8343, 4294901760
    %v8345 = vsub.f32 %v8343, %v8344
    %v8346 = vand.u32 %v8345, 4294901760
    %8347 = vmatmul.mubr.f32.gmra.mrb[0].mxu0 %v8346
    %v8348 = vpop.f32.mrb[0].mxu0
    %v8349 = vadd.f32 0.0, %v8348
    %v8350 = vpop.f32.mrb[0].mxu0
    %8351 = vdwg.mxu0
    %8352 = vmatprep.subr.mxu0 0.0
    %v8353 = vand.u32 %v8245, 4294901760
    %v8354 = vsub.f32 %v8245, %v8353
    %v8355 = vand.u32 %v8354, 4294901760
    %v8356 = vsub.f32 %v8354, %v8355
    %v8357 = vand.u32 %v8356, 4294901760
    %8358 = vmatpush1.msra.mxu0 %v8357
    %8359 = vmatprep.subr.mxu0 0.0
    %v8360 = vand.u32 %v8246, 4294901760
    %v8361 = vsub.f32 %v8246, %v8360
    %v8362 = vand.u32 %v8361, 4294901760
    %v8363 = vsub.f32 %v8361, %v8362
    %v8364 = vand.u32 %v8363, 4294901760
    %8365 = vmatpush1.msra.mxu0 %v8364
    %8366 = vmatprep.subr.mxu0 0.0
    %v8367 = vand.u32 %v8247, 4294901760
    %v8368 = vsub.f32 %v8247, %v8367
    %v8369 = vand.u32 %v8368, 4294901760
    %v8370 = vsub.f32 %v8368, %v8369
    %v8371 = vand.u32 %v8370, 4294901760
    %8372 = vmatpush1.msra.mxu0 %v8371
    %8373 = vmatprep.subr.mxu0 0.0
    %v8374 = vand.u32 %v8248, 4294901760
    %v8375 = vsub.f32 %v8248, %v8374
    %v8376 = vand.u32 %v8375, 4294901760
    %v8377 = vsub.f32 %v8375, %v8376
    %v8378 = vand.u32 %v8377, 4294901760
    %8379 = vmatpush1.msra.mxu0 %v8378
    %8380 = vmatprep.subr.mxu0 0.0
    %v8381 = vand.u32 %v8249, 4294901760
    %v8382 = vsub.f32 %v8249, %v8381
    %v8383 = vand.u32 %v8382, 4294901760
    %v8384 = vsub.f32 %v8382, %v8383
    %v8385 = vand.u32 %v8384, 4294901760
    %8386 = vmatpush1.msra.mxu0 %v8385
    %8387 = vmatprep.subr.mxu0 0.0
    %v8388 = vand.u32 %v8250, 4294901760
    %v8389 = vsub.f32 %v8250, %v8388
    %v8390 = vand.u32 %v8389, 4294901760
    %v8391 = vsub.f32 %v8389, %v8390
    %v8392 = vand.u32 %v8391, 4294901760
    %8393 = vmatpush1.msra.mxu0 %v8392
    %8394 = vmatprep.subr.mxu0 0.0
    %v8395 = vand.u32 %v8251, 4294901760
    %v8396 = vsub.f32 %v8251, %v8395
    %v8397 = vand.u32 %v8396, 4294901760
    %v8398 = vsub.f32 %v8396, %v8397
    %v8399 = vand.u32 %v8398, 4294901760
    %8400 = vmatpush1.msra.mxu0 %v8399
    %8401 = vmatprep.subr.mxu0 0.0
    %v8402 = vand.u32 %v8252, 4294901760
    %v8403 = vsub.f32 %v8252, %v8402
    %v8404 = vand.u32 %v8403, 4294901760
    %v8405 = vsub.f32 %v8403, %v8404
    %v8406 = vand.u32 %v8405, 4294901760
    %8407 = vmatpush1.msra.mxu0 %v8406
    %8408 = vmatprep.subr.mxu0 0.0
    %v8409 = vand.u32 %v8253, 4294901760
    %v8410 = vsub.f32 %v8253, %v8409
    %v8411 = vand.u32 %v8410, 4294901760
    %v8412 = vsub.f32 %v8410, %v8411
    %v8413 = vand.u32 %v8412, 4294901760
    %8414 = vmatpush1.msra.mxu0 %v8413
    %8415 = vmatprep.subr.mxu0 0.0
    %v8416 = vand.u32 %v8254, 4294901760
    %v8417 = vsub.f32 %v8254, %v8416
    %v8418 = vand.u32 %v8417, 4294901760
    %v8419 = vsub.f32 %v8417, %v8418
    %v8420 = vand.u32 %v8419, 4294901760
    %8421 = vmatpush1.msra.mxu0 %v8420
    %8422 = vmatprep.subr.mxu0 0.0
    %v8423 = vand.u32 %v8255, 4294901760
    %v8424 = vsub.f32 %v8255, %v8423
    %v8425 = vand.u32 %v8424, 4294901760
    %v8426 = vsub.f32 %v8424, %v8425
    %v8427 = vand.u32 %v8426, 4294901760
    %8428 = vmatpush1.msra.mxu0 %v8427
    %8429 = vmatprep.subr.mxu0 0.0
    %v8430 = vand.u32 %v8256, 4294901760
    %v8431 = vsub.f32 %v8256, %v8430
    %v8432 = vand.u32 %v8431, 4294901760
    %v8433 = vsub.f32 %v8431, %v8432
    %v8434 = vand.u32 %v8433, 4294901760
    %8435 = vmatpush1.msra.mxu0 %v8434
    %8436 = vmatprep.subr.mxu0 0.0
    %v8437 = vand.u32 %v8257, 4294901760
    %v8438 = vsub.f32 %v8257, %v8437
    %v8439 = vand.u32 %v8438, 4294901760
    %v8440 = vsub.f32 %v8438, %v8439
    %v8441 = vand.u32 %v8440, 4294901760
    %8442 = vmatpush1.msra.mxu0 %v8441
    %8443 = vmatprep.subr.mxu0 0.0
    %v8444 = vand.u32 %v8258, 4294901760
    %v8445 = vsub.f32 %v8258, %v8444
    %v8446 = vand.u32 %v8445, 4294901760
    %v8447 = vsub.f32 %v8445, %v8446
    %v8448 = vand.u32 %v8447, 4294901760
    %8449 = vmatpush1.msra.mxu0 %v8448
    %8450 = vmatprep.subr.mxu0 0.0
    %v8451 = vand.u32 %v8259, 4294901760
    %v8452 = vsub.f32 %v8259, %v8451
    %v8453 = vand.u32 %v8452, 4294901760
    %v8454 = vsub.f32 %v8452, %v8453
    %v8455 = vand.u32 %v8454, 4294901760
    %8456 = vmatpush1.msra.mxu0 %v8455
    %8457 = vmatprep.subr.mxu0 0.0
    %v8458 = vand.u32 %v8260, 4294901760
    %v8459 = vsub.f32 %v8260, %v8458
    %v8460 = vand.u32 %v8459, 4294901760
    %v8461 = vsub.f32 %v8459, %v8460
    %v8462 = vand.u32 %v8461, 4294901760
    %8463 = vmatpush1.msra.mxu0 %v8462
    %8464 = vmatprep.subr.mxu0 0.0
    %8465 = vmatpush1.msra.mxu0 0.0
    %8466 = vmatprep.subr.mxu0 0.0
    %8467 = vmatpush1.msra.mxu0 0.0
    %8468 = vmatprep.subr.mxu0 0.0
    %8469 = vmatpush1.msra.mxu0 0.0
    %8470 = vmatprep.subr.mxu0 0.0
    %8471 = vmatpush1.msra.mxu0 0.0
    %8472 = vmatprep.subr.mxu0 0.0
    %8473 = vmatpush1.msra.mxu0 0.0
    %8474 = vmatprep.subr.mxu0 0.0
    %8475 = vmatpush1.msra.mxu0 0.0
    %8476 = vmatprep.subr.mxu0 0.0
    %8477 = vmatpush1.msra.mxu0 0.0
    %8478 = vmatprep.subr.mxu0 0.0
    %8479 = vmatpush1.msra.mxu0 0.0
    %8480 = vmatprep.subr.mxu0 0.0
    %8481 = vmatpush1.msra.mxu0 0.0
    %8482 = vmatprep.subr.mxu0 0.0
    %8483 = vmatpush1.msra.mxu0 0.0
    %8484 = vmatprep.subr.mxu0 0.0
    %8485 = vmatpush1.msra.mxu0 0.0
    %8486 = vmatprep.subr.mxu0 0.0
    %8487 = vmatpush1.msra.mxu0 0.0
    %8488 = vmatprep.subr.mxu0 0.0
    %8489 = vmatpush1.msra.mxu0 0.0
    %8490 = vmatprep.subr.mxu0 0.0
    %8491 = vmatpush1.msra.mxu0 0.0
    %8492 = vmatprep.subr.mxu0 0.0
    %8493 = vmatpush1.msra.mxu0 0.0
    %8494 = vmatprep.subr.mxu0 0.0
    %8495 = vmatpush1.msra.mxu0 0.0
    %8496 = vmatprep.mubr.f32.mxu0 0.0
    %v8497 = vand.u32 %v384, 4294901760
    %8498 = vmatmul.mubr.f32.gmra.mrb[0].mxu0 %v8497
    %v8499 = vpop.f32.mrb[0].mxu0
    %v8500 = vadd.f32 %v8349, %v8499
    %v8501 = vpop.f32.mrb[0].mxu0
    %8502 = vdwg.mxu0
    %8503 = vmatprep.subr.mxu0 0.0
    %v8504 = vand.u32 %v8245, 4294901760
    %v8505 = vsub.f32 %v8245, %v8504
    %8506 = vmatpush1.msra.mxu0 %v8505
    %8507 = vmatprep.subr.mxu0 0.0
    %v8508 = vand.u32 %v8246, 4294901760
    %v8509 = vsub.f32 %v8246, %v8508
    %8510 = vmatpush1.msra.mxu0 %v8509
    %8511 = vmatprep.subr.mxu0 0.0
    %v8512 = vand.u32 %v8247, 4294901760
    %v8513 = vsub.f32 %v8247, %v8512
    %8514 = vmatpush1.msra.mxu0 %v8513
    %8515 = vmatprep.subr.mxu0 0.0
    %v8516 = vand.u32 %v8248, 4294901760
    %v8517 = vsub.f32 %v8248, %v8516
    %8518 = vmatpush1.msra.mxu0 %v8517
    %8519 = vmatprep.subr.mxu0 0.0
    %v8520 = vand.u32 %v8249, 4294901760
    %v8521 = vsub.f32 %v8249, %v8520
    %8522 = vmatpush1.msra.mxu0 %v8521
    %8523 = vmatprep.subr.mxu0 0.0
    %v8524 = vand.u32 %v8250, 4294901760
    %v8525 = vsub.f32 %v8250, %v8524
    %8526 = vmatpush1.msra.mxu0 %v8525
    %8527 = vmatprep.subr.mxu0 0.0
    %v8528 = vand.u32 %v8251, 4294901760
    %v8529 = vsub.f32 %v8251, %v8528
    %8530 = vmatpush1.msra.mxu0 %v8529
    %8531 = vmatprep.subr.mxu0 0.0
    %v8532 = vand.u32 %v8252, 4294901760
    %v8533 = vsub.f32 %v8252, %v8532
    %8534 = vmatpush1.msra.mxu0 %v8533
    %8535 = vmatprep.subr.mxu0 0.0
    %v8536 = vand.u32 %v8253, 4294901760
    %v8537 = vsub.f32 %v8253, %v8536
    %8538 = vmatpush1.msra.mxu0 %v8537
    %8539 = vmatprep.subr.mxu0 0.0
    %v8540 = vand.u32 %v8254, 4294901760
    %v8541 = vsub.f32 %v8254, %v8540
    %8542 = vmatpush1.msra.mxu0 %v8541
    %8543 = vmatprep.subr.mxu0 0.0
    %v8544 = vand.u32 %v8255, 4294901760
    %v8545 = vsub.f32 %v8255, %v8544
    %8546 = vmatpush1.msra.mxu0 %v8545
    %8547 = vmatprep.subr.mxu0 0.0
    %v8548 = vand.u32 %v8256, 4294901760
    %v8549 = vsub.f32 %v8256, %v8548
    %8550 = vmatpush1.msra.mxu0 %v8549
    %8551 = vmatprep.subr.mxu0 0.0
    %v8552 = vand.u32 %v8257, 4294901760
    %v8553 = vsub.f32 %v8257, %v8552
    %8554 = vmatpush1.msra.mxu0 %v8553
    %8555 = vmatprep.subr.mxu0 0.0
    %v8556 = vand.u32 %v8258, 4294901760
    %v8557 = vsub.f32 %v8258, %v8556
    %8558 = vmatpush1.msra.mxu0 %v8557
    %8559 = vmatprep.subr.mxu0 0.0
    %v8560 = vand.u32 %v8259, 4294901760
    %v8561 = vsub.f32 %v8259, %v8560
    %8562 = vmatpush1.msra.mxu0 %v8561
    %8563 = vmatprep.subr.mxu0 0.0
    %v8564 = vand.u32 %v8260, 4294901760
    %v8565 = vsub.f32 %v8260, %v8564
    %8566 = vmatpush1.msra.mxu0 %v8565
    %8567 = vmatprep.subr.mxu0 0.0
    %8568 = vmatpush1.msra.mxu0 0.0
    %8569 = vmatprep.subr.mxu0 0.0
    %8570 = vmatpush1.msra.mxu0 0.0
    %8571 = vmatprep.subr.mxu0 0.0
    %8572 = vmatpush1.msra.mxu0 0.0
    %8573 = vmatprep.subr.mxu0 0.0
    %8574 = vmatpush1.msra.mxu0 0.0
    %8575 = vmatprep.subr.mxu0 0.0
    %8576 = vmatpush1.msra.mxu0 0.0
    %8577 = vmatprep.subr.mxu0 0.0
    %8578 = vmatpush1.msra.mxu0 0.0
    %8579 = vmatprep.subr.mxu0 0.0
    %8580 = vmatpush1.msra.mxu0 0.0
    %8581 = vmatprep.subr.mxu0 0.0
    %8582 = vmatpush1.msra.mxu0 0.0
    %8583 = vmatprep.subr.mxu0 0.0
    %8584 = vmatpush1.msra.mxu0 0.0
    %8585 = vmatprep.subr.mxu0 0.0
    %8586 = vmatpush1.msra.mxu0 0.0
    %8587 = vmatprep.subr.mxu0 0.0
    %8588 = vmatpush1.msra.mxu0 0.0
    %8589 = vmatprep.subr.mxu0 0.0
    %8590 = vmatpush1.msra.mxu0 0.0
    %8591 = vmatprep.subr.mxu0 0.0
    %8592 = vmatpush1.msra.mxu0 0.0
    %8593 = vmatprep.subr.mxu0 0.0
    %8594 = vmatpush1.msra.mxu0 0.0
    %8595 = vmatprep.subr.mxu0 0.0
    %8596 = vmatpush1.msra.mxu0 0.0
    %8597 = vmatprep.subr.mxu0 0.0
    %8598 = vmatpush1.msra.mxu0 0.0
    %8599 = vmatprep.mubr.f32.mxu0 0.0
    %v8600 = vand.u32 %v384, 4294901760
    %v8601 = vsub.f32 %v384, %v8600
    %8602 = vmatmul.mubr.f32.gmra.mrb[0].mxu0 %v8601
    %v8603 = vpop.f32.mrb[0].mxu0
    %v8604 = vadd.f32 %v8500, %v8603
    %v8605 = vpop.f32.mrb[0].mxu0
    %8606 = vdwg.mxu0
    %8607 = vmatprep.subr.mxu0 0.0
    %v8608 = vand.u32 %v8245, 4294901760
    %8609 = vmatpush1.msra.mxu0 %v8608
    %8610 = vmatprep.subr.mxu0 0.0
    %v8611 = vand.u32 %v8246, 4294901760
    %8612 = vmatpush1.msra.mxu0 %v8611
    %8613 = vmatprep.subr.mxu0 0.0
    %v8614 = vand.u32 %v8247, 4294901760
    %8615 = vmatpush1.msra.mxu0 %v8614
    %8616 = vmatprep.subr.mxu0 0.0
    %v8617 = vand.u32 %v8248, 4294901760
    %8618 = vmatpush1.msra.mxu0 %v8617
    %8619 = vmatprep.subr.mxu0 0.0
    %v8620 = vand.u32 %v8249, 4294901760
    %8621 = vmatpush1.msra.mxu0 %v8620
    %8622 = vmatprep.subr.mxu0 0.0
    %v8623 = vand.u32 %v8250, 4294901760
    %8624 = vmatpush1.msra.mxu0 %v8623
    %8625 = vmatprep.subr.mxu0 0.0
    %v8626 = vand.u32 %v8251, 4294901760
    %8627 = vmatpush1.msra.mxu0 %v8626
    %8628 = vmatprep.subr.mxu0 0.0
    %v8629 = vand.u32 %v8252, 4294901760
    %8630 = vmatpush1.msra.mxu0 %v8629
    %8631 = vmatprep.subr.mxu0 0.0
    %v8632 = vand.u32 %v8253, 4294901760
    %8633 = vmatpush1.msra.mxu0 %v8632
    %8634 = vmatprep.subr.mxu0 0.0
    %v8635 = vand.u32 %v8254, 4294901760
    %8636 = vmatpush1.msra.mxu0 %v8635
    %8637 = vmatprep.subr.mxu0 0.0
    %v8638 = vand.u32 %v8255, 4294901760
    %8639 = vmatpush1.msra.mxu0 %v8638
    %8640 = vmatprep.subr.mxu0 0.0
    %v8641 = vand.u32 %v8256, 4294901760
    %8642 = vmatpush1.msra.mxu0 %v8641
    %8643 = vmatprep.subr.mxu0 0.0
    %v8644 = vand.u32 %v8257, 4294901760
    %8645 = vmatpush1.msra.mxu0 %v8644
    %8646 = vmatprep.subr.mxu0 0.0
    %v8647 = vand.u32 %v8258, 4294901760
    %8648 = vmatpush1.msra.mxu0 %v8647
    %8649 = vmatprep.subr.mxu0 0.0
    %v8650 = vand.u32 %v8259, 4294901760
    %8651 = vmatpush1.msra.mxu0 %v8650
    %8652 = vmatprep.subr.mxu0 0.0
    %v8653 = vand.u32 %v8260, 4294901760
    %8654 = vmatpush1.msra.mxu0 %v8653
    %8655 = vmatprep.subr.mxu0 0.0
    %8656 = vmatpush1.msra.mxu0 0.0
    %8657 = vmatprep.subr.mxu0 0.0
    %8658 = vmatpush1.msra.mxu0 0.0
    %8659 = vmatprep.subr.mxu0 0.0
    %8660 = vmatpush1.msra.mxu0 0.0
    %8661 = vmatprep.subr.mxu0 0.0
    %8662 = vmatpush1.msra.mxu0 0.0
    %8663 = vmatprep.subr.mxu0 0.0
    %8664 = vmatpush1.msra.mxu0 0.0
    %8665 = vmatprep.subr.mxu0 0.0
    %8666 = vmatpush1.msra.mxu0 0.0
    %8667 = vmatprep.subr.mxu0 0.0
    %8668 = vmatpush1.msra.mxu0 0.0
    %8669 = vmatprep.subr.mxu0 0.0
    %8670 = vmatpush1.msra.mxu0 0.0
    %8671 = vmatprep.subr.mxu0 0.0
    %8672 = vmatpush1.msra.mxu0 0.0
    %8673 = vmatprep.subr.mxu0 0.0
    %8674 = vmatpush1.msra.mxu0 0.0
    %8675 = vmatprep.subr.mxu0 0.0
    %8676 = vmatpush1.msra.mxu0 0.0
    %8677 = vmatprep.subr.mxu0 0.0
    %8678 = vmatpush1.msra.mxu0 0.0
    %8679 = vmatprep.subr.mxu0 0.0
    %8680 = vmatpush1.msra.mxu0 0.0
    %8681 = vmatprep.subr.mxu0 0.0
    %8682 = vmatpush1.msra.mxu0 0.0
    %8683 = vmatprep.subr.mxu0 0.0
    %8684 = vmatpush1.msra.mxu0 0.0
    %8685 = vmatprep.subr.mxu0 0.0
    %8686 = vmatpush1.msra.mxu0 0.0
    %8687 = vmatprep.mubr.f32.mxu0 0.0
    %v8688 = vand.u32 %v384, 4294901760
    %v8689 = vsub.f32 %v384, %v8688
    %v8690 = vand.u32 %v8689, 4294901760
    %8691 = vmatmul.mubr.f32.gmra.mrb[0].mxu0 %v8690
    %v8692 = vpop.f32.mrb[0].mxu0
    %v8693 = vadd.f32 %v8604, %v8692
    %v8694 = vpop.f32.mrb[0].mxu0
    %8695 = vdwg.mxu0
    %8696 = vmatprep.subr.mxu0 0.0
    %v8697 = vand.u32 %v8245, 4294901760
    %v8698 = vsub.f32 %v8245, %v8697
    %v8699 = vand.u32 %v8698, 4294901760
    %8700 = vmatpush1.msra.mxu0 %v8699
    %8701 = vmatprep.subr.mxu0 0.0
    %v8702 = vand.u32 %v8246, 4294901760
    %v8703 = vsub.f32 %v8246, %v8702
    %v8704 = vand.u32 %v8703, 4294901760
    %8705 = vmatpush1.msra.mxu0 %v8704
    %8706 = vmatprep.subr.mxu0 0.0
    %v8707 = vand.u32 %v8247, 4294901760
    %v8708 = vsub.f32 %v8247, %v8707
    %v8709 = vand.u32 %v8708, 4294901760
    %8710 = vmatpush1.msra.mxu0 %v8709
    %8711 = vmatprep.subr.mxu0 0.0
    %v8712 = vand.u32 %v8248, 4294901760
    %v8713 = vsub.f32 %v8248, %v8712
    %v8714 = vand.u32 %v8713, 4294901760
    %8715 = vmatpush1.msra.mxu0 %v8714
    %8716 = vmatprep.subr.mxu0 0.0
    %v8717 = vand.u32 %v8249, 4294901760
    %v8718 = vsub.f32 %v8249, %v8717
    %v8719 = vand.u32 %v8718, 4294901760
    %8720 = vmatpush1.msra.mxu0 %v8719
    %8721 = vmatprep.subr.mxu0 0.0
    %v8722 = vand.u32 %v8250, 4294901760
    %v8723 = vsub.f32 %v8250, %v8722
    %v8724 = vand.u32 %v8723, 4294901760
    %8725 = vmatpush1.msra.mxu0 %v8724
    %8726 = vmatprep.subr.mxu0 0.0
    %v8727 = vand.u32 %v8251, 4294901760
    %v8728 = vsub.f32 %v8251, %v8727
    %v8729 = vand.u32 %v8728, 4294901760
    %8730 = vmatpush1.msra.mxu0 %v8729
    %8731 = vmatprep.subr.mxu0 0.0
    %v8732 = vand.u32 %v8252, 4294901760
    %v8733 = vsub.f32 %v8252, %v8732
    %v8734 = vand.u32 %v8733, 4294901760
    %8735 = vmatpush1.msra.mxu0 %v8734
    %8736 = vmatprep.subr.mxu0 0.0
    %v8737 = vand.u32 %v8253, 4294901760
    %v8738 = vsub.f32 %v8253, %v8737
    %v8739 = vand.u32 %v8738, 4294901760
    %8740 = vmatpush1.msra.mxu0 %v8739
    %8741 = vmatprep.subr.mxu0 0.0
    %v8742 = vand.u32 %v8254, 4294901760
    %v8743 = vsub.f32 %v8254, %v8742
    %v8744 = vand.u32 %v8743, 4294901760
    %8745 = vmatpush1.msra.mxu0 %v8744
    %8746 = vmatprep.subr.mxu0 0.0
    %v8747 = vand.u32 %v8255, 4294901760
    %v8748 = vsub.f32 %v8255, %v8747
    %v8749 = vand.u32 %v8748, 4294901760
    %8750 = vmatpush1.msra.mxu0 %v8749
    %8751 = vmatprep.subr.mxu0 0.0
    %v8752 = vand.u32 %v8256, 4294901760
    %v8753 = vsub.f32 %v8256, %v8752
    %v8754 = vand.u32 %v8753, 4294901760
    %8755 = vmatpush1.msra.mxu0 %v8754
    %8756 = vmatprep.subr.mxu0 0.0
    %v8757 = vand.u32 %v8257, 4294901760
    %v8758 = vsub.f32 %v8257, %v8757
    %v8759 = vand.u32 %v8758, 4294901760
    %8760 = vmatpush1.msra.mxu0 %v8759
    %8761 = vmatprep.subr.mxu0 0.0
    %v8762 = vand.u32 %v8258, 4294901760
    %v8763 = vsub.f32 %v8258, %v8762
    %v8764 = vand.u32 %v8763, 4294901760
    %8765 = vmatpush1.msra.mxu0 %v8764
    %8766 = vmatprep.subr.mxu0 0.0
    %v8767 = vand.u32 %v8259, 4294901760
    %v8768 = vsub.f32 %v8259, %v8767
    %v8769 = vand.u32 %v8768, 4294901760
    %8770 = vmatpush1.msra.mxu0 %v8769
    %8771 = vmatprep.subr.mxu0 0.0
    %v8772 = vand.u32 %v8260, 4294901760
    %v8773 = vsub.f32 %v8260, %v8772
    %v8774 = vand.u32 %v8773, 4294901760
    %8775 = vmatpush1.msra.mxu0 %v8774
    %8776 = vmatprep.subr.mxu0 0.0
    %8777 = vmatpush1.msra.mxu0 0.0
    %8778 = vmatprep.subr.mxu0 0.0
    %8779 = vmatpush1.msra.mxu0 0.0
    %8780 = vmatprep.subr.mxu0 0.0
    %8781 = vmatpush1.msra.mxu0 0.0
    %8782 = vmatprep.subr.mxu0 0.0
    %8783 = vmatpush1.msra.mxu0 0.0
    %8784 = vmatprep.subr.mxu0 0.0
    %8785 = vmatpush1.msra.mxu0 0.0
    %8786 = vmatprep.subr.mxu0 0.0
    %8787 = vmatpush1.msra.mxu0 0.0
    %8788 = vmatprep.subr.mxu0 0.0
    %8789 = vmatpush1.msra.mxu0 0.0
    %8790 = vmatprep.subr.mxu0 0.0
    %8791 = vmatpush1.msra.mxu0 0.0
    %8792 = vmatprep.subr.mxu0 0.0
    %8793 = vmatpush1.msra.mxu0 0.0
    %8794 = vmatprep.subr.mxu0 0.0
    %8795 = vmatpush1.msra.mxu0 0.0
    %8796 = vmatprep.subr.mxu0 0.0
    %8797 = vmatpush1.msra.mxu0 0.0
    %8798 = vmatprep.subr.mxu0 0.0
    %8799 = vmatpush1.msra.mxu0 0.0
    %8800 = vmatprep.subr.mxu0 0.0
    %8801 = vmatpush1.msra.mxu0 0.0
    %8802 = vmatprep.subr.mxu0 0.0
    %8803 = vmatpush1.msra.mxu0 0.0
    %8804 = vmatprep.subr.mxu0 0.0
    %8805 = vmatpush1.msra.mxu0 0.0
    %8806 = vmatprep.subr.mxu0 0.0
    %8807 = vmatpush1.msra.mxu0 0.0
    %8808 = vmatprep.mubr.f32.mxu0 0.0
    %v8809 = vand.u32 %v384, 4294901760
    %8810 = vmatmul.mubr.f32.gmra.mrb[0].mxu0 %v8809
    %v8811 = vpop.f32.mrb[0].mxu0
    %v8812 = vadd.f32 %v8693, %v8811
    %v8813 = vpop.f32.mrb[0].mxu0
    %8814 = vdwg.mxu0
    %8815 = vmatprep.subr.mxu0 0.0
    %v8816 = vand.u32 %v8245, 4294901760
    %8817 = vmatpush1.msra.mxu0 %v8816
    %8818 = vmatprep.subr.mxu0 0.0
    %v8819 = vand.u32 %v8246, 4294901760
    %8820 = vmatpush1.msra.mxu0 %v8819
    %8821 = vmatprep.subr.mxu0 0.0
    %v8822 = vand.u32 %v8247, 4294901760
    %8823 = vmatpush1.msra.mxu0 %v8822
    %8824 = vmatprep.subr.mxu0 0.0
    %v8825 = vand.u32 %v8248, 4294901760
    %8826 = vmatpush1.msra.mxu0 %v8825
    %8827 = vmatprep.subr.mxu0 0.0
    %v8828 = vand.u32 %v8249, 4294901760
    %8829 = vmatpush1.msra.mxu0 %v8828
    %8830 = vmatprep.subr.mxu0 0.0
    %v8831 = vand.u32 %v8250, 4294901760
    %8832 = vmatpush1.msra.mxu0 %v8831
    %8833 = vmatprep.subr.mxu0 0.0
    %v8834 = vand.u32 %v8251, 4294901760
    %8835 = vmatpush1.msra.mxu0 %v8834
    %8836 = vmatprep.subr.mxu0 0.0
    %v8837 = vand.u32 %v8252, 4294901760
    %8838 = vmatpush1.msra.mxu0 %v8837
    %8839 = vmatprep.subr.mxu0 0.0
    %v8840 = vand.u32 %v8253, 4294901760
    %8841 = vmatpush1.msra.mxu0 %v8840
    %8842 = vmatprep.subr.mxu0 0.0
    %v8843 = vand.u32 %v8254, 4294901760
    %8844 = vmatpush1.msra.mxu0 %v8843
    %8845 = vmatprep.subr.mxu0 0.0
    %v8846 = vand.u32 %v8255, 4294901760
    %8847 = vmatpush1.msra.mxu0 %v8846
    %8848 = vmatprep.subr.mxu0 0.0
    %v8849 = vand.u32 %v8256, 4294901760
    %8850 = vmatpush1.msra.mxu0 %v8849
    %8851 = vmatprep.subr.mxu0 0.0
    %v8852 = vand.u32 %v8257, 4294901760
    %8853 = vmatpush1.msra.mxu0 %v8852
    %8854 = vmatprep.subr.mxu0 0.0
    %v8855 = vand.u32 %v8258, 4294901760
    %8856 = vmatpush1.msra.mxu0 %v8855
    %8857 = vmatprep.subr.mxu0 0.0
    %v8858 = vand.u32 %v8259, 4294901760
    %8859 = vmatpush1.msra.mxu0 %v8858
    %8860 = vmatprep.subr.mxu0 0.0
    %v8861 = vand.u32 %v8260, 4294901760
    %8862 = vmatpush1.msra.mxu0 %v8861
    %8863 = vmatprep.subr.mxu0 0.0
    %8864 = vmatpush1.msra.mxu0 0.0
    %8865 = vmatprep.subr.mxu0 0.0
    %8866 = vmatpush1.msra.mxu0 0.0
    %8867 = vmatprep.subr.mxu0 0.0
    %8868 = vmatpush1.msra.mxu0 0.0
    %8869 = vmatprep.subr.mxu0 0.0
    %8870 = vmatpush1.msra.mxu0 0.0
    %8871 = vmatprep.subr.mxu0 0.0
    %8872 = vmatpush1.msra.mxu0 0.0
    %8873 = vmatprep.subr.mxu0 0.0
    %8874 = vmatpush1.msra.mxu0 0.0
    %8875 = vmatprep.subr.mxu0 0.0
    %8876 = vmatpush1.msra.mxu0 0.0
    %8877 = vmatprep.subr.mxu0 0.0
    %8878 = vmatpush1.msra.mxu0 0.0
    %8879 = vmatprep.subr.mxu0 0.0
    %8880 = vmatpush1.msra.mxu0 0.0
    %8881 = vmatprep.subr.mxu0 0.0
    %8882 = vmatpush1.msra.mxu0 0.0
    %8883 = vmatprep.subr.mxu0 0.0
    %8884 = vmatpush1.msra.mxu0 0.0
    %8885 = vmatprep.subr.mxu0 0.0
    %8886 = vmatpush1.msra.mxu0 0.0
    %8887 = vmatprep.subr.mxu0 0.0
    %8888 = vmatpush1.msra.mxu0 0.0
    %8889 = vmatprep.subr.mxu0 0.0
    %8890 = vmatpush1.msra.mxu0 0.0
    %8891 = vmatprep.subr.mxu0 0.0
    %8892 = vmatpush1.msra.mxu0 0.0
    %8893 = vmatprep.subr.mxu0 0.0
    %8894 = vmatpush1.msra.mxu0 0.0
    %8895 = vmatprep.mubr.f32.mxu0 0.0
    %v8896 = vand.u32 %v384, 4294901760
    %8897 = vmatmul.mubr.f32.gmra.mrb[0].mxu0 %v8896
    %v8898 = vpop.f32.mrb[0].mxu0
    %v8899 = vadd.f32 %v8812, %v8898
    %v8900 = vpop.f32.mrb[0].mxu0
    %8901 = vdwg.mxu0
    %vm8902 = vcmp.gt.f32.partialorder %v8899, 0.0
    %v8903 = vmin.f32 %v8899, 0.0
    %v8904 = vmul.f32 %v8903, 1.442695
    %v8905 = vpow.pop %v8904
    %v8906 = vsub.f32 %v8905, 1.0
    %v8907 = vsel %vm8902, %v8899, %v8906
    %8909 = vrot.lane.b32.xlu0 %v8907, 96
    %v8910 = vpop.permute.xlu0 %8909
    %v8912 = vadd.f32 %v8907, %v8910
    %v8913 = vld [vmem:[%s10] sm:$0xff]
    %v8914 = vld [vmem:[%s10 + $0x8] sm:$0xff]
    %v8915 = vld [vmem:[%s10 + $0x10] sm:$0xff]
    %v8916 = vld [vmem:[%s10 + $0x18] sm:$0xff]
    %v8917 = vld [vmem:[%s10 + $0x20] sm:$0xff]
    %v8918 = vld [vmem:[%s10 + $0x28] sm:$0xff]
    %v8919 = vld [vmem:[%s10 + $0x30] sm:$0xff]
    %v8920 = vld [vmem:[%s10 + $0x38] sm:$0xff]
    %8921 = vmatprep.subr.mxu0 0.0
    %v8922 = vand.u32 %v8917, 4294901760
    %8923 = vmatpush1.msra.mxu0 %v8922
    %8924 = vmatprep.subr.mxu0 0.0
    %v8925 = vand.u32 %v8918, 4294901760
    %8926 = vmatpush1.msra.mxu0 %v8925
    %8927 = vmatprep.subr.mxu0 0.0
    %v8928 = vand.u32 %v8919, 4294901760
    %8929 = vmatpush1.msra.mxu0 %v8928
    %8930 = vmatprep.subr.mxu0 0.0
    %v8931 = vand.u32 %v8920, 4294901760
    %8932 = vmatpush1.msra.mxu0 %v8931
    %8933 = vmatprep.subr.mxu0 0.0
    %8934 = vmatpush1.msra.mxu0 0.0
    %8935 = vmatprep.subr.mxu0 0.0
    %8936 = vmatpush1.msra.mxu0 0.0
    %8937 = vmatprep.subr.mxu0 0.0
    %8938 = vmatpush1.msra.mxu0 0.0
    %8939 = vmatprep.subr.mxu0 0.0
    %8940 = vmatpush1.msra.mxu0 0.0
    %8941 = vmatprep.subr.mxu0 0.0
    %8942 = vmatpush1.msra.mxu0 0.0
    %8943 = vmatprep.subr.mxu0 0.0
    %8944 = vmatpush1.msra.mxu0 0.0
    %8945 = vmatprep.subr.mxu0 0.0
    %8946 = vmatpush1.msra.mxu0 0.0
    %8947 = vmatprep.subr.mxu0 0.0
    %8948 = vmatpush1.msra.mxu0 0.0
    %8949 = vmatprep.subr.mxu0 0.0
    %8950 = vmatpush1.msra.mxu0 0.0
    %8951 = vmatprep.subr.mxu0 0.0
    %8952 = vmatpush1.msra.mxu0 0.0
    %8953 = vmatprep.subr.mxu0 0.0
    %8954 = vmatpush1.msra.mxu0 0.0
    %8955 = vmatprep.subr.mxu0 0.0
    %8956 = vmatpush1.msra.mxu0 0.0
    %8957 = vmatprep.subr.mxu0 0.0
    %8958 = vmatpush1.msra.mxu0 0.0
    %8959 = vmatprep.subr.mxu0 0.0
    %8960 = vmatpush1.msra.mxu0 0.0
    %8961 = vmatprep.subr.mxu0 0.0
    %8962 = vmatpush1.msra.mxu0 0.0
    %8963 = vmatprep.subr.mxu0 0.0
    %8964 = vmatpush1.msra.mxu0 0.0
    %8965 = vmatprep.subr.mxu0 0.0
    %8966 = vmatpush1.msra.mxu0 0.0
    %8967 = vmatprep.subr.mxu0 0.0
    %8968 = vmatpush1.msra.mxu0 0.0
    %8969 = vmatprep.subr.mxu0 0.0
    %8970 = vmatpush1.msra.mxu0 0.0
    %8971 = vmatprep.subr.mxu0 0.0
    %8972 = vmatpush1.msra.mxu0 0.0
    %8973 = vmatprep.subr.mxu0 0.0
    %8974 = vmatpush1.msra.mxu0 0.0
    %8975 = vmatprep.subr.mxu0 0.0
    %8976 = vmatpush1.msra.mxu0 0.0
    %8977 = vmatprep.subr.mxu0 0.0
    %8978 = vmatpush1.msra.mxu0 0.0
    %8979 = vmatprep.subr.mxu0 0.0
    %8980 = vmatpush1.msra.mxu0 0.0
    %8981 = vmatprep.subr.mxu0 0.0
    %8982 = vmatpush1.msra.mxu0 0.0
    %8983 = vmatprep.subr.mxu0 0.0
    %8984 = vmatpush1.msra.mxu0 0.0
    %8985 = vmatprep.subr.mxu0 0.0
    %8986 = vmatpush1.msra.mxu0 0.0
    %8987 = vmatprep.subr.mxu0 0.0
    %8988 = vmatpush1.msra.mxu0 0.0
    %8989 = vmatprep.mubr.f32.mxu0 0.0
    %v8990 = vand.u32 %v1018, 4294901760
    %v8991 = vsub.f32 %v1018, %v8990
    %v8992 = vand.u32 %v8991, 4294901760
    %v8993 = vsub.f32 %v8991, %v8992
    %v8994 = vand.u32 %v8993, 4294901760
    %8995 = vmatmul.mubr.f32.gmra.mrb[0].mxu0 %v8994
    %v8996 = vpop.f32.mrb[0].mxu0
    %v8997 = vadd.f32 0.0, %v8996
    %v8998 = vpop.f32.mrb[0].mxu0
    %8999 = vdwg.mxu0
    %9000 = vmatprep.subr.mxu0 0.0
    %v9001 = vand.u32 %v8917, 4294901760
    %v9002 = vsub.f32 %v8917, %v9001
    %v9003 = vand.u32 %v9002, 4294901760
    %v9004 = vsub.f32 %v9002, %v9003
    %v9005 = vand.u32 %v9004, 4294901760
    %9006 = vmatpush1.msra.mxu0 %v9005
    %9007 = vmatprep.subr.mxu0 0.0
    %v9008 = vand.u32 %v8918, 4294901760
    %v9009 = vsub.f32 %v8918, %v9008
    %v9010 = vand.u32 %v9009, 4294901760
    %v9011 = vsub.f32 %v9009, %v9010
    %v9012 = vand.u32 %v9011, 4294901760
    %9013 = vmatpush1.msra.mxu0 %v9012
    %9014 = vmatprep.subr.mxu0 0.0
    %v9015 = vand.u32 %v8919, 4294901760
    %v9016 = vsub.f32 %v8919, %v9015
    %v9017 = vand.u32 %v9016, 4294901760
    %v9018 = vsub.f32 %v9016, %v9017
    %v9019 = vand.u32 %v9018, 4294901760
    %9020 = vmatpush1.msra.mxu0 %v9019
    %9021 = vmatprep.subr.mxu0 0.0
    %v9022 = vand.u32 %v8920, 4294901760
    %v9023 = vsub.f32 %v8920, %v9022
    %v9024 = vand.u32 %v9023, 4294901760
    %v9025 = vsub.f32 %v9023, %v9024
    %v9026 = vand.u32 %v9025, 4294901760
    %9027 = vmatpush1.msra.mxu0 %v9026
    %9028 = vmatprep.subr.mxu0 0.0
    %9029 = vmatpush1.msra.mxu0 0.0
    %9030 = vmatprep.subr.mxu0 0.0
    %9031 = vmatpush1.msra.mxu0 0.0
    %9032 = vmatprep.subr.mxu0 0.0
    %9033 = vmatpush1.msra.mxu0 0.0
    %9034 = vmatprep.subr.mxu0 0.0
    %9035 = vmatpush1.msra.mxu0 0.0
    %9036 = vmatprep.subr.mxu0 0.0
    %9037 = vmatpush1.msra.mxu0 0.0
    %9038 = vmatprep.subr.mxu0 0.0
    %9039 = vmatpush1.msra.mxu0 0.0
    %9040 = vmatprep.subr.mxu0 0.0
    %9041 = vmatpush1.msra.mxu0 0.0
    %9042 = vmatprep.subr.mxu0 0.0
    %9043 = vmatpush1.msra.mxu0 0.0
    %9044 = vmatprep.subr.mxu0 0.0
    %9045 = vmatpush1.msra.mxu0 0.0
    %9046 = vmatprep.subr.mxu0 0.0
    %9047 = vmatpush1.msra.mxu0 0.0
    %9048 = vmatprep.subr.mxu0 0.0
    %9049 = vmatpush1.msra.mxu0 0.0
    %9050 = vmatprep.subr.mxu0 0.0
    %9051 = vmatpush1.msra.mxu0 0.0
    %9052 = vmatprep.subr.mxu0 0.0
    %9053 = vmatpush1.msra.mxu0 0.0
    %9054 = vmatprep.subr.mxu0 0.0
    %9055 = vmatpush1.msra.mxu0 0.0
    %9056 = vmatprep.subr.mxu0 0.0
    %9057 = vmatpush1.msra.mxu0 0.0
    %9058 = vmatprep.subr.mxu0 0.0
    %9059 = vmatpush1.msra.mxu0 0.0
    %9060 = vmatprep.subr.mxu0 0.0
    %9061 = vmatpush1.msra.mxu0 0.0
    %9062 = vmatprep.subr.mxu0 0.0
    %9063 = vmatpush1.msra.mxu0 0.0
    %9064 = vmatprep.subr.mxu0 0.0
    %9065 = vmatpush1.msra.mxu0 0.0
    %9066 = vmatprep.subr.mxu0 0.0
    %9067 = vmatpush1.msra.mxu0 0.0
    %9068 = vmatprep.subr.mxu0 0.0
    %9069 = vmatpush1.msra.mxu0 0.0
    %9070 = vmatprep.subr.mxu0 0.0
    %9071 = vmatpush1.msra.mxu0 0.0
    %9072 = vmatprep.subr.mxu0 0.0
    %9073 = vmatpush1.msra.mxu0 0.0
    %9074 = vmatprep.subr.mxu0 0.0
    %9075 = vmatpush1.msra.mxu0 0.0
    %9076 = vmatprep.subr.mxu0 0.0
    %9077 = vmatpush1.msra.mxu0 0.0
    %9078 = vmatprep.subr.mxu0 0.0
    %9079 = vmatpush1.msra.mxu0 0.0
    %9080 = vmatprep.subr.mxu0 0.0
    %9081 = vmatpush1.msra.mxu0 0.0
    %9082 = vmatprep.subr.mxu0 0.0
    %9083 = vmatpush1.msra.mxu0 0.0
    %9084 = vmatprep.mubr.f32.mxu0 0.0
    %v9085 = vand.u32 %v1018, 4294901760
    %9086 = vmatmul.mubr.f32.gmra.mrb[0].mxu0 %v9085
    %v9087 = vpop.f32.mrb[0].mxu0
    %v9088 = vadd.f32 %v8997, %v9087
    %v9089 = vpop.f32.mrb[0].mxu0
    %9090 = vdwg.mxu0
    %9091 = vmatprep.subr.mxu0 0.0
    %v9092 = vand.u32 %v8917, 4294901760
    %v9093 = vsub.f32 %v8917, %v9092
    %9094 = vmatpush1.msra.mxu0 %v9093
    %9095 = vmatprep.subr.mxu0 0.0
    %v9096 = vand.u32 %v8918, 4294901760
    %v9097 = vsub.f32 %v8918, %v9096
    %9098 = vmatpush1.msra.mxu0 %v9097
    %9099 = vmatprep.subr.mxu0 0.0
    %v9100 = vand.u32 %v8919, 4294901760
    %v9101 = vsub.f32 %v8919, %v9100
    %9102 = vmatpush1.msra.mxu0 %v9101
    %9103 = vmatprep.subr.mxu0 0.0
    %v9104 = vand.u32 %v8920, 4294901760
    %v9105 = vsub.f32 %v8920, %v9104
    %9106 = vmatpush1.msra.mxu0 %v9105
    %9107 = vmatprep.subr.mxu0 0.0
    %9108 = vmatpush1.msra.mxu0 0.0
    %9109 = vmatprep.subr.mxu0 0.0
    %9110 = vmatpush1.msra.mxu0 0.0
    %9111 = vmatprep.subr.mxu0 0.0
    %9112 = vmatpush1.msra.mxu0 0.0
    %9113 = vmatprep.subr.mxu0 0.0
    %9114 = vmatpush1.msra.mxu0 0.0
    %9115 = vmatprep.subr.mxu0 0.0
    %9116 = vmatpush1.msra.mxu0 0.0
    %9117 = vmatprep.subr.mxu0 0.0
    %9118 = vmatpush1.msra.mxu0 0.0
    %9119 = vmatprep.subr.mxu0 0.0
    %9120 = vmatpush1.msra.mxu0 0.0
    %9121 = vmatprep.subr.mxu0 0.0
    %9122 = vmatpush1.msra.mxu0 0.0
    %9123 = vmatprep.subr.mxu0 0.0
    %9124 = vmatpush1.msra.mxu0 0.0
    %9125 = vmatprep.subr.mxu0 0.0
    %9126 = vmatpush1.msra.mxu0 0.0
    %9127 = vmatprep.subr.mxu0 0.0
    %9128 = vmatpush1.msra.mxu0 0.0
    %9129 = vmatprep.subr.mxu0 0.0
    %9130 = vmatpush1.msra.mxu0 0.0
    %9131 = vmatprep.subr.mxu0 0.0
    %9132 = vmatpush1.msra.mxu0 0.0
    %9133 = vmatprep.subr.mxu0 0.0
    %9134 = vmatpush1.msra.mxu0 0.0
    %9135 = vmatprep.subr.mxu0 0.0
    %9136 = vmatpush1.msra.mxu0 0.0
    %9137 = vmatprep.subr.mxu0 0.0
    %9138 = vmatpush1.msra.mxu0 0.0
    %9139 = vmatprep.subr.mxu0 0.0
    %9140 = vmatpush1.msra.mxu0 0.0
    %9141 = vmatprep.subr.mxu0 0.0
    %9142 = vmatpush1.msra.mxu0 0.0
    %9143 = vmatprep.subr.mxu0 0.0
    %9144 = vmatpush1.msra.mxu0 0.0
    %9145 = vmatprep.subr.mxu0 0.0
    %9146 = vmatpush1.msra.mxu0 0.0
    %9147 = vmatprep.subr.mxu0 0.0
    %9148 = vmatpush1.msra.mxu0 0.0
    %9149 = vmatprep.subr.mxu0 0.0
    %9150 = vmatpush1.msra.mxu0 0.0
    %9151 = vmatprep.subr.mxu0 0.0
    %9152 = vmatpush1.msra.mxu0 0.0
    %9153 = vmatprep.subr.mxu0 0.0
    %9154 = vmatpush1.msra.mxu0 0.0
    %9155 = vmatprep.subr.mxu0 0.0
    %9156 = vmatpush1.msra.mxu0 0.0
    %9157 = vmatprep.subr.mxu0 0.0
    %9158 = vmatpush1.msra.mxu0 0.0
    %9159 = vmatprep.subr.mxu0 0.0
    %9160 = vmatpush1.msra.mxu0 0.0
    %9161 = vmatprep.subr.mxu0 0.0
    %9162 = vmatpush1.msra.mxu0 0.0
    %9163 = vmatprep.mubr.f32.mxu0 0.0
    %v9164 = vand.u32 %v1018, 4294901760
    %v9165 = vsub.f32 %v1018, %v9164
    %9166 = vmatmul.mubr.f32.gmra.mrb[0].mxu0 %v9165
    %v9167 = vpop.f32.mrb[0].mxu0
    %v9168 = vadd.f32 %v9088, %v9167
    %v9169 = vpop.f32.mrb[0].mxu0
    %9170 = vdwg.mxu0
    %9171 = vmatprep.subr.mxu0 0.0
    %v9172 = vand.u32 %v8917, 4294901760
    %9173 = vmatpush1.msra.mxu0 %v9172
    %9174 = vmatprep.subr.mxu0 0.0
    %v9175 = vand.u32 %v8918, 4294901760
    %9176 = vmatpush1.msra.mxu0 %v9175
    %9177 = vmatprep.subr.mxu0 0.0
    %v9178 = vand.u32 %v8919, 4294901760
    %9179 = vmatpush1.msra.mxu0 %v9178
    %9180 = vmatprep.subr.mxu0 0.0
    %v9181 = vand.u32 %v8920, 4294901760
    %9182 = vmatpush1.msra.mxu0 %v9181
    %9183 = vmatprep.subr.mxu0 0.0
    %9184 = vmatpush1.msra.mxu0 0.0
    %9185 = vmatprep.subr.mxu0 0.0
    %9186 = vmatpush1.msra.mxu0 0.0
    %9187 = vmatprep.subr.mxu0 0.0
    %9188 = vmatpush1.msra.mxu0 0.0
    %9189 = vmatprep.subr.mxu0 0.0
    %9190 = vmatpush1.msra.mxu0 0.0
    %9191 = vmatprep.subr.mxu0 0.0
    %9192 = vmatpush1.msra.mxu0 0.0
    %9193 = vmatprep.subr.mxu0 0.0
    %9194 = vmatpush1.msra.mxu0 0.0
    %9195 = vmatprep.subr.mxu0 0.0
    %9196 = vmatpush1.msra.mxu0 0.0
    %9197 = vmatprep.subr.mxu0 0.0
    %9198 = vmatpush1.msra.mxu0 0.0
    %9199 = vmatprep.subr.mxu0 0.0
    %9200 = vmatpush1.msra.mxu0 0.0
    %9201 = vmatprep.subr.mxu0 0.0
    %9202 = vmatpush1.msra.mxu0 0.0
    %9203 = vmatprep.subr.mxu0 0.0
    %9204 = vmatpush1.msra.mxu0 0.0
    %9205 = vmatprep.subr.mxu0 0.0
    %9206 = vmatpush1.msra.mxu0 0.0
    %9207 = vmatprep.subr.mxu0 0.0
    %9208 = vmatpush1.msra.mxu0 0.0
    %9209 = vmatprep.subr.mxu0 0.0
    %9210 = vmatpush1.msra.mxu0 0.0
    %9211 = vmatprep.subr.mxu0 0.0
    %9212 = vmatpush1.msra.mxu0 0.0
    %9213 = vmatprep.subr.mxu0 0.0
    %9214 = vmatpush1.msra.mxu0 0.0
    %9215 = vmatprep.subr.mxu0 0.0
    %9216 = vmatpush1.msra.mxu0 0.0
    %9217 = vmatprep.subr.mxu0 0.0
    %9218 = vmatpush1.msra.mxu0 0.0
    %9219 = vmatprep.subr.mxu0 0.0
    %9220 = vmatpush1.msra.mxu0 0.0
    %9221 = vmatprep.subr.mxu0 0.0
    %9222 = vmatpush1.msra.mxu0 0.0
    %9223 = vmatprep.subr.mxu0 0.0
    %9224 = vmatpush1.msra.mxu0 0.0
    %9225 = vmatprep.subr.mxu0 0.0
    %9226 = vmatpush1.msra.mxu0 0.0
    %9227 = vmatprep.subr.mxu0 0.0
    %9228 = vmatpush1.msra.mxu0 0.0
    %9229 = vmatprep.subr.mxu0 0.0
    %9230 = vmatpush1.msra.mxu0 0.0
    %9231 = vmatprep.subr.mxu0 0.0
    %9232 = vmatpush1.msra.mxu0 0.0
    %9233 = vmatprep.subr.mxu0 0.0
    %9234 = vmatpush1.msra.mxu0 0.0
    %9235 = vmatprep.subr.mxu0 0.0
    %9236 = vmatpush1.msra.mxu0 0.0
    %9237 = vmatprep.subr.mxu0 0.0
    %9238 = vmatpush1.msra.mxu0 0.0
    %9239 = vmatprep.mubr.f32.mxu0 0.0
    %v9240 = vand.u32 %v1018, 4294901760
    %v9241 = vsub.f32 %v1018, %v9240
    %v9242 = vand.u32 %v9241, 4294901760
    %9243 = vmatmul.mubr.f32.gmra.mrb[0].mxu0 %v9242
    %v9244 = vpop.f32.mrb[0].mxu0
    %v9245 = vadd.f32 %v9168, %v9244
    %v9246 = vpop.f32.mrb[0].mxu0
    %9247 = vdwg.mxu0
    %9248 = vmatprep.subr.mxu0 0.0
    %v9249 = vand.u32 %v8917, 4294901760
    %v9250 = vsub.f32 %v8917, %v9249
    %v9251 = vand.u32 %v9250, 4294901760
    %9252 = vmatpush1.msra.mxu0 %v9251
    %9253 = vmatprep.subr.mxu0 0.0
    %v9254 = vand.u32 %v8918, 4294901760
    %v9255 = vsub.f32 %v8918, %v9254
    %v9256 = vand.u32 %v9255, 4294901760
    %9257 = vmatpush1.msra.mxu0 %v9256
    %9258 = vmatprep.subr.mxu0 0.0
    %v9259 = vand.u32 %v8919, 4294901760
    %v9260 = vsub.f32 %v8919, %v9259
    %v9261 = vand.u32 %v9260, 4294901760
    %9262 = vmatpush1.msra.mxu0 %v9261
    %9263 = vmatprep.subr.mxu0 0.0
    %v9264 = vand.u32 %v8920, 4294901760
    %v9265 = vsub.f32 %v8920, %v9264
    %v9266 = vand.u32 %v9265, 4294901760
    %9267 = vmatpush1.msra.mxu0 %v9266
    %9268 = vmatprep.subr.mxu0 0.0
    %9269 = vmatpush1.msra.mxu0 0.0
    %9270 = vmatprep.subr.mxu0 0.0
    %9271 = vmatpush1.msra.mxu0 0.0
    %9272 = vmatprep.subr.mxu0 0.0
    %9273 = vmatpush1.msra.mxu0 0.0
    %9274 = vmatprep.subr.mxu0 0.0
    %9275 = vmatpush1.msra.mxu0 0.0
    %9276 = vmatprep.subr.mxu0 0.0
    %9277 = vmatpush1.msra.mxu0 0.0
    %9278 = vmatprep.subr.mxu0 0.0
    %9279 = vmatpush1.msra.mxu0 0.0
    %9280 = vmatprep.subr.mxu0 0.0
    %9281 = vmatpush1.msra.mxu0 0.0
    %9282 = vmatprep.subr.mxu0 0.0
    %9283 = vmatpush1.msra.mxu0 0.0
    %9284 = vmatprep.subr.mxu0 0.0
    %9285 = vmatpush1.msra.mxu0 0.0
    %9286 = vmatprep.subr.mxu0 0.0
    %9287 = vmatpush1.msra.mxu0 0.0
    %9288 = vmatprep.subr.mxu0 0.0
    %9289 = vmatpush1.msra.mxu0 0.0
    %9290 = vmatprep.subr.mxu0 0.0
    %9291 = vmatpush1.msra.mxu0 0.0
    %9292 = vmatprep.subr.mxu0 0.0
    %9293 = vmatpush1.msra.mxu0 0.0
    %9294 = vmatprep.subr.mxu0 0.0
    %9295 = vmatpush1.msra.mxu0 0.0
    %9296 = vmatprep.subr.mxu0 0.0
    %9297 = vmatpush1.msra.mxu0 0.0
    %9298 = vmatprep.subr.mxu0 0.0
    %9299 = vmatpush1.msra.mxu0 0.0
    %9300 = vmatprep.subr.mxu0 0.0
    %9301 = vmatpush1.msra.mxu0 0.0
    %9302 = vmatprep.subr.mxu0 0.0
    %9303 = vmatpush1.msra.mxu0 0.0
    %9304 = vmatprep.subr.mxu0 0.0
    %9305 = vmatpush1.msra.mxu0 0.0
    %9306 = vmatprep.subr.mxu0 0.0
    %9307 = vmatpush1.msra.mxu0 0.0
    %9308 = vmatprep.subr.mxu0 0.0
    %9309 = vmatpush1.msra.mxu0 0.0
    %9310 = vmatprep.subr.mxu0 0.0
    %9311 = vmatpush1.msra.mxu0 0.0
    %9312 = vmatprep.subr.mxu0 0.0
    %9313 = vmatpush1.msra.mxu0 0.0
    %9314 = vmatprep.subr.mxu0 0.0
    %9315 = vmatpush1.msra.mxu0 0.0
    %9316 = vmatprep.subr.mxu0 0.0
    %9317 = vmatpush1.msra.mxu0 0.0
    %9318 = vmatprep.subr.mxu0 0.0
    %9319 = vmatpush1.msra.mxu0 0.0
    %9320 = vmatprep.subr.mxu0 0.0
    %9321 = vmatpush1.msra.mxu0 0.0
    %9322 = vmatprep.subr.mxu0 0.0
    %9323 = vmatpush1.msra.mxu0 0.0
    %9324 = vmatprep.mubr.f32.mxu0 0.0
    %v9325 = vand.u32 %v1018, 4294901760
    %9326 = vmatmul.mubr.f32.gmra.mrb[0].mxu0 %v9325
    %v9327 = vpop.f32.mrb[0].mxu0
    %v9328 = vadd.f32 %v9245, %v9327
    %v9329 = vpop.f32.mrb[0].mxu0
    %9330 = vdwg.mxu0
    %9331 = vmatprep.subr.mxu0 0.0
    %v9332 = vand.u32 %v8917, 4294901760
    %9333 = vmatpush1.msra.mxu0 %v9332
    %9334 = vmatprep.subr.mxu0 0.0
    %v9335 = vand.u32 %v8918, 4294901760
    %9336 = vmatpush1.msra.mxu0 %v9335
    %9337 = vmatprep.subr.mxu0 0.0
    %v9338 = vand.u32 %v8919, 4294901760
    %9339 = vmatpush1.msra.mxu0 %v9338
    %9340 = vmatprep.subr.mxu0 0.0
    %v9341 = vand.u32 %v8920, 4294901760
    %9342 = vmatpush1.msra.mxu0 %v9341
    %9343 = vmatprep.subr.mxu0 0.0
    %9344 = vmatpush1.msra.mxu0 0.0
    %9345 = vmatprep.subr.mxu0 0.0
    %9346 = vmatpush1.msra.mxu0 0.0
    %9347 = vmatprep.subr.mxu0 0.0
    %9348 = vmatpush1.msra.mxu0 0.0
    %9349 = vmatprep.subr.mxu0 0.0
    %9350 = vmatpush1.msra.mxu0 0.0
    %9351 = vmatprep.subr.mxu0 0.0
    %9352 = vmatpush1.msra.mxu0 0.0
    %9353 = vmatprep.subr.mxu0 0.0
    %9354 = vmatpush1.msra.mxu0 0.0
    %9355 = vmatprep.subr.mxu0 0.0
    %9356 = vmatpush1.msra.mxu0 0.0
    %9357 = vmatprep.subr.mxu0 0.0
    %9358 = vmatpush1.msra.mxu0 0.0
    %9359 = vmatprep.subr.mxu0 0.0
    %9360 = vmatpush1.msra.mxu0 0.0
    %9361 = vmatprep.subr.mxu0 0.0
    %9362 = vmatpush1.msra.mxu0 0.0
    %9363 = vmatprep.subr.mxu0 0.0
    %9364 = vmatpush1.msra.mxu0 0.0
    %9365 = vmatprep.subr.mxu0 0.0
    %9366 = vmatpush1.msra.mxu0 0.0
    %9367 = vmatprep.subr.mxu0 0.0
    %9368 = vmatpush1.msra.mxu0 0.0
    %9369 = vmatprep.subr.mxu0 0.0
    %9370 = vmatpush1.msra.mxu0 0.0
    %9371 = vmatprep.subr.mxu0 0.0
    %9372 = vmatpush1.msra.mxu0 0.0
    %9373 = vmatprep.subr.mxu0 0.0
    %9374 = vmatpush1.msra.mxu0 0.0
    %9375 = vmatprep.subr.mxu0 0.0
    %9376 = vmatpush1.msra.mxu0 0.0
    %9377 = vmatprep.subr.mxu0 0.0
    %9378 = vmatpush1.msra.mxu0 0.0
    %9379 = vmatprep.subr.mxu0 0.0
    %9380 = vmatpush1.msra.mxu0 0.0
    %9381 = vmatprep.subr.mxu0 0.0
    %9382 = vmatpush1.msra.mxu0 0.0
    %9383 = vmatprep.subr.mxu0 0.0
    %9384 = vmatpush1.msra.mxu0 0.0
    %9385 = vmatprep.subr.mxu0 0.0
    %9386 = vmatpush1.msra.mxu0 0.0
    %9387 = vmatprep.subr.mxu0 0.0
    %9388 = vmatpush1.msra.mxu0 0.0
    %9389 = vmatprep.subr.mxu0 0.0
    %9390 = vmatpush1.msra.mxu0 0.0
    %9391 = vmatprep.subr.mxu0 0.0
    %9392 = vmatpush1.msra.mxu0 0.0
    %9393 = vmatprep.subr.mxu0 0.0
    %9394 = vmatpush1.msra.mxu0 0.0
    %9395 = vmatprep.subr.mxu0 0.0
    %9396 = vmatpush1.msra.mxu0 0.0
    %9397 = vmatprep.subr.mxu0 0.0
    %9398 = vmatpush1.msra.mxu0 0.0
    %9399 = vmatprep.mubr.f32.mxu0 0.0
    %v9400 = vand.u32 %v1018, 4294901760
    %9401 = vmatmul.mubr.f32.gmra.mrb[0].mxu0 %v9400
    %v9402 = vpop.f32.mrb[0].mxu0
    %v9403 = vadd.f32 %v9328, %v9402
    %v9404 = vpop.f32.mrb[0].mxu0
    %9405 = vdwg.mxu0
    %v9407 = vsel %vm49, %v8912, 0
    %9409 = vmatprep.subr.mxu0 0.0
    %v9410 = vand.u32 %v8913, 4294901760
    %9411 = vmatpush1.msra.mxu0 %v9410
    %9412 = vmatprep.subr.mxu0 0.0
    %v9413 = vand.u32 %v8914, 4294901760
    %9414 = vmatpush1.msra.mxu0 %v9413
    %9415 = vmatprep.subr.mxu0 0.0
    %v9416 = vand.u32 %v8915, 4294901760
    %9417 = vmatpush1.msra.mxu0 %v9416
    %9418 = vmatprep.subr.mxu0 0.0
    %v9419 = vand.u32 %v8916, 4294901760
    %9420 = vmatpush1.msra.mxu0 %v9419
    %9421 = vmatprep.subr.mxu0 0.0
    %9422 = vmatpush1.msra.mxu0 0.0
    %9423 = vmatprep.subr.mxu0 0.0
    %9424 = vmatpush1.msra.mxu0 0.0
    %9425 = vmatprep.subr.mxu0 0.0
    %9426 = vmatpush1.msra.mxu0 0.0
    %9427 = vmatprep.subr.mxu0 0.0
    %9428 = vmatpush1.msra.mxu0 0.0
    %9429 = vmatprep.subr.mxu0 0.0
    %9430 = vmatpush1.msra.mxu0 0.0
    %9431 = vmatprep.subr.mxu0 0.0
    %9432 = vmatpush1.msra.mxu0 0.0
    %9433 = vmatprep.subr.mxu0 0.0
    %9434 = vmatpush1.msra.mxu0 0.0
    %9435 = vmatprep.subr.mxu0 0.0
    %9436 = vmatpush1.msra.mxu0 0.0
    %9437 = vmatprep.subr.mxu0 0.0
    %9438 = vmatpush1.msra.mxu0 0.0
    %9439 = vmatprep.subr.mxu0 0.0
    %9440 = vmatpush1.msra.mxu0 0.0
    %9441 = vmatprep.subr.mxu0 0.0
    %9442 = vmatpush1.msra.mxu0 0.0
    %9443 = vmatprep.subr.mxu0 0.0
    %9444 = vmatpush1.msra.mxu0 0.0
    %9445 = vmatprep.subr.mxu0 0.0
    %9446 = vmatpush1.msra.mxu0 0.0
    %9447 = vmatprep.subr.mxu0 0.0
    %9448 = vmatpush1.msra.mxu0 0.0
    %9449 = vmatprep.subr.mxu0 0.0
    %9450 = vmatpush1.msra.mxu0 0.0
    %9451 = vmatprep.subr.mxu0 0.0
    %9452 = vmatpush1.msra.mxu0 0.0
    %9453 = vmatprep.subr.mxu0 0.0
    %9454 = vmatpush1.msra.mxu0 0.0
    %9455 = vmatprep.subr.mxu0 0.0
    %9456 = vmatpush1.msra.mxu0 0.0
    %9457 = vmatprep.subr.mxu0 0.0
    %9458 = vmatpush1.msra.mxu0 0.0
    %9459 = vmatprep.subr.mxu0 0.0
    %9460 = vmatpush1.msra.mxu0 0.0
    %9461 = vmatprep.subr.mxu0 0.0
    %9462 = vmatpush1.msra.mxu0 0.0
    %9463 = vmatprep.subr.mxu0 0.0
    %9464 = vmatpush1.msra.mxu0 0.0
    %9465 = vmatprep.subr.mxu0 0.0
    %9466 = vmatpush1.msra.mxu0 0.0
    %9467 = vmatprep.subr.mxu0 0.0
    %9468 = vmatpush1.msra.mxu0 0.0
    %9469 = vmatprep.subr.mxu0 0.0
    %9470 = vmatpush1.msra.mxu0 0.0
    %9471 = vmatprep.subr.mxu0 0.0
    %9472 = vmatpush1.msra.mxu0 0.0
    %9473 = vmatprep.subr.mxu0 0.0
    %9474 = vmatpush1.msra.mxu0 0.0
    %9475 = vmatprep.subr.mxu0 0.0
    %9476 = vmatpush1.msra.mxu0 0.0
    %9477 = vmatprep.mubr.f32.mxu0 0.0
    %v9478 = vand.u32 %v9407, 4294901760
    %v9479 = vsub.f32 %v9407, %v9478
    %v9480 = vand.u32 %v9479, 4294901760
    %v9481 = vsub.f32 %v9479, %v9480
    %v9482 = vand.u32 %v9481, 4294901760
    %9483 = vmatmul.mubr.f32.gmra.mrb[0].mxu0 %v9482
    %v9484 = vpop.f32.mrb[0].mxu0
    %v9485 = vadd.f32 %v9403, %v9484
    %v9486 = vpop.f32.mrb[0].mxu0
    %9487 = vdwg.mxu0
    %9488 = vmatprep.subr.mxu0 0.0
    %v9489 = vand.u32 %v8913, 4294901760
    %v9490 = vsub.f32 %v8913, %v9489
    %v9491 = vand.u32 %v9490, 4294901760
    %v9492 = vsub.f32 %v9490, %v9491
    %v9493 = vand.u32 %v9492, 4294901760
    %9494 = vmatpush1.msra.mxu0 %v9493
    %9495 = vmatprep.subr.mxu0 0.0
    %v9496 = vand.u32 %v8914, 4294901760
    %v9497 = vsub.f32 %v8914, %v9496
    %v9498 = vand.u32 %v9497, 4294901760
    %v9499 = vsub.f32 %v9497, %v9498
    %v9500 = vand.u32 %v9499, 4294901760
    %9501 = vmatpush1.msra.mxu0 %v9500
    %9502 = vmatprep.subr.mxu0 0.0
    %v9503 = vand.u32 %v8915, 4294901760
    %v9504 = vsub.f32 %v8915, %v9503
    %v9505 = vand.u32 %v9504, 4294901760
    %v9506 = vsub.f32 %v9504, %v9505
    %v9507 = vand.u32 %v9506, 4294901760
    %9508 = vmatpush1.msra.mxu0 %v9507
    %9509 = vmatprep.subr.mxu0 0.0
    %v9510 = vand.u32 %v8916, 4294901760
    %v9511 = vsub.f32 %v8916, %v9510
    %v9512 = vand.u32 %v9511, 4294901760
    %v9513 = vsub.f32 %v9511, %v9512
    %v9514 = vand.u32 %v9513, 4294901760
    %9515 = vmatpush1.msra.mxu0 %v9514
    %9516 = vmatprep.subr.mxu0 0.0
    %9517 = vmatpush1.msra.mxu0 0.0
    %9518 = vmatprep.subr.mxu0 0.0
    %9519 = vmatpush1.msra.mxu0 0.0
    %9520 = vmatprep.subr.mxu0 0.0
    %9521 = vmatpush1.msra.mxu0 0.0
    %9522 = vmatprep.subr.mxu0 0.0
    %9523 = vmatpush1.msra.mxu0 0.0
    %9524 = vmatprep.subr.mxu0 0.0
    %9525 = vmatpush1.msra.mxu0 0.0
    %9526 = vmatprep.subr.mxu0 0.0
    %9527 = vmatpush1.msra.mxu0 0.0
    %9528 = vmatprep.subr.mxu0 0.0
    %9529 = vmatpush1.msra.mxu0 0.0
    %9530 = vmatprep.subr.mxu0 0.0
    %9531 = vmatpush1.msra.mxu0 0.0
    %9532 = vmatprep.subr.mxu0 0.0
    %9533 = vmatpush1.msra.mxu0 0.0
    %9534 = vmatprep.subr.mxu0 0.0
    %9535 = vmatpush1.msra.mxu0 0.0
    %9536 = vmatprep.subr.mxu0 0.0
    %9537 = vmatpush1.msra.mxu0 0.0
    %9538 = vmatprep.subr.mxu0 0.0
    %9539 = vmatpush1.msra.mxu0 0.0
    %9540 = vmatprep.subr.mxu0 0.0
    %9541 = vmatpush1.msra.mxu0 0.0
    %9542 = vmatprep.subr.mxu0 0.0
    %9543 = vmatpush1.msra.mxu0 0.0
    %9544 = vmatprep.subr.mxu0 0.0
    %9545 = vmatpush1.msra.mxu0 0.0
    %9546 = vmatprep.subr.mxu0 0.0
    %9547 = vmatpush1.msra.mxu0 0.0
    %9548 = vmatprep.subr.mxu0 0.0
    %9549 = vmatpush1.msra.mxu0 0.0
    %9550 = vmatprep.subr.mxu0 0.0
    %9551 = vmatpush1.msra.mxu0 0.0
    %9552 = vmatprep.subr.mxu0 0.0
    %9553 = vmatpush1.msra.mxu0 0.0
    %9554 = vmatprep.subr.mxu0 0.0
    %9555 = vmatpush1.msra.mxu0 0.0
    %9556 = vmatprep.subr.mxu0 0.0
    %9557 = vmatpush1.msra.mxu0 0.0
    %9558 = vmatprep.subr.mxu0 0.0
    %9559 = vmatpush1.msra.mxu0 0.0
    %9560 = vmatprep.subr.mxu0 0.0
    %9561 = vmatpush1.msra.mxu0 0.0
    %9562 = vmatprep.subr.mxu0 0.0
    %9563 = vmatpush1.msra.mxu0 0.0
    %9564 = vmatprep.subr.mxu0 0.0
    %9565 = vmatpush1.msra.mxu0 0.0
    %9566 = vmatprep.subr.mxu0 0.0
    %9567 = vmatpush1.msra.mxu0 0.0
    %9568 = vmatprep.subr.mxu0 0.0
    %9569 = vmatpush1.msra.mxu0 0.0
    %9570 = vmatprep.subr.mxu0 0.0
    %9571 = vmatpush1.msra.mxu0 0.0
    %9572 = vmatprep.mubr.f32.mxu0 0.0
    %v9573 = vand.u32 %v9407, 4294901760
    %9574 = vmatmul.mubr.f32.gmra.mrb[0].mxu0 %v9573
    %v9575 = vpop.f32.mrb[0].mxu0
    %v9576 = vadd.f32 %v9485, %v9575
    %v9577 = vpop.f32.mrb[0].mxu0
    %9578 = vdwg.mxu0
    %9579 = vmatprep.subr.mxu0 0.0
    %v9580 = vand.u32 %v8913, 4294901760
    %v9581 = vsub.f32 %v8913, %v9580
    %9582 = vmatpush1.msra.mxu0 %v9581
    %9583 = vmatprep.subr.mxu0 0.0
    %v9584 = vand.u32 %v8914, 4294901760
    %v9585 = vsub.f32 %v8914, %v9584
    %9586 = vmatpush1.msra.mxu0 %v9585
    %9587 = vmatprep.subr.mxu0 0.0
    %v9588 = vand.u32 %v8915, 4294901760
    %v9589 = vsub.f32 %v8915, %v9588
    %9590 = vmatpush1.msra.mxu0 %v9589
    %9591 = vmatprep.subr.mxu0 0.0
    %v9592 = vand.u32 %v8916, 4294901760
    %v9593 = vsub.f32 %v8916, %v9592
    %9594 = vmatpush1.msra.mxu0 %v9593
    %9595 = vmatprep.subr.mxu0 0.0
    %9596 = vmatpush1.msra.mxu0 0.0
    %9597 = vmatprep.subr.mxu0 0.0
    %9598 = vmatpush1.msra.mxu0 0.0
    %9599 = vmatprep.subr.mxu0 0.0
    %9600 = vmatpush1.msra.mxu0 0.0
    %9601 = vmatprep.subr.mxu0 0.0
    %9602 = vmatpush1.msra.mxu0 0.0
    %9603 = vmatprep.subr.mxu0 0.0
    %9604 = vmatpush1.msra.mxu0 0.0
    %9605 = vmatprep.subr.mxu0 0.0
    %9606 = vmatpush1.msra.mxu0 0.0
    %9607 = vmatprep.subr.mxu0 0.0
    %9608 = vmatpush1.msra.mxu0 0.0
    %9609 = vmatprep.subr.mxu0 0.0
    %9610 = vmatpush1.msra.mxu0 0.0
    %9611 = vmatprep.subr.mxu0 0.0
    %9612 = vmatpush1.msra.mxu0 0.0
    %9613 = vmatprep.subr.mxu0 0.0
    %9614 = vmatpush1.msra.mxu0 0.0
    %9615 = vmatprep.subr.mxu0 0.0
    %9616 = vmatpush1.msra.mxu0 0.0
    %9617 = vmatprep.subr.mxu0 0.0
    %9618 = vmatpush1.msra.mxu0 0.0
    %9619 = vmatprep.subr.mxu0 0.0
    %9620 = vmatpush1.msra.mxu0 0.0
    %9621 = vmatprep.subr.mxu0 0.0
    %9622 = vmatpush1.msra.mxu0 0.0
    %9623 = vmatprep.subr.mxu0 0.0
    %9624 = vmatpush1.msra.mxu0 0.0
    %9625 = vmatprep.subr.mxu0 0.0
    %9626 = vmatpush1.msra.mxu0 0.0
    %9627 = vmatprep.subr.mxu0 0.0
    %9628 = vmatpush1.msra.mxu0 0.0
    %9629 = vmatprep.subr.mxu0 0.0
    %9630 = vmatpush1.msra.mxu0 0.0
    %9631 = vmatprep.subr.mxu0 0.0
    %9632 = vmatpush1.msra.mxu0 0.0
    %9633 = vmatprep.subr.mxu0 0.0
    %9634 = vmatpush1.msra.mxu0 0.0
    %9635 = vmatprep.subr.mxu0 0.0
    %9636 = vmatpush1.msra.mxu0 0.0
    %9637 = vmatprep.subr.mxu0 0.0
    %9638 = vmatpush1.msra.mxu0 0.0
    %9639 = vmatprep.subr.mxu0 0.0
    %9640 = vmatpush1.msra.mxu0 0.0
    %9641 = vmatprep.subr.mxu0 0.0
    %9642 = vmatpush1.msra.mxu0 0.0
    %9643 = vmatprep.subr.mxu0 0.0
    %9644 = vmatpush1.msra.mxu0 0.0
    %9645 = vmatprep.subr.mxu0 0.0
    %9646 = vmatpush1.msra.mxu0 0.0
    %9647 = vmatprep.subr.mxu0 0.0
    %9648 = vmatpush1.msra.mxu0 0.0
    %9649 = vmatprep.subr.mxu0 0.0
    %9650 = vmatpush1.msra.mxu0 0.0
    %9651 = vmatprep.mubr.f32.mxu0 0.0
    %v9652 = vand.u32 %v9407, 4294901760
    %v9653 = vsub.f32 %v9407, %v9652
    %9654 = vmatmul.mubr.f32.gmra.mrb[0].mxu0 %v9653
    %v9655 = vpop.f32.mrb[0].mxu0
    %v9656 = vadd.f32 %v9576, %v9655
    %v9657 = vpop.f32.mrb[0].mxu0
    %9658 = vdwg.mxu0
    %9659 = vmatprep.subr.mxu0 0.0
    %v9660 = vand.u32 %v8913, 4294901760
    %9661 = vmatpush1.msra.mxu0 %v9660
    %9662 = vmatprep.subr.mxu0 0.0
    %v9663 = vand.u32 %v8914, 4294901760
    %9664 = vmatpush1.msra.mxu0 %v9663
    %9665 = vmatprep.subr.mxu0 0.0
    %v9666 = vand.u32 %v8915, 4294901760
    %9667 = vmatpush1.msra.mxu0 %v9666
    %9668 = vmatprep.subr.mxu0 0.0
    %v9669 = vand.u32 %v8916, 4294901760
    %9670 = vmatpush1.msra.mxu0 %v9669
    %9671 = vmatprep.subr.mxu0 0.0
    %9672 = vmatpush1.msra.mxu0 0.0
    %9673 = vmatprep.subr.mxu0 0.0
    %9674 = vmatpush1.msra.mxu0 0.0
    %9675 = vmatprep.subr.mxu0 0.0
    %9676 = vmatpush1.msra.mxu0 0.0
    %9677 = vmatprep.subr.mxu0 0.0
    %9678 = vmatpush1.msra.mxu0 0.0
    %9679 = vmatprep.subr.mxu0 0.0
    %9680 = vmatpush1.msra.mxu0 0.0
    %9681 = vmatprep.subr.mxu0 0.0
    %9682 = vmatpush1.msra.mxu0 0.0
    %9683 = vmatprep.subr.mxu0 0.0
    %9684 = vmatpush1.msra.mxu0 0.0
    %9685 = vmatprep.subr.mxu0 0.0
    %9686 = vmatpush1.msra.mxu0 0.0
    %9687 = vmatprep.subr.mxu0 0.0
    %9688 = vmatpush1.msra.mxu0 0.0
    %9689 = vmatprep.subr.mxu0 0.0
    %9690 = vmatpush1.msra.mxu0 0.0
    %9691 = vmatprep.subr.mxu0 0.0
    %9692 = vmatpush1.msra.mxu0 0.0
    %9693 = vmatprep.subr.mxu0 0.0
    %9694 = vmatpush1.msra.mxu0 0.0
    %9695 = vmatprep.subr.mxu0 0.0
    %9696 = vmatpush1.msra.mxu0 0.0
    %9697 = vmatprep.subr.mxu0 0.0
    %9698 = vmatpush1.msra.mxu0 0.0
    %9699 = vmatprep.subr.mxu0 0.0
    %9700 = vmatpush1.msra.mxu0 0.0
    %9701 = vmatprep.subr.mxu0 0.0
    %9702 = vmatpush1.msra.mxu0 0.0
    %9703 = vmatprep.subr.mxu0 0.0
    %9704 = vmatpush1.msra.mxu0 0.0
    %9705 = vmatprep.subr.mxu0 0.0
    %9706 = vmatpush1.msra.mxu0 0.0
    %9707 = vmatprep.subr.mxu0 0.0
    %9708 = vmatpush1.msra.mxu0 0.0
    %9709 = vmatprep.subr.mxu0 0.0
    %9710 = vmatpush1.msra.mxu0 0.0
    %9711 = vmatprep.subr.mxu0 0.0
    %9712 = vmatpush1.msra.mxu0 0.0
    %9713 = vmatprep.subr.mxu0 0.0
    %9714 = vmatpush1.msra.mxu0 0.0
    %9715 = vmatprep.subr.mxu0 0.0
    %9716 = vmatpush1.msra.mxu0 0.0
    %9717 = vmatprep.subr.mxu0 0.0
    %9718 = vmatpush1.msra.mxu0 0.0
    %9719 = vmatprep.subr.mxu0 0.0
    %9720 = vmatpush1.msra.mxu0 0.0
    %9721 = vmatprep.subr.mxu0 0.0
    %9722 = vmatpush1.msra.mxu0 0.0
    %9723 = vmatprep.subr.mxu0 0.0
    %9724 = vmatpush1.msra.mxu0 0.0
    %9725 = vmatprep.subr.mxu0 0.0
    %9726 = vmatpush1.msra.mxu0 0.0
    %9727 = vmatprep.mubr.f32.mxu0 0.0
    %v9728 = vand.u32 %v9407, 4294901760
    %v9729 = vsub.f32 %v9407, %v9728
    %v9730 = vand.u32 %v9729, 4294901760
    %9731 = vmatmul.mubr.f32.gmra.mrb[0].mxu0 %v9730
    %v9732 = vpop.f32.mrb[0].mxu0
    %v9733 = vadd.f32 %v9656, %v9732
    %v9734 = vpop.f32.mrb[0].mxu0
    %9735 = vdwg.mxu0
    %9736 = vmatprep.subr.mxu0 0.0
    %v9737 = vand.u32 %v8913, 4294901760
    %v9738 = vsub.f32 %v8913, %v9737
    %v9739 = vand.u32 %v9738, 4294901760
    %9740 = vmatpush1.msra.mxu0 %v9739
    %9741 = vmatprep.subr.mxu0 0.0
    %v9742 = vand.u32 %v8914, 4294901760
    %v9743 = vsub.f32 %v8914, %v9742
    %v9744 = vand.u32 %v9743, 4294901760
    %9745 = vmatpush1.msra.mxu0 %v9744
    %9746 = vmatprep.subr.mxu0 0.0
    %v9747 = vand.u32 %v8915, 4294901760
    %v9748 = vsub.f32 %v8915, %v9747
    %v9749 = vand.u32 %v9748, 4294901760
    %9750 = vmatpush1.msra.mxu0 %v9749
    %9751 = vmatprep.subr.mxu0 0.0
    %v9752 = vand.u32 %v8916, 4294901760
    %v9753 = vsub.f32 %v8916, %v9752
    %v9754 = vand.u32 %v9753, 4294901760
    %9755 = vmatpush1.msra.mxu0 %v9754
    %9756 = vmatprep.subr.mxu0 0.0
    %9757 = vmatpush1.msra.mxu0 0.0
    %9758 = vmatprep.subr.mxu0 0.0
    %9759 = vmatpush1.msra.mxu0 0.0
    %9760 = vmatprep.subr.mxu0 0.0
    %9761 = vmatpush1.msra.mxu0 0.0
    %9762 = vmatprep.subr.mxu0 0.0
    %9763 = vmatpush1.msra.mxu0 0.0
    %9764 = vmatprep.subr.mxu0 0.0
    %9765 = vmatpush1.msra.mxu0 0.0
    %9766 = vmatprep.subr.mxu0 0.0
    %9767 = vmatpush1.msra.mxu0 0.0
    %9768 = vmatprep.subr.mxu0 0.0
    %9769 = vmatpush1.msra.mxu0 0.0
    %9770 = vmatprep.subr.mxu0 0.0
    %9771 = vmatpush1.msra.mxu0 0.0
    %9772 = vmatprep.subr.mxu0 0.0
    %9773 = vmatpush1.msra.mxu0 0.0
    %9774 = vmatprep.subr.mxu0 0.0
    %9775 = vmatpush1.msra.mxu0 0.0
    %9776 = vmatprep.subr.mxu0 0.0
    %9777 = vmatpush1.msra.mxu0 0.0
    %9778 = vmatprep.subr.mxu0 0.0
    %9779 = vmatpush1.msra.mxu0 0.0
    %9780 = vmatprep.subr.mxu0 0.0
    %9781 = vmatpush1.msra.mxu0 0.0
    %9782 = vmatprep.subr.mxu0 0.0
    %9783 = vmatpush1.msra.mxu0 0.0
    %9784 = vmatprep.subr.mxu0 0.0
    %9785 = vmatpush1.msra.mxu0 0.0
    %9786 = vmatprep.subr.mxu0 0.0
    %9787 = vmatpush1.msra.mxu0 0.0
    %9788 = vmatprep.subr.mxu0 0.0
    %9789 = vmatpush1.msra.mxu0 0.0
    %9790 = vmatprep.subr.mxu0 0.0
    %9791 = vmatpush1.msra.mxu0 0.0
    %9792 = vmatprep.subr.mxu0 0.0
    %9793 = vmatpush1.msra.mxu0 0.0
    %9794 = vmatprep.subr.mxu0 0.0
    %9795 = vmatpush1.msra.mxu0 0.0
    %9796 = vmatprep.subr.mxu0 0.0
    %9797 = vmatpush1.msra.mxu0 0.0
    %9798 = vmatprep.subr.mxu0 0.0
    %9799 = vmatpush1.msra.mxu0 0.0
    %9800 = vmatprep.subr.mxu0 0.0
    %9801 = vmatpush1.msra.mxu0 0.0
    %9802 = vmatprep.subr.mxu0 0.0
    %9803 = vmatpush1.msra.mxu0 0.0
    %9804 = vmatprep.subr.mxu0 0.0
    %9805 = vmatpush1.msra.mxu0 0.0
    %9806 = vmatprep.subr.mxu0 0.0
    %9807 = vmatpush1.msra.mxu0 0.0
    %9808 = vmatprep.subr.mxu0 0.0
    %9809 = vmatpush1.msra.mxu0 0.0
    %9810 = vmatprep.subr.mxu0 0.0
    %9811 = vmatpush1.msra.mxu0 0.0
    %9812 = vmatprep.mubr.f32.mxu0 0.0
    %v9813 = vand.u32 %v9407, 4294901760
    %9814 = vmatmul.mubr.f32.gmra.mrb[0].mxu0 %v9813
    %v9815 = vpop.f32.mrb[0].mxu0
    %v9816 = vadd.f32 %v9733, %v9815
    %v9817 = vpop.f32.mrb[0].mxu0
    %9818 = vdwg.mxu0
    %9819 = vmatprep.subr.mxu0 0.0
    %v9820 = vand.u32 %v8913, 4294901760
    %9821 = vmatpush1.msra.mxu0 %v9820
    %9822 = vmatprep.subr.mxu0 0.0
    %v9823 = vand.u32 %v8914, 4294901760
    %9824 = vmatpush1.msra.mxu0 %v9823
    %9825 = vmatprep.subr.mxu0 0.0
    %v9826 = vand.u32 %v8915, 4294901760
    %9827 = vmatpush1.msra.mxu0 %v9826
    %9828 = vmatprep.subr.mxu0 0.0
    %v9829 = vand.u32 %v8916, 4294901760
    %9830 = vmatpush1.msra.mxu0 %v9829
    %9831 = vmatprep.subr.mxu0 0.0
    %9832 = vmatpush1.msra.mxu0 0.0
    %9833 = vmatprep.subr.mxu0 0.0
    %9834 = vmatpush1.msra.mxu0 0.0
    %9835 = vmatprep.subr.mxu0 0.0
    %9836 = vmatpush1.msra.mxu0 0.0
    %9837 = vmatprep.subr.mxu0 0.0
    %9838 = vmatpush1.msra.mxu0 0.0
    %9839 = vmatprep.subr.mxu0 0.0
    %9840 = vmatpush1.msra.mxu0 0.0
    %9841 = vmatprep.subr.mxu0 0.0
    %9842 = vmatpush1.msra.mxu0 0.0
    %9843 = vmatprep.subr.mxu0 0.0
    %9844 = vmatpush1.msra.mxu0 0.0
    %9845 = vmatprep.subr.mxu0 0.0
    %9846 = vmatpush1.msra.mxu0 0.0
    %9847 = vmatprep.subr.mxu0 0.0
    %9848 = vmatpush1.msra.mxu0 0.0
    %9849 = vmatprep.subr.mxu0 0.0
    %9850 = vmatpush1.msra.mxu0 0.0
    %9851 = vmatprep.subr.mxu0 0.0
    %9852 = vmatpush1.msra.mxu0 0.0
    %9853 = vmatprep.subr.mxu0 0.0
    %9854 = vmatpush1.msra.mxu0 0.0
    %9855 = vmatprep.subr.mxu0 0.0
    %9856 = vmatpush1.msra.mxu0 0.0
    %9857 = vmatprep.subr.mxu0 0.0
    %9858 = vmatpush1.msra.mxu0 0.0
    %9859 = vmatprep.subr.mxu0 0.0
    %9860 = vmatpush1.msra.mxu0 0.0
    %9861 = vmatprep.subr.mxu0 0.0
    %9862 = vmatpush1.msra.mxu0 0.0
    %9863 = vmatprep.subr.mxu0 0.0
    %9864 = vmatpush1.msra.mxu0 0.0
    %9865 = vmatprep.subr.mxu0 0.0
    %9866 = vmatpush1.msra.mxu0 0.0
    %9867 = vmatprep.subr.mxu0 0.0
    %9868 = vmatpush1.msra.mxu0 0.0
    %9869 = vmatprep.subr.mxu0 0.0
    %9870 = vmatpush1.msra.mxu0 0.0
    %9871 = vmatprep.subr.mxu0 0.0
    %9872 = vmatpush1.msra.mxu0 0.0
    %9873 = vmatprep.subr.mxu0 0.0
    %9874 = vmatpush1.msra.mxu0 0.0
    %9875 = vmatprep.subr.mxu0 0.0
    %9876 = vmatpush1.msra.mxu0 0.0
    %9877 = vmatprep.subr.mxu0 0.0
    %9878 = vmatpush1.msra.mxu0 0.0
    %9879 = vmatprep.subr.mxu0 0.0
    %9880 = vmatpush1.msra.mxu0 0.0
    %9881 = vmatprep.subr.mxu0 0.0
    %9882 = vmatpush1.msra.mxu0 0.0
    %9883 = vmatprep.subr.mxu0 0.0
    %9884 = vmatpush1.msra.mxu0 0.0
    %9885 = vmatprep.subr.mxu0 0.0
    %9886 = vmatpush1.msra.mxu0 0.0
    %9887 = vmatprep.mubr.f32.mxu0 0.0
    %v9888 = vand.u32 %v9407, 4294901760
    %9889 = vmatmul.mubr.f32.gmra.mrb[0].mxu0 %v9888
    %v9890 = vpop.f32.mrb[0].mxu0
    %v9891 = vadd.f32 %v9816, %v9890
    %v9892 = vpop.f32.mrb[0].mxu0
    %9893 = vdwg.mxu0
    %9894 = vst.msk [vmem:[#allocation4] sm:$0xff] %vm49, %v9891
    // Predicated region
    $region46: #{latent_learning_forward.1} parent=1 // pred_check
      _
    $region47: #{latent_learning_forward.1} parent=1 // pred_check_branch
      %9896 = sbr.rel (0) target = $region49
    $region48: #{latent_learning_forward.1} parent=1 // pred_region
      %s9898 = ssub.s32 256, 256
      %9899 = vsyncadd [#allocation3], %s9898
      %s9900 = sshll.u32 [#allocation2], 4
      %s9901 = int_to_ptr.vmem [resolvable:$true] %s9900
      %9906 = dma.vmem_to_hbm [thread:$0]  %s9901, 256, %s11, [#allocation3], 128, 128, 8
    $region49: #{latent_learning_forward.1} parent=1 // pred_fallthru
      _
    // Predicated region
    $region50: #{latent_learning_forward.1} parent=1 // pred_check
      _
    $region51: #{latent_learning_forward.1} parent=1 // pred_check_branch
      %9908 = sbr.rel (0) target = $region53
    $region52: #{latent_learning_forward.1} parent=1 // pred_region
      %s9910 = ssub.s32 128, 128
      %9911 = vsyncadd [#allocation5], %s9910
      %s9913 = sshll.u32 [#allocation4], 4
      %s9914 = int_to_ptr.vmem [resolvable:$true] %s9913
      %9916 = dma.vmem_to_hbm [thread:$0]  %s9914, 128, %s12, [#allocation5]
    $region53: #{latent_learning_forward.1} parent=1 // pred_fallthru
      _
    // Predicated region
    $region54: #{latent_learning_forward.1} parent=1 // pred_check
      _
    $region55: #{latent_learning_forward.1} parent=1 // pred_check_branch
      %9918 = sbr.rel (0) target = $region57
    $region56: #{latent_learning_forward.1} parent=1 // pred_region
      %9919 = dma.done [#allocation3], 256
    $region57: #{latent_learning_forward.1} parent=1 // pred_fallthru
      _
    // Predicated region
    $region58: #{latent_learning_forward.1} parent=1 // pred_check
      _
    $region59: #{latent_learning_forward.1} parent=1 // pred_check_branch
      %9921 = sbr.rel (0) target = $region61
    $region60: #{latent_learning_forward.1} parent=1 // pred_region
      %9922 = dma.done [#allocation5], 128
    $region61: #{latent_learning_forward.1} parent=1 // pred_fallthru
      _
    %9923 = vsyncpa [#allocation3], 1
    %9924 = vsyncpa [#allocation5], 1

</llo_original>
